<compile_context>
chip_gen: v6e
topology: v6e:2x2x1
jax: 0.10.0
libtpu: 0.0.40
codegen_flags: <defaults>
</compile_context>

<pallas_src>
import functools

import jax
import jax.numpy as jnp
from jax import lax
from jax.experimental import pallas as pl
from jax.experimental.pallas import tpu as pltpu

NCPAD = 128  # lane-dense padded classifier width (wrapper slices back to num_classes)


# ---------------- fused Pallas kernel (one batch element per grid step) ----------------

def _fused_forward_kernel(x2_ref, w1_ref, b1_ref, w2_ref, b2_ref,
                          wfc_ref, bfc_ref, mask_ref, o_ref, f1p_ref,
                          *, H, W, Wp, G, C1, C2):
    """Whole Basemodel forward for ONE batch element.

    x2_ref  : (ROWS, Cin) f32   spatially zero-padded image, flattened row-major
                                (buffer row k <-> padded pixel ((k-G)//Wp, (k-G)%Wp))
    w1_ref  : (9, Cin, C1) bf16 conv1 taps, index t = dy*3 + dx
    w2_ref  : (9, C1, C2)  bf16 conv2 taps
    b1/b2   : (1, C1)/(1, C2) f32
    wfc_ref : (C2, NCPAD)  f32  classifier weight (transposed, lane-padded)
    bfc_ref : (1, NCPAD)   f32
    mask_ref: (H*Wp, 1)    f32  1.0 on true output columns, 0.0 on halo columns
    o_ref   : (1, NCPAD)   f32  padded logits
    f1p_ref : (ROWS, C1)   f32  VMEM scratch: zero-padded conv1 feature map
    """
    HWp = H * Wp
    inv_hw = 1.0 / float(H * W)
    mask = mask_ref[...]                                     # (HWp, 1)

    # ---- conv1: implicit GEMM — 9 shifted-slice matmuls, f32 accumulation ----
    acc1 = jnp.zeros((HWp, C1), jnp.float32)
    for t in range(9):
        dy, dx = divmod(t, 3)
        s = dy * Wp + dx + (G - 1)                           # static slice start
        win = x2_ref[s:s + HWp, :].astype(jnp.bfloat16)      # (HWp, Cin) bf16
        acc1 = acc1 + jnp.dot(win, w1_ref[t],
                              preferred_element_type=jnp.float32)
    f1 = jnp.maximum(acc1 + b1_ref[...], 0.0) * mask         # ReLU + zero halo cols

    # ---- conv1 features stay resident in VMEM (zero-padded flattened layout) ----
    f1p_ref[...] = jnp.zeros_like(f1p_ref)
    f1p_ref[G + Wp:G + Wp + HWp, :] = f1                     # 8-aligned sublane store

    # ---- conv2: same implicit GEMM over the VMEM-resident features ----
    acc2 = jnp.zeros((HWp, C2), jnp.float32)
    for t in range(9):
        dy, dx = divmod(t, 3)
        s = dy * Wp + dx + (G - 1)
        win = f1p_ref[s:s + HWp, :].astype(jnp.bfloat16)     # (HWp, C1) bf16
        acc2 = acc2 + jnp.dot(win, w2_ref[t],
                              preferred_element_type=jnp.float32)
    f2 = jnp.maximum(acc2 + b2_ref[...], 0.0) * mask         # (HWp, C2) f32

    # ---- global average pool as an MXU matmul, fused with the classifier ----
    ones = jnp.ones((1, HWp), jnp.float32)
    pooled = jnp.dot(ones, f2, preferred_element_type=jnp.float32) * inv_hw  # (1, C2)
    o_ref[...] = (jnp.dot(pooled, wfc_ref[...],
                          preferred_element_type=jnp.float32) + bfc_ref[...])


# ---------------- wrapper ----------------

def basemodel_forward(x_nchw, params):
    """Forward pass of Basemodel. Input is NCHW (PyTorch convention)."""
    N, Cin, H, W = x_nchw.shape
    C1 = params["w1"].shape[0]
    C2 = params["w2"].shape[0]
    num_classes = params["w_fc"].shape[0]

    Hp, Wp = H + 2, W + 2
    HWp = H * Wp
    G = (-Wp) % 8                       # top guard so the interior scratch store is 8-aligned
    if G == 0:
        G = 8                           # still need >= 1 guard row for the corner taps
    ROWS = ((G + Hp * Wp + 2) + 7) // 8 * 8   # total buffer rows (bottom guard >= 2)

    # --- image: NCHW -> NHWC -> spatial zero-pad -> flatten rows -> guard rows ---
    x = jnp.transpose(x_nchw, (0, 2, 3, 1)).astype(jnp.float32)      # (N,H,W,Cin)
    xp = jnp.pad(x, ((0, 0), (1, 1), (1, 1), (0, 0)))                # (N,Hp,Wp,Cin)
    x2 = xp.reshape(N, Hp * Wp, Cin)
    x2 = jnp.pad(x2, ((0, 0), (G, ROWS - G - Hp * Wp), (0, 0)))      # (N,ROWS,Cin)

    # --- weights: PyTorch layouts -> kernel layouts (convs bf16, epilogue f32) ---
    w1 = jnp.transpose(params["w1"], (2, 3, 1, 0)).reshape(9, Cin, C1).astype(jnp.bfloat16)
    w2 = jnp.transpose(params["w2"], (2, 3, 1, 0)).reshape(9, C1, C2).astype(jnp.bfloat16)
    b1 = params["b1"].reshape(1, C1).astype(jnp.float32)
    b2 = params["b2"].reshape(1, C2).astype(jnp.float32)
    wfc = jnp.zeros((C2, NCPAD), jnp.float32).at[:, :num_classes].set(params["w_fc"].T)
    bfc = jnp.zeros((1, NCPAD), jnp.float32).at[:, :num_classes].set(params["b_fc"])

    # --- column mask: 1.0 on the W true output columns, 0.0 on the 2 halo columns ---
    j = jnp.arange(HWp, dtype=jnp.int32) % Wp
    mask = ((j >= 1) & (j <= W)).astype(jnp.float32).reshape(HWp, 1)

    kernel = functools.partial(_fused_forward_kernel,
                               H=H, W=W, Wp=Wp, G=G, C1=C1, C2=C2)

    out = pl.pallas_call(
        kernel,
        out_shape=jax.ShapeDtypeStruct((N, 1, NCPAD), jnp.float32),
        grid_spec=pltpu.PrefetchScalarGridSpec(
            num_scalar_prefetch=0,
            grid=(N,),
            in_specs=[
                pl.BlockSpec((None, ROWS, Cin), lambda n: (n, 0, 0)),   # x2 (per batch)
                pl.BlockSpec((9, Cin, C1), lambda n: (0, 0, 0)),        # w1
                pl.BlockSpec((1, C1), lambda n: (0, 0)),                # b1
                pl.BlockSpec((9, C1, C2), lambda n: (0, 0, 0)),         # w2
                pl.BlockSpec((1, C2), lambda n: (0, 0)),                # b2
                pl.BlockSpec((C2, NCPAD), lambda n: (0, 0)),            # w_fc^T (padded)
                pl.BlockSpec((1, NCPAD), lambda n: (0, 0)),             # b_fc (padded)
                pl.BlockSpec((HWp, 1), lambda n: (0, 0)),               # column mask
            ],
            out_specs=pl.BlockSpec((None, 1, NCPAD), lambda n: (n, 0, 0)),
            scratch_shapes=[pltpu.VMEM((ROWS, C1), jnp.float32)],       # conv1 features
        ),
        compiler_params=pltpu.CompilerParams(
            dimension_semantics=("parallel",),        # shard batch across TCs on v7x
            vmem_limit_bytes=32 * 1024 * 1024,
        ),
    )(x2, w1, b1, w2, b2, wfc, bfc, mask)

    return out.reshape(N, NCPAD)[:, :num_classes]


# ---------------- reference (pure JAX, f32) ----------------

def basemodel_reference(x_nchw, params):
    dn = ("NCHW", "OIHW", "NCHW")
    x = lax.conv_general_dilated(x_nchw, params["w1"], (1, 1), [(1, 1), (1, 1)],
                                 dimension_numbers=dn)
    x = jnp.maximum(x + params["b1"][None, :, None, None], 0.0)
    x = lax.conv_general_dilated(x, params["w2"], (1, 1), [(1, 1), (1, 1)],
                                 dimension_numbers=dn)
    x = jnp.maximum(x + params["b2"][None, :, None, None], 0.0)
    pooled = jnp.mean(x, axis=(2, 3))                              # (N, C)
    return pooled @ params["w_fc"].T + params["b_fc"]


# ---------------- main ----------------

if __name__ == "__main__":
    key = jax.random.PRNGKey(0)
    k_x, k_w1, k_b1, k_w2, k_b2, k_wfc, k_bfc = jax.random.split(key, 7)

    N, Cin, H, W = 2, 4, 16, 16
    C1, C2 = 16, 32          # representation_dim = 32
    num_classes = 10

    x = jax.random.normal(k_x, (N, Cin, H, W), dtype=jnp.float32)

    params = {
        "w1":   0.1 * jax.random.normal(k_w1, (C1, Cin, 3, 3), dtype=jnp.float32),
        "b1":   0.1 * jax.random.normal(k_b1, (C1,), dtype=jnp.float32),
        "w2":   0.1 * jax.random.normal(k_w2, (C2, C1, 3, 3), dtype=jnp.float32),
        "b2":   0.1 * jax.random.normal(k_b2, (C2,), dtype=jnp.float32),
        "w_fc": 0.1 * jax.random.normal(k_wfc, (num_classes, C2), dtype=jnp.float32),
        "b_fc": 0.1 * jax.random.normal(k_bfc, (num_classes,), dtype=jnp.float32),
    }

    fwd = jax.jit(basemodel_forward)
    out = jax.block_until_ready(fwd(x, params))
    ref = jax.block_until_ready(basemodel_reference(x, params))

    assert out.shape == (N, num_classes), out.shape
    # bf16 MXU operands + f32 accumulation -> slightly relaxed tolerance vs pure-f32 ref
    assert jnp.allclose(out, ref, atol=2e-2, rtol=2e-2), \
        f"max abs err {jnp.max(jnp.abs(out - ref))}"

    print("KERNEL_OK")
</pallas_src>

<mosaic_0001>
module attributes {stable_mosaic.version = 11 : i64} {
  func.func @_fused_forward_kernel(%arg0: i32, %arg1: memref<1x336x4xf32, #tpu.memory_space<vmem>>, %arg2: memref<9x4x16xbf16, #tpu.memory_space<vmem>>, %arg3: memref<1x16xf32, #tpu.memory_space<vmem>>, %arg4: memref<9x16x32xbf16, #tpu.memory_space<vmem>>, %arg5: memref<1x32xf32, #tpu.memory_space<vmem>>, %arg6: memref<32x128xf32, #tpu.memory_space<vmem>>, %arg7: memref<1x128xf32, #tpu.memory_space<vmem>>, %arg8: memref<288x1xf32, #tpu.memory_space<vmem>>, %arg9: memref<1x1x128xf32, #tpu.memory_space<vmem>>, %arg10: memref<336x16xf32, #tpu.memory_space<vmem>>) attributes {dimension_semantics = [#tpu.dimension_semantics<parallel>], iteration_bounds = array<i64: 2>, scalar_prefetch = 0 : i64, scratch_operands = 1 : i64, tpu.core_type = #tpu.core_type<tc>, window_params = [{transform_indices = @transform_0, window_bounds = array<i64: 1, 336, 4>}, {pipeline_mode = #tpu.pipeline_mode<synchronous>, transform_indices = @transform_1, window_bounds = array<i64: 9, 4, 16>}, {pipeline_mode = #tpu.pipeline_mode<synchronous>, transform_indices = @transform_2, window_bounds = array<i64: 1, 16>}, {pipeline_mode = #tpu.pipeline_mode<synchronous>, transform_indices = @transform_3, window_bounds = array<i64: 9, 16, 32>}, {pipeline_mode = #tpu.pipeline_mode<synchronous>, transform_indices = @transform_4, window_bounds = array<i64: 1, 32>}, {pipeline_mode = #tpu.pipeline_mode<synchronous>, transform_indices = @transform_5, window_bounds = array<i64: 32, 128>}, {pipeline_mode = #tpu.pipeline_mode<synchronous>, transform_indices = @transform_6, window_bounds = array<i64: 1, 128>}, {pipeline_mode = #tpu.pipeline_mode<synchronous>, transform_indices = @transform_7, window_bounds = array<i64: 288, 1>}, {transform_indices = @transform_8, window_bounds = array<i64: 1, 1, 128>}]} {
    %c0 = arith.constant 0 : index
    %c0_0 = arith.constant 0 : index
    %0 = vector.load %arg8[%c0, %c0_0] : memref<288x1xf32, #tpu.memory_space<vmem>>, vector<288x1xf32>
    %cst = arith.constant 0.000000e+00 : f32
    %1 = vector.broadcast %cst : f32 to vector<288x16xf32>
    %c0_1 = arith.constant 0 : index
    %c5 = arith.constant 5 : index
    %c0_2 = arith.constant 0 : index
    %2 = vector.load %arg1[%c0_1, %c5, %c0_2] : memref<1x336x4xf32, #tpu.memory_space<vmem>>, vector<1x288x4xf32>
    %3 = vector.shape_cast %2 : vector<1x288x4xf32> to vector<288x4xf32>
    %4 = arith.truncf %3 : vector<288x4xf32> to vector<288x4xbf16>
    %c0_3 = arith.constant 0 : index
    %c0_4 = arith.constant 0 : index
    %c0_5 = arith.constant 0 : index
    %5 = vector.load %arg2[%c0_3, %c0_4, %c0_5] : memref<9x4x16xbf16, #tpu.memory_space<vmem>>, vector<1x4x16xbf16>
    %6 = vector.shape_cast %5 : vector<1x4x16xbf16> to vector<4x16xbf16>
    %cst_6 = arith.constant dense<0.000000e+00> : vector<288x16xf32>
    %7 = tpu.matmul %4, %6, %cst_6 {dimension_numbers = #tpu.dot_dimension_numbers<[1], [0], [0], [1], [0, 0, 1, 1], [], []>} : vector<288x4xbf16>, vector<4x16xbf16>, vector<288x16xf32> -> vector<288x16xf32>
    %8 = arith.addf %1, %7 : vector<288x16xf32>
    %c0_7 = arith.constant 0 : index
    %c6 = arith.constant 6 : index
    %c0_8 = arith.constant 0 : index
    %9 = vector.load %arg1[%c0_7, %c6, %c0_8] : memref<1x336x4xf32, #tpu.memory_space<vmem>>, vector<1x288x4xf32>
    %10 = vector.shape_cast %9 : vector<1x288x4xf32> to vector<288x4xf32>
    %11 = arith.truncf %10 : vector<288x4xf32> to vector<288x4xbf16>
    %c1 = arith.constant 1 : index
    %c0_9 = arith.constant 0 : index
    %c0_10 = arith.constant 0 : index
    %12 = vector.load %arg2[%c1, %c0_9, %c0_10] : memref<9x4x16xbf16, #tpu.memory_space<vmem>>, vector<1x4x16xbf16>
    %13 = vector.shape_cast %12 : vector<1x4x16xbf16> to vector<4x16xbf16>
    %cst_11 = arith.constant dense<0.000000e+00> : vector<288x16xf32>
    %14 = tpu.matmul %11, %13, %cst_11 {dimension_numbers = #tpu.dot_dimension_numbers<[1], [0], [0], [1], [0, 0, 1, 1], [], []>} : vector<288x4xbf16>, vector<4x16xbf16>, vector<288x16xf32> -> vector<288x16xf32>
    %15 = arith.addf %8, %14 : vector<288x16xf32>
    %c0_12 = arith.constant 0 : index
    %c7 = arith.constant 7 : index
    %c0_13 = arith.constant 0 : index
    %16 = vector.load %arg1[%c0_12, %c7, %c0_13] : memref<1x336x4xf32, #tpu.memory_space<vmem>>, vector<1x288x4xf32>
    %17 = vector.shape_cast %16 : vector<1x288x4xf32> to vector<288x4xf32>
    %18 = arith.truncf %17 : vector<288x4xf32> to vector<288x4xbf16>
    %c2 = arith.constant 2 : index
    %c0_14 = arith.constant 0 : index
    %c0_15 = arith.constant 0 : index
    %19 = vector.load %arg2[%c2, %c0_14, %c0_15] : memref<9x4x16xbf16, #tpu.memory_space<vmem>>, vector<1x4x16xbf16>
    %20 = vector.shape_cast %19 : vector<1x4x16xbf16> to vector<4x16xbf16>
    %cst_16 = arith.constant dense<0.000000e+00> : vector<288x16xf32>
    %21 = tpu.matmul %18, %20, %cst_16 {dimension_numbers = #tpu.dot_dimension_numbers<[1], [0], [0], [1], [0, 0, 1, 1], [], []>} : vector<288x4xbf16>, vector<4x16xbf16>, vector<288x16xf32> -> vector<288x16xf32>
    %22 = arith.addf %15, %21 : vector<288x16xf32>
    %c0_17 = arith.constant 0 : index
    %c23 = arith.constant 23 : index
    %c0_18 = arith.constant 0 : index
    %23 = vector.load %arg1[%c0_17, %c23, %c0_18] : memref<1x336x4xf32, #tpu.memory_space<vmem>>, vector<1x288x4xf32>
    %24 = vector.shape_cast %23 : vector<1x288x4xf32> to vector<288x4xf32>
    %25 = arith.truncf %24 : vector<288x4xf32> to vector<288x4xbf16>
    %c3 = arith.constant 3 : index
    %c0_19 = arith.constant 0 : index
    %c0_20 = arith.constant 0 : index
    %26 = vector.load %arg2[%c3, %c0_19, %c0_20] : memref<9x4x16xbf16, #tpu.memory_space<vmem>>, vector<1x4x16xbf16>
    %27 = vector.shape_cast %26 : vector<1x4x16xbf16> to vector<4x16xbf16>
    %cst_21 = arith.constant dense<0.000000e+00> : vector<288x16xf32>
    %28 = tpu.matmul %25, %27, %cst_21 {dimension_numbers = #tpu.dot_dimension_numbers<[1], [0], [0], [1], [0, 0, 1, 1], [], []>} : vector<288x4xbf16>, vector<4x16xbf16>, vector<288x16xf32> -> vector<288x16xf32>
    %29 = arith.addf %22, %28 : vector<288x16xf32>
    %c0_22 = arith.constant 0 : index
    %c24 = arith.constant 24 : index
    %c0_23 = arith.constant 0 : index
    %30 = vector.load %arg1[%c0_22, %c24, %c0_23] : memref<1x336x4xf32, #tpu.memory_space<vmem>>, vector<1x288x4xf32>
    %31 = vector.shape_cast %30 : vector<1x288x4xf32> to vector<288x4xf32>
    %32 = arith.truncf %31 : vector<288x4xf32> to vector<288x4xbf16>
    %c4 = arith.constant 4 : index
    %c0_24 = arith.constant 0 : index
    %c0_25 = arith.constant 0 : index
    %33 = vector.load %arg2[%c4, %c0_24, %c0_25] : memref<9x4x16xbf16, #tpu.memory_space<vmem>>, vector<1x4x16xbf16>
    %34 = vector.shape_cast %33 : vector<1x4x16xbf16> to vector<4x16xbf16>
    %cst_26 = arith.constant dense<0.000000e+00> : vector<288x16xf32>
    %35 = tpu.matmul %32, %34, %cst_26 {dimension_numbers = #tpu.dot_dimension_numbers<[1], [0], [0], [1], [0, 0, 1, 1], [], []>} : vector<288x4xbf16>, vector<4x16xbf16>, vector<288x16xf32> -> vector<288x16xf32>
    %36 = arith.addf %29, %35 : vector<288x16xf32>
    %c0_27 = arith.constant 0 : index
    %c25 = arith.constant 25 : index
    %c0_28 = arith.constant 0 : index
    %37 = vector.load %arg1[%c0_27, %c25, %c0_28] : memref<1x336x4xf32, #tpu.memory_space<vmem>>, vector<1x288x4xf32>
    %38 = vector.shape_cast %37 : vector<1x288x4xf32> to vector<288x4xf32>
    %39 = arith.truncf %38 : vector<288x4xf32> to vector<288x4xbf16>
    %c5_29 = arith.constant 5 : index
    %c0_30 = arith.constant 0 : index
    %c0_31 = arith.constant 0 : index
    %40 = vector.load %arg2[%c5_29, %c0_30, %c0_31] : memref<9x4x16xbf16, #tpu.memory_space<vmem>>, vector<1x4x16xbf16>
    %41 = vector.shape_cast %40 : vector<1x4x16xbf16> to vector<4x16xbf16>
    %cst_32 = arith.constant dense<0.000000e+00> : vector<288x16xf32>
    %42 = tpu.matmul %39, %41, %cst_32 {dimension_numbers = #tpu.dot_dimension_numbers<[1], [0], [0], [1], [0, 0, 1, 1], [], []>} : vector<288x4xbf16>, vector<4x16xbf16>, vector<288x16xf32> -> vector<288x16xf32>
    %43 = arith.addf %36, %42 : vector<288x16xf32>
    %c0_33 = arith.constant 0 : index
    %c41 = arith.constant 41 : index
    %c0_34 = arith.constant 0 : index
    %44 = vector.load %arg1[%c0_33, %c41, %c0_34] : memref<1x336x4xf32, #tpu.memory_space<vmem>>, vector<1x288x4xf32>
    %45 = vector.shape_cast %44 : vector<1x288x4xf32> to vector<288x4xf32>
    %46 = arith.truncf %45 : vector<288x4xf32> to vector<288x4xbf16>
    %c6_35 = arith.constant 6 : index
    %c0_36 = arith.constant 0 : index
    %c0_37 = arith.constant 0 : index
    %47 = vector.load %arg2[%c6_35, %c0_36, %c0_37] : memref<9x4x16xbf16, #tpu.memory_space<vmem>>, vector<1x4x16xbf16>
    %48 = vector.shape_cast %47 : vector<1x4x16xbf16> to vector<4x16xbf16>
    %cst_38 = arith.constant dense<0.000000e+00> : vector<288x16xf32>
    %49 = tpu.matmul %46, %48, %cst_38 {dimension_numbers = #tpu.dot_dimension_numbers<[1], [0], [0], [1], [0, 0, 1, 1], [], []>} : vector<288x4xbf16>, vector<4x16xbf16>, vector<288x16xf32> -> vector<288x16xf32>
    %50 = arith.addf %43, %49 : vector<288x16xf32>
    %c0_39 = arith.constant 0 : index
    %c42 = arith.constant 42 : index
    %c0_40 = arith.constant 0 : index
    %51 = vector.load %arg1[%c0_39, %c42, %c0_40] : memref<1x336x4xf32, #tpu.memory_space<vmem>>, vector<1x288x4xf32>
    %52 = vector.shape_cast %51 : vector<1x288x4xf32> to vector<288x4xf32>
    %53 = arith.truncf %52 : vector<288x4xf32> to vector<288x4xbf16>
    %c7_41 = arith.constant 7 : index
    %c0_42 = arith.constant 0 : index
    %c0_43 = arith.constant 0 : index
    %54 = vector.load %arg2[%c7_41, %c0_42, %c0_43] : memref<9x4x16xbf16, #tpu.memory_space<vmem>>, vector<1x4x16xbf16>
    %55 = vector.shape_cast %54 : vector<1x4x16xbf16> to vector<4x16xbf16>
    %cst_44 = arith.constant dense<0.000000e+00> : vector<288x16xf32>
    %56 = tpu.matmul %53, %55, %cst_44 {dimension_numbers = #tpu.dot_dimension_numbers<[1], [0], [0], [1], [0, 0, 1, 1], [], []>} : vector<288x4xbf16>, vector<4x16xbf16>, vector<288x16xf32> -> vector<288x16xf32>
    %57 = arith.addf %50, %56 : vector<288x16xf32>
    %c0_45 = arith.constant 0 : index
    %c43 = arith.constant 43 : index
    %c0_46 = arith.constant 0 : index
    %58 = vector.load %arg1[%c0_45, %c43, %c0_46] : memref<1x336x4xf32, #tpu.memory_space<vmem>>, vector<1x288x4xf32>
    %59 = vector.shape_cast %58 : vector<1x288x4xf32> to vector<288x4xf32>
    %60 = arith.truncf %59 : vector<288x4xf32> to vector<288x4xbf16>
    %c8 = arith.constant 8 : index
    %c0_47 = arith.constant 0 : index
    %c0_48 = arith.constant 0 : index
    %61 = vector.load %arg2[%c8, %c0_47, %c0_48] : memref<9x4x16xbf16, #tpu.memory_space<vmem>>, vector<1x4x16xbf16>
    %62 = vector.shape_cast %61 : vector<1x4x16xbf16> to vector<4x16xbf16>
    %cst_49 = arith.constant dense<0.000000e+00> : vector<288x16xf32>
    %63 = tpu.matmul %60, %62, %cst_49 {dimension_numbers = #tpu.dot_dimension_numbers<[1], [0], [0], [1], [0, 0, 1, 1], [], []>} : vector<288x4xbf16>, vector<4x16xbf16>, vector<288x16xf32> -> vector<288x16xf32>
    %64 = arith.addf %57, %63 : vector<288x16xf32>
    %c0_50 = arith.constant 0 : index
    %c0_51 = arith.constant 0 : index
    %65 = vector.load %arg3[%c0_50, %c0_51] : memref<1x16xf32, #tpu.memory_space<vmem>>, vector<1x16xf32>
    %66 = vector.broadcast %65 : vector<1x16xf32> to vector<288x16xf32>
    %67 = arith.addf %64, %66 : vector<288x16xf32>
    %cst_52 = arith.constant 0.000000e+00 : f32
    %68 = vector.broadcast %cst_52 : f32 to vector<288x16xf32>
    %69 = arith.maximumf %67, %68 : vector<288x16xf32>
    %70 = vector.broadcast %0 : vector<288x1xf32> to vector<288x16xf32>
    %71 = arith.mulf %69, %70 : vector<288x16xf32>
    %cst_53 = arith.constant 0.000000e+00 : f32
    %72 = vector.broadcast %cst_53 : f32 to vector<336x16xf32>
    %c0_54 = arith.constant 0 : index
    %c0_55 = arith.constant 0 : index
    %73 = vector.load %arg10[%c0_54, %c0_55] : memref<336x16xf32, #tpu.memory_space<vmem>>, vector<336x16xf32>
    tpu.vector_store %arg10[%c0_54, %c0_55], %72 {strides = array<i32>} : memref<336x16xf32, #tpu.memory_space<vmem>>, vector<336x16xf32>,
    %c24_56 = arith.constant 24 : index
    %c0_57 = arith.constant 0 : index
    %74 = vector.load %arg10[%c24_56, %c0_57] : memref<336x16xf32, #tpu.memory_space<vmem>>, vector<288x16xf32>
    tpu.vector_store %arg10[%c24_56, %c0_57], %71 {strides = array<i32>} : memref<336x16xf32, #tpu.memory_space<vmem>>, vector<288x16xf32>,
    %cst_58 = arith.constant 0.000000e+00 : f32
    %75 = vector.broadcast %cst_58 : f32 to vector<288x32xf32>
    %c5_59 = arith.constant 5 : index
    %c0_60 = arith.constant 0 : index
    %76 = vector.load %arg10[%c5_59, %c0_60] : memref<336x16xf32, #tpu.memory_space<vmem>>, vector<288x16xf32>
    %77 = arith.truncf %76 : vector<288x16xf32> to vector<288x16xbf16>
    %c0_61 = arith.constant 0 : index
    %c0_62 = arith.constant 0 : index
    %c0_63 = arith.constant 0 : index
    %78 = vector.load %arg4[%c0_61, %c0_62, %c0_63] : memref<9x16x32xbf16, #tpu.memory_space<vmem>>, vector<1x16x32xbf16>
    %79 = vector.shape_cast %78 : vector<1x16x32xbf16> to vector<16x32xbf16>
    %cst_64 = arith.constant dense<0.000000e+00> : vector<288x32xf32>
    %80 = tpu.matmul %77, %79, %cst_64 {dimension_numbers = #tpu.dot_dimension_numbers<[1], [0], [0], [1], [0, 0, 1, 1], [], []>} : vector<288x16xbf16>, vector<16x32xbf16>, vector<288x32xf32> -> vector<288x32xf32>
    %81 = arith.addf %75, %80 : vector<288x32xf32>
    %c6_65 = arith.constant 6 : index
    %c0_66 = arith.constant 0 : index
    %82 = vector.load %arg10[%c6_65, %c0_66] : memref<336x16xf32, #tpu.memory_space<vmem>>, vector<288x16xf32>
    %83 = arith.truncf %82 : vector<288x16xf32> to vector<288x16xbf16>
    %c1_67 = arith.constant 1 : index
    %c0_68 = arith.constant 0 : index
    %c0_69 = arith.constant 0 : index
    %84 = vector.load %arg4[%c1_67, %c0_68, %c0_69] : memref<9x16x32xbf16, #tpu.memory_space<vmem>>, vector<1x16x32xbf16>
    %85 = vector.shape_cast %84 : vector<1x16x32xbf16> to vector<16x32xbf16>
    %cst_70 = arith.constant dense<0.000000e+00> : vector<288x32xf32>
    %86 = tpu.matmul %83, %85, %cst_70 {dimension_numbers = #tpu.dot_dimension_numbers<[1], [0], [0], [1], [0, 0, 1, 1], [], []>} : vector<288x16xbf16>, vector<16x32xbf16>, vector<288x32xf32> -> vector<288x32xf32>
    %87 = arith.addf %81, %86 : vector<288x32xf32>
    %c7_71 = arith.constant 7 : index
    %c0_72 = arith.constant 0 : index
    %88 = vector.load %arg10[%c7_71, %c0_72] : memref<336x16xf32, #tpu.memory_space<vmem>>, vector<288x16xf32>
    %89 = arith.truncf %88 : vector<288x16xf32> to vector<288x16xbf16>
    %c2_73 = arith.constant 2 : index
    %c0_74 = arith.constant 0 : index
    %c0_75 = arith.constant 0 : index
    %90 = vector.load %arg4[%c2_73, %c0_74, %c0_75] : memref<9x16x32xbf16, #tpu.memory_space<vmem>>, vector<1x16x32xbf16>
    %91 = vector.shape_cast %90 : vector<1x16x32xbf16> to vector<16x32xbf16>
    %cst_76 = arith.constant dense<0.000000e+00> : vector<288x32xf32>
    %92 = tpu.matmul %89, %91, %cst_76 {dimension_numbers = #tpu.dot_dimension_numbers<[1], [0], [0], [1], [0, 0, 1, 1], [], []>} : vector<288x16xbf16>, vector<16x32xbf16>, vector<288x32xf32> -> vector<288x32xf32>
    %93 = arith.addf %87, %92 : vector<288x32xf32>
    %c23_77 = arith.constant 23 : index
    %c0_78 = arith.constant 0 : index
    %94 = vector.load %arg10[%c23_77, %c0_78] : memref<336x16xf32, #tpu.memory_space<vmem>>, vector<288x16xf32>
    %95 = arith.truncf %94 : vector<288x16xf32> to vector<288x16xbf16>
    %c3_79 = arith.constant 3 : index
    %c0_80 = arith.constant 0 : index
    %c0_81 = arith.constant 0 : index
    %96 = vector.load %arg4[%c3_79, %c0_80, %c0_81] : memref<9x16x32xbf16, #tpu.memory_space<vmem>>, vector<1x16x32xbf16>
    %97 = vector.shape_cast %96 : vector<1x16x32xbf16> to vector<16x32xbf16>
    %cst_82 = arith.constant dense<0.000000e+00> : vector<288x32xf32>
    %98 = tpu.matmul %95, %97, %cst_82 {dimension_numbers = #tpu.dot_dimension_numbers<[1], [0], [0], [1], [0, 0, 1, 1], [], []>} : vector<288x16xbf16>, vector<16x32xbf16>, vector<288x32xf32> -> vector<288x32xf32>
    %99 = arith.addf %93, %98 : vector<288x32xf32>
    %c24_83 = arith.constant 24 : index
    %c0_84 = arith.constant 0 : index
    %100 = vector.load %arg10[%c24_83, %c0_84] : memref<336x16xf32, #tpu.memory_space<vmem>>, vector<288x16xf32>
    %101 = arith.truncf %100 : vector<288x16xf32> to vector<288x16xbf16>
    %c4_85 = arith.constant 4 : index
    %c0_86 = arith.constant 0 : index
    %c0_87 = arith.constant 0 : index
    %102 = vector.load %arg4[%c4_85, %c0_86, %c0_87] : memref<9x16x32xbf16, #tpu.memory_space<vmem>>, vector<1x16x32xbf16>
    %103 = vector.shape_cast %102 : vector<1x16x32xbf16> to vector<16x32xbf16>
    %cst_88 = arith.constant dense<0.000000e+00> : vector<288x32xf32>
    %104 = tpu.matmul %101, %103, %cst_88 {dimension_numbers = #tpu.dot_dimension_numbers<[1], [0], [0], [1], [0, 0, 1, 1], [], []>} : vector<288x16xbf16>, vector<16x32xbf16>, vector<288x32xf32> -> vector<288x32xf32>
    %105 = arith.addf %99, %104 : vector<288x32xf32>
    %c25_89 = arith.constant 25 : index
    %c0_90 = arith.constant 0 : index
    %106 = vector.load %arg10[%c25_89, %c0_90] : memref<336x16xf32, #tpu.memory_space<vmem>>, vector<288x16xf32>
    %107 = arith.truncf %106 : vector<288x16xf32> to vector<288x16xbf16>
    %c5_91 = arith.constant 5 : index
    %c0_92 = arith.constant 0 : index
    %c0_93 = arith.constant 0 : index
    %108 = vector.load %arg4[%c5_91, %c0_92, %c0_93] : memref<9x16x32xbf16, #tpu.memory_space<vmem>>, vector<1x16x32xbf16>
    %109 = vector.shape_cast %108 : vector<1x16x32xbf16> to vector<16x32xbf16>
    %cst_94 = arith.constant dense<0.000000e+00> : vector<288x32xf32>
    %110 = tpu.matmul %107, %109, %cst_94 {dimension_numbers = #tpu.dot_dimension_numbers<[1], [0], [0], [1], [0, 0, 1, 1], [], []>} : vector<288x16xbf16>, vector<16x32xbf16>, vector<288x32xf32> -> vector<288x32xf32>
    %111 = arith.addf %105, %110 : vector<288x32xf32>
    %c41_95 = arith.constant 41 : index
    %c0_96 = arith.constant 0 : index
    %112 = vector.load %arg10[%c41_95, %c0_96] : memref<336x16xf32, #tpu.memory_space<vmem>>, vector<288x16xf32>
    %113 = arith.truncf %112 : vector<288x16xf32> to vector<288x16xbf16>
    %c6_97 = arith.constant 6 : index
    %c0_98 = arith.constant 0 : index
    %c0_99 = arith.constant 0 : index
    %114 = vector.load %arg4[%c6_97, %c0_98, %c0_99] : memref<9x16x32xbf16, #tpu.memory_space<vmem>>, vector<1x16x32xbf16>
    %115 = vector.shape_cast %114 : vector<1x16x32xbf16> to vector<16x32xbf16>
    %cst_100 = arith.constant dense<0.000000e+00> : vector<288x32xf32>
    %116 = tpu.matmul %113, %115, %cst_100 {dimension_numbers = #tpu.dot_dimension_numbers<[1], [0], [0], [1], [0, 0, 1, 1], [], []>} : vector<288x16xbf16>, vector<16x32xbf16>, vector<288x32xf32> -> vector<288x32xf32>
    %117 = arith.addf %111, %116 : vector<288x32xf32>
    %c42_101 = arith.constant 42 : index
    %c0_102 = arith.constant 0 : index
    %118 = vector.load %arg10[%c42_101, %c0_102] : memref<336x16xf32, #tpu.memory_space<vmem>>, vector<288x16xf32>
    %119 = arith.truncf %118 : vector<288x16xf32> to vector<288x16xbf16>
    %c7_103 = arith.constant 7 : index
    %c0_104 = arith.constant 0 : index
    %c0_105 = arith.constant 0 : index
    %120 = vector.load %arg4[%c7_103, %c0_104, %c0_105] : memref<9x16x32xbf16, #tpu.memory_space<vmem>>, vector<1x16x32xbf16>
    %121 = vector.shape_cast %120 : vector<1x16x32xbf16> to vector<16x32xbf16>
    %cst_106 = arith.constant dense<0.000000e+00> : vector<288x32xf32>
    %122 = tpu.matmul %119, %121, %cst_106 {dimension_numbers = #tpu.dot_dimension_numbers<[1], [0], [0], [1], [0, 0, 1, 1], [], []>} : vector<288x16xbf16>, vector<16x32xbf16>, vector<288x32xf32> -> vector<288x32xf32>
    %123 = arith.addf %117, %122 : vector<288x32xf32>
    %c43_107 = arith.constant 43 : index
    %c0_108 = arith.constant 0 : index
    %124 = vector.load %arg10[%c43_107, %c0_108] : memref<336x16xf32, #tpu.memory_space<vmem>>, vector<288x16xf32>
    %125 = arith.truncf %124 : vector<288x16xf32> to vector<288x16xbf16>
    %c8_109 = arith.constant 8 : index
    %c0_110 = arith.constant 0 : index
    %c0_111 = arith.constant 0 : index
    %126 = vector.load %arg4[%c8_109, %c0_110, %c0_111] : memref<9x16x32xbf16, #tpu.memory_space<vmem>>, vector<1x16x32xbf16>
    %127 = vector.shape_cast %126 : vector<1x16x32xbf16> to vector<16x32xbf16>
    %cst_112 = arith.constant dense<0.000000e+00> : vector<288x32xf32>
    %128 = tpu.matmul %125, %127, %cst_112 {dimension_numbers = #tpu.dot_dimension_numbers<[1], [0], [0], [1], [0, 0, 1, 1], [], []>} : vector<288x16xbf16>, vector<16x32xbf16>, vector<288x32xf32> -> vector<288x32xf32>
    %129 = arith.addf %123, %128 : vector<288x32xf32>
    %c0_113 = arith.constant 0 : index
    %c0_114 = arith.constant 0 : index
    %130 = vector.load %arg5[%c0_113, %c0_114] : memref<1x32xf32, #tpu.memory_space<vmem>>, vector<1x32xf32>
    %131 = vector.broadcast %130 : vector<1x32xf32> to vector<288x32xf32>
    %132 = arith.addf %129, %131 : vector<288x32xf32>
    %cst_115 = arith.constant 0.000000e+00 : f32
    %133 = vector.broadcast %cst_115 : f32 to vector<288x32xf32>
    %134 = arith.maximumf %132, %133 : vector<288x32xf32>
    %135 = vector.broadcast %0 : vector<288x1xf32> to vector<288x32xf32>
    %136 = arith.mulf %134, %135 : vector<288x32xf32>
    %cst_116 = arith.constant 1.000000e+00 : f32
    %137 = vector.broadcast %cst_116 : f32 to vector<1x288xf32>
    %cst_117 = arith.constant dense<0.000000e+00> : vector<1x32xf32>
    %138 = tpu.matmul %137, %136, %cst_117 {dimension_numbers = #tpu.dot_dimension_numbers<[1], [0], [0], [1], [0, 0, 1, 1], [], []>} : vector<1x288xf32>, vector<288x32xf32>, vector<1x32xf32> -> vector<1x32xf32>
    %cst_118 = arith.constant 3.906250e-03 : f32
    %139 = vector.broadcast %cst_118 : f32 to vector<1x32xf32>
    %140 = arith.mulf %138, %139 : vector<1x32xf32>
    %c0_119 = arith.constant 0 : index
    %c0_120 = arith.constant 0 : index
    %141 = vector.load %arg6[%c0_119, %c0_120] : memref<32x128xf32, #tpu.memory_space<vmem>>, vector<32x128xf32>
    %cst_121 = arith.constant dense<0.000000e+00> : vector<1x128xf32>
    %142 = tpu.matmul %140, %141, %cst_121 {dimension_numbers = #tpu.dot_dimension_numbers<[1], [0], [0], [1], [0, 0, 1, 1], [], []>} : vector<1x32xf32>, vector<32x128xf32>, vector<1x128xf32> -> vector<1x128xf32>
    %c0_122 = arith.constant 0 : index
    %c0_123 = arith.constant 0 : index
    %143 = vector.load %arg7[%c0_122, %c0_123] : memref<1x128xf32, #tpu.memory_space<vmem>>, vector<1x128xf32>
    %144 = arith.addf %142, %143 : vector<1x128xf32>
    %c0_124 = arith.constant 0 : index
    %c0_125 = arith.constant 0 : index
    %c0_126 = arith.constant 0 : index
    %145 = vector.load %arg9[%c0_124, %c0_125, %c0_126] : memref<1x1x128xf32, #tpu.memory_space<vmem>>, vector<1x1x128xf32>
    %146 = vector.shape_cast %145 : vector<1x1x128xf32> to vector<1x128xf32>
    %147 = vector.shape_cast %144 : vector<1x128xf32> to vector<1x1x128xf32>
    tpu.vector_store %arg9[%c0_124, %c0_125, %c0_126], %147 {strides = array<i32>} : memref<1x1x128xf32, #tpu.memory_space<vmem>>, vector<1x1x128xf32>,
    return
  }
  func.func @transform_0(%arg0: i32) -> (i32, i32, i32) {
    %c0_i32 = arith.constant 0 : i32
    %c0_i32_0 = arith.constant 0 : i32
    %c0_i32_1 = arith.constant 0 : i32
    return %arg0, %c0_i32, %c0_i32_0 : i32, i32, i32
  }
  func.func @transform_1(%arg0: i32) -> (i32, i32, i32) {
    %c0_i32 = arith.constant 0 : i32
    %c0_i32_0 = arith.constant 0 : i32
    %c0_i32_1 = arith.constant 0 : i32
    %c0_i32_2 = arith.constant 0 : i32
    return %c0_i32, %c0_i32_0, %c0_i32_1 : i32, i32, i32
  }
  func.func @transform_2(%arg0: i32) -> (i32, i32) {
    %c0_i32 = arith.constant 0 : i32
    %c0_i32_0 = arith.constant 0 : i32
    %c0_i32_1 = arith.constant 0 : i32
    return %c0_i32, %c0_i32_0 : i32, i32
  }
  func.func @transform_3(%arg0: i32) -> (i32, i32, i32) {
    %c0_i32 = arith.constant 0 : i32
    %c0_i32_0 = arith.constant 0 : i32
    %c0_i32_1 = arith.constant 0 : i32
    %c0_i32_2 = arith.constant 0 : i32
    return %c0_i32, %c0_i32_0, %c0_i32_1 : i32, i32, i32
  }
  func.func @transform_4(%arg0: i32) -> (i32, i32) {
    %c0_i32 = arith.constant 0 : i32
    %c0_i32_0 = arith.constant 0 : i32
    %c0_i32_1 = arith.constant 0 : i32
    return %c0_i32, %c0_i32_0 : i32, i32
  }
  func.func @transform_5(%arg0: i32) -> (i32, i32) {
    %c0_i32 = arith.constant 0 : i32
    %c0_i32_0 = arith.constant 0 : i32
    %c0_i32_1 = arith.constant 0 : i32
    return %c0_i32, %c0_i32_0 : i32, i32
  }
  func.func @transform_6(%arg0: i32) -> (i32, i32) {
    %c0_i32 = arith.constant 0 : i32
    %c0_i32_0 = arith.constant 0 : i32
    %c0_i32_1 = arith.constant 0 : i32
    return %c0_i32, %c0_i32_0 : i32, i32
  }
  func.func @transform_7(%arg0: i32) -> (i32, i32) {
    %c0_i32 = arith.constant 0 : i32
    %c0_i32_0 = arith.constant 0 : i32
    %c0_i32_1 = arith.constant 0 : i32
    return %c0_i32, %c0_i32_0 : i32, i32
  }
  func.func @transform_8(%arg0: i32) -> (i32, i32, i32) {
    %c0_i32 = arith.constant 0 : i32
    %c0_i32_0 = arith.constant 0 : i32
    %c0_i32_1 = arith.constant 0 : i32
    return %arg0, %c0_i32, %c0_i32_0 : i32, i32, i32
  }
}

</mosaic_0001>

<llo_original>
// kernel: basemodel_forward.1
$region0: #{basemodel_forward.1}
  #allocation0 [shape = 'u32[]', space=smem, size = 0x4, offset = 0x4, fixed_abs, tag = 'smem constant byte address 0x4 - core index']
  #allocation1 [shape = 'u32[144,128]{1,0:T(1,128)}', space=vmem, size = 0x12000, scoped, tag = 'internal scratch']
  #allocation2 [shape = 'f32[336,16]{1,0:T(8,128)}', space=vmem, size = 0x2a000, scoped, tag = 'scratch operand']
  %s0 = inlined_call_operand.vmem [shape: f32[2,336,4], index: 0, kind: input, shape index: {}]
  %s1 = inlined_call_operand.vmem [shape: bf16[9,4,16], index: 1, kind: input, shape index: {}]
  %s2 = inlined_call_operand.vmem [shape: f32[1,16], index: 2, kind: input, shape index: {}]
  %s3 = inlined_call_operand.vmem [shape: bf16[9,16,32], index: 3, kind: input, shape index: {}]
  %s4 = inlined_call_operand.vmem [shape: f32[1,32], index: 4, kind: input, shape index: {}]
  %s5 = inlined_call_operand.vmem [shape: f32[32,128], index: 5, kind: input, shape index: {}]
  %s6 = inlined_call_operand.vmem [shape: f32[1,128], index: 6, kind: input, shape index: {}]
  %s7 = inlined_call_operand.vmem [shape: f32[288,1], index: 7, kind: input, shape index: {}]
  %s8 = inlined_call_operand.hbm [shape: f32[2,1,128], index: 8, kind: output, shape index: {}]
  %s9 = sld [smem:[#allocation0]]
  $region65: #{basemodel_forward.1} parent=0
    _
  %s11 = ssub.s32 1, %s9
  %s12 = scalar_select 0, %s11, %s9
  $region1: #{basemodel_forward.1} parent=0
    #allocation3 [shape = 'u8[1024]{0}', space=vmem, size = 0x400, scoped, tag = 'output window, operand 0']
    #allocation4 [shape = 's32[2]{0}', space=sflag, size = 0x8, scoped, tag = 'scoped memory for basemodel_forward.1']
    %13 = vsyncpa [#allocation4], 0
    %s14 = scalar_lea.sflag [#allocation4], 1
    %15 = vsyncpa %s14, 0
    loop: start=0, step=1, limit=4
    $region2: #{basemodel_forward.1} parent=1 // loop_pre_header
      _
    $region3: #{basemodel_forward.1} parent=1 // loop_header
      %s17 = sphi 0, %s21
      %p18 = scmp.ge.s32.totalorder %s17, 4
      %s27 = sphi 0, %s29
      %s30 = sphi 0, %s27
      %s31 = sphi 0, %s30
      %s47 = sphi 0, %s31
      %s51 = sphi 0, %s51
      %s53 = sphi 0, %s51
      %s54 = sphi 0, %s53
      %s68 = sphi 0, %s54
      %s72 = sphi 0, %s72
      %s74 = sphi 0, %s72
      %s75 = sphi 0, %s74
      %s89 = sphi 0, %s75
      %s93 = sphi 0, %s93
      %s95 = sphi 0, %s93
      %s96 = sphi 0, %s95
      %s110 = sphi 0, %s96
      %s114 = sphi 0, %s114
      %s116 = sphi 0, %s114
      %s117 = sphi 0, %s116
      %s131 = sphi 0, %s117
      %s135 = sphi 0, %s135
      %s137 = sphi 0, %s135
      %s138 = sphi 0, %s137
      %s152 = sphi 0, %s138
      %s156 = sphi 0, %s156
      %s158 = sphi 0, %s156
      %s159 = sphi 0, %s158
      %s173 = sphi 0, %s159
      %s177 = sphi 0, %s177
      %s179 = sphi 0, %s177
      %s180 = sphi 0, %s179
      %s194 = sphi 0, %s180
      %s200 = sphi 0, %s202
      %s203 = sphi 0, %s200
      %s204 = sphi 0, %s203
      %s220 = sphi 0, %s204
    $region4: #{basemodel_forward.1} parent=1 // loop_header_branch
      %20 = sbr.rel (%p18) target = $region8
    $region5: #{basemodel_forward.1} parent=1 // loop_body
      %s22 = ssub.s32 %s17, 1
      %s23 = ssub.s32 %s17, 2
      %s24 = sadd.s32 %s17, 1
      %s25 = ssub.s32 %s17, %s24
      %p26 = scmp.eq.s32.totalorder %s25, 0
      %s28 = sadd.s32 %s27, 1
      %s29 = scalar_select %p26, %s27, %s28
      %p32 = pneg %p26
      %p33 = scmp.eq.s32.totalorder %s17, 1
      %p34 = por %p32, %p33
      %p35 = scmp.ne.s32.totalorder %s27, %s30
      %p36 = scmp.eq.s32.totalorder %s17, 0
      %p37 = por %p35, %p36
      %p38 = scmp.ne.s32.totalorder %s27, %s30
      %p39 = scmp.eq.s32.totalorder %s22, 1
      %p40 = por %p38, %p39
      %p41 = scmp.ne.s32.totalorder %s30, %s31
      %p42 = scmp.eq.s32.totalorder %s22, 0
      %p43 = por %p41, %p42
      %p44 = scmp.ne.s32.totalorder %s30, %s31
      %p45 = scmp.eq.s32.totalorder %s23, 1
      %p46 = por %p44, %p45
      %p48 = scmp.ne.s32.totalorder %s31, %s47
      %p49 = scmp.eq.s32.totalorder %s23, 0
      %p50 = por %p48, %p49
      %s52 = sadd.s32 %s51, 1
      %p55 = scmp.eq.s32.totalorder %s17, 1
      %p56 = scmp.ne.s32.totalorder %s51, %s53
      %p57 = scmp.eq.s32.totalorder %s17, 0
      %p58 = por %p56, %p57
      %p59 = scmp.ne.s32.totalorder %s51, %s53
      %p60 = scmp.eq.s32.totalorder %s22, 1
      %p61 = por %p59, %p60
      %p62 = scmp.ne.s32.totalorder %s53, %s54
      %p63 = scmp.eq.s32.totalorder %s22, 0
      %p64 = por %p62, %p63
      %p65 = scmp.ne.s32.totalorder %s53, %s54
      %p66 = scmp.eq.s32.totalorder %s23, 1
      %p67 = por %p65, %p66
      %p69 = scmp.ne.s32.totalorder %s54, %s68
      %p70 = scmp.eq.s32.totalorder %s23, 0
      %p71 = por %p69, %p70
      %s73 = sadd.s32 %s72, 1
      %p76 = scmp.eq.s32.totalorder %s17, 1
      %p77 = scmp.ne.s32.totalorder %s72, %s74
      %p78 = scmp.eq.s32.totalorder %s17, 0
      %p79 = por %p77, %p78
      %p80 = scmp.ne.s32.totalorder %s72, %s74
      %p81 = scmp.eq.s32.totalorder %s22, 1
      %p82 = por %p80, %p81
      %p83 = scmp.ne.s32.totalorder %s74, %s75
      %p84 = scmp.eq.s32.totalorder %s22, 0
      %p85 = por %p83, %p84
      %p86 = scmp.ne.s32.totalorder %s74, %s75
      %p87 = scmp.eq.s32.totalorder %s23, 1
      %p88 = por %p86, %p87
      %p90 = scmp.ne.s32.totalorder %s75, %s89
      %p91 = scmp.eq.s32.totalorder %s23, 0
      %p92 = por %p90, %p91
      %s94 = sadd.s32 %s93, 1
      %p97 = scmp.eq.s32.totalorder %s17, 1
      %p98 = scmp.ne.s32.totalorder %s93, %s95
      %p99 = scmp.eq.s32.totalorder %s17, 0
      %p100 = por %p98, %p99
      %p101 = scmp.ne.s32.totalorder %s93, %s95
      %p102 = scmp.eq.s32.totalorder %s22, 1
      %p103 = por %p101, %p102
      %p104 = scmp.ne.s32.totalorder %s95, %s96
      %p105 = scmp.eq.s32.totalorder %s22, 0
      %p106 = por %p104, %p105
      %p107 = scmp.ne.s32.totalorder %s95, %s96
      %p108 = scmp.eq.s32.totalorder %s23, 1
      %p109 = por %p107, %p108
      %p111 = scmp.ne.s32.totalorder %s96, %s110
      %p112 = scmp.eq.s32.totalorder %s23, 0
      %p113 = por %p111, %p112
      %s115 = sadd.s32 %s114, 1
      %p118 = scmp.eq.s32.totalorder %s17, 1
      %p119 = scmp.ne.s32.totalorder %s114, %s116
      %p120 = scmp.eq.s32.totalorder %s17, 0
      %p121 = por %p119, %p120
      %p122 = scmp.ne.s32.totalorder %s114, %s116
      %p123 = scmp.eq.s32.totalorder %s22, 1
      %p124 = por %p122, %p123
      %p125 = scmp.ne.s32.totalorder %s116, %s117
      %p126 = scmp.eq.s32.totalorder %s22, 0
      %p127 = por %p125, %p126
      %p128 = scmp.ne.s32.totalorder %s116, %s117
      %p129 = scmp.eq.s32.totalorder %s23, 1
      %p130 = por %p128, %p129
      %p132 = scmp.ne.s32.totalorder %s117, %s131
      %p133 = scmp.eq.s32.totalorder %s23, 0
      %p134 = por %p132, %p133
      %s136 = sadd.s32 %s135, 1
      %p139 = scmp.eq.s32.totalorder %s17, 1
      %p140 = scmp.ne.s32.totalorder %s135, %s137
      %p141 = scmp.eq.s32.totalorder %s17, 0
      %p142 = por %p140, %p141
      %p143 = scmp.ne.s32.totalorder %s135, %s137
      %p144 = scmp.eq.s32.totalorder %s22, 1
      %p145 = por %p143, %p144
      %p146 = scmp.ne.s32.totalorder %s137, %s138
      %p147 = scmp.eq.s32.totalorder %s22, 0
      %p148 = por %p146, %p147
      %p149 = scmp.ne.s32.totalorder %s137, %s138
      %p150 = scmp.eq.s32.totalorder %s23, 1
      %p151 = por %p149, %p150
      %p153 = scmp.ne.s32.totalorder %s138, %s152
      %p154 = scmp.eq.s32.totalorder %s23, 0
      %p155 = por %p153, %p154
      %s157 = sadd.s32 %s156, 1
      %p160 = scmp.eq.s32.totalorder %s17, 1
      %p161 = scmp.ne.s32.totalorder %s156, %s158
      %p162 = scmp.eq.s32.totalorder %s17, 0
      %p163 = por %p161, %p162
      %p164 = scmp.ne.s32.totalorder %s156, %s158
      %p165 = scmp.eq.s32.totalorder %s22, 1
      %p166 = por %p164, %p165
      %p167 = scmp.ne.s32.totalorder %s158, %s159
      %p168 = scmp.eq.s32.totalorder %s22, 0
      %p169 = por %p167, %p168
      %p170 = scmp.ne.s32.totalorder %s158, %s159
      %p171 = scmp.eq.s32.totalorder %s23, 1
      %p172 = por %p170, %p171
      %p174 = scmp.ne.s32.totalorder %s159, %s173
      %p175 = scmp.eq.s32.totalorder %s23, 0
      %p176 = por %p174, %p175
      %s178 = sadd.s32 %s177, 1
      %p181 = scmp.eq.s32.totalorder %s17, 1
      %p182 = scmp.ne.s32.totalorder %s177, %s179
      %p183 = scmp.eq.s32.totalorder %s17, 0
      %p184 = por %p182, %p183
      %p185 = scmp.ne.s32.totalorder %s177, %s179
      %p186 = scmp.eq.s32.totalorder %s22, 1
      %p187 = por %p185, %p186
      %p188 = scmp.ne.s32.totalorder %s179, %s180
      %p189 = scmp.eq.s32.totalorder %s22, 0
      %p190 = por %p188, %p189
      %p191 = scmp.ne.s32.totalorder %s179, %s180
      %p192 = scmp.eq.s32.totalorder %s23, 1
      %p193 = por %p191, %p192
      %p195 = scmp.ne.s32.totalorder %s180, %s194
      %p196 = scmp.eq.s32.totalorder %s23, 0
      %p197 = por %p195, %p196
      %s198 = ssub.s32 %s17, %s24
      %p199 = scmp.eq.s32.totalorder %s198, 0
      %s201 = sadd.s32 %s200, 1
      %s202 = scalar_select %p199, %s200, %s201
      %p205 = pneg %p199
      %p206 = scmp.eq.s32.totalorder %s17, 1
      %p207 = por %p205, %p206
      %p208 = scmp.ne.s32.totalorder %s200, %s203
      %p209 = scmp.eq.s32.totalorder %s17, 0
      %p210 = por %p208, %p209
      %p211 = scmp.ne.s32.totalorder %s200, %s203
      %p212 = scmp.eq.s32.totalorder %s22, 1
      %p213 = por %p211, %p212
      %p214 = scmp.ne.s32.totalorder %s203, %s204
      %p215 = scmp.eq.s32.totalorder %s22, 0
      %p216 = por %p214, %p215
      %p217 = scmp.ne.s32.totalorder %s203, %s204
      %p218 = scmp.eq.s32.totalorder %s23, 1
      %p219 = por %p217, %p218
      %p221 = scmp.ne.s32.totalorder %s204, %s220
      %p222 = scmp.eq.s32.totalorder %s23, 0
      %p223 = por %p221, %p222
      %p224 = scmp.le.s32.totalorder 1, %s17
      %p225 = scmp.lt.s32.totalorder %s17, 3
      %p226 = pnand %p224, %p225
      %p227 = pneg %p226
      // Predicated region
      $region9: #{basemodel_forward.1} parent=5 // pred_check
        _
      $region10: #{basemodel_forward.1} parent=5 // pred_check_branch
        %229 = sbr.rel (%p226) target = $region12
      $region11: #{basemodel_forward.1} parent=5 // pred_region
        %s230 = ssub.s32 %s17, 1
        // Predicated region
        $region13: #{basemodel_forward.1} parent=11 // pred_check
          %p231 = pneg %p64
        $region14: #{basemodel_forward.1} parent=11 // pred_check_branch
          %233 = sbr.rel (%p231) target = $region16
        $region15: #{basemodel_forward.1} parent=11 // pred_region
          _
        $region16: #{basemodel_forward.1} parent=11 // pred_fallthru
          _
        // Predicated region
        $region17: #{basemodel_forward.1} parent=11 // pred_check
          %p234 = pneg %p85
        $region18: #{basemodel_forward.1} parent=11 // pred_check_branch
          %236 = sbr.rel (%p234) target = $region20
        $region19: #{basemodel_forward.1} parent=11 // pred_region
          _
        $region20: #{basemodel_forward.1} parent=11 // pred_fallthru
          _
        // Predicated region
        $region21: #{basemodel_forward.1} parent=11 // pred_check
          %p237 = pneg %p106
        $region22: #{basemodel_forward.1} parent=11 // pred_check_branch
          %239 = sbr.rel (%p237) target = $region24
        $region23: #{basemodel_forward.1} parent=11 // pred_region
          _
        $region24: #{basemodel_forward.1} parent=11 // pred_fallthru
          _
        // Predicated region
        $region25: #{basemodel_forward.1} parent=11 // pred_check
          %p240 = pneg %p127
        $region26: #{basemodel_forward.1} parent=11 // pred_check_branch
          %242 = sbr.rel (%p240) target = $region28
        $region27: #{basemodel_forward.1} parent=11 // pred_region
          _
        $region28: #{basemodel_forward.1} parent=11 // pred_fallthru
          _
        // Predicated region
        $region29: #{basemodel_forward.1} parent=11 // pred_check
          %p243 = pneg %p148
        $region30: #{basemodel_forward.1} parent=11 // pred_check_branch
          %245 = sbr.rel (%p243) target = $region32
        $region31: #{basemodel_forward.1} parent=11 // pred_region
          _
        $region32: #{basemodel_forward.1} parent=11 // pred_fallthru
          _
        // Predicated region
        $region33: #{basemodel_forward.1} parent=11 // pred_check
          %p246 = pneg %p169
        $region34: #{basemodel_forward.1} parent=11 // pred_check_branch
          %248 = sbr.rel (%p246) target = $region36
        $region35: #{basemodel_forward.1} parent=11 // pred_region
          _
        $region36: #{basemodel_forward.1} parent=11 // pred_fallthru
          _
        // Predicated region
        $region37: #{basemodel_forward.1} parent=11 // pred_check
          %p249 = pneg %p190
        $region38: #{basemodel_forward.1} parent=11 // pred_check_branch
          %251 = sbr.rel (%p249) target = $region40
        $region39: #{basemodel_forward.1} parent=11 // pred_region
          _
        $region40: #{basemodel_forward.1} parent=11 // pred_fallthru
          _
      $region12: #{basemodel_forward.1} parent=5 // pred_fallthru
        _
      %p252 = scmp.lt.s32.totalorder %s17, 2
      // Predicated region
      $region41: #{basemodel_forward.1} parent=5 // pred_check
        %p253 = pneg %p252
      $region42: #{basemodel_forward.1} parent=5 // pred_check_branch
        %255 = sbr.rel (%p253) target = $region44
      $region43: #{basemodel_forward.1} parent=5 // pred_region
        // Predicated region
        $region45: #{basemodel_forward.1} parent=43 // pred_check
          %p256 = pneg %p37
        $region46: #{basemodel_forward.1} parent=43 // pred_check_branch
          %258 = sbr.rel (%p256) target = $region48
        $region47: #{basemodel_forward.1} parent=43 // pred_region
          %p259 = scmp.lt.s32.totalorder %s17, 1
          %s260 = scalar_select %p259, %s17, 1
          %s261 = smul.addr %s260, 42
          %s262 = smul.addr %s261, 8
          %s263 = scalar_lea.vmem %s0, %s262
        $region48: #{basemodel_forward.1} parent=43 // pred_fallthru
          _
      $region44: #{basemodel_forward.1} parent=5 // pred_fallthru
        _
      %p264 = scmp.le.s32.totalorder 1, %s17
      %p265 = scmp.lt.s32.totalorder %s17, 3
      %p266 = pnand %p264, %p265
      %p267 = pneg %p266
      // Predicated region
      $region49: #{basemodel_forward.1} parent=5 // pred_check
        _
      $region50: #{basemodel_forward.1} parent=5 // pred_check_branch
        %269 = sbr.rel (%p266) target = $region52
      $region51: #{basemodel_forward.1} parent=5 // pred_region
        %s270 = ssub.s32 %s17, 1
        %p271 = scmp.lt.s32.totalorder %s22, 1
        %s272 = scalar_select %p271, %s22, 1
        %s273 = smul.addr %s272, 42
        %s274 = smul.addr %s273, 8
        %s275 = scalar_lea.vmem %s0, %s274
        %p276 = pneg %p43
        %p277 = pneg %p40
        %p278 = pneg %p64
        %p279 = pneg %p61
        %p280 = pneg %p85
        %p281 = pneg %p82
        %p282 = pneg %p106
        %p283 = pneg %p103
        %p284 = pneg %p127
        %p285 = pneg %p124
        %p286 = pneg %p148
        %p287 = pneg %p145
        %p288 = pneg %p169
        %p289 = pneg %p166
        %p290 = pneg %p190
        %p291 = pneg %p187
        %p292 = pneg %p216
        %p293 = pneg %p213
        %s294 = sand.u32 %s203, 1
        %s295 = scalar_lea.sflag [#allocation4], %s294
        %s296 = sand.u32 %s203, 1
        %s297 = scalar_lea.vmem [#allocation3], %s296
        %p298 = scmp.lt.s32.totalorder %s22, 1
        %s299 = scalar_select %p298, %s22, 1
        %s300 = smul.addr %s299, 42
        %s301 = smul.addr %s300, 8
        %s302 = scalar_lea.vmem %s0, %s301
        %v304 = vld [vmem:[%s7] sm:$0xff]
        %v305 = vld [vmem:[%s7 + $0x8] sm:$0xff]
        %v306 = vld [vmem:[%s7 + $0x10] sm:$0xff]
        %v307 = vld [vmem:[%s7 + $0x18] sm:$0xff]
        %v308 = vld [vmem:[%s7 + $0x20] sm:$0xff]
        %v309 = vld [vmem:[%s7 + $0x28] sm:$0xff]
        %v310 = vld [vmem:[%s7 + $0x30] sm:$0xff]
        %v311 = vld [vmem:[%s7 + $0x38] sm:$0xff]
        %v312 = vld [vmem:[%s7 + $0x40] sm:$0xff]
        %v313 = vld [vmem:[%s7 + $0x48] sm:$0xff]
        %v314 = vld [vmem:[%s7 + $0x50] sm:$0xff]
        %v315 = vld [vmem:[%s7 + $0x58] sm:$0xff]
        %v316 = vld [vmem:[%s7 + $0x60] sm:$0xff]
        %v317 = vld [vmem:[%s7 + $0x68] sm:$0xff]
        %v318 = vld [vmem:[%s7 + $0x70] sm:$0xff]
        %v319 = vld [vmem:[%s7 + $0x78] sm:$0xff]
        %v320 = vld [vmem:[%s7 + $0x80] sm:$0xff]
        %v321 = vld [vmem:[%s7 + $0x88] sm:$0xff]
        %v322 = vld [vmem:[%s7 + $0x90] sm:$0xff]
        %v323 = vld [vmem:[%s7 + $0x98] sm:$0xff]
        %v324 = vld [vmem:[%s7 + $0xa0] sm:$0xff]
        %v325 = vld [vmem:[%s7 + $0xa8] sm:$0xff]
        %v326 = vld [vmem:[%s7 + $0xb0] sm:$0xff]
        %v327 = vld [vmem:[%s7 + $0xb8] sm:$0xff]
        %v328 = vld [vmem:[%s7 + $0xc0] sm:$0xff]
        %v329 = vld [vmem:[%s7 + $0xc8] sm:$0xff]
        %v330 = vld [vmem:[%s7 + $0xd0] sm:$0xff]
        %v331 = vld [vmem:[%s7 + $0xd8] sm:$0xff]
        %v332 = vld [vmem:[%s7 + $0xe0] sm:$0xff]
        %v333 = vld [vmem:[%s7 + $0xe8] sm:$0xff]
        %v334 = vld [vmem:[%s7 + $0xf0] sm:$0xff]
        %v335 = vld [vmem:[%s7 + $0xf8] sm:$0xff]
        %v336 = vld [vmem:[%s7 + $0x100] sm:$0xff]
        %v337 = vld [vmem:[%s7 + $0x108] sm:$0xff]
        %v338 = vld [vmem:[%s7 + $0x110] sm:$0xff]
        %v339 = vld [vmem:[%s7 + $0x118] sm:$0xff]
        %v340 = vld [vmem:[%s302 + $0x5] sm:$0xff]
        %v341 = vld [vmem:[%s302 + $0xd] sm:$0xff]
        %v342 = vld [vmem:[%s302 + $0x15] sm:$0xff]
        %v343 = vld [vmem:[%s302 + $0x1d] sm:$0xff]
        %v344 = vld [vmem:[%s302 + $0x25] sm:$0xff]
        %v345 = vld [vmem:[%s302 + $0x2d] sm:$0xff]
        %v346 = vld [vmem:[%s302 + $0x35] sm:$0xff]
        %v347 = vld [vmem:[%s302 + $0x3d] sm:$0xff]
        %v348 = vld [vmem:[%s302 + $0x45] sm:$0xff]
        %v349 = vld [vmem:[%s302 + $0x4d] sm:$0xff]
        %v350 = vld [vmem:[%s302 + $0x55] sm:$0xff]
        %v351 = vld [vmem:[%s302 + $0x5d] sm:$0xff]
        %v352 = vld [vmem:[%s302 + $0x65] sm:$0xff]
        %v353 = vld [vmem:[%s302 + $0x6d] sm:$0xff]
        %v354 = vld [vmem:[%s302 + $0x75] sm:$0xff]
        %v355 = vld [vmem:[%s302 + $0x7d] sm:$0xff]
        %v356 = vld [vmem:[%s302 + $0x85] sm:$0xff]
        %v357 = vld [vmem:[%s302 + $0x8d] sm:$0xff]
        %v358 = vld [vmem:[%s302 + $0x95] sm:$0xff]
        %v359 = vld [vmem:[%s302 + $0x9d] sm:$0xff]
        %v360 = vld [vmem:[%s302 + $0xa5] sm:$0xff]
        %v361 = vld [vmem:[%s302 + $0xad] sm:$0xff]
        %v362 = vld [vmem:[%s302 + $0xb5] sm:$0xff]
        %v363 = vld [vmem:[%s302 + $0xbd] sm:$0xff]
        %v364 = vld [vmem:[%s302 + $0xc5] sm:$0xff]
        %v365 = vld [vmem:[%s302 + $0xcd] sm:$0xff]
        %v366 = vld [vmem:[%s302 + $0xd5] sm:$0xff]
        %v367 = vld [vmem:[%s302 + $0xdd] sm:$0xff]
        %v368 = vld [vmem:[%s302 + $0xe5] sm:$0xff]
        %v369 = vld [vmem:[%s302 + $0xed] sm:$0xff]
        %v370 = vld [vmem:[%s302 + $0xf5] sm:$0xff]
        %v371 = vld [vmem:[%s302 + $0xfd] sm:$0xff]
        %v372 = vld [vmem:[%s302 + $0x105] sm:$0xff]
        %v373 = vld [vmem:[%s302 + $0x10d] sm:$0xff]
        %v374 = vld [vmem:[%s302 + $0x115] sm:$0xff]
        %v375 = vld [vmem:[%s302 + $0x11d] sm:$0xff]
        %v376 = vpack.c.bf16 %v341, %v340
        %v377 = vpack.c.bf16 %v343, %v342
        %v378 = vpack.c.bf16 %v345, %v344
        %v379 = vpack.c.bf16 %v347, %v346
        %v380 = vpack.c.bf16 %v349, %v348
        %v381 = vpack.c.bf16 %v351, %v350
        %v382 = vpack.c.bf16 %v353, %v352
        %v383 = vpack.c.bf16 %v355, %v354
        %v384 = vpack.c.bf16 %v357, %v356
        %v385 = vpack.c.bf16 %v359, %v358
        %v386 = vpack.c.bf16 %v361, %v360
        %v387 = vpack.c.bf16 %v363, %v362
        %v388 = vpack.c.bf16 %v365, %v364
        %v389 = vpack.c.bf16 %v367, %v366
        %v390 = vpack.c.bf16 %v369, %v368
        %v391 = vpack.c.bf16 %v371, %v370
        %v392 = vpack.c.bf16 %v373, %v372
        %v393 = vpack.c.bf16 %v375, %v374
        %v394 = vld [vmem:[%s1] sm:$0x3]
        %v395 = vld [vmem:[%s302 + $0x6] sm:$0xff]
        %v396 = vld [vmem:[%s302 + $0xe] sm:$0xff]
        %v397 = vld [vmem:[%s302 + $0x16] sm:$0xff]
        %v398 = vld [vmem:[%s302 + $0x1e] sm:$0xff]
        %v399 = vld [vmem:[%s302 + $0x26] sm:$0xff]
        %v400 = vld [vmem:[%s302 + $0x2e] sm:$0xff]
        %v401 = vld [vmem:[%s302 + $0x36] sm:$0xff]
        %v402 = vld [vmem:[%s302 + $0x3e] sm:$0xff]
        %v403 = vld [vmem:[%s302 + $0x46] sm:$0xff]
        %v404 = vld [vmem:[%s302 + $0x4e] sm:$0xff]
        %v405 = vld [vmem:[%s302 + $0x56] sm:$0xff]
        %v406 = vld [vmem:[%s302 + $0x5e] sm:$0xff]
        %v407 = vld [vmem:[%s302 + $0x66] sm:$0xff]
        %v408 = vld [vmem:[%s302 + $0x6e] sm:$0xff]
        %v409 = vld [vmem:[%s302 + $0x76] sm:$0xff]
        %v410 = vld [vmem:[%s302 + $0x7e] sm:$0xff]
        %v411 = vld [vmem:[%s302 + $0x86] sm:$0xff]
        %v412 = vld [vmem:[%s302 + $0x8e] sm:$0xff]
        %v413 = vld [vmem:[%s302 + $0x96] sm:$0xff]
        %v414 = vld [vmem:[%s302 + $0x9e] sm:$0xff]
        %v415 = vld [vmem:[%s302 + $0xa6] sm:$0xff]
        %v416 = vld [vmem:[%s302 + $0xae] sm:$0xff]
        %v417 = vld [vmem:[%s302 + $0xb6] sm:$0xff]
        %v418 = vld [vmem:[%s302 + $0xbe] sm:$0xff]
        %v419 = vld [vmem:[%s302 + $0xc6] sm:$0xff]
        %v420 = vld [vmem:[%s302 + $0xce] sm:$0xff]
        %v421 = vld [vmem:[%s302 + $0xd6] sm:$0xff]
        %v422 = vld [vmem:[%s302 + $0xde] sm:$0xff]
        %v423 = vld [vmem:[%s302 + $0xe6] sm:$0xff]
        %v424 = vld [vmem:[%s302 + $0xee] sm:$0xff]
        %v425 = vld [vmem:[%s302 + $0xf6] sm:$0xff]
        %v426 = vld [vmem:[%s302 + $0xfe] sm:$0xff]
        %v427 = vld [vmem:[%s302 + $0x106] sm:$0xff]
        %v428 = vld [vmem:[%s302 + $0x10e] sm:$0xff]
        %v429 = vld [vmem:[%s302 + $0x116] sm:$0xff]
        %v430 = vld [vmem:[%s302 + $0x11e] sm:$0xff]
        %v431 = vpack.c.bf16 %v396, %v395
        %v432 = vpack.c.bf16 %v398, %v397
        %v433 = vpack.c.bf16 %v400, %v399
        %v434 = vpack.c.bf16 %v402, %v401
        %v435 = vpack.c.bf16 %v404, %v403
        %v436 = vpack.c.bf16 %v406, %v405
        %v437 = vpack.c.bf16 %v408, %v407
        %v438 = vpack.c.bf16 %v410, %v409
        %v439 = vpack.c.bf16 %v412, %v411
        %v440 = vpack.c.bf16 %v414, %v413
        %v441 = vpack.c.bf16 %v416, %v415
        %v442 = vpack.c.bf16 %v418, %v417
        %v443 = vpack.c.bf16 %v420, %v419
        %v444 = vpack.c.bf16 %v422, %v421
        %v445 = vpack.c.bf16 %v424, %v423
        %v446 = vpack.c.bf16 %v426, %v425
        %v447 = vpack.c.bf16 %v428, %v427
        %v448 = vpack.c.bf16 %v430, %v429
        %s449 = scalar_lea.vmem %s1, 2
        %v450 = vld [vmem:[%s449] sm:$0x3]
        %vm451 = vcmask 31744
        %v453 = vsel %vm451, %v431, 0
        %v456 = vsel %vm451, %v432, 0
        %v459 = vsel %vm451, %v433, 0
        %v462 = vsel %vm451, %v434, 0
        %v465 = vsel %vm451, %v435, 0
        %v468 = vsel %vm451, %v436, 0
        %v471 = vsel %vm451, %v437, 0
        %v474 = vsel %vm451, %v438, 0
        %v477 = vsel %vm451, %v439, 0
        %v480 = vsel %vm451, %v440, 0
        %v483 = vsel %vm451, %v441, 0
        %v486 = vsel %vm451, %v442, 0
        %v489 = vsel %vm451, %v443, 0
        %v492 = vsel %vm451, %v444, 0
        %v495 = vsel %vm451, %v445, 0
        %v498 = vsel %vm451, %v446, 0
        %v501 = vsel %vm451, %v447, 0
        %v504 = vsel %vm451, %v448, 0
        %vm506 = vcmask 1041408
        %v508 = vsel %vm506, %v450, 0
        %510 = vmatprep.subr.bf16.mxu0 0
        %511 = vmatpush1.bf16.msra.mxu0 0
        %512 = vmatprep.subr.bf16.mxu0 0
        %513 = vmatpush1.bf16.msra.mxu0 0
        %514 = vmatprep.subr.bf16.mxu0 0
        %515 = vmatpush1.bf16.msra.mxu0 0
        %516 = vmatprep.subr.bf16.mxu0 0
        %517 = vmatpush1.bf16.msra.mxu0 0
        %518 = vmatprep.subr.bf16.mxu0 0
        %519 = vmatpush1.bf16.msra.mxu0 0
        %520 = vmatprep.subr.bf16.mxu0 0
        %521 = vmatpush1.bf16.msra.mxu0 0
        %522 = vmatprep.subr.bf16.mxu0 0
        %523 = vmatpush1.bf16.msra.mxu0 0
        %524 = vmatprep.subr.bf16.mxu0 0
        %525 = vmatpush1.bf16.msra.mxu0 %v508
        %526 = vmatprep.subr.bf16.mxu0 0
        %527 = vmatpush2.bf16.msra.mxu0 0
        %528 = vmatprep.subr.bf16.mxu0 0
        %529 = vmatpush2.bf16.msra.mxu0 0
        %530 = vmatprep.subr.bf16.mxu0 0
        %531 = vmatpush2.bf16.msra.mxu0 0
        %532 = vmatprep.subr.bf16.mxu0 0
        %533 = vmatpush2.bf16.msra.mxu0 0
        %534 = vmatprep.subr.bf16.mxu0 0
        %535 = vmatpush2.bf16.msra.mxu0 0
        %536 = vmatprep.subr.bf16.mxu0 0
        %537 = vmatpush2.bf16.msra.mxu0 0
        %538 = vmatprep.subr.bf16.mxu0 0
        %539 = vmatpush2.bf16.msra.mxu0 0
        %540 = vmatprep.subr.bf16.mxu0 0
        %541 = vmatpush2.bf16.msra.mxu0 0
        %542 = vmatprep.mubr.bf16.mxu0 0
        %543 = vmatmul.mubr.bf16.gmra.mxu0 %v453
        %v544 = vpop.f32.mrf.mxu0
        %v545 = vadd.f32 0.0, %v544
        %v546 = vpop.f32.mrf.mxu0
        %v547 = vpop.f32.mrf.mxu0
        %v548 = vadd.f32 0.0, %v547
        %v549 = vpop.f32.mrf.mxu0
        %550 = vmatprep.mubr.bf16.mxu0 0
        %551 = vmatmul.mubr.bf16.gmra.mxu0 %v456
        %v552 = vpop.f32.mrf.mxu0
        %v553 = vadd.f32 0.0, %v552
        %v554 = vpop.f32.mrf.mxu0
        %v555 = vpop.f32.mrf.mxu0
        %v556 = vadd.f32 0.0, %v555
        %v557 = vpop.f32.mrf.mxu0
        %558 = vmatprep.mubr.bf16.mxu0 0
        %559 = vmatmul.mubr.bf16.gmra.mxu0 %v459
        %v560 = vpop.f32.mrf.mxu0
        %v561 = vadd.f32 0.0, %v560
        %v562 = vpop.f32.mrf.mxu0
        %v563 = vpop.f32.mrf.mxu0
        %v564 = vadd.f32 0.0, %v563
        %v565 = vpop.f32.mrf.mxu0
        %566 = vmatprep.mubr.bf16.mxu0 0
        %567 = vmatmul.mubr.bf16.gmra.mxu0 %v462
        %v568 = vpop.f32.mrf.mxu0
        %v569 = vadd.f32 0.0, %v568
        %v570 = vpop.f32.mrf.mxu0
        %v571 = vpop.f32.mrf.mxu0
        %v572 = vadd.f32 0.0, %v571
        %v573 = vpop.f32.mrf.mxu0
        %574 = vmatprep.mubr.bf16.mxu0 0
        %575 = vmatmul.mubr.bf16.gmra.mxu0 %v465
        %v576 = vpop.f32.mrf.mxu0
        %v577 = vadd.f32 0.0, %v576
        %v578 = vpop.f32.mrf.mxu0
        %v579 = vpop.f32.mrf.mxu0
        %v580 = vadd.f32 0.0, %v579
        %v581 = vpop.f32.mrf.mxu0
        %582 = vmatprep.mubr.bf16.mxu0 0
        %583 = vmatmul.mubr.bf16.gmra.mxu0 %v468
        %v584 = vpop.f32.mrf.mxu0
        %v585 = vadd.f32 0.0, %v584
        %v586 = vpop.f32.mrf.mxu0
        %v587 = vpop.f32.mrf.mxu0
        %v588 = vadd.f32 0.0, %v587
        %v589 = vpop.f32.mrf.mxu0
        %590 = vmatprep.mubr.bf16.mxu0 0
        %591 = vmatmul.mubr.bf16.gmra.mxu0 %v471
        %v592 = vpop.f32.mrf.mxu0
        %v593 = vadd.f32 0.0, %v592
        %v594 = vpop.f32.mrf.mxu0
        %v595 = vpop.f32.mrf.mxu0
        %v596 = vadd.f32 0.0, %v595
        %v597 = vpop.f32.mrf.mxu0
        %598 = vmatprep.mubr.bf16.mxu0 0
        %599 = vmatmul.mubr.bf16.gmra.mxu0 %v474
        %v600 = vpop.f32.mrf.mxu0
        %v601 = vadd.f32 0.0, %v600
        %v602 = vpop.f32.mrf.mxu0
        %v603 = vpop.f32.mrf.mxu0
        %v604 = vadd.f32 0.0, %v603
        %v605 = vpop.f32.mrf.mxu0
        %606 = vmatprep.mubr.bf16.mxu0 0
        %607 = vmatmul.mubr.bf16.gmra.mxu0 %v477
        %v608 = vpop.f32.mrf.mxu0
        %v609 = vadd.f32 0.0, %v608
        %v610 = vpop.f32.mrf.mxu0
        %v611 = vpop.f32.mrf.mxu0
        %v612 = vadd.f32 0.0, %v611
        %v613 = vpop.f32.mrf.mxu0
        %614 = vmatprep.mubr.bf16.mxu0 0
        %615 = vmatmul.mubr.bf16.gmra.mxu0 %v480
        %v616 = vpop.f32.mrf.mxu0
        %v617 = vadd.f32 0.0, %v616
        %v618 = vpop.f32.mrf.mxu0
        %v619 = vpop.f32.mrf.mxu0
        %v620 = vadd.f32 0.0, %v619
        %v621 = vpop.f32.mrf.mxu0
        %622 = vmatprep.mubr.bf16.mxu0 0
        %623 = vmatmul.mubr.bf16.gmra.mxu0 %v483
        %v624 = vpop.f32.mrf.mxu0
        %v625 = vadd.f32 0.0, %v624
        %v626 = vpop.f32.mrf.mxu0
        %v627 = vpop.f32.mrf.mxu0
        %v628 = vadd.f32 0.0, %v627
        %v629 = vpop.f32.mrf.mxu0
        %630 = vmatprep.mubr.bf16.mxu0 0
        %631 = vmatmul.mubr.bf16.gmra.mxu0 %v486
        %v632 = vpop.f32.mrf.mxu0
        %v633 = vadd.f32 0.0, %v632
        %v634 = vpop.f32.mrf.mxu0
        %v635 = vpop.f32.mrf.mxu0
        %v636 = vadd.f32 0.0, %v635
        %v637 = vpop.f32.mrf.mxu0
        %638 = vmatprep.mubr.bf16.mxu0 0
        %639 = vmatmul.mubr.bf16.gmra.mxu0 %v489
        %v640 = vpop.f32.mrf.mxu0
        %v641 = vadd.f32 0.0, %v640
        %v642 = vpop.f32.mrf.mxu0
        %v643 = vpop.f32.mrf.mxu0
        %v644 = vadd.f32 0.0, %v643
        %v645 = vpop.f32.mrf.mxu0
        %646 = vmatprep.mubr.bf16.mxu0 0
        %647 = vmatmul.mubr.bf16.gmra.mxu0 %v492
        %v648 = vpop.f32.mrf.mxu0
        %v649 = vadd.f32 0.0, %v648
        %v650 = vpop.f32.mrf.mxu0
        %v651 = vpop.f32.mrf.mxu0
        %v652 = vadd.f32 0.0, %v651
        %v653 = vpop.f32.mrf.mxu0
        %654 = vmatprep.mubr.bf16.mxu0 0
        %655 = vmatmul.mubr.bf16.gmra.mxu0 %v495
        %v656 = vpop.f32.mrf.mxu0
        %v657 = vadd.f32 0.0, %v656
        %v658 = vpop.f32.mrf.mxu0
        %v659 = vpop.f32.mrf.mxu0
        %v660 = vadd.f32 0.0, %v659
        %v661 = vpop.f32.mrf.mxu0
        %662 = vmatprep.mubr.bf16.mxu0 0
        %663 = vmatmul.mubr.bf16.gmra.mxu0 %v498
        %v664 = vpop.f32.mrf.mxu0
        %v665 = vadd.f32 0.0, %v664
        %v666 = vpop.f32.mrf.mxu0
        %v667 = vpop.f32.mrf.mxu0
        %v668 = vadd.f32 0.0, %v667
        %v669 = vpop.f32.mrf.mxu0
        %670 = vmatprep.mubr.bf16.mxu0 0
        %671 = vmatmul.mubr.bf16.gmra.mxu0 %v501
        %v672 = vpop.f32.mrf.mxu0
        %v673 = vadd.f32 0.0, %v672
        %v674 = vpop.f32.mrf.mxu0
        %v675 = vpop.f32.mrf.mxu0
        %v676 = vadd.f32 0.0, %v675
        %v677 = vpop.f32.mrf.mxu0
        %678 = vmatprep.mubr.bf16.mxu0 0
        %679 = vmatmul.mubr.bf16.gmra.mxu0 %v504
        %v680 = vpop.f32.mrf.mxu0
        %v681 = vadd.f32 0.0, %v680
        %v682 = vpop.f32.mrf.mxu0
        %v683 = vpop.f32.mrf.mxu0
        %v684 = vadd.f32 0.0, %v683
        %v685 = vpop.f32.mrf.mxu0
        %686 = vdwg.mxu0
        %v688 = vsel %vm451, %v376, 0
        %v691 = vsel %vm451, %v377, 0
        %v694 = vsel %vm451, %v378, 0
        %v697 = vsel %vm451, %v379, 0
        %v700 = vsel %vm451, %v380, 0
        %v703 = vsel %vm451, %v381, 0
        %v706 = vsel %vm451, %v382, 0
        %v709 = vsel %vm451, %v383, 0
        %v712 = vsel %vm451, %v384, 0
        %v715 = vsel %vm451, %v385, 0
        %v718 = vsel %vm451, %v386, 0
        %v721 = vsel %vm451, %v387, 0
        %v724 = vsel %vm451, %v388, 0
        %v727 = vsel %vm451, %v389, 0
        %v730 = vsel %vm451, %v390, 0
        %v733 = vsel %vm451, %v391, 0
        %v736 = vsel %vm451, %v392, 0
        %v739 = vsel %vm451, %v393, 0
        %v742 = vsel %vm506, %v394, 0
        %744 = vmatprep.subr.bf16.mxu0 0
        %745 = vmatpush1.bf16.msra.mxu0 0
        %746 = vmatprep.subr.bf16.mxu0 0
        %747 = vmatpush1.bf16.msra.mxu0 0
        %748 = vmatprep.subr.bf16.mxu0 0
        %749 = vmatpush1.bf16.msra.mxu0 0
        %750 = vmatprep.subr.bf16.mxu0 0
        %751 = vmatpush1.bf16.msra.mxu0 0
        %752 = vmatprep.subr.bf16.mxu0 0
        %753 = vmatpush1.bf16.msra.mxu0 0
        %754 = vmatprep.subr.bf16.mxu0 0
        %755 = vmatpush1.bf16.msra.mxu0 0
        %756 = vmatprep.subr.bf16.mxu0 0
        %757 = vmatpush1.bf16.msra.mxu0 0
        %758 = vmatprep.subr.bf16.mxu0 0
        %759 = vmatpush1.bf16.msra.mxu0 %v742
        %760 = vmatprep.subr.bf16.mxu0 0
        %761 = vmatpush2.bf16.msra.mxu0 0
        %762 = vmatprep.subr.bf16.mxu0 0
        %763 = vmatpush2.bf16.msra.mxu0 0
        %764 = vmatprep.subr.bf16.mxu0 0
        %765 = vmatpush2.bf16.msra.mxu0 0
        %766 = vmatprep.subr.bf16.mxu0 0
        %767 = vmatpush2.bf16.msra.mxu0 0
        %768 = vmatprep.subr.bf16.mxu0 0
        %769 = vmatpush2.bf16.msra.mxu0 0
        %770 = vmatprep.subr.bf16.mxu0 0
        %771 = vmatpush2.bf16.msra.mxu0 0
        %772 = vmatprep.subr.bf16.mxu0 0
        %773 = vmatpush2.bf16.msra.mxu0 0
        %774 = vmatprep.subr.bf16.mxu0 0
        %775 = vmatpush2.bf16.msra.mxu0 0
        %776 = vmatprep.mubr.bf16.mxu0 0
        %777 = vmatmul.mubr.bf16.gmra.mxu0 %v688
        %v778 = vpop.f32.mrf.mxu0
        %v779 = vadd.f32 %v545, %v778
        %v780 = vpop.f32.mrf.mxu0
        %v781 = vpop.f32.mrf.mxu0
        %v782 = vadd.f32 %v548, %v781
        %v783 = vpop.f32.mrf.mxu0
        %784 = vmatprep.mubr.bf16.mxu0 0
        %785 = vmatmul.mubr.bf16.gmra.mxu0 %v691
        %v786 = vpop.f32.mrf.mxu0
        %v787 = vadd.f32 %v553, %v786
        %v788 = vpop.f32.mrf.mxu0
        %v789 = vpop.f32.mrf.mxu0
        %v790 = vadd.f32 %v556, %v789
        %v791 = vpop.f32.mrf.mxu0
        %792 = vmatprep.mubr.bf16.mxu0 0
        %793 = vmatmul.mubr.bf16.gmra.mxu0 %v694
        %v794 = vpop.f32.mrf.mxu0
        %v795 = vadd.f32 %v561, %v794
        %v796 = vpop.f32.mrf.mxu0
        %v797 = vpop.f32.mrf.mxu0
        %v798 = vadd.f32 %v564, %v797
        %v799 = vpop.f32.mrf.mxu0
        %800 = vmatprep.mubr.bf16.mxu0 0
        %801 = vmatmul.mubr.bf16.gmra.mxu0 %v697
        %v802 = vpop.f32.mrf.mxu0
        %v803 = vadd.f32 %v569, %v802
        %v804 = vpop.f32.mrf.mxu0
        %v805 = vpop.f32.mrf.mxu0
        %v806 = vadd.f32 %v572, %v805
        %v807 = vpop.f32.mrf.mxu0
        %808 = vmatprep.mubr.bf16.mxu0 0
        %809 = vmatmul.mubr.bf16.gmra.mxu0 %v700
        %v810 = vpop.f32.mrf.mxu0
        %v811 = vadd.f32 %v577, %v810
        %v812 = vpop.f32.mrf.mxu0
        %v813 = vpop.f32.mrf.mxu0
        %v814 = vadd.f32 %v580, %v813
        %v815 = vpop.f32.mrf.mxu0
        %816 = vmatprep.mubr.bf16.mxu0 0
        %817 = vmatmul.mubr.bf16.gmra.mxu0 %v703
        %v818 = vpop.f32.mrf.mxu0
        %v819 = vadd.f32 %v585, %v818
        %v820 = vpop.f32.mrf.mxu0
        %v821 = vpop.f32.mrf.mxu0
        %v822 = vadd.f32 %v588, %v821
        %v823 = vpop.f32.mrf.mxu0
        %824 = vmatprep.mubr.bf16.mxu0 0
        %825 = vmatmul.mubr.bf16.gmra.mxu0 %v706
        %v826 = vpop.f32.mrf.mxu0
        %v827 = vadd.f32 %v593, %v826
        %v828 = vpop.f32.mrf.mxu0
        %v829 = vpop.f32.mrf.mxu0
        %v830 = vadd.f32 %v596, %v829
        %v831 = vpop.f32.mrf.mxu0
        %832 = vmatprep.mubr.bf16.mxu0 0
        %833 = vmatmul.mubr.bf16.gmra.mxu0 %v709
        %v834 = vpop.f32.mrf.mxu0
        %v835 = vadd.f32 %v601, %v834
        %v836 = vpop.f32.mrf.mxu0
        %v837 = vpop.f32.mrf.mxu0
        %v838 = vadd.f32 %v604, %v837
        %v839 = vpop.f32.mrf.mxu0
        %840 = vmatprep.mubr.bf16.mxu0 0
        %841 = vmatmul.mubr.bf16.gmra.mxu0 %v712
        %v842 = vpop.f32.mrf.mxu0
        %v843 = vadd.f32 %v609, %v842
        %v844 = vpop.f32.mrf.mxu0
        %v845 = vpop.f32.mrf.mxu0
        %v846 = vadd.f32 %v612, %v845
        %v847 = vpop.f32.mrf.mxu0
        %848 = vmatprep.mubr.bf16.mxu0 0
        %849 = vmatmul.mubr.bf16.gmra.mxu0 %v715
        %v850 = vpop.f32.mrf.mxu0
        %v851 = vadd.f32 %v617, %v850
        %v852 = vpop.f32.mrf.mxu0
        %v853 = vpop.f32.mrf.mxu0
        %v854 = vadd.f32 %v620, %v853
        %v855 = vpop.f32.mrf.mxu0
        %856 = vmatprep.mubr.bf16.mxu0 0
        %857 = vmatmul.mubr.bf16.gmra.mxu0 %v718
        %v858 = vpop.f32.mrf.mxu0
        %v859 = vadd.f32 %v625, %v858
        %v860 = vpop.f32.mrf.mxu0
        %v861 = vpop.f32.mrf.mxu0
        %v862 = vadd.f32 %v628, %v861
        %v863 = vpop.f32.mrf.mxu0
        %864 = vmatprep.mubr.bf16.mxu0 0
        %865 = vmatmul.mubr.bf16.gmra.mxu0 %v721
        %v866 = vpop.f32.mrf.mxu0
        %v867 = vadd.f32 %v633, %v866
        %v868 = vpop.f32.mrf.mxu0
        %v869 = vpop.f32.mrf.mxu0
        %v870 = vadd.f32 %v636, %v869
        %v871 = vpop.f32.mrf.mxu0
        %872 = vmatprep.mubr.bf16.mxu0 0
        %873 = vmatmul.mubr.bf16.gmra.mxu0 %v724
        %v874 = vpop.f32.mrf.mxu0
        %v875 = vadd.f32 %v641, %v874
        %v876 = vpop.f32.mrf.mxu0
        %v877 = vpop.f32.mrf.mxu0
        %v878 = vadd.f32 %v644, %v877
        %v879 = vpop.f32.mrf.mxu0
        %880 = vmatprep.mubr.bf16.mxu0 0
        %881 = vmatmul.mubr.bf16.gmra.mxu0 %v727
        %v882 = vpop.f32.mrf.mxu0
        %v883 = vadd.f32 %v649, %v882
        %v884 = vpop.f32.mrf.mxu0
        %v885 = vpop.f32.mrf.mxu0
        %v886 = vadd.f32 %v652, %v885
        %v887 = vpop.f32.mrf.mxu0
        %888 = vmatprep.mubr.bf16.mxu0 0
        %889 = vmatmul.mubr.bf16.gmra.mxu0 %v730
        %v890 = vpop.f32.mrf.mxu0
        %v891 = vadd.f32 %v657, %v890
        %v892 = vpop.f32.mrf.mxu0
        %v893 = vpop.f32.mrf.mxu0
        %v894 = vadd.f32 %v660, %v893
        %v895 = vpop.f32.mrf.mxu0
        %896 = vmatprep.mubr.bf16.mxu0 0
        %897 = vmatmul.mubr.bf16.gmra.mxu0 %v733
        %v898 = vpop.f32.mrf.mxu0
        %v899 = vadd.f32 %v665, %v898
        %v900 = vpop.f32.mrf.mxu0
        %v901 = vpop.f32.mrf.mxu0
        %v902 = vadd.f32 %v668, %v901
        %v903 = vpop.f32.mrf.mxu0
        %904 = vmatprep.mubr.bf16.mxu0 0
        %905 = vmatmul.mubr.bf16.gmra.mxu0 %v736
        %v906 = vpop.f32.mrf.mxu0
        %v907 = vadd.f32 %v673, %v906
        %v908 = vpop.f32.mrf.mxu0
        %v909 = vpop.f32.mrf.mxu0
        %v910 = vadd.f32 %v676, %v909
        %v911 = vpop.f32.mrf.mxu0
        %912 = vmatprep.mubr.bf16.mxu0 0
        %913 = vmatmul.mubr.bf16.gmra.mxu0 %v739
        %v914 = vpop.f32.mrf.mxu0
        %v915 = vadd.f32 %v681, %v914
        %v916 = vpop.f32.mrf.mxu0
        %v917 = vpop.f32.mrf.mxu0
        %v918 = vadd.f32 %v684, %v917
        %v919 = vpop.f32.mrf.mxu0
        %920 = vdwg.mxu0
        %v921 = vld [vmem:[%s302 + $0x7] sm:$0xff]
        %v922 = vld [vmem:[%s302 + $0xf] sm:$0xff]
        %v923 = vld [vmem:[%s302 + $0x17] sm:$0xff]
        %v924 = vld [vmem:[%s302 + $0x1f] sm:$0xff]
        %v925 = vld [vmem:[%s302 + $0x27] sm:$0xff]
        %v926 = vld [vmem:[%s302 + $0x2f] sm:$0xff]
        %v927 = vld [vmem:[%s302 + $0x37] sm:$0xff]
        %v928 = vld [vmem:[%s302 + $0x3f] sm:$0xff]
        %v929 = vld [vmem:[%s302 + $0x47] sm:$0xff]
        %v930 = vld [vmem:[%s302 + $0x4f] sm:$0xff]
        %v931 = vld [vmem:[%s302 + $0x57] sm:$0xff]
        %v932 = vld [vmem:[%s302 + $0x5f] sm:$0xff]
        %v933 = vld [vmem:[%s302 + $0x67] sm:$0xff]
        %v934 = vld [vmem:[%s302 + $0x6f] sm:$0xff]
        %v935 = vld [vmem:[%s302 + $0x77] sm:$0xff]
        %v936 = vld [vmem:[%s302 + $0x7f] sm:$0xff]
        %v937 = vld [vmem:[%s302 + $0x87] sm:$0xff]
        %v938 = vld [vmem:[%s302 + $0x8f] sm:$0xff]
        %v939 = vld [vmem:[%s302 + $0x97] sm:$0xff]
        %v940 = vld [vmem:[%s302 + $0x9f] sm:$0xff]
        %v941 = vld [vmem:[%s302 + $0xa7] sm:$0xff]
        %v942 = vld [vmem:[%s302 + $0xaf] sm:$0xff]
        %v943 = vld [vmem:[%s302 + $0xb7] sm:$0xff]
        %v944 = vld [vmem:[%s302 + $0xbf] sm:$0xff]
        %v945 = vld [vmem:[%s302 + $0xc7] sm:$0xff]
        %v946 = vld [vmem:[%s302 + $0xcf] sm:$0xff]
        %v947 = vld [vmem:[%s302 + $0xd7] sm:$0xff]
        %v948 = vld [vmem:[%s302 + $0xdf] sm:$0xff]
        %v949 = vld [vmem:[%s302 + $0xe7] sm:$0xff]
        %v950 = vld [vmem:[%s302 + $0xef] sm:$0xff]
        %v951 = vld [vmem:[%s302 + $0xf7] sm:$0xff]
        %v952 = vld [vmem:[%s302 + $0xff] sm:$0xff]
        %v953 = vld [vmem:[%s302 + $0x107] sm:$0xff]
        %v954 = vld [vmem:[%s302 + $0x10f] sm:$0xff]
        %v955 = vld [vmem:[%s302 + $0x117] sm:$0xff]
        %v956 = vld [vmem:[%s302 + $0x11f] sm:$0xff]
        %v957 = vpack.c.bf16 %v922, %v921
        %v958 = vpack.c.bf16 %v924, %v923
        %v959 = vpack.c.bf16 %v926, %v925
        %v960 = vpack.c.bf16 %v928, %v927
        %v961 = vpack.c.bf16 %v930, %v929
        %v962 = vpack.c.bf16 %v932, %v931
        %v963 = vpack.c.bf16 %v934, %v933
        %v964 = vpack.c.bf16 %v936, %v935
        %v965 = vpack.c.bf16 %v938, %v937
        %v966 = vpack.c.bf16 %v940, %v939
        %v967 = vpack.c.bf16 %v942, %v941
        %v968 = vpack.c.bf16 %v944, %v943
        %v969 = vpack.c.bf16 %v946, %v945
        %v970 = vpack.c.bf16 %v948, %v947
        %v971 = vpack.c.bf16 %v950, %v949
        %v972 = vpack.c.bf16 %v952, %v951
        %v973 = vpack.c.bf16 %v954, %v953
        %v974 = vpack.c.bf16 %v956, %v955
        %s975 = scalar_lea.vmem %s1, 4
        %v976 = vld [vmem:[%s975] sm:$0x3]
        %v978 = vsel %vm451, %v957, 0
        %v981 = vsel %vm451, %v958, 0
        %v984 = vsel %vm451, %v959, 0
        %v987 = vsel %vm451, %v960, 0
        %v990 = vsel %vm451, %v961, 0
        %v993 = vsel %vm451, %v962, 0
        %v996 = vsel %vm451, %v963, 0
        %v999 = vsel %vm451, %v964, 0
        %v1002 = vsel %vm451, %v965, 0
        %v1005 = vsel %vm451, %v966, 0
        %v1008 = vsel %vm451, %v967, 0
        %v1011 = vsel %vm451, %v968, 0
        %v1014 = vsel %vm451, %v969, 0
        %v1017 = vsel %vm451, %v970, 0
        %v1020 = vsel %vm451, %v971, 0
        %v1023 = vsel %vm451, %v972, 0
        %v1026 = vsel %vm451, %v973, 0
        %v1029 = vsel %vm451, %v974, 0
        %v1032 = vsel %vm506, %v976, 0
        %1034 = vmatprep.subr.bf16.mxu0 0
        %1035 = vmatpush1.bf16.msra.mxu0 0
        %1036 = vmatprep.subr.bf16.mxu0 0
        %1037 = vmatpush1.bf16.msra.mxu0 0
        %1038 = vmatprep.subr.bf16.mxu0 0
        %1039 = vmatpush1.bf16.msra.mxu0 0
        %1040 = vmatprep.subr.bf16.mxu0 0
        %1041 = vmatpush1.bf16.msra.mxu0 0
        %1042 = vmatprep.subr.bf16.mxu0 0
        %1043 = vmatpush1.bf16.msra.mxu0 0
        %1044 = vmatprep.subr.bf16.mxu0 0
        %1045 = vmatpush1.bf16.msra.mxu0 0
        %1046 = vmatprep.subr.bf16.mxu0 0
        %1047 = vmatpush1.bf16.msra.mxu0 0
        %1048 = vmatprep.subr.bf16.mxu0 0
        %1049 = vmatpush1.bf16.msra.mxu0 %v1032
        %1050 = vmatprep.subr.bf16.mxu0 0
        %1051 = vmatpush2.bf16.msra.mxu0 0
        %1052 = vmatprep.subr.bf16.mxu0 0
        %1053 = vmatpush2.bf16.msra.mxu0 0
        %1054 = vmatprep.subr.bf16.mxu0 0
        %1055 = vmatpush2.bf16.msra.mxu0 0
        %1056 = vmatprep.subr.bf16.mxu0 0
        %1057 = vmatpush2.bf16.msra.mxu0 0
        %1058 = vmatprep.subr.bf16.mxu0 0
        %1059 = vmatpush2.bf16.msra.mxu0 0
        %1060 = vmatprep.subr.bf16.mxu0 0
        %1061 = vmatpush2.bf16.msra.mxu0 0
        %1062 = vmatprep.subr.bf16.mxu0 0
        %1063 = vmatpush2.bf16.msra.mxu0 0
        %1064 = vmatprep.subr.bf16.mxu0 0
        %1065 = vmatpush2.bf16.msra.mxu0 0
        %1066 = vmatprep.mubr.bf16.mxu0 0
        %1067 = vmatmul.mubr.bf16.gmra.mxu0 %v978
        %v1068 = vpop.f32.mrf.mxu0
        %v1069 = vadd.f32 0.0, %v1068
        %v1070 = vpop.f32.mrf.mxu0
        %v1071 = vpop.f32.mrf.mxu0
        %v1072 = vadd.f32 0.0, %v1071
        %v1073 = vpop.f32.mrf.mxu0
        %1074 = vmatprep.mubr.bf16.mxu0 0
        %1075 = vmatmul.mubr.bf16.gmra.mxu0 %v981
        %v1076 = vpop.f32.mrf.mxu0
        %v1077 = vadd.f32 0.0, %v1076
        %v1078 = vpop.f32.mrf.mxu0
        %v1079 = vpop.f32.mrf.mxu0
        %v1080 = vadd.f32 0.0, %v1079
        %v1081 = vpop.f32.mrf.mxu0
        %1082 = vmatprep.mubr.bf16.mxu0 0
        %1083 = vmatmul.mubr.bf16.gmra.mxu0 %v984
        %v1084 = vpop.f32.mrf.mxu0
        %v1085 = vadd.f32 0.0, %v1084
        %v1086 = vpop.f32.mrf.mxu0
        %v1087 = vpop.f32.mrf.mxu0
        %v1088 = vadd.f32 0.0, %v1087
        %v1089 = vpop.f32.mrf.mxu0
        %1090 = vmatprep.mubr.bf16.mxu0 0
        %1091 = vmatmul.mubr.bf16.gmra.mxu0 %v987
        %v1092 = vpop.f32.mrf.mxu0
        %v1093 = vadd.f32 0.0, %v1092
        %v1094 = vpop.f32.mrf.mxu0
        %v1095 = vpop.f32.mrf.mxu0
        %v1096 = vadd.f32 0.0, %v1095
        %v1097 = vpop.f32.mrf.mxu0
        %1098 = vmatprep.mubr.bf16.mxu0 0
        %1099 = vmatmul.mubr.bf16.gmra.mxu0 %v990
        %v1100 = vpop.f32.mrf.mxu0
        %v1101 = vadd.f32 0.0, %v1100
        %v1102 = vpop.f32.mrf.mxu0
        %v1103 = vpop.f32.mrf.mxu0
        %v1104 = vadd.f32 0.0, %v1103
        %v1105 = vpop.f32.mrf.mxu0
        %1106 = vmatprep.mubr.bf16.mxu0 0
        %1107 = vmatmul.mubr.bf16.gmra.mxu0 %v993
        %v1108 = vpop.f32.mrf.mxu0
        %v1109 = vadd.f32 0.0, %v1108
        %v1110 = vpop.f32.mrf.mxu0
        %v1111 = vpop.f32.mrf.mxu0
        %v1112 = vadd.f32 0.0, %v1111
        %v1113 = vpop.f32.mrf.mxu0
        %1114 = vmatprep.mubr.bf16.mxu0 0
        %1115 = vmatmul.mubr.bf16.gmra.mxu0 %v996
        %v1116 = vpop.f32.mrf.mxu0
        %v1117 = vadd.f32 0.0, %v1116
        %v1118 = vpop.f32.mrf.mxu0
        %v1119 = vpop.f32.mrf.mxu0
        %v1120 = vadd.f32 0.0, %v1119
        %v1121 = vpop.f32.mrf.mxu0
        %1122 = vmatprep.mubr.bf16.mxu0 0
        %1123 = vmatmul.mubr.bf16.gmra.mxu0 %v999
        %v1124 = vpop.f32.mrf.mxu0
        %v1125 = vadd.f32 0.0, %v1124
        %v1126 = vpop.f32.mrf.mxu0
        %v1127 = vpop.f32.mrf.mxu0
        %v1128 = vadd.f32 0.0, %v1127
        %v1129 = vpop.f32.mrf.mxu0
        %1130 = vmatprep.mubr.bf16.mxu0 0
        %1131 = vmatmul.mubr.bf16.gmra.mxu0 %v1002
        %v1132 = vpop.f32.mrf.mxu0
        %v1133 = vadd.f32 0.0, %v1132
        %v1134 = vpop.f32.mrf.mxu0
        %v1135 = vpop.f32.mrf.mxu0
        %v1136 = vadd.f32 0.0, %v1135
        %v1137 = vpop.f32.mrf.mxu0
        %1138 = vmatprep.mubr.bf16.mxu0 0
        %1139 = vmatmul.mubr.bf16.gmra.mxu0 %v1005
        %v1140 = vpop.f32.mrf.mxu0
        %v1141 = vadd.f32 0.0, %v1140
        %v1142 = vpop.f32.mrf.mxu0
        %v1143 = vpop.f32.mrf.mxu0
        %v1144 = vadd.f32 0.0, %v1143
        %v1145 = vpop.f32.mrf.mxu0
        %1146 = vmatprep.mubr.bf16.mxu0 0
        %1147 = vmatmul.mubr.bf16.gmra.mxu0 %v1008
        %v1148 = vpop.f32.mrf.mxu0
        %v1149 = vadd.f32 0.0, %v1148
        %v1150 = vpop.f32.mrf.mxu0
        %v1151 = vpop.f32.mrf.mxu0
        %v1152 = vadd.f32 0.0, %v1151
        %v1153 = vpop.f32.mrf.mxu0
        %1154 = vmatprep.mubr.bf16.mxu0 0
        %1155 = vmatmul.mubr.bf16.gmra.mxu0 %v1011
        %v1156 = vpop.f32.mrf.mxu0
        %v1157 = vadd.f32 0.0, %v1156
        %v1158 = vpop.f32.mrf.mxu0
        %v1159 = vpop.f32.mrf.mxu0
        %v1160 = vadd.f32 0.0, %v1159
        %v1161 = vpop.f32.mrf.mxu0
        %1162 = vmatprep.mubr.bf16.mxu0 0
        %1163 = vmatmul.mubr.bf16.gmra.mxu0 %v1014
        %v1164 = vpop.f32.mrf.mxu0
        %v1165 = vadd.f32 0.0, %v1164
        %v1166 = vpop.f32.mrf.mxu0
        %v1167 = vpop.f32.mrf.mxu0
        %v1168 = vadd.f32 0.0, %v1167
        %v1169 = vpop.f32.mrf.mxu0
        %1170 = vmatprep.mubr.bf16.mxu0 0
        %1171 = vmatmul.mubr.bf16.gmra.mxu0 %v1017
        %v1172 = vpop.f32.mrf.mxu0
        %v1173 = vadd.f32 0.0, %v1172
        %v1174 = vpop.f32.mrf.mxu0
        %v1175 = vpop.f32.mrf.mxu0
        %v1176 = vadd.f32 0.0, %v1175
        %v1177 = vpop.f32.mrf.mxu0
        %1178 = vmatprep.mubr.bf16.mxu0 0
        %1179 = vmatmul.mubr.bf16.gmra.mxu0 %v1020
        %v1180 = vpop.f32.mrf.mxu0
        %v1181 = vadd.f32 0.0, %v1180
        %v1182 = vpop.f32.mrf.mxu0
        %v1183 = vpop.f32.mrf.mxu0
        %v1184 = vadd.f32 0.0, %v1183
        %v1185 = vpop.f32.mrf.mxu0
        %1186 = vmatprep.mubr.bf16.mxu0 0
        %1187 = vmatmul.mubr.bf16.gmra.mxu0 %v1023
        %v1188 = vpop.f32.mrf.mxu0
        %v1189 = vadd.f32 0.0, %v1188
        %v1190 = vpop.f32.mrf.mxu0
        %v1191 = vpop.f32.mrf.mxu0
        %v1192 = vadd.f32 0.0, %v1191
        %v1193 = vpop.f32.mrf.mxu0
        %1194 = vmatprep.mubr.bf16.mxu0 0
        %1195 = vmatmul.mubr.bf16.gmra.mxu0 %v1026
        %v1196 = vpop.f32.mrf.mxu0
        %v1197 = vadd.f32 0.0, %v1196
        %v1198 = vpop.f32.mrf.mxu0
        %v1199 = vpop.f32.mrf.mxu0
        %v1200 = vadd.f32 0.0, %v1199
        %v1201 = vpop.f32.mrf.mxu0
        %1202 = vmatprep.mubr.bf16.mxu0 0
        %1203 = vmatmul.mubr.bf16.gmra.mxu0 %v1029
        %v1204 = vpop.f32.mrf.mxu0
        %v1205 = vadd.f32 0.0, %v1204
        %v1206 = vpop.f32.mrf.mxu0
        %v1207 = vpop.f32.mrf.mxu0
        %v1208 = vadd.f32 0.0, %v1207
        %v1209 = vpop.f32.mrf.mxu0
        %1210 = vdwg.mxu0
        %v1211 = vadd.f32 %v779, %v1069
        %v1212 = vadd.f32 %v782, %v1072
        %v1213 = vadd.f32 %v787, %v1077
        %v1214 = vadd.f32 %v790, %v1080
        %v1215 = vadd.f32 %v795, %v1085
        %v1216 = vadd.f32 %v798, %v1088
        %v1217 = vadd.f32 %v803, %v1093
        %v1218 = vadd.f32 %v806, %v1096
        %v1219 = vadd.f32 %v811, %v1101
        %v1220 = vadd.f32 %v814, %v1104
        %v1221 = vadd.f32 %v819, %v1109
        %v1222 = vadd.f32 %v822, %v1112
        %v1223 = vadd.f32 %v827, %v1117
        %v1224 = vadd.f32 %v830, %v1120
        %v1225 = vadd.f32 %v835, %v1125
        %v1226 = vadd.f32 %v838, %v1128
        %v1227 = vadd.f32 %v843, %v1133
        %v1228 = vadd.f32 %v846, %v1136
        %v1229 = vadd.f32 %v851, %v1141
        %v1230 = vadd.f32 %v854, %v1144
        %v1231 = vadd.f32 %v859, %v1149
        %v1232 = vadd.f32 %v862, %v1152
        %v1233 = vadd.f32 %v867, %v1157
        %v1234 = vadd.f32 %v870, %v1160
        %v1235 = vadd.f32 %v875, %v1165
        %v1236 = vadd.f32 %v878, %v1168
        %v1237 = vadd.f32 %v883, %v1173
        %v1238 = vadd.f32 %v886, %v1176
        %v1239 = vadd.f32 %v891, %v1181
        %v1240 = vadd.f32 %v894, %v1184
        %v1241 = vadd.f32 %v899, %v1189
        %v1242 = vadd.f32 %v902, %v1192
        %v1243 = vadd.f32 %v907, %v1197
        %v1244 = vadd.f32 %v910, %v1200
        %v1245 = vadd.f32 %v915, %v1205
        %v1246 = vadd.f32 %v918, %v1208
        %v1247 = vld [vmem:[%s302 + $0x17] sm:$0xff]
        %v1248 = vld [vmem:[%s302 + $0x1f] sm:$0xff]
        %v1249 = vld [vmem:[%s302 + $0x27] sm:$0xff]
        %v1250 = vld [vmem:[%s302 + $0x2f] sm:$0xff]
        %v1251 = vld [vmem:[%s302 + $0x37] sm:$0xff]
        %v1252 = vld [vmem:[%s302 + $0x3f] sm:$0xff]
        %v1253 = vld [vmem:[%s302 + $0x47] sm:$0xff]
        %v1254 = vld [vmem:[%s302 + $0x4f] sm:$0xff]
        %v1255 = vld [vmem:[%s302 + $0x57] sm:$0xff]
        %v1256 = vld [vmem:[%s302 + $0x5f] sm:$0xff]
        %v1257 = vld [vmem:[%s302 + $0x67] sm:$0xff]
        %v1258 = vld [vmem:[%s302 + $0x6f] sm:$0xff]
        %v1259 = vld [vmem:[%s302 + $0x77] sm:$0xff]
        %v1260 = vld [vmem:[%s302 + $0x7f] sm:$0xff]
        %v1261 = vld [vmem:[%s302 + $0x87] sm:$0xff]
        %v1262 = vld [vmem:[%s302 + $0x8f] sm:$0xff]
        %v1263 = vld [vmem:[%s302 + $0x97] sm:$0xff]
        %v1264 = vld [vmem:[%s302 + $0x9f] sm:$0xff]
        %v1265 = vld [vmem:[%s302 + $0xa7] sm:$0xff]
        %v1266 = vld [vmem:[%s302 + $0xaf] sm:$0xff]
        %v1267 = vld [vmem:[%s302 + $0xb7] sm:$0xff]
        %v1268 = vld [vmem:[%s302 + $0xbf] sm:$0xff]
        %v1269 = vld [vmem:[%s302 + $0xc7] sm:$0xff]
        %v1270 = vld [vmem:[%s302 + $0xcf] sm:$0xff]
        %v1271 = vld [vmem:[%s302 + $0xd7] sm:$0xff]
        %v1272 = vld [vmem:[%s302 + $0xdf] sm:$0xff]
        %v1273 = vld [vmem:[%s302 + $0xe7] sm:$0xff]
        %v1274 = vld [vmem:[%s302 + $0xef] sm:$0xff]
        %v1275 = vld [vmem:[%s302 + $0xf7] sm:$0xff]
        %v1276 = vld [vmem:[%s302 + $0xff] sm:$0xff]
        %v1277 = vld [vmem:[%s302 + $0x107] sm:$0xff]
        %v1278 = vld [vmem:[%s302 + $0x10f] sm:$0xff]
        %v1279 = vld [vmem:[%s302 + $0x117] sm:$0xff]
        %v1280 = vld [vmem:[%s302 + $0x11f] sm:$0xff]
        %v1281 = vld [vmem:[%s302 + $0x127] sm:$0xff]
        %v1282 = vld [vmem:[%s302 + $0x12f] sm:$0xff]
        %v1283 = vpack.c.bf16 %v1248, %v1247
        %v1284 = vpack.c.bf16 %v1250, %v1249
        %v1285 = vpack.c.bf16 %v1252, %v1251
        %v1286 = vpack.c.bf16 %v1254, %v1253
        %v1287 = vpack.c.bf16 %v1256, %v1255
        %v1288 = vpack.c.bf16 %v1258, %v1257
        %v1289 = vpack.c.bf16 %v1260, %v1259
        %v1290 = vpack.c.bf16 %v1262, %v1261
        %v1291 = vpack.c.bf16 %v1264, %v1263
        %v1292 = vpack.c.bf16 %v1266, %v1265
        %v1293 = vpack.c.bf16 %v1268, %v1267
        %v1294 = vpack.c.bf16 %v1270, %v1269
        %v1295 = vpack.c.bf16 %v1272, %v1271
        %v1296 = vpack.c.bf16 %v1274, %v1273
        %v1297 = vpack.c.bf16 %v1276, %v1275
        %v1298 = vpack.c.bf16 %v1278, %v1277
        %v1299 = vpack.c.bf16 %v1280, %v1279
        %v1300 = vpack.c.bf16 %v1282, %v1281
        %s1301 = scalar_lea.vmem %s1, 6
        %v1302 = vld [vmem:[%s1301] sm:$0x3]
        %v1304 = vsel %vm451, %v1283, 0
        %v1307 = vsel %vm451, %v1284, 0
        %v1310 = vsel %vm451, %v1285, 0
        %v1313 = vsel %vm451, %v1286, 0
        %v1316 = vsel %vm451, %v1287, 0
        %v1319 = vsel %vm451, %v1288, 0
        %v1322 = vsel %vm451, %v1289, 0
        %v1325 = vsel %vm451, %v1290, 0
        %v1328 = vsel %vm451, %v1291, 0
        %v1331 = vsel %vm451, %v1292, 0
        %v1334 = vsel %vm451, %v1293, 0
        %v1337 = vsel %vm451, %v1294, 0
        %v1340 = vsel %vm451, %v1295, 0
        %v1343 = vsel %vm451, %v1296, 0
        %v1346 = vsel %vm451, %v1297, 0
        %v1349 = vsel %vm451, %v1298, 0
        %v1352 = vsel %vm451, %v1299, 0
        %v1355 = vsel %vm451, %v1300, 0
        %v1358 = vsel %vm506, %v1302, 0
        %1360 = vmatprep.subr.bf16.mxu0 0
        %1361 = vmatpush1.bf16.msra.mxu0 0
        %1362 = vmatprep.subr.bf16.mxu0 0
        %1363 = vmatpush1.bf16.msra.mxu0 0
        %1364 = vmatprep.subr.bf16.mxu0 0
        %1365 = vmatpush1.bf16.msra.mxu0 0
        %1366 = vmatprep.subr.bf16.mxu0 0
        %1367 = vmatpush1.bf16.msra.mxu0 0
        %1368 = vmatprep.subr.bf16.mxu0 0
        %1369 = vmatpush1.bf16.msra.mxu0 0
        %1370 = vmatprep.subr.bf16.mxu0 0
        %1371 = vmatpush1.bf16.msra.mxu0 0
        %1372 = vmatprep.subr.bf16.mxu0 0
        %1373 = vmatpush1.bf16.msra.mxu0 0
        %1374 = vmatprep.subr.bf16.mxu0 0
        %1375 = vmatpush1.bf16.msra.mxu0 %v1358
        %1376 = vmatprep.subr.bf16.mxu0 0
        %1377 = vmatpush2.bf16.msra.mxu0 0
        %1378 = vmatprep.subr.bf16.mxu0 0
        %1379 = vmatpush2.bf16.msra.mxu0 0
        %1380 = vmatprep.subr.bf16.mxu0 0
        %1381 = vmatpush2.bf16.msra.mxu0 0
        %1382 = vmatprep.subr.bf16.mxu0 0
        %1383 = vmatpush2.bf16.msra.mxu0 0
        %1384 = vmatprep.subr.bf16.mxu0 0
        %1385 = vmatpush2.bf16.msra.mxu0 0
        %1386 = vmatprep.subr.bf16.mxu0 0
        %1387 = vmatpush2.bf16.msra.mxu0 0
        %1388 = vmatprep.subr.bf16.mxu0 0
        %1389 = vmatpush2.bf16.msra.mxu0 0
        %1390 = vmatprep.subr.bf16.mxu0 0
        %1391 = vmatpush2.bf16.msra.mxu0 0
        %1392 = vmatprep.mubr.bf16.mxu0 0
        %1393 = vmatmul.mubr.bf16.gmra.mxu0 %v1304
        %v1394 = vpop.f32.mrf.mxu0
        %v1395 = vadd.f32 0.0, %v1394
        %v1396 = vpop.f32.mrf.mxu0
        %v1397 = vpop.f32.mrf.mxu0
        %v1398 = vadd.f32 0.0, %v1397
        %v1399 = vpop.f32.mrf.mxu0
        %1400 = vmatprep.mubr.bf16.mxu0 0
        %1401 = vmatmul.mubr.bf16.gmra.mxu0 %v1307
        %v1402 = vpop.f32.mrf.mxu0
        %v1403 = vadd.f32 0.0, %v1402
        %v1404 = vpop.f32.mrf.mxu0
        %v1405 = vpop.f32.mrf.mxu0
        %v1406 = vadd.f32 0.0, %v1405
        %v1407 = vpop.f32.mrf.mxu0
        %1408 = vmatprep.mubr.bf16.mxu0 0
        %1409 = vmatmul.mubr.bf16.gmra.mxu0 %v1310
        %v1410 = vpop.f32.mrf.mxu0
        %v1411 = vadd.f32 0.0, %v1410
        %v1412 = vpop.f32.mrf.mxu0
        %v1413 = vpop.f32.mrf.mxu0
        %v1414 = vadd.f32 0.0, %v1413
        %v1415 = vpop.f32.mrf.mxu0
        %1416 = vmatprep.mubr.bf16.mxu0 0
        %1417 = vmatmul.mubr.bf16.gmra.mxu0 %v1313
        %v1418 = vpop.f32.mrf.mxu0
        %v1419 = vadd.f32 0.0, %v1418
        %v1420 = vpop.f32.mrf.mxu0
        %v1421 = vpop.f32.mrf.mxu0
        %v1422 = vadd.f32 0.0, %v1421
        %v1423 = vpop.f32.mrf.mxu0
        %1424 = vmatprep.mubr.bf16.mxu0 0
        %1425 = vmatmul.mubr.bf16.gmra.mxu0 %v1316
        %v1426 = vpop.f32.mrf.mxu0
        %v1427 = vadd.f32 0.0, %v1426
        %v1428 = vpop.f32.mrf.mxu0
        %v1429 = vpop.f32.mrf.mxu0
        %v1430 = vadd.f32 0.0, %v1429
        %v1431 = vpop.f32.mrf.mxu0
        %1432 = vmatprep.mubr.bf16.mxu0 0
        %1433 = vmatmul.mubr.bf16.gmra.mxu0 %v1319
        %v1434 = vpop.f32.mrf.mxu0
        %v1435 = vadd.f32 0.0, %v1434
        %v1436 = vpop.f32.mrf.mxu0
        %v1437 = vpop.f32.mrf.mxu0
        %v1438 = vadd.f32 0.0, %v1437
        %v1439 = vpop.f32.mrf.mxu0
        %1440 = vmatprep.mubr.bf16.mxu0 0
        %1441 = vmatmul.mubr.bf16.gmra.mxu0 %v1322
        %v1442 = vpop.f32.mrf.mxu0
        %v1443 = vadd.f32 0.0, %v1442
        %v1444 = vpop.f32.mrf.mxu0
        %v1445 = vpop.f32.mrf.mxu0
        %v1446 = vadd.f32 0.0, %v1445
        %v1447 = vpop.f32.mrf.mxu0
        %1448 = vmatprep.mubr.bf16.mxu0 0
        %1449 = vmatmul.mubr.bf16.gmra.mxu0 %v1325
        %v1450 = vpop.f32.mrf.mxu0
        %v1451 = vadd.f32 0.0, %v1450
        %v1452 = vpop.f32.mrf.mxu0
        %v1453 = vpop.f32.mrf.mxu0
        %v1454 = vadd.f32 0.0, %v1453
        %v1455 = vpop.f32.mrf.mxu0
        %1456 = vmatprep.mubr.bf16.mxu0 0
        %1457 = vmatmul.mubr.bf16.gmra.mxu0 %v1328
        %v1458 = vpop.f32.mrf.mxu0
        %v1459 = vadd.f32 0.0, %v1458
        %v1460 = vpop.f32.mrf.mxu0
        %v1461 = vpop.f32.mrf.mxu0
        %v1462 = vadd.f32 0.0, %v1461
        %v1463 = vpop.f32.mrf.mxu0
        %1464 = vmatprep.mubr.bf16.mxu0 0
        %1465 = vmatmul.mubr.bf16.gmra.mxu0 %v1331
        %v1466 = vpop.f32.mrf.mxu0
        %v1467 = vadd.f32 0.0, %v1466
        %v1468 = vpop.f32.mrf.mxu0
        %v1469 = vpop.f32.mrf.mxu0
        %v1470 = vadd.f32 0.0, %v1469
        %v1471 = vpop.f32.mrf.mxu0
        %1472 = vmatprep.mubr.bf16.mxu0 0
        %1473 = vmatmul.mubr.bf16.gmra.mxu0 %v1334
        %v1474 = vpop.f32.mrf.mxu0
        %v1475 = vadd.f32 0.0, %v1474
        %v1476 = vpop.f32.mrf.mxu0
        %v1477 = vpop.f32.mrf.mxu0
        %v1478 = vadd.f32 0.0, %v1477
        %v1479 = vpop.f32.mrf.mxu0
        %1480 = vmatprep.mubr.bf16.mxu0 0
        %1481 = vmatmul.mubr.bf16.gmra.mxu0 %v1337
        %v1482 = vpop.f32.mrf.mxu0
        %v1483 = vadd.f32 0.0, %v1482
        %v1484 = vpop.f32.mrf.mxu0
        %v1485 = vpop.f32.mrf.mxu0
        %v1486 = vadd.f32 0.0, %v1485
        %v1487 = vpop.f32.mrf.mxu0
        %1488 = vmatprep.mubr.bf16.mxu0 0
        %1489 = vmatmul.mubr.bf16.gmra.mxu0 %v1340
        %v1490 = vpop.f32.mrf.mxu0
        %v1491 = vadd.f32 0.0, %v1490
        %v1492 = vpop.f32.mrf.mxu0
        %v1493 = vpop.f32.mrf.mxu0
        %v1494 = vadd.f32 0.0, %v1493
        %v1495 = vpop.f32.mrf.mxu0
        %1496 = vmatprep.mubr.bf16.mxu0 0
        %1497 = vmatmul.mubr.bf16.gmra.mxu0 %v1343
        %v1498 = vpop.f32.mrf.mxu0
        %v1499 = vadd.f32 0.0, %v1498
        %v1500 = vpop.f32.mrf.mxu0
        %v1501 = vpop.f32.mrf.mxu0
        %v1502 = vadd.f32 0.0, %v1501
        %v1503 = vpop.f32.mrf.mxu0
        %1504 = vmatprep.mubr.bf16.mxu0 0
        %1505 = vmatmul.mubr.bf16.gmra.mxu0 %v1346
        %v1506 = vpop.f32.mrf.mxu0
        %v1507 = vadd.f32 0.0, %v1506
        %v1508 = vpop.f32.mrf.mxu0
        %v1509 = vpop.f32.mrf.mxu0
        %v1510 = vadd.f32 0.0, %v1509
        %v1511 = vpop.f32.mrf.mxu0
        %1512 = vmatprep.mubr.bf16.mxu0 0
        %1513 = vmatmul.mubr.bf16.gmra.mxu0 %v1349
        %v1514 = vpop.f32.mrf.mxu0
        %v1515 = vadd.f32 0.0, %v1514
        %v1516 = vpop.f32.mrf.mxu0
        %v1517 = vpop.f32.mrf.mxu0
        %v1518 = vadd.f32 0.0, %v1517
        %v1519 = vpop.f32.mrf.mxu0
        %1520 = vmatprep.mubr.bf16.mxu0 0
        %1521 = vmatmul.mubr.bf16.gmra.mxu0 %v1352
        %v1522 = vpop.f32.mrf.mxu0
        %v1523 = vadd.f32 0.0, %v1522
        %v1524 = vpop.f32.mrf.mxu0
        %v1525 = vpop.f32.mrf.mxu0
        %v1526 = vadd.f32 0.0, %v1525
        %v1527 = vpop.f32.mrf.mxu0
        %1528 = vmatprep.mubr.bf16.mxu0 0
        %1529 = vmatmul.mubr.bf16.gmra.mxu0 %v1355
        %v1530 = vpop.f32.mrf.mxu0
        %v1531 = vadd.f32 0.0, %v1530
        %v1532 = vpop.f32.mrf.mxu0
        %v1533 = vpop.f32.mrf.mxu0
        %v1534 = vadd.f32 0.0, %v1533
        %v1535 = vpop.f32.mrf.mxu0
        %1536 = vdwg.mxu0
        %v1537 = vadd.f32 %v1211, %v1395
        %v1538 = vadd.f32 %v1212, %v1398
        %v1539 = vadd.f32 %v1213, %v1403
        %v1540 = vadd.f32 %v1214, %v1406
        %v1541 = vadd.f32 %v1215, %v1411
        %v1542 = vadd.f32 %v1216, %v1414
        %v1543 = vadd.f32 %v1217, %v1419
        %v1544 = vadd.f32 %v1218, %v1422
        %v1545 = vadd.f32 %v1219, %v1427
        %v1546 = vadd.f32 %v1220, %v1430
        %v1547 = vadd.f32 %v1221, %v1435
        %v1548 = vadd.f32 %v1222, %v1438
        %v1549 = vadd.f32 %v1223, %v1443
        %v1550 = vadd.f32 %v1224, %v1446
        %v1551 = vadd.f32 %v1225, %v1451
        %v1552 = vadd.f32 %v1226, %v1454
        %v1553 = vadd.f32 %v1227, %v1459
        %v1554 = vadd.f32 %v1228, %v1462
        %v1555 = vadd.f32 %v1229, %v1467
        %v1556 = vadd.f32 %v1230, %v1470
        %v1557 = vadd.f32 %v1231, %v1475
        %v1558 = vadd.f32 %v1232, %v1478
        %v1559 = vadd.f32 %v1233, %v1483
        %v1560 = vadd.f32 %v1234, %v1486
        %v1561 = vadd.f32 %v1235, %v1491
        %v1562 = vadd.f32 %v1236, %v1494
        %v1563 = vadd.f32 %v1237, %v1499
        %v1564 = vadd.f32 %v1238, %v1502
        %v1565 = vadd.f32 %v1239, %v1507
        %v1566 = vadd.f32 %v1240, %v1510
        %v1567 = vadd.f32 %v1241, %v1515
        %v1568 = vadd.f32 %v1242, %v1518
        %v1569 = vadd.f32 %v1243, %v1523
        %v1570 = vadd.f32 %v1244, %v1526
        %v1571 = vadd.f32 %v1245, %v1531
        %v1572 = vadd.f32 %v1246, %v1534
        %v1573 = vld [vmem:[%s302 + $0x18] sm:$0xff]
        %v1574 = vld [vmem:[%s302 + $0x20] sm:$0xff]
        %v1575 = vld [vmem:[%s302 + $0x28] sm:$0xff]
        %v1576 = vld [vmem:[%s302 + $0x30] sm:$0xff]
        %v1577 = vld [vmem:[%s302 + $0x38] sm:$0xff]
        %v1578 = vld [vmem:[%s302 + $0x40] sm:$0xff]
        %v1579 = vld [vmem:[%s302 + $0x48] sm:$0xff]
        %v1580 = vld [vmem:[%s302 + $0x50] sm:$0xff]
        %v1581 = vld [vmem:[%s302 + $0x58] sm:$0xff]
        %v1582 = vld [vmem:[%s302 + $0x60] sm:$0xff]
        %v1583 = vld [vmem:[%s302 + $0x68] sm:$0xff]
        %v1584 = vld [vmem:[%s302 + $0x70] sm:$0xff]
        %v1585 = vld [vmem:[%s302 + $0x78] sm:$0xff]
        %v1586 = vld [vmem:[%s302 + $0x80] sm:$0xff]
        %v1587 = vld [vmem:[%s302 + $0x88] sm:$0xff]
        %v1588 = vld [vmem:[%s302 + $0x90] sm:$0xff]
        %v1589 = vld [vmem:[%s302 + $0x98] sm:$0xff]
        %v1590 = vld [vmem:[%s302 + $0xa0] sm:$0xff]
        %v1591 = vld [vmem:[%s302 + $0xa8] sm:$0xff]
        %v1592 = vld [vmem:[%s302 + $0xb0] sm:$0xff]
        %v1593 = vld [vmem:[%s302 + $0xb8] sm:$0xff]
        %v1594 = vld [vmem:[%s302 + $0xc0] sm:$0xff]
        %v1595 = vld [vmem:[%s302 + $0xc8] sm:$0xff]
        %v1596 = vld [vmem:[%s302 + $0xd0] sm:$0xff]
        %v1597 = vld [vmem:[%s302 + $0xd8] sm:$0xff]
        %v1598 = vld [vmem:[%s302 + $0xe0] sm:$0xff]
        %v1599 = vld [vmem:[%s302 + $0xe8] sm:$0xff]
        %v1600 = vld [vmem:[%s302 + $0xf0] sm:$0xff]
        %v1601 = vld [vmem:[%s302 + $0xf8] sm:$0xff]
        %v1602 = vld [vmem:[%s302 + $0x100] sm:$0xff]
        %v1603 = vld [vmem:[%s302 + $0x108] sm:$0xff]
        %v1604 = vld [vmem:[%s302 + $0x110] sm:$0xff]
        %v1605 = vld [vmem:[%s302 + $0x118] sm:$0xff]
        %v1606 = vld [vmem:[%s302 + $0x120] sm:$0xff]
        %v1607 = vld [vmem:[%s302 + $0x128] sm:$0xff]
        %v1608 = vld [vmem:[%s302 + $0x130] sm:$0xff]
        %v1609 = vpack.c.bf16 %v1574, %v1573
        %v1610 = vpack.c.bf16 %v1576, %v1575
        %v1611 = vpack.c.bf16 %v1578, %v1577
        %v1612 = vpack.c.bf16 %v1580, %v1579
        %v1613 = vpack.c.bf16 %v1582, %v1581
        %v1614 = vpack.c.bf16 %v1584, %v1583
        %v1615 = vpack.c.bf16 %v1586, %v1585
        %v1616 = vpack.c.bf16 %v1588, %v1587
        %v1617 = vpack.c.bf16 %v1590, %v1589
        %v1618 = vpack.c.bf16 %v1592, %v1591
        %v1619 = vpack.c.bf16 %v1594, %v1593
        %v1620 = vpack.c.bf16 %v1596, %v1595
        %v1621 = vpack.c.bf16 %v1598, %v1597
        %v1622 = vpack.c.bf16 %v1600, %v1599
        %v1623 = vpack.c.bf16 %v1602, %v1601
        %v1624 = vpack.c.bf16 %v1604, %v1603
        %v1625 = vpack.c.bf16 %v1606, %v1605
        %v1626 = vpack.c.bf16 %v1608, %v1607
        %s1627 = scalar_lea.vmem %s1, 8
        %v1628 = vld [vmem:[%s1627] sm:$0x3]
        %v1630 = vsel %vm451, %v1609, 0
        %v1633 = vsel %vm451, %v1610, 0
        %v1636 = vsel %vm451, %v1611, 0
        %v1639 = vsel %vm451, %v1612, 0
        %v1642 = vsel %vm451, %v1613, 0
        %v1645 = vsel %vm451, %v1614, 0
        %v1648 = vsel %vm451, %v1615, 0
        %v1651 = vsel %vm451, %v1616, 0
        %v1654 = vsel %vm451, %v1617, 0
        %v1657 = vsel %vm451, %v1618, 0
        %v1660 = vsel %vm451, %v1619, 0
        %v1663 = vsel %vm451, %v1620, 0
        %v1666 = vsel %vm451, %v1621, 0
        %v1669 = vsel %vm451, %v1622, 0
        %v1672 = vsel %vm451, %v1623, 0
        %v1675 = vsel %vm451, %v1624, 0
        %v1678 = vsel %vm451, %v1625, 0
        %v1681 = vsel %vm451, %v1626, 0
        %v1684 = vsel %vm506, %v1628, 0
        %1686 = vmatprep.subr.bf16.mxu0 0
        %1687 = vmatpush1.bf16.msra.mxu0 0
        %1688 = vmatprep.subr.bf16.mxu0 0
        %1689 = vmatpush1.bf16.msra.mxu0 0
        %1690 = vmatprep.subr.bf16.mxu0 0
        %1691 = vmatpush1.bf16.msra.mxu0 0
        %1692 = vmatprep.subr.bf16.mxu0 0
        %1693 = vmatpush1.bf16.msra.mxu0 0
        %1694 = vmatprep.subr.bf16.mxu0 0
        %1695 = vmatpush1.bf16.msra.mxu0 0
        %1696 = vmatprep.subr.bf16.mxu0 0
        %1697 = vmatpush1.bf16.msra.mxu0 0
        %1698 = vmatprep.subr.bf16.mxu0 0
        %1699 = vmatpush1.bf16.msra.mxu0 0
        %1700 = vmatprep.subr.bf16.mxu0 0
        %1701 = vmatpush1.bf16.msra.mxu0 %v1684
        %1702 = vmatprep.subr.bf16.mxu0 0
        %1703 = vmatpush2.bf16.msra.mxu0 0
        %1704 = vmatprep.subr.bf16.mxu0 0
        %1705 = vmatpush2.bf16.msra.mxu0 0
        %1706 = vmatprep.subr.bf16.mxu0 0
        %1707 = vmatpush2.bf16.msra.mxu0 0
        %1708 = vmatprep.subr.bf16.mxu0 0
        %1709 = vmatpush2.bf16.msra.mxu0 0
        %1710 = vmatprep.subr.bf16.mxu0 0
        %1711 = vmatpush2.bf16.msra.mxu0 0
        %1712 = vmatprep.subr.bf16.mxu0 0
        %1713 = vmatpush2.bf16.msra.mxu0 0
        %1714 = vmatprep.subr.bf16.mxu0 0
        %1715 = vmatpush2.bf16.msra.mxu0 0
        %1716 = vmatprep.subr.bf16.mxu0 0
        %1717 = vmatpush2.bf16.msra.mxu0 0
        %1718 = vmatprep.mubr.bf16.mxu0 0
        %1719 = vmatmul.mubr.bf16.gmra.mxu0 %v1630
        %v1720 = vpop.f32.mrf.mxu0
        %v1721 = vadd.f32 0.0, %v1720
        %v1722 = vpop.f32.mrf.mxu0
        %v1723 = vpop.f32.mrf.mxu0
        %v1724 = vadd.f32 0.0, %v1723
        %v1725 = vpop.f32.mrf.mxu0
        %1726 = vmatprep.mubr.bf16.mxu0 0
        %1727 = vmatmul.mubr.bf16.gmra.mxu0 %v1633
        %v1728 = vpop.f32.mrf.mxu0
        %v1729 = vadd.f32 0.0, %v1728
        %v1730 = vpop.f32.mrf.mxu0
        %v1731 = vpop.f32.mrf.mxu0
        %v1732 = vadd.f32 0.0, %v1731
        %v1733 = vpop.f32.mrf.mxu0
        %1734 = vmatprep.mubr.bf16.mxu0 0
        %1735 = vmatmul.mubr.bf16.gmra.mxu0 %v1636
        %v1736 = vpop.f32.mrf.mxu0
        %v1737 = vadd.f32 0.0, %v1736
        %v1738 = vpop.f32.mrf.mxu0
        %v1739 = vpop.f32.mrf.mxu0
        %v1740 = vadd.f32 0.0, %v1739
        %v1741 = vpop.f32.mrf.mxu0
        %1742 = vmatprep.mubr.bf16.mxu0 0
        %1743 = vmatmul.mubr.bf16.gmra.mxu0 %v1639
        %v1744 = vpop.f32.mrf.mxu0
        %v1745 = vadd.f32 0.0, %v1744
        %v1746 = vpop.f32.mrf.mxu0
        %v1747 = vpop.f32.mrf.mxu0
        %v1748 = vadd.f32 0.0, %v1747
        %v1749 = vpop.f32.mrf.mxu0
        %1750 = vmatprep.mubr.bf16.mxu0 0
        %1751 = vmatmul.mubr.bf16.gmra.mxu0 %v1642
        %v1752 = vpop.f32.mrf.mxu0
        %v1753 = vadd.f32 0.0, %v1752
        %v1754 = vpop.f32.mrf.mxu0
        %v1755 = vpop.f32.mrf.mxu0
        %v1756 = vadd.f32 0.0, %v1755
        %v1757 = vpop.f32.mrf.mxu0
        %1758 = vmatprep.mubr.bf16.mxu0 0
        %1759 = vmatmul.mubr.bf16.gmra.mxu0 %v1645
        %v1760 = vpop.f32.mrf.mxu0
        %v1761 = vadd.f32 0.0, %v1760
        %v1762 = vpop.f32.mrf.mxu0
        %v1763 = vpop.f32.mrf.mxu0
        %v1764 = vadd.f32 0.0, %v1763
        %v1765 = vpop.f32.mrf.mxu0
        %1766 = vmatprep.mubr.bf16.mxu0 0
        %1767 = vmatmul.mubr.bf16.gmra.mxu0 %v1648
        %v1768 = vpop.f32.mrf.mxu0
        %v1769 = vadd.f32 0.0, %v1768
        %v1770 = vpop.f32.mrf.mxu0
        %v1771 = vpop.f32.mrf.mxu0
        %v1772 = vadd.f32 0.0, %v1771
        %v1773 = vpop.f32.mrf.mxu0
        %1774 = vmatprep.mubr.bf16.mxu0 0
        %1775 = vmatmul.mubr.bf16.gmra.mxu0 %v1651
        %v1776 = vpop.f32.mrf.mxu0
        %v1777 = vadd.f32 0.0, %v1776
        %v1778 = vpop.f32.mrf.mxu0
        %v1779 = vpop.f32.mrf.mxu0
        %v1780 = vadd.f32 0.0, %v1779
        %v1781 = vpop.f32.mrf.mxu0
        %1782 = vmatprep.mubr.bf16.mxu0 0
        %1783 = vmatmul.mubr.bf16.gmra.mxu0 %v1654
        %v1784 = vpop.f32.mrf.mxu0
        %v1785 = vadd.f32 0.0, %v1784
        %v1786 = vpop.f32.mrf.mxu0
        %v1787 = vpop.f32.mrf.mxu0
        %v1788 = vadd.f32 0.0, %v1787
        %v1789 = vpop.f32.mrf.mxu0
        %1790 = vmatprep.mubr.bf16.mxu0 0
        %1791 = vmatmul.mubr.bf16.gmra.mxu0 %v1657
        %v1792 = vpop.f32.mrf.mxu0
        %v1793 = vadd.f32 0.0, %v1792
        %v1794 = vpop.f32.mrf.mxu0
        %v1795 = vpop.f32.mrf.mxu0
        %v1796 = vadd.f32 0.0, %v1795
        %v1797 = vpop.f32.mrf.mxu0
        %1798 = vmatprep.mubr.bf16.mxu0 0
        %1799 = vmatmul.mubr.bf16.gmra.mxu0 %v1660
        %v1800 = vpop.f32.mrf.mxu0
        %v1801 = vadd.f32 0.0, %v1800
        %v1802 = vpop.f32.mrf.mxu0
        %v1803 = vpop.f32.mrf.mxu0
        %v1804 = vadd.f32 0.0, %v1803
        %v1805 = vpop.f32.mrf.mxu0
        %1806 = vmatprep.mubr.bf16.mxu0 0
        %1807 = vmatmul.mubr.bf16.gmra.mxu0 %v1663
        %v1808 = vpop.f32.mrf.mxu0
        %v1809 = vadd.f32 0.0, %v1808
        %v1810 = vpop.f32.mrf.mxu0
        %v1811 = vpop.f32.mrf.mxu0
        %v1812 = vadd.f32 0.0, %v1811
        %v1813 = vpop.f32.mrf.mxu0
        %1814 = vmatprep.mubr.bf16.mxu0 0
        %1815 = vmatmul.mubr.bf16.gmra.mxu0 %v1666
        %v1816 = vpop.f32.mrf.mxu0
        %v1817 = vadd.f32 0.0, %v1816
        %v1818 = vpop.f32.mrf.mxu0
        %v1819 = vpop.f32.mrf.mxu0
        %v1820 = vadd.f32 0.0, %v1819
        %v1821 = vpop.f32.mrf.mxu0
        %1822 = vmatprep.mubr.bf16.mxu0 0
        %1823 = vmatmul.mubr.bf16.gmra.mxu0 %v1669
        %v1824 = vpop.f32.mrf.mxu0
        %v1825 = vadd.f32 0.0, %v1824
        %v1826 = vpop.f32.mrf.mxu0
        %v1827 = vpop.f32.mrf.mxu0
        %v1828 = vadd.f32 0.0, %v1827
        %v1829 = vpop.f32.mrf.mxu0
        %1830 = vmatprep.mubr.bf16.mxu0 0
        %1831 = vmatmul.mubr.bf16.gmra.mxu0 %v1672
        %v1832 = vpop.f32.mrf.mxu0
        %v1833 = vadd.f32 0.0, %v1832
        %v1834 = vpop.f32.mrf.mxu0
        %v1835 = vpop.f32.mrf.mxu0
        %v1836 = vadd.f32 0.0, %v1835
        %v1837 = vpop.f32.mrf.mxu0
        %1838 = vmatprep.mubr.bf16.mxu0 0
        %1839 = vmatmul.mubr.bf16.gmra.mxu0 %v1675
        %v1840 = vpop.f32.mrf.mxu0
        %v1841 = vadd.f32 0.0, %v1840
        %v1842 = vpop.f32.mrf.mxu0
        %v1843 = vpop.f32.mrf.mxu0
        %v1844 = vadd.f32 0.0, %v1843
        %v1845 = vpop.f32.mrf.mxu0
        %1846 = vmatprep.mubr.bf16.mxu0 0
        %1847 = vmatmul.mubr.bf16.gmra.mxu0 %v1678
        %v1848 = vpop.f32.mrf.mxu0
        %v1849 = vadd.f32 0.0, %v1848
        %v1850 = vpop.f32.mrf.mxu0
        %v1851 = vpop.f32.mrf.mxu0
        %v1852 = vadd.f32 0.0, %v1851
        %v1853 = vpop.f32.mrf.mxu0
        %1854 = vmatprep.mubr.bf16.mxu0 0
        %1855 = vmatmul.mubr.bf16.gmra.mxu0 %v1681
        %v1856 = vpop.f32.mrf.mxu0
        %v1857 = vadd.f32 0.0, %v1856
        %v1858 = vpop.f32.mrf.mxu0
        %v1859 = vpop.f32.mrf.mxu0
        %v1860 = vadd.f32 0.0, %v1859
        %v1861 = vpop.f32.mrf.mxu0
        %1862 = vdwg.mxu0
        %v1863 = vadd.f32 %v1537, %v1721
        %v1864 = vadd.f32 %v1538, %v1724
        %v1865 = vadd.f32 %v1539, %v1729
        %v1866 = vadd.f32 %v1540, %v1732
        %v1867 = vadd.f32 %v1541, %v1737
        %v1868 = vadd.f32 %v1542, %v1740
        %v1869 = vadd.f32 %v1543, %v1745
        %v1870 = vadd.f32 %v1544, %v1748
        %v1871 = vadd.f32 %v1545, %v1753
        %v1872 = vadd.f32 %v1546, %v1756
        %v1873 = vadd.f32 %v1547, %v1761
        %v1874 = vadd.f32 %v1548, %v1764
        %v1875 = vadd.f32 %v1549, %v1769
        %v1876 = vadd.f32 %v1550, %v1772
        %v1877 = vadd.f32 %v1551, %v1777
        %v1878 = vadd.f32 %v1552, %v1780
        %v1879 = vadd.f32 %v1553, %v1785
        %v1880 = vadd.f32 %v1554, %v1788
        %v1881 = vadd.f32 %v1555, %v1793
        %v1882 = vadd.f32 %v1556, %v1796
        %v1883 = vadd.f32 %v1557, %v1801
        %v1884 = vadd.f32 %v1558, %v1804
        %v1885 = vadd.f32 %v1559, %v1809
        %v1886 = vadd.f32 %v1560, %v1812
        %v1887 = vadd.f32 %v1561, %v1817
        %v1888 = vadd.f32 %v1562, %v1820
        %v1889 = vadd.f32 %v1563, %v1825
        %v1890 = vadd.f32 %v1564, %v1828
        %v1891 = vadd.f32 %v1565, %v1833
        %v1892 = vadd.f32 %v1566, %v1836
        %v1893 = vadd.f32 %v1567, %v1841
        %v1894 = vadd.f32 %v1568, %v1844
        %v1895 = vadd.f32 %v1569, %v1849
        %v1896 = vadd.f32 %v1570, %v1852
        %v1897 = vadd.f32 %v1571, %v1857
        %v1898 = vadd.f32 %v1572, %v1860
        %v1899 = vld [vmem:[%s302 + $0x19] sm:$0xff]
        %v1900 = vld [vmem:[%s302 + $0x21] sm:$0xff]
        %v1901 = vld [vmem:[%s302 + $0x29] sm:$0xff]
        %v1902 = vld [vmem:[%s302 + $0x31] sm:$0xff]
        %v1903 = vld [vmem:[%s302 + $0x39] sm:$0xff]
        %v1904 = vld [vmem:[%s302 + $0x41] sm:$0xff]
        %v1905 = vld [vmem:[%s302 + $0x49] sm:$0xff]
        %v1906 = vld [vmem:[%s302 + $0x51] sm:$0xff]
        %v1907 = vld [vmem:[%s302 + $0x59] sm:$0xff]
        %v1908 = vld [vmem:[%s302 + $0x61] sm:$0xff]
        %v1909 = vld [vmem:[%s302 + $0x69] sm:$0xff]
        %v1910 = vld [vmem:[%s302 + $0x71] sm:$0xff]
        %v1911 = vld [vmem:[%s302 + $0x79] sm:$0xff]
        %v1912 = vld [vmem:[%s302 + $0x81] sm:$0xff]
        %v1913 = vld [vmem:[%s302 + $0x89] sm:$0xff]
        %v1914 = vld [vmem:[%s302 + $0x91] sm:$0xff]
        %v1915 = vld [vmem:[%s302 + $0x99] sm:$0xff]
        %v1916 = vld [vmem:[%s302 + $0xa1] sm:$0xff]
        %v1917 = vld [vmem:[%s302 + $0xa9] sm:$0xff]
        %v1918 = vld [vmem:[%s302 + $0xb1] sm:$0xff]
        %v1919 = vld [vmem:[%s302 + $0xb9] sm:$0xff]
        %v1920 = vld [vmem:[%s302 + $0xc1] sm:$0xff]
        %v1921 = vld [vmem:[%s302 + $0xc9] sm:$0xff]
        %v1922 = vld [vmem:[%s302 + $0xd1] sm:$0xff]
        %v1923 = vld [vmem:[%s302 + $0xd9] sm:$0xff]
        %v1924 = vld [vmem:[%s302 + $0xe1] sm:$0xff]
        %v1925 = vld [vmem:[%s302 + $0xe9] sm:$0xff]
        %v1926 = vld [vmem:[%s302 + $0xf1] sm:$0xff]
        %v1927 = vld [vmem:[%s302 + $0xf9] sm:$0xff]
        %v1928 = vld [vmem:[%s302 + $0x101] sm:$0xff]
        %v1929 = vld [vmem:[%s302 + $0x109] sm:$0xff]
        %v1930 = vld [vmem:[%s302 + $0x111] sm:$0xff]
        %v1931 = vld [vmem:[%s302 + $0x119] sm:$0xff]
        %v1932 = vld [vmem:[%s302 + $0x121] sm:$0xff]
        %v1933 = vld [vmem:[%s302 + $0x129] sm:$0xff]
        %v1934 = vld [vmem:[%s302 + $0x131] sm:$0xff]
        %v1935 = vpack.c.bf16 %v1900, %v1899
        %v1936 = vpack.c.bf16 %v1902, %v1901
        %v1937 = vpack.c.bf16 %v1904, %v1903
        %v1938 = vpack.c.bf16 %v1906, %v1905
        %v1939 = vpack.c.bf16 %v1908, %v1907
        %v1940 = vpack.c.bf16 %v1910, %v1909
        %v1941 = vpack.c.bf16 %v1912, %v1911
        %v1942 = vpack.c.bf16 %v1914, %v1913
        %v1943 = vpack.c.bf16 %v1916, %v1915
        %v1944 = vpack.c.bf16 %v1918, %v1917
        %v1945 = vpack.c.bf16 %v1920, %v1919
        %v1946 = vpack.c.bf16 %v1922, %v1921
        %v1947 = vpack.c.bf16 %v1924, %v1923
        %v1948 = vpack.c.bf16 %v1926, %v1925
        %v1949 = vpack.c.bf16 %v1928, %v1927
        %v1950 = vpack.c.bf16 %v1930, %v1929
        %v1951 = vpack.c.bf16 %v1932, %v1931
        %v1952 = vpack.c.bf16 %v1934, %v1933
        %s1953 = scalar_lea.vmem %s1, 10
        %v1954 = vld [vmem:[%s1953] sm:$0x3]
        %v1956 = vsel %vm451, %v1935, 0
        %v1959 = vsel %vm451, %v1936, 0
        %v1962 = vsel %vm451, %v1937, 0
        %v1965 = vsel %vm451, %v1938, 0
        %v1968 = vsel %vm451, %v1939, 0
        %v1971 = vsel %vm451, %v1940, 0
        %v1974 = vsel %vm451, %v1941, 0
        %v1977 = vsel %vm451, %v1942, 0
        %v1980 = vsel %vm451, %v1943, 0
        %v1983 = vsel %vm451, %v1944, 0
        %v1986 = vsel %vm451, %v1945, 0
        %v1989 = vsel %vm451, %v1946, 0
        %v1992 = vsel %vm451, %v1947, 0
        %v1995 = vsel %vm451, %v1948, 0
        %v1998 = vsel %vm451, %v1949, 0
        %v2001 = vsel %vm451, %v1950, 0
        %v2004 = vsel %vm451, %v1951, 0
        %v2007 = vsel %vm451, %v1952, 0
        %v2010 = vsel %vm506, %v1954, 0
        %2012 = vmatprep.subr.bf16.mxu0 0
        %2013 = vmatpush1.bf16.msra.mxu0 0
        %2014 = vmatprep.subr.bf16.mxu0 0
        %2015 = vmatpush1.bf16.msra.mxu0 0
        %2016 = vmatprep.subr.bf16.mxu0 0
        %2017 = vmatpush1.bf16.msra.mxu0 0
        %2018 = vmatprep.subr.bf16.mxu0 0
        %2019 = vmatpush1.bf16.msra.mxu0 0
        %2020 = vmatprep.subr.bf16.mxu0 0
        %2021 = vmatpush1.bf16.msra.mxu0 0
        %2022 = vmatprep.subr.bf16.mxu0 0
        %2023 = vmatpush1.bf16.msra.mxu0 0
        %2024 = vmatprep.subr.bf16.mxu0 0
        %2025 = vmatpush1.bf16.msra.mxu0 0
        %2026 = vmatprep.subr.bf16.mxu0 0
        %2027 = vmatpush1.bf16.msra.mxu0 %v2010
        %2028 = vmatprep.subr.bf16.mxu0 0
        %2029 = vmatpush2.bf16.msra.mxu0 0
        %2030 = vmatprep.subr.bf16.mxu0 0
        %2031 = vmatpush2.bf16.msra.mxu0 0
        %2032 = vmatprep.subr.bf16.mxu0 0
        %2033 = vmatpush2.bf16.msra.mxu0 0
        %2034 = vmatprep.subr.bf16.mxu0 0
        %2035 = vmatpush2.bf16.msra.mxu0 0
        %2036 = vmatprep.subr.bf16.mxu0 0
        %2037 = vmatpush2.bf16.msra.mxu0 0
        %2038 = vmatprep.subr.bf16.mxu0 0
        %2039 = vmatpush2.bf16.msra.mxu0 0
        %2040 = vmatprep.subr.bf16.mxu0 0
        %2041 = vmatpush2.bf16.msra.mxu0 0
        %2042 = vmatprep.subr.bf16.mxu0 0
        %2043 = vmatpush2.bf16.msra.mxu0 0
        %2044 = vmatprep.mubr.bf16.mxu0 0
        %2045 = vmatmul.mubr.bf16.gmra.mxu0 %v1956
        %v2046 = vpop.f32.mrf.mxu0
        %v2047 = vadd.f32 0.0, %v2046
        %v2048 = vpop.f32.mrf.mxu0
        %v2049 = vpop.f32.mrf.mxu0
        %v2050 = vadd.f32 0.0, %v2049
        %v2051 = vpop.f32.mrf.mxu0
        %2052 = vmatprep.mubr.bf16.mxu0 0
        %2053 = vmatmul.mubr.bf16.gmra.mxu0 %v1959
        %v2054 = vpop.f32.mrf.mxu0
        %v2055 = vadd.f32 0.0, %v2054
        %v2056 = vpop.f32.mrf.mxu0
        %v2057 = vpop.f32.mrf.mxu0
        %v2058 = vadd.f32 0.0, %v2057
        %v2059 = vpop.f32.mrf.mxu0
        %2060 = vmatprep.mubr.bf16.mxu0 0
        %2061 = vmatmul.mubr.bf16.gmra.mxu0 %v1962
        %v2062 = vpop.f32.mrf.mxu0
        %v2063 = vadd.f32 0.0, %v2062
        %v2064 = vpop.f32.mrf.mxu0
        %v2065 = vpop.f32.mrf.mxu0
        %v2066 = vadd.f32 0.0, %v2065
        %v2067 = vpop.f32.mrf.mxu0
        %2068 = vmatprep.mubr.bf16.mxu0 0
        %2069 = vmatmul.mubr.bf16.gmra.mxu0 %v1965
        %v2070 = vpop.f32.mrf.mxu0
        %v2071 = vadd.f32 0.0, %v2070
        %v2072 = vpop.f32.mrf.mxu0
        %v2073 = vpop.f32.mrf.mxu0
        %v2074 = vadd.f32 0.0, %v2073
        %v2075 = vpop.f32.mrf.mxu0
        %2076 = vmatprep.mubr.bf16.mxu0 0
        %2077 = vmatmul.mubr.bf16.gmra.mxu0 %v1968
        %v2078 = vpop.f32.mrf.mxu0
        %v2079 = vadd.f32 0.0, %v2078
        %v2080 = vpop.f32.mrf.mxu0
        %v2081 = vpop.f32.mrf.mxu0
        %v2082 = vadd.f32 0.0, %v2081
        %v2083 = vpop.f32.mrf.mxu0
        %2084 = vmatprep.mubr.bf16.mxu0 0
        %2085 = vmatmul.mubr.bf16.gmra.mxu0 %v1971
        %v2086 = vpop.f32.mrf.mxu0
        %v2087 = vadd.f32 0.0, %v2086
        %v2088 = vpop.f32.mrf.mxu0
        %v2089 = vpop.f32.mrf.mxu0
        %v2090 = vadd.f32 0.0, %v2089
        %v2091 = vpop.f32.mrf.mxu0
        %2092 = vmatprep.mubr.bf16.mxu0 0
        %2093 = vmatmul.mubr.bf16.gmra.mxu0 %v1974
        %v2094 = vpop.f32.mrf.mxu0
        %v2095 = vadd.f32 0.0, %v2094
        %v2096 = vpop.f32.mrf.mxu0
        %v2097 = vpop.f32.mrf.mxu0
        %v2098 = vadd.f32 0.0, %v2097
        %v2099 = vpop.f32.mrf.mxu0
        %2100 = vmatprep.mubr.bf16.mxu0 0
        %2101 = vmatmul.mubr.bf16.gmra.mxu0 %v1977
        %v2102 = vpop.f32.mrf.mxu0
        %v2103 = vadd.f32 0.0, %v2102
        %v2104 = vpop.f32.mrf.mxu0
        %v2105 = vpop.f32.mrf.mxu0
        %v2106 = vadd.f32 0.0, %v2105
        %v2107 = vpop.f32.mrf.mxu0
        %2108 = vmatprep.mubr.bf16.mxu0 0
        %2109 = vmatmul.mubr.bf16.gmra.mxu0 %v1980
        %v2110 = vpop.f32.mrf.mxu0
        %v2111 = vadd.f32 0.0, %v2110
        %v2112 = vpop.f32.mrf.mxu0
        %v2113 = vpop.f32.mrf.mxu0
        %v2114 = vadd.f32 0.0, %v2113
        %v2115 = vpop.f32.mrf.mxu0
        %2116 = vmatprep.mubr.bf16.mxu0 0
        %2117 = vmatmul.mubr.bf16.gmra.mxu0 %v1983
        %v2118 = vpop.f32.mrf.mxu0
        %v2119 = vadd.f32 0.0, %v2118
        %v2120 = vpop.f32.mrf.mxu0
        %v2121 = vpop.f32.mrf.mxu0
        %v2122 = vadd.f32 0.0, %v2121
        %v2123 = vpop.f32.mrf.mxu0
        %2124 = vmatprep.mubr.bf16.mxu0 0
        %2125 = vmatmul.mubr.bf16.gmra.mxu0 %v1986
        %v2126 = vpop.f32.mrf.mxu0
        %v2127 = vadd.f32 0.0, %v2126
        %v2128 = vpop.f32.mrf.mxu0
        %v2129 = vpop.f32.mrf.mxu0
        %v2130 = vadd.f32 0.0, %v2129
        %v2131 = vpop.f32.mrf.mxu0
        %2132 = vmatprep.mubr.bf16.mxu0 0
        %2133 = vmatmul.mubr.bf16.gmra.mxu0 %v1989
        %v2134 = vpop.f32.mrf.mxu0
        %v2135 = vadd.f32 0.0, %v2134
        %v2136 = vpop.f32.mrf.mxu0
        %v2137 = vpop.f32.mrf.mxu0
        %v2138 = vadd.f32 0.0, %v2137
        %v2139 = vpop.f32.mrf.mxu0
        %2140 = vmatprep.mubr.bf16.mxu0 0
        %2141 = vmatmul.mubr.bf16.gmra.mxu0 %v1992
        %v2142 = vpop.f32.mrf.mxu0
        %v2143 = vadd.f32 0.0, %v2142
        %v2144 = vpop.f32.mrf.mxu0
        %v2145 = vpop.f32.mrf.mxu0
        %v2146 = vadd.f32 0.0, %v2145
        %v2147 = vpop.f32.mrf.mxu0
        %2148 = vmatprep.mubr.bf16.mxu0 0
        %2149 = vmatmul.mubr.bf16.gmra.mxu0 %v1995
        %v2150 = vpop.f32.mrf.mxu0
        %v2151 = vadd.f32 0.0, %v2150
        %v2152 = vpop.f32.mrf.mxu0
        %v2153 = vpop.f32.mrf.mxu0
        %v2154 = vadd.f32 0.0, %v2153
        %v2155 = vpop.f32.mrf.mxu0
        %2156 = vmatprep.mubr.bf16.mxu0 0
        %2157 = vmatmul.mubr.bf16.gmra.mxu0 %v1998
        %v2158 = vpop.f32.mrf.mxu0
        %v2159 = vadd.f32 0.0, %v2158
        %v2160 = vpop.f32.mrf.mxu0
        %v2161 = vpop.f32.mrf.mxu0
        %v2162 = vadd.f32 0.0, %v2161
        %v2163 = vpop.f32.mrf.mxu0
        %2164 = vmatprep.mubr.bf16.mxu0 0
        %2165 = vmatmul.mubr.bf16.gmra.mxu0 %v2001
        %v2166 = vpop.f32.mrf.mxu0
        %v2167 = vadd.f32 0.0, %v2166
        %v2168 = vpop.f32.mrf.mxu0
        %v2169 = vpop.f32.mrf.mxu0
        %v2170 = vadd.f32 0.0, %v2169
        %v2171 = vpop.f32.mrf.mxu0
        %2172 = vmatprep.mubr.bf16.mxu0 0
        %2173 = vmatmul.mubr.bf16.gmra.mxu0 %v2004
        %v2174 = vpop.f32.mrf.mxu0
        %v2175 = vadd.f32 0.0, %v2174
        %v2176 = vpop.f32.mrf.mxu0
        %v2177 = vpop.f32.mrf.mxu0
        %v2178 = vadd.f32 0.0, %v2177
        %v2179 = vpop.f32.mrf.mxu0
        %2180 = vmatprep.mubr.bf16.mxu0 0
        %2181 = vmatmul.mubr.bf16.gmra.mxu0 %v2007
        %v2182 = vpop.f32.mrf.mxu0
        %v2183 = vadd.f32 0.0, %v2182
        %v2184 = vpop.f32.mrf.mxu0
        %v2185 = vpop.f32.mrf.mxu0
        %v2186 = vadd.f32 0.0, %v2185
        %v2187 = vpop.f32.mrf.mxu0
        %2188 = vdwg.mxu0
        %v2189 = vadd.f32 %v1863, %v2047
        %v2190 = vadd.f32 %v1864, %v2050
        %v2191 = vadd.f32 %v1865, %v2055
        %v2192 = vadd.f32 %v1866, %v2058
        %v2193 = vadd.f32 %v1867, %v2063
        %v2194 = vadd.f32 %v1868, %v2066
        %v2195 = vadd.f32 %v1869, %v2071
        %v2196 = vadd.f32 %v1870, %v2074
        %v2197 = vadd.f32 %v1871, %v2079
        %v2198 = vadd.f32 %v1872, %v2082
        %v2199 = vadd.f32 %v1873, %v2087
        %v2200 = vadd.f32 %v1874, %v2090
        %v2201 = vadd.f32 %v1875, %v2095
        %v2202 = vadd.f32 %v1876, %v2098
        %v2203 = vadd.f32 %v1877, %v2103
        %v2204 = vadd.f32 %v1878, %v2106
        %v2205 = vadd.f32 %v1879, %v2111
        %v2206 = vadd.f32 %v1880, %v2114
        %v2207 = vadd.f32 %v1881, %v2119
        %v2208 = vadd.f32 %v1882, %v2122
        %v2209 = vadd.f32 %v1883, %v2127
        %v2210 = vadd.f32 %v1884, %v2130
        %v2211 = vadd.f32 %v1885, %v2135
        %v2212 = vadd.f32 %v1886, %v2138
        %v2213 = vadd.f32 %v1887, %v2143
        %v2214 = vadd.f32 %v1888, %v2146
        %v2215 = vadd.f32 %v1889, %v2151
        %v2216 = vadd.f32 %v1890, %v2154
        %v2217 = vadd.f32 %v1891, %v2159
        %v2218 = vadd.f32 %v1892, %v2162
        %v2219 = vadd.f32 %v1893, %v2167
        %v2220 = vadd.f32 %v1894, %v2170
        %v2221 = vadd.f32 %v1895, %v2175
        %v2222 = vadd.f32 %v1896, %v2178
        %v2223 = vadd.f32 %v1897, %v2183
        %v2224 = vadd.f32 %v1898, %v2186
        %v2225 = vld [vmem:[%s302 + $0x29] sm:$0xff]
        %v2226 = vld [vmem:[%s302 + $0x31] sm:$0xff]
        %v2227 = vld [vmem:[%s302 + $0x39] sm:$0xff]
        %v2228 = vld [vmem:[%s302 + $0x41] sm:$0xff]
        %v2229 = vld [vmem:[%s302 + $0x49] sm:$0xff]
        %v2230 = vld [vmem:[%s302 + $0x51] sm:$0xff]
        %v2231 = vld [vmem:[%s302 + $0x59] sm:$0xff]
        %v2232 = vld [vmem:[%s302 + $0x61] sm:$0xff]
        %v2233 = vld [vmem:[%s302 + $0x69] sm:$0xff]
        %v2234 = vld [vmem:[%s302 + $0x71] sm:$0xff]
        %v2235 = vld [vmem:[%s302 + $0x79] sm:$0xff]
        %v2236 = vld [vmem:[%s302 + $0x81] sm:$0xff]
        %v2237 = vld [vmem:[%s302 + $0x89] sm:$0xff]
        %v2238 = vld [vmem:[%s302 + $0x91] sm:$0xff]
        %v2239 = vld [vmem:[%s302 + $0x99] sm:$0xff]
        %v2240 = vld [vmem:[%s302 + $0xa1] sm:$0xff]
        %v2241 = vld [vmem:[%s302 + $0xa9] sm:$0xff]
        %v2242 = vld [vmem:[%s302 + $0xb1] sm:$0xff]
        %v2243 = vld [vmem:[%s302 + $0xb9] sm:$0xff]
        %v2244 = vld [vmem:[%s302 + $0xc1] sm:$0xff]
        %v2245 = vld [vmem:[%s302 + $0xc9] sm:$0xff]
        %v2246 = vld [vmem:[%s302 + $0xd1] sm:$0xff]
        %v2247 = vld [vmem:[%s302 + $0xd9] sm:$0xff]
        %v2248 = vld [vmem:[%s302 + $0xe1] sm:$0xff]
        %v2249 = vld [vmem:[%s302 + $0xe9] sm:$0xff]
        %v2250 = vld [vmem:[%s302 + $0xf1] sm:$0xff]
        %v2251 = vld [vmem:[%s302 + $0xf9] sm:$0xff]
        %v2252 = vld [vmem:[%s302 + $0x101] sm:$0xff]
        %v2253 = vld [vmem:[%s302 + $0x109] sm:$0xff]
        %v2254 = vld [vmem:[%s302 + $0x111] sm:$0xff]
        %v2255 = vld [vmem:[%s302 + $0x119] sm:$0xff]
        %v2256 = vld [vmem:[%s302 + $0x121] sm:$0xff]
        %v2257 = vld [vmem:[%s302 + $0x129] sm:$0xff]
        %v2258 = vld [vmem:[%s302 + $0x131] sm:$0xff]
        %v2259 = vld [vmem:[%s302 + $0x139] sm:$0xff]
        %v2260 = vld [vmem:[%s302 + $0x141] sm:$0xff]
        %v2261 = vpack.c.bf16 %v2226, %v2225
        %v2262 = vpack.c.bf16 %v2228, %v2227
        %v2263 = vpack.c.bf16 %v2230, %v2229
        %v2264 = vpack.c.bf16 %v2232, %v2231
        %v2265 = vpack.c.bf16 %v2234, %v2233
        %v2266 = vpack.c.bf16 %v2236, %v2235
        %v2267 = vpack.c.bf16 %v2238, %v2237
        %v2268 = vpack.c.bf16 %v2240, %v2239
        %v2269 = vpack.c.bf16 %v2242, %v2241
        %v2270 = vpack.c.bf16 %v2244, %v2243
        %v2271 = vpack.c.bf16 %v2246, %v2245
        %v2272 = vpack.c.bf16 %v2248, %v2247
        %v2273 = vpack.c.bf16 %v2250, %v2249
        %v2274 = vpack.c.bf16 %v2252, %v2251
        %v2275 = vpack.c.bf16 %v2254, %v2253
        %v2276 = vpack.c.bf16 %v2256, %v2255
        %v2277 = vpack.c.bf16 %v2258, %v2257
        %v2278 = vpack.c.bf16 %v2260, %v2259
        %s2279 = scalar_lea.vmem %s1, 12
        %v2280 = vld [vmem:[%s2279] sm:$0x3]
        %v2282 = vsel %vm451, %v2261, 0
        %v2285 = vsel %vm451, %v2262, 0
        %v2288 = vsel %vm451, %v2263, 0
        %v2291 = vsel %vm451, %v2264, 0
        %v2294 = vsel %vm451, %v2265, 0
        %v2297 = vsel %vm451, %v2266, 0
        %v2300 = vsel %vm451, %v2267, 0
        %v2303 = vsel %vm451, %v2268, 0
        %v2306 = vsel %vm451, %v2269, 0
        %v2309 = vsel %vm451, %v2270, 0
        %v2312 = vsel %vm451, %v2271, 0
        %v2315 = vsel %vm451, %v2272, 0
        %v2318 = vsel %vm451, %v2273, 0
        %v2321 = vsel %vm451, %v2274, 0
        %v2324 = vsel %vm451, %v2275, 0
        %v2327 = vsel %vm451, %v2276, 0
        %v2330 = vsel %vm451, %v2277, 0
        %v2333 = vsel %vm451, %v2278, 0
        %v2336 = vsel %vm506, %v2280, 0
        %2338 = vmatprep.subr.bf16.mxu0 0
        %2339 = vmatpush1.bf16.msra.mxu0 0
        %2340 = vmatprep.subr.bf16.mxu0 0
        %2341 = vmatpush1.bf16.msra.mxu0 0
        %2342 = vmatprep.subr.bf16.mxu0 0
        %2343 = vmatpush1.bf16.msra.mxu0 0
        %2344 = vmatprep.subr.bf16.mxu0 0
        %2345 = vmatpush1.bf16.msra.mxu0 0
        %2346 = vmatprep.subr.bf16.mxu0 0
        %2347 = vmatpush1.bf16.msra.mxu0 0
        %2348 = vmatprep.subr.bf16.mxu0 0
        %2349 = vmatpush1.bf16.msra.mxu0 0
        %2350 = vmatprep.subr.bf16.mxu0 0
        %2351 = vmatpush1.bf16.msra.mxu0 0
        %2352 = vmatprep.subr.bf16.mxu0 0
        %2353 = vmatpush1.bf16.msra.mxu0 %v2336
        %2354 = vmatprep.subr.bf16.mxu0 0
        %2355 = vmatpush2.bf16.msra.mxu0 0
        %2356 = vmatprep.subr.bf16.mxu0 0
        %2357 = vmatpush2.bf16.msra.mxu0 0
        %2358 = vmatprep.subr.bf16.mxu0 0
        %2359 = vmatpush2.bf16.msra.mxu0 0
        %2360 = vmatprep.subr.bf16.mxu0 0
        %2361 = vmatpush2.bf16.msra.mxu0 0
        %2362 = vmatprep.subr.bf16.mxu0 0
        %2363 = vmatpush2.bf16.msra.mxu0 0
        %2364 = vmatprep.subr.bf16.mxu0 0
        %2365 = vmatpush2.bf16.msra.mxu0 0
        %2366 = vmatprep.subr.bf16.mxu0 0
        %2367 = vmatpush2.bf16.msra.mxu0 0
        %2368 = vmatprep.subr.bf16.mxu0 0
        %2369 = vmatpush2.bf16.msra.mxu0 0
        %2370 = vmatprep.mubr.bf16.mxu0 0
        %2371 = vmatmul.mubr.bf16.gmra.mxu0 %v2282
        %v2372 = vpop.f32.mrf.mxu0
        %v2373 = vadd.f32 0.0, %v2372
        %v2374 = vpop.f32.mrf.mxu0
        %v2375 = vpop.f32.mrf.mxu0
        %v2376 = vadd.f32 0.0, %v2375
        %v2377 = vpop.f32.mrf.mxu0
        %2378 = vmatprep.mubr.bf16.mxu0 0
        %2379 = vmatmul.mubr.bf16.gmra.mxu0 %v2285
        %v2380 = vpop.f32.mrf.mxu0
        %v2381 = vadd.f32 0.0, %v2380
        %v2382 = vpop.f32.mrf.mxu0
        %v2383 = vpop.f32.mrf.mxu0
        %v2384 = vadd.f32 0.0, %v2383
        %v2385 = vpop.f32.mrf.mxu0
        %2386 = vmatprep.mubr.bf16.mxu0 0
        %2387 = vmatmul.mubr.bf16.gmra.mxu0 %v2288
        %v2388 = vpop.f32.mrf.mxu0
        %v2389 = vadd.f32 0.0, %v2388
        %v2390 = vpop.f32.mrf.mxu0
        %v2391 = vpop.f32.mrf.mxu0
        %v2392 = vadd.f32 0.0, %v2391
        %v2393 = vpop.f32.mrf.mxu0
        %2394 = vmatprep.mubr.bf16.mxu0 0
        %2395 = vmatmul.mubr.bf16.gmra.mxu0 %v2291
        %v2396 = vpop.f32.mrf.mxu0
        %v2397 = vadd.f32 0.0, %v2396
        %v2398 = vpop.f32.mrf.mxu0
        %v2399 = vpop.f32.mrf.mxu0
        %v2400 = vadd.f32 0.0, %v2399
        %v2401 = vpop.f32.mrf.mxu0
        %2402 = vmatprep.mubr.bf16.mxu0 0
        %2403 = vmatmul.mubr.bf16.gmra.mxu0 %v2294
        %v2404 = vpop.f32.mrf.mxu0
        %v2405 = vadd.f32 0.0, %v2404
        %v2406 = vpop.f32.mrf.mxu0
        %v2407 = vpop.f32.mrf.mxu0
        %v2408 = vadd.f32 0.0, %v2407
        %v2409 = vpop.f32.mrf.mxu0
        %2410 = vmatprep.mubr.bf16.mxu0 0
        %2411 = vmatmul.mubr.bf16.gmra.mxu0 %v2297
        %v2412 = vpop.f32.mrf.mxu0
        %v2413 = vadd.f32 0.0, %v2412
        %v2414 = vpop.f32.mrf.mxu0
        %v2415 = vpop.f32.mrf.mxu0
        %v2416 = vadd.f32 0.0, %v2415
        %v2417 = vpop.f32.mrf.mxu0
        %2418 = vmatprep.mubr.bf16.mxu0 0
        %2419 = vmatmul.mubr.bf16.gmra.mxu0 %v2300
        %v2420 = vpop.f32.mrf.mxu0
        %v2421 = vadd.f32 0.0, %v2420
        %v2422 = vpop.f32.mrf.mxu0
        %v2423 = vpop.f32.mrf.mxu0
        %v2424 = vadd.f32 0.0, %v2423
        %v2425 = vpop.f32.mrf.mxu0
        %2426 = vmatprep.mubr.bf16.mxu0 0
        %2427 = vmatmul.mubr.bf16.gmra.mxu0 %v2303
        %v2428 = vpop.f32.mrf.mxu0
        %v2429 = vadd.f32 0.0, %v2428
        %v2430 = vpop.f32.mrf.mxu0
        %v2431 = vpop.f32.mrf.mxu0
        %v2432 = vadd.f32 0.0, %v2431
        %v2433 = vpop.f32.mrf.mxu0
        %2434 = vmatprep.mubr.bf16.mxu0 0
        %2435 = vmatmul.mubr.bf16.gmra.mxu0 %v2306
        %v2436 = vpop.f32.mrf.mxu0
        %v2437 = vadd.f32 0.0, %v2436
        %v2438 = vpop.f32.mrf.mxu0
        %v2439 = vpop.f32.mrf.mxu0
        %v2440 = vadd.f32 0.0, %v2439
        %v2441 = vpop.f32.mrf.mxu0
        %2442 = vmatprep.mubr.bf16.mxu0 0
        %2443 = vmatmul.mubr.bf16.gmra.mxu0 %v2309
        %v2444 = vpop.f32.mrf.mxu0
        %v2445 = vadd.f32 0.0, %v2444
        %v2446 = vpop.f32.mrf.mxu0
        %v2447 = vpop.f32.mrf.mxu0
        %v2448 = vadd.f32 0.0, %v2447
        %v2449 = vpop.f32.mrf.mxu0
        %2450 = vmatprep.mubr.bf16.mxu0 0
        %2451 = vmatmul.mubr.bf16.gmra.mxu0 %v2312
        %v2452 = vpop.f32.mrf.mxu0
        %v2453 = vadd.f32 0.0, %v2452
        %v2454 = vpop.f32.mrf.mxu0
        %v2455 = vpop.f32.mrf.mxu0
        %v2456 = vadd.f32 0.0, %v2455
        %v2457 = vpop.f32.mrf.mxu0
        %2458 = vmatprep.mubr.bf16.mxu0 0
        %2459 = vmatmul.mubr.bf16.gmra.mxu0 %v2315
        %v2460 = vpop.f32.mrf.mxu0
        %v2461 = vadd.f32 0.0, %v2460
        %v2462 = vpop.f32.mrf.mxu0
        %v2463 = vpop.f32.mrf.mxu0
        %v2464 = vadd.f32 0.0, %v2463
        %v2465 = vpop.f32.mrf.mxu0
        %2466 = vmatprep.mubr.bf16.mxu0 0
        %2467 = vmatmul.mubr.bf16.gmra.mxu0 %v2318
        %v2468 = vpop.f32.mrf.mxu0
        %v2469 = vadd.f32 0.0, %v2468
        %v2470 = vpop.f32.mrf.mxu0
        %v2471 = vpop.f32.mrf.mxu0
        %v2472 = vadd.f32 0.0, %v2471
        %v2473 = vpop.f32.mrf.mxu0
        %2474 = vmatprep.mubr.bf16.mxu0 0
        %2475 = vmatmul.mubr.bf16.gmra.mxu0 %v2321
        %v2476 = vpop.f32.mrf.mxu0
        %v2477 = vadd.f32 0.0, %v2476
        %v2478 = vpop.f32.mrf.mxu0
        %v2479 = vpop.f32.mrf.mxu0
        %v2480 = vadd.f32 0.0, %v2479
        %v2481 = vpop.f32.mrf.mxu0
        %2482 = vmatprep.mubr.bf16.mxu0 0
        %2483 = vmatmul.mubr.bf16.gmra.mxu0 %v2324
        %v2484 = vpop.f32.mrf.mxu0
        %v2485 = vadd.f32 0.0, %v2484
        %v2486 = vpop.f32.mrf.mxu0
        %v2487 = vpop.f32.mrf.mxu0
        %v2488 = vadd.f32 0.0, %v2487
        %v2489 = vpop.f32.mrf.mxu0
        %2490 = vmatprep.mubr.bf16.mxu0 0
        %2491 = vmatmul.mubr.bf16.gmra.mxu0 %v2327
        %v2492 = vpop.f32.mrf.mxu0
        %v2493 = vadd.f32 0.0, %v2492
        %v2494 = vpop.f32.mrf.mxu0
        %v2495 = vpop.f32.mrf.mxu0
        %v2496 = vadd.f32 0.0, %v2495
        %v2497 = vpop.f32.mrf.mxu0
        %2498 = vmatprep.mubr.bf16.mxu0 0
        %2499 = vmatmul.mubr.bf16.gmra.mxu0 %v2330
        %v2500 = vpop.f32.mrf.mxu0
        %v2501 = vadd.f32 0.0, %v2500
        %v2502 = vpop.f32.mrf.mxu0
        %v2503 = vpop.f32.mrf.mxu0
        %v2504 = vadd.f32 0.0, %v2503
        %v2505 = vpop.f32.mrf.mxu0
        %2506 = vmatprep.mubr.bf16.mxu0 0
        %2507 = vmatmul.mubr.bf16.gmra.mxu0 %v2333
        %v2508 = vpop.f32.mrf.mxu0
        %v2509 = vadd.f32 0.0, %v2508
        %v2510 = vpop.f32.mrf.mxu0
        %v2511 = vpop.f32.mrf.mxu0
        %v2512 = vadd.f32 0.0, %v2511
        %v2513 = vpop.f32.mrf.mxu0
        %2514 = vdwg.mxu0
        %v2515 = vadd.f32 %v2189, %v2373
        %v2516 = vadd.f32 %v2190, %v2376
        %v2517 = vadd.f32 %v2191, %v2381
        %v2518 = vadd.f32 %v2192, %v2384
        %v2519 = vadd.f32 %v2193, %v2389
        %v2520 = vadd.f32 %v2194, %v2392
        %v2521 = vadd.f32 %v2195, %v2397
        %v2522 = vadd.f32 %v2196, %v2400
        %v2523 = vadd.f32 %v2197, %v2405
        %v2524 = vadd.f32 %v2198, %v2408
        %v2525 = vadd.f32 %v2199, %v2413
        %v2526 = vadd.f32 %v2200, %v2416
        %v2527 = vadd.f32 %v2201, %v2421
        %v2528 = vadd.f32 %v2202, %v2424
        %v2529 = vadd.f32 %v2203, %v2429
        %v2530 = vadd.f32 %v2204, %v2432
        %v2531 = vadd.f32 %v2205, %v2437
        %v2532 = vadd.f32 %v2206, %v2440
        %v2533 = vadd.f32 %v2207, %v2445
        %v2534 = vadd.f32 %v2208, %v2448
        %v2535 = vadd.f32 %v2209, %v2453
        %v2536 = vadd.f32 %v2210, %v2456
        %v2537 = vadd.f32 %v2211, %v2461
        %v2538 = vadd.f32 %v2212, %v2464
        %v2539 = vadd.f32 %v2213, %v2469
        %v2540 = vadd.f32 %v2214, %v2472
        %v2541 = vadd.f32 %v2215, %v2477
        %v2542 = vadd.f32 %v2216, %v2480
        %v2543 = vadd.f32 %v2217, %v2485
        %v2544 = vadd.f32 %v2218, %v2488
        %v2545 = vadd.f32 %v2219, %v2493
        %v2546 = vadd.f32 %v2220, %v2496
        %v2547 = vadd.f32 %v2221, %v2501
        %v2548 = vadd.f32 %v2222, %v2504
        %v2549 = vadd.f32 %v2223, %v2509
        %v2550 = vadd.f32 %v2224, %v2512
        %v2551 = vld [vmem:[%s302 + $0x2a] sm:$0xff]
        %v2552 = vld [vmem:[%s302 + $0x32] sm:$0xff]
        %v2553 = vld [vmem:[%s302 + $0x3a] sm:$0xff]
        %v2554 = vld [vmem:[%s302 + $0x42] sm:$0xff]
        %v2555 = vld [vmem:[%s302 + $0x4a] sm:$0xff]
        %v2556 = vld [vmem:[%s302 + $0x52] sm:$0xff]
        %v2557 = vld [vmem:[%s302 + $0x5a] sm:$0xff]
        %v2558 = vld [vmem:[%s302 + $0x62] sm:$0xff]
        %v2559 = vld [vmem:[%s302 + $0x6a] sm:$0xff]
        %v2560 = vld [vmem:[%s302 + $0x72] sm:$0xff]
        %v2561 = vld [vmem:[%s302 + $0x7a] sm:$0xff]
        %v2562 = vld [vmem:[%s302 + $0x82] sm:$0xff]
        %v2563 = vld [vmem:[%s302 + $0x8a] sm:$0xff]
        %v2564 = vld [vmem:[%s302 + $0x92] sm:$0xff]
        %v2565 = vld [vmem:[%s302 + $0x9a] sm:$0xff]
        %v2566 = vld [vmem:[%s302 + $0xa2] sm:$0xff]
        %v2567 = vld [vmem:[%s302 + $0xaa] sm:$0xff]
        %v2568 = vld [vmem:[%s302 + $0xb2] sm:$0xff]
        %v2569 = vld [vmem:[%s302 + $0xba] sm:$0xff]
        %v2570 = vld [vmem:[%s302 + $0xc2] sm:$0xff]
        %v2571 = vld [vmem:[%s302 + $0xca] sm:$0xff]
        %v2572 = vld [vmem:[%s302 + $0xd2] sm:$0xff]
        %v2573 = vld [vmem:[%s302 + $0xda] sm:$0xff]
        %v2574 = vld [vmem:[%s302 + $0xe2] sm:$0xff]
        %v2575 = vld [vmem:[%s302 + $0xea] sm:$0xff]
        %v2576 = vld [vmem:[%s302 + $0xf2] sm:$0xff]
        %v2577 = vld [vmem:[%s302 + $0xfa] sm:$0xff]
        %v2578 = vld [vmem:[%s302 + $0x102] sm:$0xff]
        %v2579 = vld [vmem:[%s302 + $0x10a] sm:$0xff]
        %v2580 = vld [vmem:[%s302 + $0x112] sm:$0xff]
        %v2581 = vld [vmem:[%s302 + $0x11a] sm:$0xff]
        %v2582 = vld [vmem:[%s302 + $0x122] sm:$0xff]
        %v2583 = vld [vmem:[%s302 + $0x12a] sm:$0xff]
        %v2584 = vld [vmem:[%s302 + $0x132] sm:$0xff]
        %v2585 = vld [vmem:[%s302 + $0x13a] sm:$0xff]
        %v2586 = vld [vmem:[%s302 + $0x142] sm:$0xff]
        %v2587 = vpack.c.bf16 %v2552, %v2551
        %v2588 = vpack.c.bf16 %v2554, %v2553
        %v2589 = vpack.c.bf16 %v2556, %v2555
        %v2590 = vpack.c.bf16 %v2558, %v2557
        %v2591 = vpack.c.bf16 %v2560, %v2559
        %v2592 = vpack.c.bf16 %v2562, %v2561
        %v2593 = vpack.c.bf16 %v2564, %v2563
        %v2594 = vpack.c.bf16 %v2566, %v2565
        %v2595 = vpack.c.bf16 %v2568, %v2567
        %v2596 = vpack.c.bf16 %v2570, %v2569
        %v2597 = vpack.c.bf16 %v2572, %v2571
        %v2598 = vpack.c.bf16 %v2574, %v2573
        %v2599 = vpack.c.bf16 %v2576, %v2575
        %v2600 = vpack.c.bf16 %v2578, %v2577
        %v2601 = vpack.c.bf16 %v2580, %v2579
        %v2602 = vpack.c.bf16 %v2582, %v2581
        %v2603 = vpack.c.bf16 %v2584, %v2583
        %v2604 = vpack.c.bf16 %v2586, %v2585
        %s2605 = scalar_lea.vmem %s1, 14
        %v2606 = vld [vmem:[%s2605] sm:$0x3]
        %v2608 = vsel %vm451, %v2587, 0
        %v2611 = vsel %vm451, %v2588, 0
        %v2614 = vsel %vm451, %v2589, 0
        %v2617 = vsel %vm451, %v2590, 0
        %v2620 = vsel %vm451, %v2591, 0
        %v2623 = vsel %vm451, %v2592, 0
        %v2626 = vsel %vm451, %v2593, 0
        %v2629 = vsel %vm451, %v2594, 0
        %v2632 = vsel %vm451, %v2595, 0
        %v2635 = vsel %vm451, %v2596, 0
        %v2638 = vsel %vm451, %v2597, 0
        %v2641 = vsel %vm451, %v2598, 0
        %v2644 = vsel %vm451, %v2599, 0
        %v2647 = vsel %vm451, %v2600, 0
        %v2650 = vsel %vm451, %v2601, 0
        %v2653 = vsel %vm451, %v2602, 0
        %v2656 = vsel %vm451, %v2603, 0
        %v2659 = vsel %vm451, %v2604, 0
        %v2662 = vsel %vm506, %v2606, 0
        %2664 = vmatprep.subr.bf16.mxu0 0
        %2665 = vmatpush1.bf16.msra.mxu0 0
        %2666 = vmatprep.subr.bf16.mxu0 0
        %2667 = vmatpush1.bf16.msra.mxu0 0
        %2668 = vmatprep.subr.bf16.mxu0 0
        %2669 = vmatpush1.bf16.msra.mxu0 0
        %2670 = vmatprep.subr.bf16.mxu0 0
        %2671 = vmatpush1.bf16.msra.mxu0 0
        %2672 = vmatprep.subr.bf16.mxu0 0
        %2673 = vmatpush1.bf16.msra.mxu0 0
        %2674 = vmatprep.subr.bf16.mxu0 0
        %2675 = vmatpush1.bf16.msra.mxu0 0
        %2676 = vmatprep.subr.bf16.mxu0 0
        %2677 = vmatpush1.bf16.msra.mxu0 0
        %2678 = vmatprep.subr.bf16.mxu0 0
        %2679 = vmatpush1.bf16.msra.mxu0 %v2662
        %2680 = vmatprep.subr.bf16.mxu0 0
        %2681 = vmatpush2.bf16.msra.mxu0 0
        %2682 = vmatprep.subr.bf16.mxu0 0
        %2683 = vmatpush2.bf16.msra.mxu0 0
        %2684 = vmatprep.subr.bf16.mxu0 0
        %2685 = vmatpush2.bf16.msra.mxu0 0
        %2686 = vmatprep.subr.bf16.mxu0 0
        %2687 = vmatpush2.bf16.msra.mxu0 0
        %2688 = vmatprep.subr.bf16.mxu0 0
        %2689 = vmatpush2.bf16.msra.mxu0 0
        %2690 = vmatprep.subr.bf16.mxu0 0
        %2691 = vmatpush2.bf16.msra.mxu0 0
        %2692 = vmatprep.subr.bf16.mxu0 0
        %2693 = vmatpush2.bf16.msra.mxu0 0
        %2694 = vmatprep.subr.bf16.mxu0 0
        %2695 = vmatpush2.bf16.msra.mxu0 0
        %2696 = vmatprep.mubr.bf16.mxu0 0
        %2697 = vmatmul.mubr.bf16.gmra.mxu0 %v2608
        %v2698 = vpop.f32.mrf.mxu0
        %v2699 = vadd.f32 0.0, %v2698
        %v2700 = vpop.f32.mrf.mxu0
        %v2701 = vpop.f32.mrf.mxu0
        %v2702 = vadd.f32 0.0, %v2701
        %v2703 = vpop.f32.mrf.mxu0
        %2704 = vmatprep.mubr.bf16.mxu0 0
        %2705 = vmatmul.mubr.bf16.gmra.mxu0 %v2611
        %v2706 = vpop.f32.mrf.mxu0
        %v2707 = vadd.f32 0.0, %v2706
        %v2708 = vpop.f32.mrf.mxu0
        %v2709 = vpop.f32.mrf.mxu0
        %v2710 = vadd.f32 0.0, %v2709
        %v2711 = vpop.f32.mrf.mxu0
        %2712 = vmatprep.mubr.bf16.mxu0 0
        %2713 = vmatmul.mubr.bf16.gmra.mxu0 %v2614
        %v2714 = vpop.f32.mrf.mxu0
        %v2715 = vadd.f32 0.0, %v2714
        %v2716 = vpop.f32.mrf.mxu0
        %v2717 = vpop.f32.mrf.mxu0
        %v2718 = vadd.f32 0.0, %v2717
        %v2719 = vpop.f32.mrf.mxu0
        %2720 = vmatprep.mubr.bf16.mxu0 0
        %2721 = vmatmul.mubr.bf16.gmra.mxu0 %v2617
        %v2722 = vpop.f32.mrf.mxu0
        %v2723 = vadd.f32 0.0, %v2722
        %v2724 = vpop.f32.mrf.mxu0
        %v2725 = vpop.f32.mrf.mxu0
        %v2726 = vadd.f32 0.0, %v2725
        %v2727 = vpop.f32.mrf.mxu0
        %2728 = vmatprep.mubr.bf16.mxu0 0
        %2729 = vmatmul.mubr.bf16.gmra.mxu0 %v2620
        %v2730 = vpop.f32.mrf.mxu0
        %v2731 = vadd.f32 0.0, %v2730
        %v2732 = vpop.f32.mrf.mxu0
        %v2733 = vpop.f32.mrf.mxu0
        %v2734 = vadd.f32 0.0, %v2733
        %v2735 = vpop.f32.mrf.mxu0
        %2736 = vmatprep.mubr.bf16.mxu0 0
        %2737 = vmatmul.mubr.bf16.gmra.mxu0 %v2623
        %v2738 = vpop.f32.mrf.mxu0
        %v2739 = vadd.f32 0.0, %v2738
        %v2740 = vpop.f32.mrf.mxu0
        %v2741 = vpop.f32.mrf.mxu0
        %v2742 = vadd.f32 0.0, %v2741
        %v2743 = vpop.f32.mrf.mxu0
        %2744 = vmatprep.mubr.bf16.mxu0 0
        %2745 = vmatmul.mubr.bf16.gmra.mxu0 %v2626
        %v2746 = vpop.f32.mrf.mxu0
        %v2747 = vadd.f32 0.0, %v2746
        %v2748 = vpop.f32.mrf.mxu0
        %v2749 = vpop.f32.mrf.mxu0
        %v2750 = vadd.f32 0.0, %v2749
        %v2751 = vpop.f32.mrf.mxu0
        %2752 = vmatprep.mubr.bf16.mxu0 0
        %2753 = vmatmul.mubr.bf16.gmra.mxu0 %v2629
        %v2754 = vpop.f32.mrf.mxu0
        %v2755 = vadd.f32 0.0, %v2754
        %v2756 = vpop.f32.mrf.mxu0
        %v2757 = vpop.f32.mrf.mxu0
        %v2758 = vadd.f32 0.0, %v2757
        %v2759 = vpop.f32.mrf.mxu0
        %2760 = vmatprep.mubr.bf16.mxu0 0
        %2761 = vmatmul.mubr.bf16.gmra.mxu0 %v2632
        %v2762 = vpop.f32.mrf.mxu0
        %v2763 = vadd.f32 0.0, %v2762
        %v2764 = vpop.f32.mrf.mxu0
        %v2765 = vpop.f32.mrf.mxu0
        %v2766 = vadd.f32 0.0, %v2765
        %v2767 = vpop.f32.mrf.mxu0
        %2768 = vmatprep.mubr.bf16.mxu0 0
        %2769 = vmatmul.mubr.bf16.gmra.mxu0 %v2635
        %v2770 = vpop.f32.mrf.mxu0
        %v2771 = vadd.f32 0.0, %v2770
        %v2772 = vpop.f32.mrf.mxu0
        %v2773 = vpop.f32.mrf.mxu0
        %v2774 = vadd.f32 0.0, %v2773
        %v2775 = vpop.f32.mrf.mxu0
        %2776 = vmatprep.mubr.bf16.mxu0 0
        %2777 = vmatmul.mubr.bf16.gmra.mxu0 %v2638
        %v2778 = vpop.f32.mrf.mxu0
        %v2779 = vadd.f32 0.0, %v2778
        %v2780 = vpop.f32.mrf.mxu0
        %v2781 = vpop.f32.mrf.mxu0
        %v2782 = vadd.f32 0.0, %v2781
        %v2783 = vpop.f32.mrf.mxu0
        %2784 = vmatprep.mubr.bf16.mxu0 0
        %2785 = vmatmul.mubr.bf16.gmra.mxu0 %v2641
        %v2786 = vpop.f32.mrf.mxu0
        %v2787 = vadd.f32 0.0, %v2786
        %v2788 = vpop.f32.mrf.mxu0
        %v2789 = vpop.f32.mrf.mxu0
        %v2790 = vadd.f32 0.0, %v2789
        %v2791 = vpop.f32.mrf.mxu0
        %2792 = vmatprep.mubr.bf16.mxu0 0
        %2793 = vmatmul.mubr.bf16.gmra.mxu0 %v2644
        %v2794 = vpop.f32.mrf.mxu0
        %v2795 = vadd.f32 0.0, %v2794
        %v2796 = vpop.f32.mrf.mxu0
        %v2797 = vpop.f32.mrf.mxu0
        %v2798 = vadd.f32 0.0, %v2797
        %v2799 = vpop.f32.mrf.mxu0
        %2800 = vmatprep.mubr.bf16.mxu0 0
        %2801 = vmatmul.mubr.bf16.gmra.mxu0 %v2647
        %v2802 = vpop.f32.mrf.mxu0
        %v2803 = vadd.f32 0.0, %v2802
        %v2804 = vpop.f32.mrf.mxu0
        %v2805 = vpop.f32.mrf.mxu0
        %v2806 = vadd.f32 0.0, %v2805
        %v2807 = vpop.f32.mrf.mxu0
        %2808 = vmatprep.mubr.bf16.mxu0 0
        %2809 = vmatmul.mubr.bf16.gmra.mxu0 %v2650
        %v2810 = vpop.f32.mrf.mxu0
        %v2811 = vadd.f32 0.0, %v2810
        %v2812 = vpop.f32.mrf.mxu0
        %v2813 = vpop.f32.mrf.mxu0
        %v2814 = vadd.f32 0.0, %v2813
        %v2815 = vpop.f32.mrf.mxu0
        %2816 = vmatprep.mubr.bf16.mxu0 0
        %2817 = vmatmul.mubr.bf16.gmra.mxu0 %v2653
        %v2818 = vpop.f32.mrf.mxu0
        %v2819 = vadd.f32 0.0, %v2818
        %v2820 = vpop.f32.mrf.mxu0
        %v2821 = vpop.f32.mrf.mxu0
        %v2822 = vadd.f32 0.0, %v2821
        %v2823 = vpop.f32.mrf.mxu0
        %2824 = vmatprep.mubr.bf16.mxu0 0
        %2825 = vmatmul.mubr.bf16.gmra.mxu0 %v2656
        %v2826 = vpop.f32.mrf.mxu0
        %v2827 = vadd.f32 0.0, %v2826
        %v2828 = vpop.f32.mrf.mxu0
        %v2829 = vpop.f32.mrf.mxu0
        %v2830 = vadd.f32 0.0, %v2829
        %v2831 = vpop.f32.mrf.mxu0
        %2832 = vmatprep.mubr.bf16.mxu0 0
        %2833 = vmatmul.mubr.bf16.gmra.mxu0 %v2659
        %v2834 = vpop.f32.mrf.mxu0
        %v2835 = vadd.f32 0.0, %v2834
        %v2836 = vpop.f32.mrf.mxu0
        %v2837 = vpop.f32.mrf.mxu0
        %v2838 = vadd.f32 0.0, %v2837
        %v2839 = vpop.f32.mrf.mxu0
        %2840 = vdwg.mxu0
        %v2841 = vadd.f32 %v2515, %v2699
        %v2842 = vadd.f32 %v2516, %v2702
        %v2843 = vadd.f32 %v2517, %v2707
        %v2844 = vadd.f32 %v2518, %v2710
        %v2845 = vadd.f32 %v2519, %v2715
        %v2846 = vadd.f32 %v2520, %v2718
        %v2847 = vadd.f32 %v2521, %v2723
        %v2848 = vadd.f32 %v2522, %v2726
        %v2849 = vadd.f32 %v2523, %v2731
        %v2850 = vadd.f32 %v2524, %v2734
        %v2851 = vadd.f32 %v2525, %v2739
        %v2852 = vadd.f32 %v2526, %v2742
        %v2853 = vadd.f32 %v2527, %v2747
        %v2854 = vadd.f32 %v2528, %v2750
        %v2855 = vadd.f32 %v2529, %v2755
        %v2856 = vadd.f32 %v2530, %v2758
        %v2857 = vadd.f32 %v2531, %v2763
        %v2858 = vadd.f32 %v2532, %v2766
        %v2859 = vadd.f32 %v2533, %v2771
        %v2860 = vadd.f32 %v2534, %v2774
        %v2861 = vadd.f32 %v2535, %v2779
        %v2862 = vadd.f32 %v2536, %v2782
        %v2863 = vadd.f32 %v2537, %v2787
        %v2864 = vadd.f32 %v2538, %v2790
        %v2865 = vadd.f32 %v2539, %v2795
        %v2866 = vadd.f32 %v2540, %v2798
        %v2867 = vadd.f32 %v2541, %v2803
        %v2868 = vadd.f32 %v2542, %v2806
        %v2869 = vadd.f32 %v2543, %v2811
        %v2870 = vadd.f32 %v2544, %v2814
        %v2871 = vadd.f32 %v2545, %v2819
        %v2872 = vadd.f32 %v2546, %v2822
        %v2873 = vadd.f32 %v2547, %v2827
        %v2874 = vadd.f32 %v2548, %v2830
        %v2875 = vadd.f32 %v2549, %v2835
        %v2876 = vadd.f32 %v2550, %v2838
        %v2877 = vld [vmem:[%s302 + $0x2b] sm:$0xff]
        %v2878 = vld [vmem:[%s302 + $0x33] sm:$0xff]
        %v2879 = vld [vmem:[%s302 + $0x3b] sm:$0xff]
        %v2880 = vld [vmem:[%s302 + $0x43] sm:$0xff]
        %v2881 = vld [vmem:[%s302 + $0x4b] sm:$0xff]
        %v2882 = vld [vmem:[%s302 + $0x53] sm:$0xff]
        %v2883 = vld [vmem:[%s302 + $0x5b] sm:$0xff]
        %v2884 = vld [vmem:[%s302 + $0x63] sm:$0xff]
        %v2885 = vld [vmem:[%s302 + $0x6b] sm:$0xff]
        %v2886 = vld [vmem:[%s302 + $0x73] sm:$0xff]
        %v2887 = vld [vmem:[%s302 + $0x7b] sm:$0xff]
        %v2888 = vld [vmem:[%s302 + $0x83] sm:$0xff]
        %v2889 = vld [vmem:[%s302 + $0x8b] sm:$0xff]
        %v2890 = vld [vmem:[%s302 + $0x93] sm:$0xff]
        %v2891 = vld [vmem:[%s302 + $0x9b] sm:$0xff]
        %v2892 = vld [vmem:[%s302 + $0xa3] sm:$0xff]
        %v2893 = vld [vmem:[%s302 + $0xab] sm:$0xff]
        %v2894 = vld [vmem:[%s302 + $0xb3] sm:$0xff]
        %v2895 = vld [vmem:[%s302 + $0xbb] sm:$0xff]
        %v2896 = vld [vmem:[%s302 + $0xc3] sm:$0xff]
        %v2897 = vld [vmem:[%s302 + $0xcb] sm:$0xff]
        %v2898 = vld [vmem:[%s302 + $0xd3] sm:$0xff]
        %v2899 = vld [vmem:[%s302 + $0xdb] sm:$0xff]
        %v2900 = vld [vmem:[%s302 + $0xe3] sm:$0xff]
        %v2901 = vld [vmem:[%s302 + $0xeb] sm:$0xff]
        %v2902 = vld [vmem:[%s302 + $0xf3] sm:$0xff]
        %v2903 = vld [vmem:[%s302 + $0xfb] sm:$0xff]
        %v2904 = vld [vmem:[%s302 + $0x103] sm:$0xff]
        %v2905 = vld [vmem:[%s302 + $0x10b] sm:$0xff]
        %v2906 = vld [vmem:[%s302 + $0x113] sm:$0xff]
        %v2907 = vld [vmem:[%s302 + $0x11b] sm:$0xff]
        %v2908 = vld [vmem:[%s302 + $0x123] sm:$0xff]
        %v2909 = vld [vmem:[%s302 + $0x12b] sm:$0xff]
        %v2910 = vld [vmem:[%s302 + $0x133] sm:$0xff]
        %v2911 = vld [vmem:[%s302 + $0x13b] sm:$0xff]
        %v2912 = vld [vmem:[%s302 + $0x143] sm:$0xff]
        %v2913 = vpack.c.bf16 %v2878, %v2877
        %v2914 = vpack.c.bf16 %v2880, %v2879
        %v2915 = vpack.c.bf16 %v2882, %v2881
        %v2916 = vpack.c.bf16 %v2884, %v2883
        %v2917 = vpack.c.bf16 %v2886, %v2885
        %v2918 = vpack.c.bf16 %v2888, %v2887
        %v2919 = vpack.c.bf16 %v2890, %v2889
        %v2920 = vpack.c.bf16 %v2892, %v2891
        %v2921 = vpack.c.bf16 %v2894, %v2893
        %v2922 = vpack.c.bf16 %v2896, %v2895
        %v2923 = vpack.c.bf16 %v2898, %v2897
        %v2924 = vpack.c.bf16 %v2900, %v2899
        %v2925 = vpack.c.bf16 %v2902, %v2901
        %v2926 = vpack.c.bf16 %v2904, %v2903
        %v2927 = vpack.c.bf16 %v2906, %v2905
        %v2928 = vpack.c.bf16 %v2908, %v2907
        %v2929 = vpack.c.bf16 %v2910, %v2909
        %v2930 = vpack.c.bf16 %v2912, %v2911
        %s2931 = scalar_lea.vmem %s1, 16
        %v2932 = vld [vmem:[%s2931] sm:$0x3]
        %v2934 = vsel %vm451, %v2913, 0
        %v2937 = vsel %vm451, %v2914, 0
        %v2940 = vsel %vm451, %v2915, 0
        %v2943 = vsel %vm451, %v2916, 0
        %v2946 = vsel %vm451, %v2917, 0
        %v2949 = vsel %vm451, %v2918, 0
        %v2952 = vsel %vm451, %v2919, 0
        %v2955 = vsel %vm451, %v2920, 0
        %v2958 = vsel %vm451, %v2921, 0
        %v2961 = vsel %vm451, %v2922, 0
        %v2964 = vsel %vm451, %v2923, 0
        %v2967 = vsel %vm451, %v2924, 0
        %v2970 = vsel %vm451, %v2925, 0
        %v2973 = vsel %vm451, %v2926, 0
        %v2976 = vsel %vm451, %v2927, 0
        %v2979 = vsel %vm451, %v2928, 0
        %v2982 = vsel %vm451, %v2929, 0
        %v2985 = vsel %vm451, %v2930, 0
        %v2988 = vsel %vm506, %v2932, 0
        %2990 = vmatprep.subr.bf16.mxu0 0
        %2991 = vmatpush1.bf16.msra.mxu0 0
        %2992 = vmatprep.subr.bf16.mxu0 0
        %2993 = vmatpush1.bf16.msra.mxu0 0
        %2994 = vmatprep.subr.bf16.mxu0 0
        %2995 = vmatpush1.bf16.msra.mxu0 0
        %2996 = vmatprep.subr.bf16.mxu0 0
        %2997 = vmatpush1.bf16.msra.mxu0 0
        %2998 = vmatprep.subr.bf16.mxu0 0
        %2999 = vmatpush1.bf16.msra.mxu0 0
        %3000 = vmatprep.subr.bf16.mxu0 0
        %3001 = vmatpush1.bf16.msra.mxu0 0
        %3002 = vmatprep.subr.bf16.mxu0 0
        %3003 = vmatpush1.bf16.msra.mxu0 0
        %3004 = vmatprep.subr.bf16.mxu0 0
        %3005 = vmatpush1.bf16.msra.mxu0 %v2988
        %3006 = vmatprep.subr.bf16.mxu0 0
        %3007 = vmatpush2.bf16.msra.mxu0 0
        %3008 = vmatprep.subr.bf16.mxu0 0
        %3009 = vmatpush2.bf16.msra.mxu0 0
        %3010 = vmatprep.subr.bf16.mxu0 0
        %3011 = vmatpush2.bf16.msra.mxu0 0
        %3012 = vmatprep.subr.bf16.mxu0 0
        %3013 = vmatpush2.bf16.msra.mxu0 0
        %3014 = vmatprep.subr.bf16.mxu0 0
        %3015 = vmatpush2.bf16.msra.mxu0 0
        %3016 = vmatprep.subr.bf16.mxu0 0
        %3017 = vmatpush2.bf16.msra.mxu0 0
        %3018 = vmatprep.subr.bf16.mxu0 0
        %3019 = vmatpush2.bf16.msra.mxu0 0
        %3020 = vmatprep.subr.bf16.mxu0 0
        %3021 = vmatpush2.bf16.msra.mxu0 0
        %3022 = vmatprep.mubr.bf16.mxu0 0
        %3023 = vmatmul.mubr.bf16.gmra.mxu0 %v2934
        %v3024 = vpop.f32.mrf.mxu0
        %v3025 = vadd.f32 0.0, %v3024
        %v3026 = vpop.f32.mrf.mxu0
        %v3027 = vpop.f32.mrf.mxu0
        %v3028 = vadd.f32 0.0, %v3027
        %v3029 = vpop.f32.mrf.mxu0
        %3030 = vmatprep.mubr.bf16.mxu0 0
        %3031 = vmatmul.mubr.bf16.gmra.mxu0 %v2937
        %v3032 = vpop.f32.mrf.mxu0
        %v3033 = vadd.f32 0.0, %v3032
        %v3034 = vpop.f32.mrf.mxu0
        %v3035 = vpop.f32.mrf.mxu0
        %v3036 = vadd.f32 0.0, %v3035
        %v3037 = vpop.f32.mrf.mxu0
        %3038 = vmatprep.mubr.bf16.mxu0 0
        %3039 = vmatmul.mubr.bf16.gmra.mxu0 %v2940
        %v3040 = vpop.f32.mrf.mxu0
        %v3041 = vadd.f32 0.0, %v3040
        %v3042 = vpop.f32.mrf.mxu0
        %v3043 = vpop.f32.mrf.mxu0
        %v3044 = vadd.f32 0.0, %v3043
        %v3045 = vpop.f32.mrf.mxu0
        %3046 = vmatprep.mubr.bf16.mxu0 0
        %3047 = vmatmul.mubr.bf16.gmra.mxu0 %v2943
        %v3048 = vpop.f32.mrf.mxu0
        %v3049 = vadd.f32 0.0, %v3048
        %v3050 = vpop.f32.mrf.mxu0
        %v3051 = vpop.f32.mrf.mxu0
        %v3052 = vadd.f32 0.0, %v3051
        %v3053 = vpop.f32.mrf.mxu0
        %3054 = vmatprep.mubr.bf16.mxu0 0
        %3055 = vmatmul.mubr.bf16.gmra.mxu0 %v2946
        %v3056 = vpop.f32.mrf.mxu0
        %v3057 = vadd.f32 0.0, %v3056
        %v3058 = vpop.f32.mrf.mxu0
        %v3059 = vpop.f32.mrf.mxu0
        %v3060 = vadd.f32 0.0, %v3059
        %v3061 = vpop.f32.mrf.mxu0
        %3062 = vmatprep.mubr.bf16.mxu0 0
        %3063 = vmatmul.mubr.bf16.gmra.mxu0 %v2949
        %v3064 = vpop.f32.mrf.mxu0
        %v3065 = vadd.f32 0.0, %v3064
        %v3066 = vpop.f32.mrf.mxu0
        %v3067 = vpop.f32.mrf.mxu0
        %v3068 = vadd.f32 0.0, %v3067
        %v3069 = vpop.f32.mrf.mxu0
        %3070 = vmatprep.mubr.bf16.mxu0 0
        %3071 = vmatmul.mubr.bf16.gmra.mxu0 %v2952
        %v3072 = vpop.f32.mrf.mxu0
        %v3073 = vadd.f32 0.0, %v3072
        %v3074 = vpop.f32.mrf.mxu0
        %v3075 = vpop.f32.mrf.mxu0
        %v3076 = vadd.f32 0.0, %v3075
        %v3077 = vpop.f32.mrf.mxu0
        %3078 = vmatprep.mubr.bf16.mxu0 0
        %3079 = vmatmul.mubr.bf16.gmra.mxu0 %v2955
        %v3080 = vpop.f32.mrf.mxu0
        %v3081 = vadd.f32 0.0, %v3080
        %v3082 = vpop.f32.mrf.mxu0
        %v3083 = vpop.f32.mrf.mxu0
        %v3084 = vadd.f32 0.0, %v3083
        %v3085 = vpop.f32.mrf.mxu0
        %3086 = vmatprep.mubr.bf16.mxu0 0
        %3087 = vmatmul.mubr.bf16.gmra.mxu0 %v2958
        %v3088 = vpop.f32.mrf.mxu0
        %v3089 = vadd.f32 0.0, %v3088
        %v3090 = vpop.f32.mrf.mxu0
        %v3091 = vpop.f32.mrf.mxu0
        %v3092 = vadd.f32 0.0, %v3091
        %v3093 = vpop.f32.mrf.mxu0
        %3094 = vmatprep.mubr.bf16.mxu0 0
        %3095 = vmatmul.mubr.bf16.gmra.mxu0 %v2961
        %v3096 = vpop.f32.mrf.mxu0
        %v3097 = vadd.f32 0.0, %v3096
        %v3098 = vpop.f32.mrf.mxu0
        %v3099 = vpop.f32.mrf.mxu0
        %v3100 = vadd.f32 0.0, %v3099
        %v3101 = vpop.f32.mrf.mxu0
        %3102 = vmatprep.mubr.bf16.mxu0 0
        %3103 = vmatmul.mubr.bf16.gmra.mxu0 %v2964
        %v3104 = vpop.f32.mrf.mxu0
        %v3105 = vadd.f32 0.0, %v3104
        %v3106 = vpop.f32.mrf.mxu0
        %v3107 = vpop.f32.mrf.mxu0
        %v3108 = vadd.f32 0.0, %v3107
        %v3109 = vpop.f32.mrf.mxu0
        %3110 = vmatprep.mubr.bf16.mxu0 0
        %3111 = vmatmul.mubr.bf16.gmra.mxu0 %v2967
        %v3112 = vpop.f32.mrf.mxu0
        %v3113 = vadd.f32 0.0, %v3112
        %v3114 = vpop.f32.mrf.mxu0
        %v3115 = vpop.f32.mrf.mxu0
        %v3116 = vadd.f32 0.0, %v3115
        %v3117 = vpop.f32.mrf.mxu0
        %3118 = vmatprep.mubr.bf16.mxu0 0
        %3119 = vmatmul.mubr.bf16.gmra.mxu0 %v2970
        %v3120 = vpop.f32.mrf.mxu0
        %v3121 = vadd.f32 0.0, %v3120
        %v3122 = vpop.f32.mrf.mxu0
        %v3123 = vpop.f32.mrf.mxu0
        %v3124 = vadd.f32 0.0, %v3123
        %v3125 = vpop.f32.mrf.mxu0
        %3126 = vmatprep.mubr.bf16.mxu0 0
        %3127 = vmatmul.mubr.bf16.gmra.mxu0 %v2973
        %v3128 = vpop.f32.mrf.mxu0
        %v3129 = vadd.f32 0.0, %v3128
        %v3130 = vpop.f32.mrf.mxu0
        %v3131 = vpop.f32.mrf.mxu0
        %v3132 = vadd.f32 0.0, %v3131
        %v3133 = vpop.f32.mrf.mxu0
        %3134 = vmatprep.mubr.bf16.mxu0 0
        %3135 = vmatmul.mubr.bf16.gmra.mxu0 %v2976
        %v3136 = vpop.f32.mrf.mxu0
        %v3137 = vadd.f32 0.0, %v3136
        %v3138 = vpop.f32.mrf.mxu0
        %v3139 = vpop.f32.mrf.mxu0
        %v3140 = vadd.f32 0.0, %v3139
        %v3141 = vpop.f32.mrf.mxu0
        %3142 = vmatprep.mubr.bf16.mxu0 0
        %3143 = vmatmul.mubr.bf16.gmra.mxu0 %v2979
        %v3144 = vpop.f32.mrf.mxu0
        %v3145 = vadd.f32 0.0, %v3144
        %v3146 = vpop.f32.mrf.mxu0
        %v3147 = vpop.f32.mrf.mxu0
        %v3148 = vadd.f32 0.0, %v3147
        %v3149 = vpop.f32.mrf.mxu0
        %3150 = vmatprep.mubr.bf16.mxu0 0
        %3151 = vmatmul.mubr.bf16.gmra.mxu0 %v2982
        %v3152 = vpop.f32.mrf.mxu0
        %v3153 = vadd.f32 0.0, %v3152
        %v3154 = vpop.f32.mrf.mxu0
        %v3155 = vpop.f32.mrf.mxu0
        %v3156 = vadd.f32 0.0, %v3155
        %v3157 = vpop.f32.mrf.mxu0
        %3158 = vmatprep.mubr.bf16.mxu0 0
        %3159 = vmatmul.mubr.bf16.gmra.mxu0 %v2985
        %v3160 = vpop.f32.mrf.mxu0
        %v3161 = vadd.f32 0.0, %v3160
        %v3162 = vpop.f32.mrf.mxu0
        %v3163 = vpop.f32.mrf.mxu0
        %v3164 = vadd.f32 0.0, %v3163
        %v3165 = vpop.f32.mrf.mxu0
        %3166 = vdwg.mxu0
        %v3167 = vadd.f32 %v2841, %v3025
        %v3168 = vadd.f32 %v2842, %v3028
        %v3169 = vadd.f32 %v2843, %v3033
        %v3170 = vadd.f32 %v2844, %v3036
        %v3171 = vadd.f32 %v2845, %v3041
        %v3172 = vadd.f32 %v2846, %v3044
        %v3173 = vadd.f32 %v2847, %v3049
        %v3174 = vadd.f32 %v2848, %v3052
        %v3175 = vadd.f32 %v2849, %v3057
        %v3176 = vadd.f32 %v2850, %v3060
        %v3177 = vadd.f32 %v2851, %v3065
        %v3178 = vadd.f32 %v2852, %v3068
        %v3179 = vadd.f32 %v2853, %v3073
        %v3180 = vadd.f32 %v2854, %v3076
        %v3181 = vadd.f32 %v2855, %v3081
        %v3182 = vadd.f32 %v2856, %v3084
        %v3183 = vadd.f32 %v2857, %v3089
        %v3184 = vadd.f32 %v2858, %v3092
        %v3185 = vadd.f32 %v2859, %v3097
        %v3186 = vadd.f32 %v2860, %v3100
        %v3187 = vadd.f32 %v2861, %v3105
        %v3188 = vadd.f32 %v2862, %v3108
        %v3189 = vadd.f32 %v2863, %v3113
        %v3190 = vadd.f32 %v2864, %v3116
        %v3191 = vadd.f32 %v2865, %v3121
        %v3192 = vadd.f32 %v2866, %v3124
        %v3193 = vadd.f32 %v2867, %v3129
        %v3194 = vadd.f32 %v2868, %v3132
        %v3195 = vadd.f32 %v2869, %v3137
        %v3196 = vadd.f32 %v2870, %v3140
        %v3197 = vadd.f32 %v2871, %v3145
        %v3198 = vadd.f32 %v2872, %v3148
        %v3199 = vadd.f32 %v2873, %v3153
        %v3200 = vadd.f32 %v2874, %v3156
        %v3201 = vadd.f32 %v2875, %v3161
        %v3202 = vadd.f32 %v2876, %v3164
        %v3203 = vld [vmem:[%s2] sm:$0x1]
        %v3205 = vlaneseq
        %v3206 = vshrl.u32 %v3205, 7
        %v3207 = vsub.s32 0, %v3206
        %v3208 = vrot.slane %v3203, %v3207
        %v3210 = vadd.f32 %v3167, %v3208
        %v3211 = vadd.f32 %v3168, %v3208
        %v3212 = vadd.f32 %v3169, %v3208
        %v3213 = vadd.f32 %v3170, %v3208
        %v3214 = vadd.f32 %v3171, %v3208
        %v3215 = vadd.f32 %v3172, %v3208
        %v3216 = vadd.f32 %v3173, %v3208
        %v3217 = vadd.f32 %v3174, %v3208
        %v3218 = vadd.f32 %v3175, %v3208
        %v3219 = vadd.f32 %v3176, %v3208
        %v3220 = vadd.f32 %v3177, %v3208
        %v3221 = vadd.f32 %v3178, %v3208
        %v3222 = vadd.f32 %v3179, %v3208
        %v3223 = vadd.f32 %v3180, %v3208
        %v3224 = vadd.f32 %v3181, %v3208
        %v3225 = vadd.f32 %v3182, %v3208
        %v3226 = vadd.f32 %v3183, %v3208
        %v3227 = vadd.f32 %v3184, %v3208
        %v3228 = vadd.f32 %v3185, %v3208
        %v3229 = vadd.f32 %v3186, %v3208
        %v3230 = vadd.f32 %v3187, %v3208
        %v3231 = vadd.f32 %v3188, %v3208
        %v3232 = vadd.f32 %v3189, %v3208
        %v3233 = vadd.f32 %v3190, %v3208
        %v3234 = vadd.f32 %v3191, %v3208
        %v3235 = vadd.f32 %v3192, %v3208
        %v3236 = vadd.f32 %v3193, %v3208
        %v3237 = vadd.f32 %v3194, %v3208
        %v3238 = vadd.f32 %v3195, %v3208
        %v3239 = vadd.f32 %v3196, %v3208
        %v3240 = vadd.f32 %v3197, %v3208
        %v3241 = vadd.f32 %v3198, %v3208
        %v3242 = vadd.f32 %v3199, %v3208
        %v3243 = vadd.f32 %v3200, %v3208
        %v3244 = vadd.f32 %v3201, %v3208
        %v3245 = vadd.f32 %v3202, %v3208
        %v3246 = vmax.f32 %v3210, 0.0
        %v3247 = vmax.f32 %v3211, 0.0
        %v3248 = vmax.f32 %v3212, 0.0
        %v3249 = vmax.f32 %v3213, 0.0
        %v3250 = vmax.f32 %v3214, 0.0
        %v3251 = vmax.f32 %v3215, 0.0
        %v3252 = vmax.f32 %v3216, 0.0
        %v3253 = vmax.f32 %v3217, 0.0
        %v3254 = vmax.f32 %v3218, 0.0
        %v3255 = vmax.f32 %v3219, 0.0
        %v3256 = vmax.f32 %v3220, 0.0
        %v3257 = vmax.f32 %v3221, 0.0
        %v3258 = vmax.f32 %v3222, 0.0
        %v3259 = vmax.f32 %v3223, 0.0
        %v3260 = vmax.f32 %v3224, 0.0
        %v3261 = vmax.f32 %v3225, 0.0
        %v3262 = vmax.f32 %v3226, 0.0
        %v3263 = vmax.f32 %v3227, 0.0
        %v3264 = vmax.f32 %v3228, 0.0
        %v3265 = vmax.f32 %v3229, 0.0
        %v3266 = vmax.f32 %v3230, 0.0
        %v3267 = vmax.f32 %v3231, 0.0
        %v3268 = vmax.f32 %v3232, 0.0
        %v3269 = vmax.f32 %v3233, 0.0
        %v3270 = vmax.f32 %v3234, 0.0
        %v3271 = vmax.f32 %v3235, 0.0
        %v3272 = vmax.f32 %v3236, 0.0
        %v3273 = vmax.f32 %v3237, 0.0
        %v3274 = vmax.f32 %v3238, 0.0
        %v3275 = vmax.f32 %v3239, 0.0
        %v3276 = vmax.f32 %v3240, 0.0
        %v3277 = vmax.f32 %v3241, 0.0
        %v3278 = vmax.f32 %v3242, 0.0
        %v3279 = vmax.f32 %v3243, 0.0
        %v3280 = vmax.f32 %v3244, 0.0
        %v3281 = vmax.f32 %v3245, 0.0
        %3283 = vset.pattern.permute.xlu0 0
        %3284 = vperm.xlu0 %3283, %v304
        %v3285 = vpop.permute.xlu0 %3284
        %3288 = vset.pattern.permute.xlu0 0
        %3289 = vperm.xlu0 %3288, %v305
        %v3290 = vpop.permute.xlu0 %3289
        %3293 = vset.pattern.permute.xlu0 0
        %3294 = vperm.xlu0 %3293, %v306
        %v3295 = vpop.permute.xlu0 %3294
        %3298 = vset.pattern.permute.xlu0 0
        %3299 = vperm.xlu0 %3298, %v307
        %v3300 = vpop.permute.xlu0 %3299
        %3303 = vset.pattern.permute.xlu0 0
        %3304 = vperm.xlu0 %3303, %v308
        %v3305 = vpop.permute.xlu0 %3304
        %3308 = vset.pattern.permute.xlu0 0
        %3309 = vperm.xlu0 %3308, %v309
        %v3310 = vpop.permute.xlu0 %3309
        %3313 = vset.pattern.permute.xlu0 0
        %3314 = vperm.xlu0 %3313, %v310
        %v3315 = vpop.permute.xlu0 %3314
        %3318 = vset.pattern.permute.xlu0 0
        %3319 = vperm.xlu0 %3318, %v311
        %v3320 = vpop.permute.xlu0 %3319
        %3323 = vset.pattern.permute.xlu0 0
        %3324 = vperm.xlu0 %3323, %v312
        %v3325 = vpop.permute.xlu0 %3324
        %3328 = vset.pattern.permute.xlu0 0
        %3329 = vperm.xlu0 %3328, %v313
        %v3330 = vpop.permute.xlu0 %3329
        %3333 = vset.pattern.permute.xlu0 0
        %3334 = vperm.xlu0 %3333, %v314
        %v3335 = vpop.permute.xlu0 %3334
        %3338 = vset.pattern.permute.xlu0 0
        %3339 = vperm.xlu0 %3338, %v315
        %v3340 = vpop.permute.xlu0 %3339
        %3343 = vset.pattern.permute.xlu0 0
        %3344 = vperm.xlu0 %3343, %v316
        %v3345 = vpop.permute.xlu0 %3344
        %3348 = vset.pattern.permute.xlu0 0
        %3349 = vperm.xlu0 %3348, %v317
        %v3350 = vpop.permute.xlu0 %3349
        %3353 = vset.pattern.permute.xlu0 0
        %3354 = vperm.xlu0 %3353, %v318
        %v3355 = vpop.permute.xlu0 %3354
        %3358 = vset.pattern.permute.xlu0 0
        %3359 = vperm.xlu0 %3358, %v319
        %v3360 = vpop.permute.xlu0 %3359
        %3363 = vset.pattern.permute.xlu0 0
        %3364 = vperm.xlu0 %3363, %v320
        %v3365 = vpop.permute.xlu0 %3364
        %3368 = vset.pattern.permute.xlu0 0
        %3369 = vperm.xlu0 %3368, %v321
        %v3370 = vpop.permute.xlu0 %3369
        %3373 = vset.pattern.permute.xlu0 0
        %3374 = vperm.xlu0 %3373, %v322
        %v3375 = vpop.permute.xlu0 %3374
        %3378 = vset.pattern.permute.xlu0 0
        %3379 = vperm.xlu0 %3378, %v323
        %v3380 = vpop.permute.xlu0 %3379
        %3383 = vset.pattern.permute.xlu0 0
        %3384 = vperm.xlu0 %3383, %v324
        %v3385 = vpop.permute.xlu0 %3384
        %3388 = vset.pattern.permute.xlu0 0
        %3389 = vperm.xlu0 %3388, %v325
        %v3390 = vpop.permute.xlu0 %3389
        %3393 = vset.pattern.permute.xlu0 0
        %3394 = vperm.xlu0 %3393, %v326
        %v3395 = vpop.permute.xlu0 %3394
        %3398 = vset.pattern.permute.xlu0 0
        %3399 = vperm.xlu0 %3398, %v327
        %v3400 = vpop.permute.xlu0 %3399
        %3403 = vset.pattern.permute.xlu0 0
        %3404 = vperm.xlu0 %3403, %v328
        %v3405 = vpop.permute.xlu0 %3404
        %3408 = vset.pattern.permute.xlu0 0
        %3409 = vperm.xlu0 %3408, %v329
        %v3410 = vpop.permute.xlu0 %3409
        %3413 = vset.pattern.permute.xlu0 0
        %3414 = vperm.xlu0 %3413, %v330
        %v3415 = vpop.permute.xlu0 %3414
        %3418 = vset.pattern.permute.xlu0 0
        %3419 = vperm.xlu0 %3418, %v331
        %v3420 = vpop.permute.xlu0 %3419
        %3423 = vset.pattern.permute.xlu0 0
        %3424 = vperm.xlu0 %3423, %v332
        %v3425 = vpop.permute.xlu0 %3424
        %3428 = vset.pattern.permute.xlu0 0
        %3429 = vperm.xlu0 %3428, %v333
        %v3430 = vpop.permute.xlu0 %3429
        %3433 = vset.pattern.permute.xlu0 0
        %3434 = vperm.xlu0 %3433, %v334
        %v3435 = vpop.permute.xlu0 %3434
        %3438 = vset.pattern.permute.xlu0 0
        %3439 = vperm.xlu0 %3438, %v335
        %v3440 = vpop.permute.xlu0 %3439
        %3443 = vset.pattern.permute.xlu0 0
        %3444 = vperm.xlu0 %3443, %v336
        %v3445 = vpop.permute.xlu0 %3444
        %3448 = vset.pattern.permute.xlu0 0
        %3449 = vperm.xlu0 %3448, %v337
        %v3450 = vpop.permute.xlu0 %3449
        %3453 = vset.pattern.permute.xlu0 0
        %3454 = vperm.xlu0 %3453, %v338
        %v3455 = vpop.permute.xlu0 %3454
        %3458 = vset.pattern.permute.xlu0 0
        %3459 = vperm.xlu0 %3458, %v339
        %v3460 = vpop.permute.xlu0 %3459
        %v3462 = vmul.f32 %v3246, %v3285
        %v3463 = vmul.f32 %v3247, %v3290
        %v3464 = vmul.f32 %v3248, %v3295
        %v3465 = vmul.f32 %v3249, %v3300
        %v3466 = vmul.f32 %v3250, %v3305
        %v3467 = vmul.f32 %v3251, %v3310
        %v3468 = vmul.f32 %v3252, %v3315
        %v3469 = vmul.f32 %v3253, %v3320
        %v3470 = vmul.f32 %v3254, %v3325
        %v3471 = vmul.f32 %v3255, %v3330
        %v3472 = vmul.f32 %v3256, %v3335
        %v3473 = vmul.f32 %v3257, %v3340
        %v3474 = vmul.f32 %v3258, %v3345
        %v3475 = vmul.f32 %v3259, %v3350
        %v3476 = vmul.f32 %v3260, %v3355
        %v3477 = vmul.f32 %v3261, %v3360
        %v3478 = vmul.f32 %v3262, %v3365
        %v3479 = vmul.f32 %v3263, %v3370
        %v3480 = vmul.f32 %v3264, %v3375
        %v3481 = vmul.f32 %v3265, %v3380
        %v3482 = vmul.f32 %v3266, %v3385
        %v3483 = vmul.f32 %v3267, %v3390
        %v3484 = vmul.f32 %v3268, %v3395
        %v3485 = vmul.f32 %v3269, %v3400
        %v3486 = vmul.f32 %v3270, %v3405
        %v3487 = vmul.f32 %v3271, %v3410
        %v3488 = vmul.f32 %v3272, %v3415
        %v3489 = vmul.f32 %v3273, %v3420
        %v3490 = vmul.f32 %v3274, %v3425
        %v3491 = vmul.f32 %v3275, %v3430
        %v3492 = vmul.f32 %v3276, %v3435
        %v3493 = vmul.f32 %v3277, %v3440
        %v3494 = vmul.f32 %v3278, %v3445
        %v3495 = vmul.f32 %v3279, %v3450
        %v3496 = vmul.f32 %v3280, %v3455
        %v3497 = vmul.f32 %v3281, %v3460
        %vm3498 = vcmask 130048
        %3499 = vst.msk [vmem:[#allocation2] sm:$0xff] %vm3498, 0.0
        %3500 = vst.msk [vmem:[#allocation2 + $0x8] sm:$0xff] %vm3498, 0.0
        %3501 = vst.msk [vmem:[#allocation2 + $0x10] sm:$0xff] %vm3498, 0.0
        %3502 = vst.msk [vmem:[#allocation2 + $0x18] sm:$0xff] %vm3498, 0.0
        %3503 = vst.msk [vmem:[#allocation2 + $0x20] sm:$0xff] %vm3498, 0.0
        %3504 = vst.msk [vmem:[#allocation2 + $0x28] sm:$0xff] %vm3498, 0.0
        %3505 = vst.msk [vmem:[#allocation2 + $0x30] sm:$0xff] %vm3498, 0.0
        %3506 = vst.msk [vmem:[#allocation2 + $0x38] sm:$0xff] %vm3498, 0.0
        %3507 = vst.msk [vmem:[#allocation2 + $0x40] sm:$0xff] %vm3498, 0.0
        %3508 = vst.msk [vmem:[#allocation2 + $0x48] sm:$0xff] %vm3498, 0.0
        %3509 = vst.msk [vmem:[#allocation2 + $0x50] sm:$0xff] %vm3498, 0.0
        %3510 = vst.msk [vmem:[#allocation2 + $0x58] sm:$0xff] %vm3498, 0.0
        %3511 = vst.msk [vmem:[#allocation2 + $0x60] sm:$0xff] %vm3498, 0.0
        %3512 = vst.msk [vmem:[#allocation2 + $0x68] sm:$0xff] %vm3498, 0.0
        %3513 = vst.msk [vmem:[#allocation2 + $0x70] sm:$0xff] %vm3498, 0.0
        %3514 = vst.msk [vmem:[#allocation2 + $0x78] sm:$0xff] %vm3498, 0.0
        %3515 = vst.msk [vmem:[#allocation2 + $0x80] sm:$0xff] %vm3498, 0.0
        %3516 = vst.msk [vmem:[#allocation2 + $0x88] sm:$0xff] %vm3498, 0.0
        %3517 = vst.msk [vmem:[#allocation2 + $0x90] sm:$0xff] %vm3498, 0.0
        %3518 = vst.msk [vmem:[#allocation2 + $0x98] sm:$0xff] %vm3498, 0.0
        %3519 = vst.msk [vmem:[#allocation2 + $0xa0] sm:$0xff] %vm3498, 0.0
        %3520 = vst.msk [vmem:[#allocation2 + $0xa8] sm:$0xff] %vm3498, 0.0
        %3521 = vst.msk [vmem:[#allocation2 + $0xb0] sm:$0xff] %vm3498, 0.0
        %3522 = vst.msk [vmem:[#allocation2 + $0xb8] sm:$0xff] %vm3498, 0.0
        %3523 = vst.msk [vmem:[#allocation2 + $0xc0] sm:$0xff] %vm3498, 0.0
        %3524 = vst.msk [vmem:[#allocation2 + $0xc8] sm:$0xff] %vm3498, 0.0
        %3525 = vst.msk [vmem:[#allocation2 + $0xd0] sm:$0xff] %vm3498, 0.0
        %3526 = vst.msk [vmem:[#allocation2 + $0xd8] sm:$0xff] %vm3498, 0.0
        %3527 = vst.msk [vmem:[#allocation2 + $0xe0] sm:$0xff] %vm3498, 0.0
        %3528 = vst.msk [vmem:[#allocation2 + $0xe8] sm:$0xff] %vm3498, 0.0
        %3529 = vst.msk [vmem:[#allocation2 + $0xf0] sm:$0xff] %vm3498, 0.0
        %3530 = vst.msk [vmem:[#allocation2 + $0xf8] sm:$0xff] %vm3498, 0.0
        %3531 = vst.msk [vmem:[#allocation2 + $0x100] sm:$0xff] %vm3498, 0.0
        %3532 = vst.msk [vmem:[#allocation2 + $0x108] sm:$0xff] %vm3498, 0.0
        %3533 = vst.msk [vmem:[#allocation2 + $0x110] sm:$0xff] %vm3498, 0.0
        %3534 = vst.msk [vmem:[#allocation2 + $0x118] sm:$0xff] %vm3498, 0.0
        %3535 = vst.msk [vmem:[#allocation2 + $0x120] sm:$0xff] %vm3498, 0.0
        %3536 = vst.msk [vmem:[#allocation2 + $0x128] sm:$0xff] %vm3498, 0.0
        %3537 = vst.msk [vmem:[#allocation2 + $0x130] sm:$0xff] %vm3498, 0.0
        %3538 = vst.msk [vmem:[#allocation2 + $0x138] sm:$0xff] %vm3498, 0.0
        %3539 = vst.msk [vmem:[#allocation2 + $0x140] sm:$0xff] %vm3498, 0.0
        %3540 = vst.msk [vmem:[#allocation2 + $0x148] sm:$0xff] %vm3498, 0.0
        %3541 = vst.msk [vmem:[#allocation2 + $0x18] sm:$0xff] %vm3498, %v3462
        %3542 = vst.msk [vmem:[#allocation2 + $0x20] sm:$0xff] %vm3498, %v3463
        %3543 = vst.msk [vmem:[#allocation2 + $0x28] sm:$0xff] %vm3498, %v3464
        %3544 = vst.msk [vmem:[#allocation2 + $0x30] sm:$0xff] %vm3498, %v3465
        %3545 = vst.msk [vmem:[#allocation2 + $0x38] sm:$0xff] %vm3498, %v3466
        %3546 = vst.msk [vmem:[#allocation2 + $0x40] sm:$0xff] %vm3498, %v3467
        %3547 = vst.msk [vmem:[#allocation2 + $0x48] sm:$0xff] %vm3498, %v3468
        %3548 = vst.msk [vmem:[#allocation2 + $0x50] sm:$0xff] %vm3498, %v3469
        %3549 = vst.msk [vmem:[#allocation2 + $0x58] sm:$0xff] %vm3498, %v3470
        %3550 = vst.msk [vmem:[#allocation2 + $0x60] sm:$0xff] %vm3498, %v3471
        %3551 = vst.msk [vmem:[#allocation2 + $0x68] sm:$0xff] %vm3498, %v3472
        %3552 = vst.msk [vmem:[#allocation2 + $0x70] sm:$0xff] %vm3498, %v3473
        %3553 = vst.msk [vmem:[#allocation2 + $0x78] sm:$0xff] %vm3498, %v3474
        %3554 = vst.msk [vmem:[#allocation2 + $0x80] sm:$0xff] %vm3498, %v3475
        %3555 = vst.msk [vmem:[#allocation2 + $0x88] sm:$0xff] %vm3498, %v3476
        %3556 = vst.msk [vmem:[#allocation2 + $0x90] sm:$0xff] %vm3498, %v3477
        %3557 = vst.msk [vmem:[#allocation2 + $0x98] sm:$0xff] %vm3498, %v3478
        %3558 = vst.msk [vmem:[#allocation2 + $0xa0] sm:$0xff] %vm3498, %v3479
        %3559 = vst.msk [vmem:[#allocation2 + $0xa8] sm:$0xff] %vm3498, %v3480
        %3560 = vst.msk [vmem:[#allocation2 + $0xb0] sm:$0xff] %vm3498, %v3481
        %3561 = vst.msk [vmem:[#allocation2 + $0xb8] sm:$0xff] %vm3498, %v3482
        %3562 = vst.msk [vmem:[#allocation2 + $0xc0] sm:$0xff] %vm3498, %v3483
        %3563 = vst.msk [vmem:[#allocation2 + $0xc8] sm:$0xff] %vm3498, %v3484
        %3564 = vst.msk [vmem:[#allocation2 + $0xd0] sm:$0xff] %vm3498, %v3485
        %3565 = vst.msk [vmem:[#allocation2 + $0xd8] sm:$0xff] %vm3498, %v3486
        %3566 = vst.msk [vmem:[#allocation2 + $0xe0] sm:$0xff] %vm3498, %v3487
        %3567 = vst.msk [vmem:[#allocation2 + $0xe8] sm:$0xff] %vm3498, %v3488
        %3568 = vst.msk [vmem:[#allocation2 + $0xf0] sm:$0xff] %vm3498, %v3489
        %3569 = vst.msk [vmem:[#allocation2 + $0xf8] sm:$0xff] %vm3498, %v3490
        %3570 = vst.msk [vmem:[#allocation2 + $0x100] sm:$0xff] %vm3498, %v3491
        %3571 = vst.msk [vmem:[#allocation2 + $0x108] sm:$0xff] %vm3498, %v3492
        %3572 = vst.msk [vmem:[#allocation2 + $0x110] sm:$0xff] %vm3498, %v3493
        %3573 = vst.msk [vmem:[#allocation2 + $0x118] sm:$0xff] %vm3498, %v3494
        %3574 = vst.msk [vmem:[#allocation2 + $0x120] sm:$0xff] %vm3498, %v3495
        %3575 = vst.msk [vmem:[#allocation2 + $0x128] sm:$0xff] %vm3498, %v3496
        %3576 = vst.msk [vmem:[#allocation2 + $0x130] sm:$0xff] %vm3498, %v3497
        %v3577 = vld [vmem:[#allocation2 + $0x5] sm:$0xff]
        %v3578 = vld [vmem:[#allocation2 + $0xd] sm:$0xff]
        %v3579 = vld [vmem:[#allocation2 + $0x15] sm:$0xff]
        %v3580 = vld [vmem:[#allocation2 + $0x1d] sm:$0xff]
        %v3581 = vld [vmem:[#allocation2 + $0x25] sm:$0xff]
        %v3582 = vld [vmem:[#allocation2 + $0x2d] sm:$0xff]
        %v3583 = vld [vmem:[#allocation2 + $0x35] sm:$0xff]
        %v3584 = vld [vmem:[#allocation2 + $0x3d] sm:$0xff]
        %v3585 = vld [vmem:[#allocation2 + $0x45] sm:$0xff]
        %v3586 = vld [vmem:[#allocation2 + $0x4d] sm:$0xff]
        %v3587 = vld [vmem:[#allocation2 + $0x55] sm:$0xff]
        %v3588 = vld [vmem:[#allocation2 + $0x5d] sm:$0xff]
        %v3589 = vld [vmem:[#allocation2 + $0x65] sm:$0xff]
        %v3590 = vld [vmem:[#allocation2 + $0x6d] sm:$0xff]
        %v3591 = vld [vmem:[#allocation2 + $0x75] sm:$0xff]
        %v3592 = vld [vmem:[#allocation2 + $0x7d] sm:$0xff]
        %v3593 = vld [vmem:[#allocation2 + $0x85] sm:$0xff]
        %v3594 = vld [vmem:[#allocation2 + $0x8d] sm:$0xff]
        %v3595 = vld [vmem:[#allocation2 + $0x95] sm:$0xff]
        %v3596 = vld [vmem:[#allocation2 + $0x9d] sm:$0xff]
        %v3597 = vld [vmem:[#allocation2 + $0xa5] sm:$0xff]
        %v3598 = vld [vmem:[#allocation2 + $0xad] sm:$0xff]
        %v3599 = vld [vmem:[#allocation2 + $0xb5] sm:$0xff]
        %v3600 = vld [vmem:[#allocation2 + $0xbd] sm:$0xff]
        %v3601 = vld [vmem:[#allocation2 + $0xc5] sm:$0xff]
        %v3602 = vld [vmem:[#allocation2 + $0xcd] sm:$0xff]
        %v3603 = vld [vmem:[#allocation2 + $0xd5] sm:$0xff]
        %v3604 = vld [vmem:[#allocation2 + $0xdd] sm:$0xff]
        %v3605 = vld [vmem:[#allocation2 + $0xe5] sm:$0xff]
        %v3606 = vld [vmem:[#allocation2 + $0xed] sm:$0xff]
        %v3607 = vld [vmem:[#allocation2 + $0xf5] sm:$0xff]
        %v3608 = vld [vmem:[#allocation2 + $0xfd] sm:$0xff]
        %v3609 = vld [vmem:[#allocation2 + $0x105] sm:$0xff]
        %v3610 = vld [vmem:[#allocation2 + $0x10d] sm:$0xff]
        %v3611 = vld [vmem:[#allocation2 + $0x115] sm:$0xff]
        %v3612 = vld [vmem:[#allocation2 + $0x11d] sm:$0xff]
        %v3613 = vpack.c.bf16 %v3578, %v3577
        %v3614 = vpack.c.bf16 %v3580, %v3579
        %v3615 = vpack.c.bf16 %v3582, %v3581
        %v3616 = vpack.c.bf16 %v3584, %v3583
        %v3617 = vpack.c.bf16 %v3586, %v3585
        %v3618 = vpack.c.bf16 %v3588, %v3587
        %v3619 = vpack.c.bf16 %v3590, %v3589
        %v3620 = vpack.c.bf16 %v3592, %v3591
        %v3621 = vpack.c.bf16 %v3594, %v3593
        %v3622 = vpack.c.bf16 %v3596, %v3595
        %v3623 = vpack.c.bf16 %v3598, %v3597
        %v3624 = vpack.c.bf16 %v3600, %v3599
        %v3625 = vpack.c.bf16 %v3602, %v3601
        %v3626 = vpack.c.bf16 %v3604, %v3603
        %v3627 = vpack.c.bf16 %v3606, %v3605
        %v3628 = vpack.c.bf16 %v3608, %v3607
        %v3629 = vpack.c.bf16 %v3610, %v3609
        %v3630 = vpack.c.bf16 %v3612, %v3611
        %v3631 = vld [vmem:[%s3] sm:$0xf]
        %v3632 = vld [vmem:[%s3 + $0x4] sm:$0xf]
        %v3633 = vld [vmem:[#allocation2 + $0x6] sm:$0xff]
        %v3634 = vld [vmem:[#allocation2 + $0xe] sm:$0xff]
        %v3635 = vld [vmem:[#allocation2 + $0x16] sm:$0xff]
        %v3636 = vld [vmem:[#allocation2 + $0x1e] sm:$0xff]
        %v3637 = vld [vmem:[#allocation2 + $0x26] sm:$0xff]
        %v3638 = vld [vmem:[#allocation2 + $0x2e] sm:$0xff]
        %v3639 = vld [vmem:[#allocation2 + $0x36] sm:$0xff]
        %v3640 = vld [vmem:[#allocation2 + $0x3e] sm:$0xff]
        %v3641 = vld [vmem:[#allocation2 + $0x46] sm:$0xff]
        %v3642 = vld [vmem:[#allocation2 + $0x4e] sm:$0xff]
        %v3643 = vld [vmem:[#allocation2 + $0x56] sm:$0xff]
        %v3644 = vld [vmem:[#allocation2 + $0x5e] sm:$0xff]
        %v3645 = vld [vmem:[#allocation2 + $0x66] sm:$0xff]
        %v3646 = vld [vmem:[#allocation2 + $0x6e] sm:$0xff]
        %v3647 = vld [vmem:[#allocation2 + $0x76] sm:$0xff]
        %v3648 = vld [vmem:[#allocation2 + $0x7e] sm:$0xff]
        %v3649 = vld [vmem:[#allocation2 + $0x86] sm:$0xff]
        %v3650 = vld [vmem:[#allocation2 + $0x8e] sm:$0xff]
        %v3651 = vld [vmem:[#allocation2 + $0x96] sm:$0xff]
        %v3652 = vld [vmem:[#allocation2 + $0x9e] sm:$0xff]
        %v3653 = vld [vmem:[#allocation2 + $0xa6] sm:$0xff]
        %v3654 = vld [vmem:[#allocation2 + $0xae] sm:$0xff]
        %v3655 = vld [vmem:[#allocation2 + $0xb6] sm:$0xff]
        %v3656 = vld [vmem:[#allocation2 + $0xbe] sm:$0xff]
        %v3657 = vld [vmem:[#allocation2 + $0xc6] sm:$0xff]
        %v3658 = vld [vmem:[#allocation2 + $0xce] sm:$0xff]
        %v3659 = vld [vmem:[#allocation2 + $0xd6] sm:$0xff]
        %v3660 = vld [vmem:[#allocation2 + $0xde] sm:$0xff]
        %v3661 = vld [vmem:[#allocation2 + $0xe6] sm:$0xff]
        %v3662 = vld [vmem:[#allocation2 + $0xee] sm:$0xff]
        %v3663 = vld [vmem:[#allocation2 + $0xf6] sm:$0xff]
        %v3664 = vld [vmem:[#allocation2 + $0xfe] sm:$0xff]
        %v3665 = vld [vmem:[#allocation2 + $0x106] sm:$0xff]
        %v3666 = vld [vmem:[#allocation2 + $0x10e] sm:$0xff]
        %v3667 = vld [vmem:[#allocation2 + $0x116] sm:$0xff]
        %v3668 = vld [vmem:[#allocation2 + $0x11e] sm:$0xff]
        %v3669 = vpack.c.bf16 %v3634, %v3633
        %v3670 = vpack.c.bf16 %v3636, %v3635
        %v3671 = vpack.c.bf16 %v3638, %v3637
        %v3672 = vpack.c.bf16 %v3640, %v3639
        %v3673 = vpack.c.bf16 %v3642, %v3641
        %v3674 = vpack.c.bf16 %v3644, %v3643
        %v3675 = vpack.c.bf16 %v3646, %v3645
        %v3676 = vpack.c.bf16 %v3648, %v3647
        %v3677 = vpack.c.bf16 %v3650, %v3649
        %v3678 = vpack.c.bf16 %v3652, %v3651
        %v3679 = vpack.c.bf16 %v3654, %v3653
        %v3680 = vpack.c.bf16 %v3656, %v3655
        %v3681 = vpack.c.bf16 %v3658, %v3657
        %v3682 = vpack.c.bf16 %v3660, %v3659
        %v3683 = vpack.c.bf16 %v3662, %v3661
        %v3684 = vpack.c.bf16 %v3664, %v3663
        %v3685 = vpack.c.bf16 %v3666, %v3665
        %v3686 = vpack.c.bf16 %v3668, %v3667
        %s3687 = scalar_lea.vmem %s3, 8
        %v3688 = vld [vmem:[%s3687] sm:$0xf]
        %v3689 = vld [vmem:[%s3687 + $0x4] sm:$0xf]
        %v3692 = vunpack.c.l.b16 %v3688
        %v3693 = vunpack.c.l.b16 %v3689
        %v3694 = vpack.c.b16 %v3693, %v3692
        %v3697 = vsel %vm3498, %v3669, 0
        %v3700 = vsel %vm3498, %v3670, 0
        %v3703 = vsel %vm3498, %v3671, 0
        %v3706 = vsel %vm3498, %v3672, 0
        %v3709 = vsel %vm3498, %v3673, 0
        %v3712 = vsel %vm3498, %v3674, 0
        %v3715 = vsel %vm3498, %v3675, 0
        %v3718 = vsel %vm3498, %v3676, 0
        %v3721 = vsel %vm3498, %v3677, 0
        %v3724 = vsel %vm3498, %v3678, 0
        %v3727 = vsel %vm3498, %v3679, 0
        %v3730 = vsel %vm3498, %v3680, 0
        %v3733 = vsel %vm3498, %v3681, 0
        %v3736 = vsel %vm3498, %v3682, 0
        %v3739 = vsel %vm3498, %v3683, 0
        %v3742 = vsel %vm3498, %v3684, 0
        %v3745 = vsel %vm3498, %v3685, 0
        %v3748 = vsel %vm3498, %v3686, 0
        %3750 = vmatprep.subr.bf16.mxu0 0
        %3751 = vmatpush1.bf16.msra.mxu0 0
        %3752 = vmatprep.subr.bf16.mxu0 0
        %3753 = vmatpush1.bf16.msra.mxu0 0
        %3754 = vmatprep.subr.bf16.mxu0 0
        %3755 = vmatpush1.bf16.msra.mxu0 0
        %3756 = vmatprep.subr.bf16.mxu0 0
        %3757 = vmatpush1.bf16.msra.mxu0 0
        %3758 = vmatprep.subr.bf16.mxu0 0
        %3759 = vmatpush1.bf16.msra.mxu0 0
        %3760 = vmatprep.subr.bf16.mxu0 0
        %3761 = vmatpush1.bf16.msra.mxu0 0
        %3762 = vmatprep.subr.bf16.mxu0 0
        %3763 = vmatpush1.bf16.msra.mxu0 0
        %3764 = vmatprep.subr.bf16.mxu0 0
        %3765 = vmatpush1.bf16.msra.mxu0 %v3694
        %3766 = vmatprep.subr.bf16.mxu0 0
        %3767 = vmatpush2.bf16.msra.mxu0 0
        %3768 = vmatprep.subr.bf16.mxu0 0
        %3769 = vmatpush2.bf16.msra.mxu0 0
        %3770 = vmatprep.subr.bf16.mxu0 0
        %3771 = vmatpush2.bf16.msra.mxu0 0
        %3772 = vmatprep.subr.bf16.mxu0 0
        %3773 = vmatpush2.bf16.msra.mxu0 0
        %3774 = vmatprep.subr.bf16.mxu0 0
        %3775 = vmatpush2.bf16.msra.mxu0 0
        %3776 = vmatprep.subr.bf16.mxu0 0
        %3777 = vmatpush2.bf16.msra.mxu0 0
        %3778 = vmatprep.subr.bf16.mxu0 0
        %3779 = vmatpush2.bf16.msra.mxu0 0
        %3780 = vmatprep.subr.bf16.mxu0 0
        %3781 = vmatpush2.bf16.msra.mxu0 0
        %3782 = vmatprep.mubr.bf16.mxu0 0
        %3783 = vmatmul.mubr.bf16.gmra.mxu0 %v3697
        %v3784 = vpop.f32.mrf.mxu0
        %v3785 = vadd.f32 0.0, %v3784
        %v3786 = vpop.f32.mrf.mxu0
        %v3787 = vpop.f32.mrf.mxu0
        %v3788 = vadd.f32 0.0, %v3787
        %v3789 = vpop.f32.mrf.mxu0
        %3790 = vmatprep.mubr.bf16.mxu0 0
        %3791 = vmatmul.mubr.bf16.gmra.mxu0 %v3700
        %v3792 = vpop.f32.mrf.mxu0
        %v3793 = vadd.f32 0.0, %v3792
        %v3794 = vpop.f32.mrf.mxu0
        %v3795 = vpop.f32.mrf.mxu0
        %v3796 = vadd.f32 0.0, %v3795
        %v3797 = vpop.f32.mrf.mxu0
        %3798 = vmatprep.mubr.bf16.mxu0 0
        %3799 = vmatmul.mubr.bf16.gmra.mxu0 %v3703
        %v3800 = vpop.f32.mrf.mxu0
        %v3801 = vadd.f32 0.0, %v3800
        %v3802 = vpop.f32.mrf.mxu0
        %v3803 = vpop.f32.mrf.mxu0
        %v3804 = vadd.f32 0.0, %v3803
        %v3805 = vpop.f32.mrf.mxu0
        %3806 = vmatprep.mubr.bf16.mxu0 0
        %3807 = vmatmul.mubr.bf16.gmra.mxu0 %v3706
        %v3808 = vpop.f32.mrf.mxu0
        %v3809 = vadd.f32 0.0, %v3808
        %v3810 = vpop.f32.mrf.mxu0
        %v3811 = vpop.f32.mrf.mxu0
        %v3812 = vadd.f32 0.0, %v3811
        %v3813 = vpop.f32.mrf.mxu0
        %3814 = vmatprep.mubr.bf16.mxu0 0
        %3815 = vmatmul.mubr.bf16.gmra.mxu0 %v3709
        %v3816 = vpop.f32.mrf.mxu0
        %v3817 = vadd.f32 0.0, %v3816
        %v3818 = vpop.f32.mrf.mxu0
        %v3819 = vpop.f32.mrf.mxu0
        %v3820 = vadd.f32 0.0, %v3819
        %v3821 = vpop.f32.mrf.mxu0
        %3822 = vmatprep.mubr.bf16.mxu0 0
        %3823 = vmatmul.mubr.bf16.gmra.mxu0 %v3712
        %v3824 = vpop.f32.mrf.mxu0
        %v3825 = vadd.f32 0.0, %v3824
        %v3826 = vpop.f32.mrf.mxu0
        %v3827 = vpop.f32.mrf.mxu0
        %v3828 = vadd.f32 0.0, %v3827
        %v3829 = vpop.f32.mrf.mxu0
        %3830 = vmatprep.mubr.bf16.mxu0 0
        %3831 = vmatmul.mubr.bf16.gmra.mxu0 %v3715
        %v3832 = vpop.f32.mrf.mxu0
        %v3833 = vadd.f32 0.0, %v3832
        %v3834 = vpop.f32.mrf.mxu0
        %v3835 = vpop.f32.mrf.mxu0
        %v3836 = vadd.f32 0.0, %v3835
        %v3837 = vpop.f32.mrf.mxu0
        %3838 = vmatprep.mubr.bf16.mxu0 0
        %3839 = vmatmul.mubr.bf16.gmra.mxu0 %v3718
        %v3840 = vpop.f32.mrf.mxu0
        %v3841 = vadd.f32 0.0, %v3840
        %v3842 = vpop.f32.mrf.mxu0
        %v3843 = vpop.f32.mrf.mxu0
        %v3844 = vadd.f32 0.0, %v3843
        %v3845 = vpop.f32.mrf.mxu0
        %3846 = vmatprep.mubr.bf16.mxu0 0
        %3847 = vmatmul.mubr.bf16.gmra.mxu0 %v3721
        %v3848 = vpop.f32.mrf.mxu0
        %v3849 = vadd.f32 0.0, %v3848
        %v3850 = vpop.f32.mrf.mxu0
        %v3851 = vpop.f32.mrf.mxu0
        %v3852 = vadd.f32 0.0, %v3851
        %v3853 = vpop.f32.mrf.mxu0
        %3854 = vmatprep.mubr.bf16.mxu0 0
        %3855 = vmatmul.mubr.bf16.gmra.mxu0 %v3724
        %v3856 = vpop.f32.mrf.mxu0
        %v3857 = vadd.f32 0.0, %v3856
        %v3858 = vpop.f32.mrf.mxu0
        %v3859 = vpop.f32.mrf.mxu0
        %v3860 = vadd.f32 0.0, %v3859
        %v3861 = vpop.f32.mrf.mxu0
        %3862 = vmatprep.mubr.bf16.mxu0 0
        %3863 = vmatmul.mubr.bf16.gmra.mxu0 %v3727
        %v3864 = vpop.f32.mrf.mxu0
        %v3865 = vadd.f32 0.0, %v3864
        %v3866 = vpop.f32.mrf.mxu0
        %v3867 = vpop.f32.mrf.mxu0
        %v3868 = vadd.f32 0.0, %v3867
        %v3869 = vpop.f32.mrf.mxu0
        %3870 = vmatprep.mubr.bf16.mxu0 0
        %3871 = vmatmul.mubr.bf16.gmra.mxu0 %v3730
        %v3872 = vpop.f32.mrf.mxu0
        %v3873 = vadd.f32 0.0, %v3872
        %v3874 = vpop.f32.mrf.mxu0
        %v3875 = vpop.f32.mrf.mxu0
        %v3876 = vadd.f32 0.0, %v3875
        %v3877 = vpop.f32.mrf.mxu0
        %3878 = vmatprep.mubr.bf16.mxu0 0
        %3879 = vmatmul.mubr.bf16.gmra.mxu0 %v3733
        %v3880 = vpop.f32.mrf.mxu0
        %v3881 = vadd.f32 0.0, %v3880
        %v3882 = vpop.f32.mrf.mxu0
        %v3883 = vpop.f32.mrf.mxu0
        %v3884 = vadd.f32 0.0, %v3883
        %v3885 = vpop.f32.mrf.mxu0
        %3886 = vmatprep.mubr.bf16.mxu0 0
        %3887 = vmatmul.mubr.bf16.gmra.mxu0 %v3736
        %v3888 = vpop.f32.mrf.mxu0
        %v3889 = vadd.f32 0.0, %v3888
        %v3890 = vpop.f32.mrf.mxu0
        %v3891 = vpop.f32.mrf.mxu0
        %v3892 = vadd.f32 0.0, %v3891
        %v3893 = vpop.f32.mrf.mxu0
        %3894 = vmatprep.mubr.bf16.mxu0 0
        %3895 = vmatmul.mubr.bf16.gmra.mxu0 %v3739
        %v3896 = vpop.f32.mrf.mxu0
        %v3897 = vadd.f32 0.0, %v3896
        %v3898 = vpop.f32.mrf.mxu0
        %v3899 = vpop.f32.mrf.mxu0
        %v3900 = vadd.f32 0.0, %v3899
        %v3901 = vpop.f32.mrf.mxu0
        %3902 = vmatprep.mubr.bf16.mxu0 0
        %3903 = vmatmul.mubr.bf16.gmra.mxu0 %v3742
        %v3904 = vpop.f32.mrf.mxu0
        %v3905 = vadd.f32 0.0, %v3904
        %v3906 = vpop.f32.mrf.mxu0
        %v3907 = vpop.f32.mrf.mxu0
        %v3908 = vadd.f32 0.0, %v3907
        %v3909 = vpop.f32.mrf.mxu0
        %3910 = vmatprep.mubr.bf16.mxu0 0
        %3911 = vmatmul.mubr.bf16.gmra.mxu0 %v3745
        %v3912 = vpop.f32.mrf.mxu0
        %v3913 = vadd.f32 0.0, %v3912
        %v3914 = vpop.f32.mrf.mxu0
        %v3915 = vpop.f32.mrf.mxu0
        %v3916 = vadd.f32 0.0, %v3915
        %v3917 = vpop.f32.mrf.mxu0
        %3918 = vmatprep.mubr.bf16.mxu0 0
        %3919 = vmatmul.mubr.bf16.gmra.mxu0 %v3748
        %v3920 = vpop.f32.mrf.mxu0
        %v3921 = vadd.f32 0.0, %v3920
        %v3922 = vpop.f32.mrf.mxu0
        %v3923 = vpop.f32.mrf.mxu0
        %v3924 = vadd.f32 0.0, %v3923
        %v3925 = vpop.f32.mrf.mxu0
        %3926 = vdwg.mxu0
        %v3929 = vunpack.c.l.b16 %v3631
        %v3930 = vunpack.c.l.b16 %v3632
        %v3931 = vpack.c.b16 %v3930, %v3929
        %v3934 = vsel %vm3498, %v3613, 0
        %v3937 = vsel %vm3498, %v3614, 0
        %v3940 = vsel %vm3498, %v3615, 0
        %v3943 = vsel %vm3498, %v3616, 0
        %v3946 = vsel %vm3498, %v3617, 0
        %v3949 = vsel %vm3498, %v3618, 0
        %v3952 = vsel %vm3498, %v3619, 0
        %v3955 = vsel %vm3498, %v3620, 0
        %v3958 = vsel %vm3498, %v3621, 0
        %v3961 = vsel %vm3498, %v3622, 0
        %v3964 = vsel %vm3498, %v3623, 0
        %v3967 = vsel %vm3498, %v3624, 0
        %v3970 = vsel %vm3498, %v3625, 0
        %v3973 = vsel %vm3498, %v3626, 0
        %v3976 = vsel %vm3498, %v3627, 0
        %v3979 = vsel %vm3498, %v3628, 0
        %v3982 = vsel %vm3498, %v3629, 0
        %v3985 = vsel %vm3498, %v3630, 0
        %3987 = vmatprep.subr.bf16.mxu0 0
        %3988 = vmatpush1.bf16.msra.mxu0 0
        %3989 = vmatprep.subr.bf16.mxu0 0
        %3990 = vmatpush1.bf16.msra.mxu0 0
        %3991 = vmatprep.subr.bf16.mxu0 0
        %3992 = vmatpush1.bf16.msra.mxu0 0
        %3993 = vmatprep.subr.bf16.mxu0 0
        %3994 = vmatpush1.bf16.msra.mxu0 0
        %3995 = vmatprep.subr.bf16.mxu0 0
        %3996 = vmatpush1.bf16.msra.mxu0 0
        %3997 = vmatprep.subr.bf16.mxu0 0
        %3998 = vmatpush1.bf16.msra.mxu0 0
        %3999 = vmatprep.subr.bf16.mxu0 0
        %4000 = vmatpush1.bf16.msra.mxu0 0
        %4001 = vmatprep.subr.bf16.mxu0 0
        %4002 = vmatpush1.bf16.msra.mxu0 %v3931
        %4003 = vmatprep.subr.bf16.mxu0 0
        %4004 = vmatpush2.bf16.msra.mxu0 0
        %4005 = vmatprep.subr.bf16.mxu0 0
        %4006 = vmatpush2.bf16.msra.mxu0 0
        %4007 = vmatprep.subr.bf16.mxu0 0
        %4008 = vmatpush2.bf16.msra.mxu0 0
        %4009 = vmatprep.subr.bf16.mxu0 0
        %4010 = vmatpush2.bf16.msra.mxu0 0
        %4011 = vmatprep.subr.bf16.mxu0 0
        %4012 = vmatpush2.bf16.msra.mxu0 0
        %4013 = vmatprep.subr.bf16.mxu0 0
        %4014 = vmatpush2.bf16.msra.mxu0 0
        %4015 = vmatprep.subr.bf16.mxu0 0
        %4016 = vmatpush2.bf16.msra.mxu0 0
        %4017 = vmatprep.subr.bf16.mxu0 0
        %4018 = vmatpush2.bf16.msra.mxu0 0
        %4019 = vmatprep.mubr.bf16.mxu0 0
        %4020 = vmatmul.mubr.bf16.gmra.mxu0 %v3934
        %v4021 = vpop.f32.mrf.mxu0
        %v4022 = vadd.f32 %v3785, %v4021
        %v4023 = vpop.f32.mrf.mxu0
        %v4024 = vpop.f32.mrf.mxu0
        %v4025 = vadd.f32 %v3788, %v4024
        %v4026 = vpop.f32.mrf.mxu0
        %4027 = vmatprep.mubr.bf16.mxu0 0
        %4028 = vmatmul.mubr.bf16.gmra.mxu0 %v3937
        %v4029 = vpop.f32.mrf.mxu0
        %v4030 = vadd.f32 %v3793, %v4029
        %v4031 = vpop.f32.mrf.mxu0
        %v4032 = vpop.f32.mrf.mxu0
        %v4033 = vadd.f32 %v3796, %v4032
        %v4034 = vpop.f32.mrf.mxu0
        %4035 = vmatprep.mubr.bf16.mxu0 0
        %4036 = vmatmul.mubr.bf16.gmra.mxu0 %v3940
        %v4037 = vpop.f32.mrf.mxu0
        %v4038 = vadd.f32 %v3801, %v4037
        %v4039 = vpop.f32.mrf.mxu0
        %v4040 = vpop.f32.mrf.mxu0
        %v4041 = vadd.f32 %v3804, %v4040
        %v4042 = vpop.f32.mrf.mxu0
        %4043 = vmatprep.mubr.bf16.mxu0 0
        %4044 = vmatmul.mubr.bf16.gmra.mxu0 %v3943
        %v4045 = vpop.f32.mrf.mxu0
        %v4046 = vadd.f32 %v3809, %v4045
        %v4047 = vpop.f32.mrf.mxu0
        %v4048 = vpop.f32.mrf.mxu0
        %v4049 = vadd.f32 %v3812, %v4048
        %v4050 = vpop.f32.mrf.mxu0
        %4051 = vmatprep.mubr.bf16.mxu0 0
        %4052 = vmatmul.mubr.bf16.gmra.mxu0 %v3946
        %v4053 = vpop.f32.mrf.mxu0
        %v4054 = vadd.f32 %v3817, %v4053
        %v4055 = vpop.f32.mrf.mxu0
        %v4056 = vpop.f32.mrf.mxu0
        %v4057 = vadd.f32 %v3820, %v4056
        %v4058 = vpop.f32.mrf.mxu0
        %4059 = vmatprep.mubr.bf16.mxu0 0
        %4060 = vmatmul.mubr.bf16.gmra.mxu0 %v3949
        %v4061 = vpop.f32.mrf.mxu0
        %v4062 = vadd.f32 %v3825, %v4061
        %v4063 = vpop.f32.mrf.mxu0
        %v4064 = vpop.f32.mrf.mxu0
        %v4065 = vadd.f32 %v3828, %v4064
        %v4066 = vpop.f32.mrf.mxu0
        %4067 = vmatprep.mubr.bf16.mxu0 0
        %4068 = vmatmul.mubr.bf16.gmra.mxu0 %v3952
        %v4069 = vpop.f32.mrf.mxu0
        %v4070 = vadd.f32 %v3833, %v4069
        %v4071 = vpop.f32.mrf.mxu0
        %v4072 = vpop.f32.mrf.mxu0
        %v4073 = vadd.f32 %v3836, %v4072
        %v4074 = vpop.f32.mrf.mxu0
        %4075 = vmatprep.mubr.bf16.mxu0 0
        %4076 = vmatmul.mubr.bf16.gmra.mxu0 %v3955
        %v4077 = vpop.f32.mrf.mxu0
        %v4078 = vadd.f32 %v3841, %v4077
        %v4079 = vpop.f32.mrf.mxu0
        %v4080 = vpop.f32.mrf.mxu0
        %v4081 = vadd.f32 %v3844, %v4080
        %v4082 = vpop.f32.mrf.mxu0
        %4083 = vmatprep.mubr.bf16.mxu0 0
        %4084 = vmatmul.mubr.bf16.gmra.mxu0 %v3958
        %v4085 = vpop.f32.mrf.mxu0
        %v4086 = vadd.f32 %v3849, %v4085
        %v4087 = vpop.f32.mrf.mxu0
        %v4088 = vpop.f32.mrf.mxu0
        %v4089 = vadd.f32 %v3852, %v4088
        %v4090 = vpop.f32.mrf.mxu0
        %4091 = vmatprep.mubr.bf16.mxu0 0
        %4092 = vmatmul.mubr.bf16.gmra.mxu0 %v3961
        %v4093 = vpop.f32.mrf.mxu0
        %v4094 = vadd.f32 %v3857, %v4093
        %v4095 = vpop.f32.mrf.mxu0
        %v4096 = vpop.f32.mrf.mxu0
        %v4097 = vadd.f32 %v3860, %v4096
        %v4098 = vpop.f32.mrf.mxu0
        %4099 = vmatprep.mubr.bf16.mxu0 0
        %4100 = vmatmul.mubr.bf16.gmra.mxu0 %v3964
        %v4101 = vpop.f32.mrf.mxu0
        %v4102 = vadd.f32 %v3865, %v4101
        %v4103 = vpop.f32.mrf.mxu0
        %v4104 = vpop.f32.mrf.mxu0
        %v4105 = vadd.f32 %v3868, %v4104
        %v4106 = vpop.f32.mrf.mxu0
        %4107 = vmatprep.mubr.bf16.mxu0 0
        %4108 = vmatmul.mubr.bf16.gmra.mxu0 %v3967
        %v4109 = vpop.f32.mrf.mxu0
        %v4110 = vadd.f32 %v3873, %v4109
        %v4111 = vpop.f32.mrf.mxu0
        %v4112 = vpop.f32.mrf.mxu0
        %v4113 = vadd.f32 %v3876, %v4112
        %v4114 = vpop.f32.mrf.mxu0
        %4115 = vmatprep.mubr.bf16.mxu0 0
        %4116 = vmatmul.mubr.bf16.gmra.mxu0 %v3970
        %v4117 = vpop.f32.mrf.mxu0
        %v4118 = vadd.f32 %v3881, %v4117
        %v4119 = vpop.f32.mrf.mxu0
        %v4120 = vpop.f32.mrf.mxu0
        %v4121 = vadd.f32 %v3884, %v4120
        %v4122 = vpop.f32.mrf.mxu0
        %4123 = vmatprep.mubr.bf16.mxu0 0
        %4124 = vmatmul.mubr.bf16.gmra.mxu0 %v3973
        %v4125 = vpop.f32.mrf.mxu0
        %v4126 = vadd.f32 %v3889, %v4125
        %v4127 = vpop.f32.mrf.mxu0
        %v4128 = vpop.f32.mrf.mxu0
        %v4129 = vadd.f32 %v3892, %v4128
        %v4130 = vpop.f32.mrf.mxu0
        %4131 = vmatprep.mubr.bf16.mxu0 0
        %4132 = vmatmul.mubr.bf16.gmra.mxu0 %v3976
        %v4133 = vpop.f32.mrf.mxu0
        %v4134 = vadd.f32 %v3897, %v4133
        %v4135 = vpop.f32.mrf.mxu0
        %v4136 = vpop.f32.mrf.mxu0
        %v4137 = vadd.f32 %v3900, %v4136
        %v4138 = vpop.f32.mrf.mxu0
        %4139 = vmatprep.mubr.bf16.mxu0 0
        %4140 = vmatmul.mubr.bf16.gmra.mxu0 %v3979
        %v4141 = vpop.f32.mrf.mxu0
        %v4142 = vadd.f32 %v3905, %v4141
        %v4143 = vpop.f32.mrf.mxu0
        %v4144 = vpop.f32.mrf.mxu0
        %v4145 = vadd.f32 %v3908, %v4144
        %v4146 = vpop.f32.mrf.mxu0
        %4147 = vmatprep.mubr.bf16.mxu0 0
        %4148 = vmatmul.mubr.bf16.gmra.mxu0 %v3982
        %v4149 = vpop.f32.mrf.mxu0
        %v4150 = vadd.f32 %v3913, %v4149
        %v4151 = vpop.f32.mrf.mxu0
        %v4152 = vpop.f32.mrf.mxu0
        %v4153 = vadd.f32 %v3916, %v4152
        %v4154 = vpop.f32.mrf.mxu0
        %4155 = vmatprep.mubr.bf16.mxu0 0
        %4156 = vmatmul.mubr.bf16.gmra.mxu0 %v3985
        %v4157 = vpop.f32.mrf.mxu0
        %v4158 = vadd.f32 %v3921, %v4157
        %v4159 = vpop.f32.mrf.mxu0
        %v4160 = vpop.f32.mrf.mxu0
        %v4161 = vadd.f32 %v3924, %v4160
        %v4162 = vpop.f32.mrf.mxu0
        %4163 = vdwg.mxu0
        %v4164 = vld [vmem:[#allocation2 + $0x7] sm:$0xff]
        %v4165 = vld [vmem:[#allocation2 + $0xf] sm:$0xff]
        %v4166 = vld [vmem:[#allocation2 + $0x17] sm:$0xff]
        %v4167 = vld [vmem:[#allocation2 + $0x1f] sm:$0xff]
        %v4168 = vld [vmem:[#allocation2 + $0x27] sm:$0xff]
        %v4169 = vld [vmem:[#allocation2 + $0x2f] sm:$0xff]
        %v4170 = vld [vmem:[#allocation2 + $0x37] sm:$0xff]
        %v4171 = vld [vmem:[#allocation2 + $0x3f] sm:$0xff]
        %v4172 = vld [vmem:[#allocation2 + $0x47] sm:$0xff]
        %v4173 = vld [vmem:[#allocation2 + $0x4f] sm:$0xff]
        %v4174 = vld [vmem:[#allocation2 + $0x57] sm:$0xff]
        %v4175 = vld [vmem:[#allocation2 + $0x5f] sm:$0xff]
        %v4176 = vld [vmem:[#allocation2 + $0x67] sm:$0xff]
        %v4177 = vld [vmem:[#allocation2 + $0x6f] sm:$0xff]
        %v4178 = vld [vmem:[#allocation2 + $0x77] sm:$0xff]
        %v4179 = vld [vmem:[#allocation2 + $0x7f] sm:$0xff]
        %v4180 = vld [vmem:[#allocation2 + $0x87] sm:$0xff]
        %v4181 = vld [vmem:[#allocation2 + $0x8f] sm:$0xff]
        %v4182 = vld [vmem:[#allocation2 + $0x97] sm:$0xff]
        %v4183 = vld [vmem:[#allocation2 + $0x9f] sm:$0xff]
        %v4184 = vld [vmem:[#allocation2 + $0xa7] sm:$0xff]
        %v4185 = vld [vmem:[#allocation2 + $0xaf] sm:$0xff]
        %v4186 = vld [vmem:[#allocation2 + $0xb7] sm:$0xff]
        %v4187 = vld [vmem:[#allocation2 + $0xbf] sm:$0xff]
        %v4188 = vld [vmem:[#allocation2 + $0xc7] sm:$0xff]
        %v4189 = vld [vmem:[#allocation2 + $0xcf] sm:$0xff]
        %v4190 = vld [vmem:[#allocation2 + $0xd7] sm:$0xff]
        %v4191 = vld [vmem:[#allocation2 + $0xdf] sm:$0xff]
        %v4192 = vld [vmem:[#allocation2 + $0xe7] sm:$0xff]
        %v4193 = vld [vmem:[#allocation2 + $0xef] sm:$0xff]
        %v4194 = vld [vmem:[#allocation2 + $0xf7] sm:$0xff]
        %v4195 = vld [vmem:[#allocation2 + $0xff] sm:$0xff]
        %v4196 = vld [vmem:[#allocation2 + $0x107] sm:$0xff]
        %v4197 = vld [vmem:[#allocation2 + $0x10f] sm:$0xff]
        %v4198 = vld [vmem:[#allocation2 + $0x117] sm:$0xff]
        %v4199 = vld [vmem:[#allocation2 + $0x11f] sm:$0xff]
        %v4200 = vpack.c.bf16 %v4165, %v4164
        %v4201 = vpack.c.bf16 %v4167, %v4166
        %v4202 = vpack.c.bf16 %v4169, %v4168
        %v4203 = vpack.c.bf16 %v4171, %v4170
        %v4204 = vpack.c.bf16 %v4173, %v4172
        %v4205 = vpack.c.bf16 %v4175, %v4174
        %v4206 = vpack.c.bf16 %v4177, %v4176
        %v4207 = vpack.c.bf16 %v4179, %v4178
        %v4208 = vpack.c.bf16 %v4181, %v4180
        %v4209 = vpack.c.bf16 %v4183, %v4182
        %v4210 = vpack.c.bf16 %v4185, %v4184
        %v4211 = vpack.c.bf16 %v4187, %v4186
        %v4212 = vpack.c.bf16 %v4189, %v4188
        %v4213 = vpack.c.bf16 %v4191, %v4190
        %v4214 = vpack.c.bf16 %v4193, %v4192
        %v4215 = vpack.c.bf16 %v4195, %v4194
        %v4216 = vpack.c.bf16 %v4197, %v4196
        %v4217 = vpack.c.bf16 %v4199, %v4198
        %s4218 = scalar_lea.vmem %s3, 16
        %v4219 = vld [vmem:[%s4218] sm:$0xf]
        %v4220 = vld [vmem:[%s4218 + $0x4] sm:$0xf]
        %v4223 = vunpack.c.l.b16 %v4219
        %v4224 = vunpack.c.l.b16 %v4220
        %v4225 = vpack.c.b16 %v4224, %v4223
        %v4228 = vsel %vm3498, %v4200, 0
        %v4231 = vsel %vm3498, %v4201, 0
        %v4234 = vsel %vm3498, %v4202, 0
        %v4237 = vsel %vm3498, %v4203, 0
        %v4240 = vsel %vm3498, %v4204, 0
        %v4243 = vsel %vm3498, %v4205, 0
        %v4246 = vsel %vm3498, %v4206, 0
        %v4249 = vsel %vm3498, %v4207, 0
        %v4252 = vsel %vm3498, %v4208, 0
        %v4255 = vsel %vm3498, %v4209, 0
        %v4258 = vsel %vm3498, %v4210, 0
        %v4261 = vsel %vm3498, %v4211, 0
        %v4264 = vsel %vm3498, %v4212, 0
        %v4267 = vsel %vm3498, %v4213, 0
        %v4270 = vsel %vm3498, %v4214, 0
        %v4273 = vsel %vm3498, %v4215, 0
        %v4276 = vsel %vm3498, %v4216, 0
        %v4279 = vsel %vm3498, %v4217, 0
        %4281 = vmatprep.subr.bf16.mxu0 0
        %4282 = vmatpush1.bf16.msra.mxu0 0
        %4283 = vmatprep.subr.bf16.mxu0 0
        %4284 = vmatpush1.bf16.msra.mxu0 0
        %4285 = vmatprep.subr.bf16.mxu0 0
        %4286 = vmatpush1.bf16.msra.mxu0 0
        %4287 = vmatprep.subr.bf16.mxu0 0
        %4288 = vmatpush1.bf16.msra.mxu0 0
        %4289 = vmatprep.subr.bf16.mxu0 0
        %4290 = vmatpush1.bf16.msra.mxu0 0
        %4291 = vmatprep.subr.bf16.mxu0 0
        %4292 = vmatpush1.bf16.msra.mxu0 0
        %4293 = vmatprep.subr.bf16.mxu0 0
        %4294 = vmatpush1.bf16.msra.mxu0 0
        %4295 = vmatprep.subr.bf16.mxu0 0
        %4296 = vmatpush1.bf16.msra.mxu0 %v4225
        %4297 = vmatprep.subr.bf16.mxu0 0
        %4298 = vmatpush2.bf16.msra.mxu0 0
        %4299 = vmatprep.subr.bf16.mxu0 0
        %4300 = vmatpush2.bf16.msra.mxu0 0
        %4301 = vmatprep.subr.bf16.mxu0 0
        %4302 = vmatpush2.bf16.msra.mxu0 0
        %4303 = vmatprep.subr.bf16.mxu0 0
        %4304 = vmatpush2.bf16.msra.mxu0 0
        %4305 = vmatprep.subr.bf16.mxu0 0
        %4306 = vmatpush2.bf16.msra.mxu0 0
        %4307 = vmatprep.subr.bf16.mxu0 0
        %4308 = vmatpush2.bf16.msra.mxu0 0
        %4309 = vmatprep.subr.bf16.mxu0 0
        %4310 = vmatpush2.bf16.msra.mxu0 0
        %4311 = vmatprep.subr.bf16.mxu0 0
        %4312 = vmatpush2.bf16.msra.mxu0 0
        %4313 = vmatprep.mubr.bf16.mxu0 0
        %4314 = vmatmul.mubr.bf16.gmra.mxu0 %v4228
        %v4315 = vpop.f32.mrf.mxu0
        %v4316 = vadd.f32 0.0, %v4315
        %v4317 = vpop.f32.mrf.mxu0
        %v4318 = vpop.f32.mrf.mxu0
        %v4319 = vadd.f32 0.0, %v4318
        %v4320 = vpop.f32.mrf.mxu0
        %4321 = vmatprep.mubr.bf16.mxu0 0
        %4322 = vmatmul.mubr.bf16.gmra.mxu0 %v4231
        %v4323 = vpop.f32.mrf.mxu0
        %v4324 = vadd.f32 0.0, %v4323
        %v4325 = vpop.f32.mrf.mxu0
        %v4326 = vpop.f32.mrf.mxu0
        %v4327 = vadd.f32 0.0, %v4326
        %v4328 = vpop.f32.mrf.mxu0
        %4329 = vmatprep.mubr.bf16.mxu0 0
        %4330 = vmatmul.mubr.bf16.gmra.mxu0 %v4234
        %v4331 = vpop.f32.mrf.mxu0
        %v4332 = vadd.f32 0.0, %v4331
        %v4333 = vpop.f32.mrf.mxu0
        %v4334 = vpop.f32.mrf.mxu0
        %v4335 = vadd.f32 0.0, %v4334
        %v4336 = vpop.f32.mrf.mxu0
        %4337 = vmatprep.mubr.bf16.mxu0 0
        %4338 = vmatmul.mubr.bf16.gmra.mxu0 %v4237
        %v4339 = vpop.f32.mrf.mxu0
        %v4340 = vadd.f32 0.0, %v4339
        %v4341 = vpop.f32.mrf.mxu0
        %v4342 = vpop.f32.mrf.mxu0
        %v4343 = vadd.f32 0.0, %v4342
        %v4344 = vpop.f32.mrf.mxu0
        %4345 = vmatprep.mubr.bf16.mxu0 0
        %4346 = vmatmul.mubr.bf16.gmra.mxu0 %v4240
        %v4347 = vpop.f32.mrf.mxu0
        %v4348 = vadd.f32 0.0, %v4347
        %v4349 = vpop.f32.mrf.mxu0
        %v4350 = vpop.f32.mrf.mxu0
        %v4351 = vadd.f32 0.0, %v4350
        %v4352 = vpop.f32.mrf.mxu0
        %4353 = vmatprep.mubr.bf16.mxu0 0
        %4354 = vmatmul.mubr.bf16.gmra.mxu0 %v4243
        %v4355 = vpop.f32.mrf.mxu0
        %v4356 = vadd.f32 0.0, %v4355
        %v4357 = vpop.f32.mrf.mxu0
        %v4358 = vpop.f32.mrf.mxu0
        %v4359 = vadd.f32 0.0, %v4358
        %v4360 = vpop.f32.mrf.mxu0
        %4361 = vmatprep.mubr.bf16.mxu0 0
        %4362 = vmatmul.mubr.bf16.gmra.mxu0 %v4246
        %v4363 = vpop.f32.mrf.mxu0
        %v4364 = vadd.f32 0.0, %v4363
        %v4365 = vpop.f32.mrf.mxu0
        %v4366 = vpop.f32.mrf.mxu0
        %v4367 = vadd.f32 0.0, %v4366
        %v4368 = vpop.f32.mrf.mxu0
        %4369 = vmatprep.mubr.bf16.mxu0 0
        %4370 = vmatmul.mubr.bf16.gmra.mxu0 %v4249
        %v4371 = vpop.f32.mrf.mxu0
        %v4372 = vadd.f32 0.0, %v4371
        %v4373 = vpop.f32.mrf.mxu0
        %v4374 = vpop.f32.mrf.mxu0
        %v4375 = vadd.f32 0.0, %v4374
        %v4376 = vpop.f32.mrf.mxu0
        %4377 = vmatprep.mubr.bf16.mxu0 0
        %4378 = vmatmul.mubr.bf16.gmra.mxu0 %v4252
        %v4379 = vpop.f32.mrf.mxu0
        %v4380 = vadd.f32 0.0, %v4379
        %v4381 = vpop.f32.mrf.mxu0
        %v4382 = vpop.f32.mrf.mxu0
        %v4383 = vadd.f32 0.0, %v4382
        %v4384 = vpop.f32.mrf.mxu0
        %4385 = vmatprep.mubr.bf16.mxu0 0
        %4386 = vmatmul.mubr.bf16.gmra.mxu0 %v4255
        %v4387 = vpop.f32.mrf.mxu0
        %v4388 = vadd.f32 0.0, %v4387
        %v4389 = vpop.f32.mrf.mxu0
        %v4390 = vpop.f32.mrf.mxu0
        %v4391 = vadd.f32 0.0, %v4390
        %v4392 = vpop.f32.mrf.mxu0
        %4393 = vmatprep.mubr.bf16.mxu0 0
        %4394 = vmatmul.mubr.bf16.gmra.mxu0 %v4258
        %v4395 = vpop.f32.mrf.mxu0
        %v4396 = vadd.f32 0.0, %v4395
        %v4397 = vpop.f32.mrf.mxu0
        %v4398 = vpop.f32.mrf.mxu0
        %v4399 = vadd.f32 0.0, %v4398
        %v4400 = vpop.f32.mrf.mxu0
        %4401 = vmatprep.mubr.bf16.mxu0 0
        %4402 = vmatmul.mubr.bf16.gmra.mxu0 %v4261
        %v4403 = vpop.f32.mrf.mxu0
        %v4404 = vadd.f32 0.0, %v4403
        %v4405 = vpop.f32.mrf.mxu0
        %v4406 = vpop.f32.mrf.mxu0
        %v4407 = vadd.f32 0.0, %v4406
        %v4408 = vpop.f32.mrf.mxu0
        %4409 = vmatprep.mubr.bf16.mxu0 0
        %4410 = vmatmul.mubr.bf16.gmra.mxu0 %v4264
        %v4411 = vpop.f32.mrf.mxu0
        %v4412 = vadd.f32 0.0, %v4411
        %v4413 = vpop.f32.mrf.mxu0
        %v4414 = vpop.f32.mrf.mxu0
        %v4415 = vadd.f32 0.0, %v4414
        %v4416 = vpop.f32.mrf.mxu0
        %4417 = vmatprep.mubr.bf16.mxu0 0
        %4418 = vmatmul.mubr.bf16.gmra.mxu0 %v4267
        %v4419 = vpop.f32.mrf.mxu0
        %v4420 = vadd.f32 0.0, %v4419
        %v4421 = vpop.f32.mrf.mxu0
        %v4422 = vpop.f32.mrf.mxu0
        %v4423 = vadd.f32 0.0, %v4422
        %v4424 = vpop.f32.mrf.mxu0
        %4425 = vmatprep.mubr.bf16.mxu0 0
        %4426 = vmatmul.mubr.bf16.gmra.mxu0 %v4270
        %v4427 = vpop.f32.mrf.mxu0
        %v4428 = vadd.f32 0.0, %v4427
        %v4429 = vpop.f32.mrf.mxu0
        %v4430 = vpop.f32.mrf.mxu0
        %v4431 = vadd.f32 0.0, %v4430
        %v4432 = vpop.f32.mrf.mxu0
        %4433 = vmatprep.mubr.bf16.mxu0 0
        %4434 = vmatmul.mubr.bf16.gmra.mxu0 %v4273
        %v4435 = vpop.f32.mrf.mxu0
        %v4436 = vadd.f32 0.0, %v4435
        %v4437 = vpop.f32.mrf.mxu0
        %v4438 = vpop.f32.mrf.mxu0
        %v4439 = vadd.f32 0.0, %v4438
        %v4440 = vpop.f32.mrf.mxu0
        %4441 = vmatprep.mubr.bf16.mxu0 0
        %4442 = vmatmul.mubr.bf16.gmra.mxu0 %v4276
        %v4443 = vpop.f32.mrf.mxu0
        %v4444 = vadd.f32 0.0, %v4443
        %v4445 = vpop.f32.mrf.mxu0
        %v4446 = vpop.f32.mrf.mxu0
        %v4447 = vadd.f32 0.0, %v4446
        %v4448 = vpop.f32.mrf.mxu0
        %4449 = vmatprep.mubr.bf16.mxu0 0
        %4450 = vmatmul.mubr.bf16.gmra.mxu0 %v4279
        %v4451 = vpop.f32.mrf.mxu0
        %v4452 = vadd.f32 0.0, %v4451
        %v4453 = vpop.f32.mrf.mxu0
        %v4454 = vpop.f32.mrf.mxu0
        %v4455 = vadd.f32 0.0, %v4454
        %v4456 = vpop.f32.mrf.mxu0
        %4457 = vdwg.mxu0
        %v4458 = vadd.f32 %v4022, %v4316
        %v4459 = vadd.f32 %v4025, %v4319
        %v4460 = vadd.f32 %v4030, %v4324
        %v4461 = vadd.f32 %v4033, %v4327
        %v4462 = vadd.f32 %v4038, %v4332
        %v4463 = vadd.f32 %v4041, %v4335
        %v4464 = vadd.f32 %v4046, %v4340
        %v4465 = vadd.f32 %v4049, %v4343
        %v4466 = vadd.f32 %v4054, %v4348
        %v4467 = vadd.f32 %v4057, %v4351
        %v4468 = vadd.f32 %v4062, %v4356
        %v4469 = vadd.f32 %v4065, %v4359
        %v4470 = vadd.f32 %v4070, %v4364
        %v4471 = vadd.f32 %v4073, %v4367
        %v4472 = vadd.f32 %v4078, %v4372
        %v4473 = vadd.f32 %v4081, %v4375
        %v4474 = vadd.f32 %v4086, %v4380
        %v4475 = vadd.f32 %v4089, %v4383
        %v4476 = vadd.f32 %v4094, %v4388
        %v4477 = vadd.f32 %v4097, %v4391
        %v4478 = vadd.f32 %v4102, %v4396
        %v4479 = vadd.f32 %v4105, %v4399
        %v4480 = vadd.f32 %v4110, %v4404
        %v4481 = vadd.f32 %v4113, %v4407
        %v4482 = vadd.f32 %v4118, %v4412
        %v4483 = vadd.f32 %v4121, %v4415
        %v4484 = vadd.f32 %v4126, %v4420
        %v4485 = vadd.f32 %v4129, %v4423
        %v4486 = vadd.f32 %v4134, %v4428
        %v4487 = vadd.f32 %v4137, %v4431
        %v4488 = vadd.f32 %v4142, %v4436
        %v4489 = vadd.f32 %v4145, %v4439
        %v4490 = vadd.f32 %v4150, %v4444
        %v4491 = vadd.f32 %v4153, %v4447
        %v4492 = vadd.f32 %v4158, %v4452
        %v4493 = vadd.f32 %v4161, %v4455
        %v4494 = vld [vmem:[#allocation2 + $0x17] sm:$0xff]
        %v4495 = vld [vmem:[#allocation2 + $0x1f] sm:$0xff]
        %v4496 = vld [vmem:[#allocation2 + $0x27] sm:$0xff]
        %v4497 = vld [vmem:[#allocation2 + $0x2f] sm:$0xff]
        %v4498 = vld [vmem:[#allocation2 + $0x37] sm:$0xff]
        %v4499 = vld [vmem:[#allocation2 + $0x3f] sm:$0xff]
        %v4500 = vld [vmem:[#allocation2 + $0x47] sm:$0xff]
        %v4501 = vld [vmem:[#allocation2 + $0x4f] sm:$0xff]
        %v4502 = vld [vmem:[#allocation2 + $0x57] sm:$0xff]
        %v4503 = vld [vmem:[#allocation2 + $0x5f] sm:$0xff]
        %v4504 = vld [vmem:[#allocation2 + $0x67] sm:$0xff]
        %v4505 = vld [vmem:[#allocation2 + $0x6f] sm:$0xff]
        %v4506 = vld [vmem:[#allocation2 + $0x77] sm:$0xff]
        %v4507 = vld [vmem:[#allocation2 + $0x7f] sm:$0xff]
        %v4508 = vld [vmem:[#allocation2 + $0x87] sm:$0xff]
        %v4509 = vld [vmem:[#allocation2 + $0x8f] sm:$0xff]
        %v4510 = vld [vmem:[#allocation2 + $0x97] sm:$0xff]
        %v4511 = vld [vmem:[#allocation2 + $0x9f] sm:$0xff]
        %v4512 = vld [vmem:[#allocation2 + $0xa7] sm:$0xff]
        %v4513 = vld [vmem:[#allocation2 + $0xaf] sm:$0xff]
        %v4514 = vld [vmem:[#allocation2 + $0xb7] sm:$0xff]
        %v4515 = vld [vmem:[#allocation2 + $0xbf] sm:$0xff]
        %v4516 = vld [vmem:[#allocation2 + $0xc7] sm:$0xff]
        %v4517 = vld [vmem:[#allocation2 + $0xcf] sm:$0xff]
        %v4518 = vld [vmem:[#allocation2 + $0xd7] sm:$0xff]
        %v4519 = vld [vmem:[#allocation2 + $0xdf] sm:$0xff]
        %v4520 = vld [vmem:[#allocation2 + $0xe7] sm:$0xff]
        %v4521 = vld [vmem:[#allocation2 + $0xef] sm:$0xff]
        %v4522 = vld [vmem:[#allocation2 + $0xf7] sm:$0xff]
        %v4523 = vld [vmem:[#allocation2 + $0xff] sm:$0xff]
        %v4524 = vld [vmem:[#allocation2 + $0x107] sm:$0xff]
        %v4525 = vld [vmem:[#allocation2 + $0x10f] sm:$0xff]
        %v4526 = vld [vmem:[#allocation2 + $0x117] sm:$0xff]
        %v4527 = vld [vmem:[#allocation2 + $0x11f] sm:$0xff]
        %v4528 = vld [vmem:[#allocation2 + $0x127] sm:$0xff]
        %v4529 = vld [vmem:[#allocation2 + $0x12f] sm:$0xff]
        %v4530 = vpack.c.bf16 %v4495, %v4494
        %v4531 = vpack.c.bf16 %v4497, %v4496
        %v4532 = vpack.c.bf16 %v4499, %v4498
        %v4533 = vpack.c.bf16 %v4501, %v4500
        %v4534 = vpack.c.bf16 %v4503, %v4502
        %v4535 = vpack.c.bf16 %v4505, %v4504
        %v4536 = vpack.c.bf16 %v4507, %v4506
        %v4537 = vpack.c.bf16 %v4509, %v4508
        %v4538 = vpack.c.bf16 %v4511, %v4510
        %v4539 = vpack.c.bf16 %v4513, %v4512
        %v4540 = vpack.c.bf16 %v4515, %v4514
        %v4541 = vpack.c.bf16 %v4517, %v4516
        %v4542 = vpack.c.bf16 %v4519, %v4518
        %v4543 = vpack.c.bf16 %v4521, %v4520
        %v4544 = vpack.c.bf16 %v4523, %v4522
        %v4545 = vpack.c.bf16 %v4525, %v4524
        %v4546 = vpack.c.bf16 %v4527, %v4526
        %v4547 = vpack.c.bf16 %v4529, %v4528
        %s4548 = scalar_lea.vmem %s3, 24
        %v4549 = vld [vmem:[%s4548] sm:$0xf]
        %v4550 = vld [vmem:[%s4548 + $0x4] sm:$0xf]
        %v4553 = vunpack.c.l.b16 %v4549
        %v4554 = vunpack.c.l.b16 %v4550
        %v4555 = vpack.c.b16 %v4554, %v4553
        %v4558 = vsel %vm3498, %v4530, 0
        %v4561 = vsel %vm3498, %v4531, 0
        %v4564 = vsel %vm3498, %v4532, 0
        %v4567 = vsel %vm3498, %v4533, 0
        %v4570 = vsel %vm3498, %v4534, 0
        %v4573 = vsel %vm3498, %v4535, 0
        %v4576 = vsel %vm3498, %v4536, 0
        %v4579 = vsel %vm3498, %v4537, 0
        %v4582 = vsel %vm3498, %v4538, 0
        %v4585 = vsel %vm3498, %v4539, 0
        %v4588 = vsel %vm3498, %v4540, 0
        %v4591 = vsel %vm3498, %v4541, 0
        %v4594 = vsel %vm3498, %v4542, 0
        %v4597 = vsel %vm3498, %v4543, 0
        %v4600 = vsel %vm3498, %v4544, 0
        %v4603 = vsel %vm3498, %v4545, 0
        %v4606 = vsel %vm3498, %v4546, 0
        %v4609 = vsel %vm3498, %v4547, 0
        %4611 = vmatprep.subr.bf16.mxu0 0
        %4612 = vmatpush1.bf16.msra.mxu0 0
        %4613 = vmatprep.subr.bf16.mxu0 0
        %4614 = vmatpush1.bf16.msra.mxu0 0
        %4615 = vmatprep.subr.bf16.mxu0 0
        %4616 = vmatpush1.bf16.msra.mxu0 0
        %4617 = vmatprep.subr.bf16.mxu0 0
        %4618 = vmatpush1.bf16.msra.mxu0 0
        %4619 = vmatprep.subr.bf16.mxu0 0
        %4620 = vmatpush1.bf16.msra.mxu0 0
        %4621 = vmatprep.subr.bf16.mxu0 0
        %4622 = vmatpush1.bf16.msra.mxu0 0
        %4623 = vmatprep.subr.bf16.mxu0 0
        %4624 = vmatpush1.bf16.msra.mxu0 0
        %4625 = vmatprep.subr.bf16.mxu0 0
        %4626 = vmatpush1.bf16.msra.mxu0 %v4555
        %4627 = vmatprep.subr.bf16.mxu0 0
        %4628 = vmatpush2.bf16.msra.mxu0 0
        %4629 = vmatprep.subr.bf16.mxu0 0
        %4630 = vmatpush2.bf16.msra.mxu0 0
        %4631 = vmatprep.subr.bf16.mxu0 0
        %4632 = vmatpush2.bf16.msra.mxu0 0
        %4633 = vmatprep.subr.bf16.mxu0 0
        %4634 = vmatpush2.bf16.msra.mxu0 0
        %4635 = vmatprep.subr.bf16.mxu0 0
        %4636 = vmatpush2.bf16.msra.mxu0 0
        %4637 = vmatprep.subr.bf16.mxu0 0
        %4638 = vmatpush2.bf16.msra.mxu0 0
        %4639 = vmatprep.subr.bf16.mxu0 0
        %4640 = vmatpush2.bf16.msra.mxu0 0
        %4641 = vmatprep.subr.bf16.mxu0 0
        %4642 = vmatpush2.bf16.msra.mxu0 0
        %4643 = vmatprep.mubr.bf16.mxu0 0
        %4644 = vmatmul.mubr.bf16.gmra.mxu0 %v4558
        %v4645 = vpop.f32.mrf.mxu0
        %v4646 = vadd.f32 0.0, %v4645
        %v4647 = vpop.f32.mrf.mxu0
        %v4648 = vpop.f32.mrf.mxu0
        %v4649 = vadd.f32 0.0, %v4648
        %v4650 = vpop.f32.mrf.mxu0
        %4651 = vmatprep.mubr.bf16.mxu0 0
        %4652 = vmatmul.mubr.bf16.gmra.mxu0 %v4561
        %v4653 = vpop.f32.mrf.mxu0
        %v4654 = vadd.f32 0.0, %v4653
        %v4655 = vpop.f32.mrf.mxu0
        %v4656 = vpop.f32.mrf.mxu0
        %v4657 = vadd.f32 0.0, %v4656
        %v4658 = vpop.f32.mrf.mxu0
        %4659 = vmatprep.mubr.bf16.mxu0 0
        %4660 = vmatmul.mubr.bf16.gmra.mxu0 %v4564
        %v4661 = vpop.f32.mrf.mxu0
        %v4662 = vadd.f32 0.0, %v4661
        %v4663 = vpop.f32.mrf.mxu0
        %v4664 = vpop.f32.mrf.mxu0
        %v4665 = vadd.f32 0.0, %v4664
        %v4666 = vpop.f32.mrf.mxu0
        %4667 = vmatprep.mubr.bf16.mxu0 0
        %4668 = vmatmul.mubr.bf16.gmra.mxu0 %v4567
        %v4669 = vpop.f32.mrf.mxu0
        %v4670 = vadd.f32 0.0, %v4669
        %v4671 = vpop.f32.mrf.mxu0
        %v4672 = vpop.f32.mrf.mxu0
        %v4673 = vadd.f32 0.0, %v4672
        %v4674 = vpop.f32.mrf.mxu0
        %4675 = vmatprep.mubr.bf16.mxu0 0
        %4676 = vmatmul.mubr.bf16.gmra.mxu0 %v4570
        %v4677 = vpop.f32.mrf.mxu0
        %v4678 = vadd.f32 0.0, %v4677
        %v4679 = vpop.f32.mrf.mxu0
        %v4680 = vpop.f32.mrf.mxu0
        %v4681 = vadd.f32 0.0, %v4680
        %v4682 = vpop.f32.mrf.mxu0
        %4683 = vmatprep.mubr.bf16.mxu0 0
        %4684 = vmatmul.mubr.bf16.gmra.mxu0 %v4573
        %v4685 = vpop.f32.mrf.mxu0
        %v4686 = vadd.f32 0.0, %v4685
        %v4687 = vpop.f32.mrf.mxu0
        %v4688 = vpop.f32.mrf.mxu0
        %v4689 = vadd.f32 0.0, %v4688
        %v4690 = vpop.f32.mrf.mxu0
        %4691 = vmatprep.mubr.bf16.mxu0 0
        %4692 = vmatmul.mubr.bf16.gmra.mxu0 %v4576
        %v4693 = vpop.f32.mrf.mxu0
        %v4694 = vadd.f32 0.0, %v4693
        %v4695 = vpop.f32.mrf.mxu0
        %v4696 = vpop.f32.mrf.mxu0
        %v4697 = vadd.f32 0.0, %v4696
        %v4698 = vpop.f32.mrf.mxu0
        %4699 = vmatprep.mubr.bf16.mxu0 0
        %4700 = vmatmul.mubr.bf16.gmra.mxu0 %v4579
        %v4701 = vpop.f32.mrf.mxu0
        %v4702 = vadd.f32 0.0, %v4701
        %v4703 = vpop.f32.mrf.mxu0
        %v4704 = vpop.f32.mrf.mxu0
        %v4705 = vadd.f32 0.0, %v4704
        %v4706 = vpop.f32.mrf.mxu0
        %4707 = vmatprep.mubr.bf16.mxu0 0
        %4708 = vmatmul.mubr.bf16.gmra.mxu0 %v4582
        %v4709 = vpop.f32.mrf.mxu0
        %v4710 = vadd.f32 0.0, %v4709
        %v4711 = vpop.f32.mrf.mxu0
        %v4712 = vpop.f32.mrf.mxu0
        %v4713 = vadd.f32 0.0, %v4712
        %v4714 = vpop.f32.mrf.mxu0
        %4715 = vmatprep.mubr.bf16.mxu0 0
        %4716 = vmatmul.mubr.bf16.gmra.mxu0 %v4585
        %v4717 = vpop.f32.mrf.mxu0
        %v4718 = vadd.f32 0.0, %v4717
        %v4719 = vpop.f32.mrf.mxu0
        %v4720 = vpop.f32.mrf.mxu0
        %v4721 = vadd.f32 0.0, %v4720
        %v4722 = vpop.f32.mrf.mxu0
        %4723 = vmatprep.mubr.bf16.mxu0 0
        %4724 = vmatmul.mubr.bf16.gmra.mxu0 %v4588
        %v4725 = vpop.f32.mrf.mxu0
        %v4726 = vadd.f32 0.0, %v4725
        %v4727 = vpop.f32.mrf.mxu0
        %v4728 = vpop.f32.mrf.mxu0
        %v4729 = vadd.f32 0.0, %v4728
        %v4730 = vpop.f32.mrf.mxu0
        %4731 = vmatprep.mubr.bf16.mxu0 0
        %4732 = vmatmul.mubr.bf16.gmra.mxu0 %v4591
        %v4733 = vpop.f32.mrf.mxu0
        %v4734 = vadd.f32 0.0, %v4733
        %v4735 = vpop.f32.mrf.mxu0
        %v4736 = vpop.f32.mrf.mxu0
        %v4737 = vadd.f32 0.0, %v4736
        %v4738 = vpop.f32.mrf.mxu0
        %4739 = vmatprep.mubr.bf16.mxu0 0
        %4740 = vmatmul.mubr.bf16.gmra.mxu0 %v4594
        %v4741 = vpop.f32.mrf.mxu0
        %v4742 = vadd.f32 0.0, %v4741
        %v4743 = vpop.f32.mrf.mxu0
        %v4744 = vpop.f32.mrf.mxu0
        %v4745 = vadd.f32 0.0, %v4744
        %v4746 = vpop.f32.mrf.mxu0
        %4747 = vmatprep.mubr.bf16.mxu0 0
        %4748 = vmatmul.mubr.bf16.gmra.mxu0 %v4597
        %v4749 = vpop.f32.mrf.mxu0
        %v4750 = vadd.f32 0.0, %v4749
        %v4751 = vpop.f32.mrf.mxu0
        %v4752 = vpop.f32.mrf.mxu0
        %v4753 = vadd.f32 0.0, %v4752
        %v4754 = vpop.f32.mrf.mxu0
        %4755 = vmatprep.mubr.bf16.mxu0 0
        %4756 = vmatmul.mubr.bf16.gmra.mxu0 %v4600
        %v4757 = vpop.f32.mrf.mxu0
        %v4758 = vadd.f32 0.0, %v4757
        %v4759 = vpop.f32.mrf.mxu0
        %v4760 = vpop.f32.mrf.mxu0
        %v4761 = vadd.f32 0.0, %v4760
        %v4762 = vpop.f32.mrf.mxu0
        %4763 = vmatprep.mubr.bf16.mxu0 0
        %4764 = vmatmul.mubr.bf16.gmra.mxu0 %v4603
        %v4765 = vpop.f32.mrf.mxu0
        %v4766 = vadd.f32 0.0, %v4765
        %v4767 = vpop.f32.mrf.mxu0
        %v4768 = vpop.f32.mrf.mxu0
        %v4769 = vadd.f32 0.0, %v4768
        %v4770 = vpop.f32.mrf.mxu0
        %4771 = vmatprep.mubr.bf16.mxu0 0
        %4772 = vmatmul.mubr.bf16.gmra.mxu0 %v4606
        %v4773 = vpop.f32.mrf.mxu0
        %v4774 = vadd.f32 0.0, %v4773
        %v4775 = vpop.f32.mrf.mxu0
        %v4776 = vpop.f32.mrf.mxu0
        %v4777 = vadd.f32 0.0, %v4776
        %v4778 = vpop.f32.mrf.mxu0
        %4779 = vmatprep.mubr.bf16.mxu0 0
        %4780 = vmatmul.mubr.bf16.gmra.mxu0 %v4609
        %v4781 = vpop.f32.mrf.mxu0
        %v4782 = vadd.f32 0.0, %v4781
        %v4783 = vpop.f32.mrf.mxu0
        %v4784 = vpop.f32.mrf.mxu0
        %v4785 = vadd.f32 0.0, %v4784
        %v4786 = vpop.f32.mrf.mxu0
        %4787 = vdwg.mxu0
        %v4788 = vadd.f32 %v4458, %v4646
        %v4789 = vadd.f32 %v4459, %v4649
        %v4790 = vadd.f32 %v4460, %v4654
        %v4791 = vadd.f32 %v4461, %v4657
        %v4792 = vadd.f32 %v4462, %v4662
        %v4793 = vadd.f32 %v4463, %v4665
        %v4794 = vadd.f32 %v4464, %v4670
        %v4795 = vadd.f32 %v4465, %v4673
        %v4796 = vadd.f32 %v4466, %v4678
        %v4797 = vadd.f32 %v4467, %v4681
        %v4798 = vadd.f32 %v4468, %v4686
        %v4799 = vadd.f32 %v4469, %v4689
        %v4800 = vadd.f32 %v4470, %v4694
        %v4801 = vadd.f32 %v4471, %v4697
        %v4802 = vadd.f32 %v4472, %v4702
        %v4803 = vadd.f32 %v4473, %v4705
        %v4804 = vadd.f32 %v4474, %v4710
        %v4805 = vadd.f32 %v4475, %v4713
        %v4806 = vadd.f32 %v4476, %v4718
        %v4807 = vadd.f32 %v4477, %v4721
        %v4808 = vadd.f32 %v4478, %v4726
        %v4809 = vadd.f32 %v4479, %v4729
        %v4810 = vadd.f32 %v4480, %v4734
        %v4811 = vadd.f32 %v4481, %v4737
        %v4812 = vadd.f32 %v4482, %v4742
        %v4813 = vadd.f32 %v4483, %v4745
        %v4814 = vadd.f32 %v4484, %v4750
        %v4815 = vadd.f32 %v4485, %v4753
        %v4816 = vadd.f32 %v4486, %v4758
        %v4817 = vadd.f32 %v4487, %v4761
        %v4818 = vadd.f32 %v4488, %v4766
        %v4819 = vadd.f32 %v4489, %v4769
        %v4820 = vadd.f32 %v4490, %v4774
        %v4821 = vadd.f32 %v4491, %v4777
        %v4822 = vadd.f32 %v4492, %v4782
        %v4823 = vadd.f32 %v4493, %v4785
        %v4824 = vld [vmem:[#allocation2 + $0x18] sm:$0xff]
        %v4825 = vld [vmem:[#allocation2 + $0x20] sm:$0xff]
        %v4826 = vld [vmem:[#allocation2 + $0x28] sm:$0xff]
        %v4827 = vld [vmem:[#allocation2 + $0x30] sm:$0xff]
        %v4828 = vld [vmem:[#allocation2 + $0x38] sm:$0xff]
        %v4829 = vld [vmem:[#allocation2 + $0x40] sm:$0xff]
        %v4830 = vld [vmem:[#allocation2 + $0x48] sm:$0xff]
        %v4831 = vld [vmem:[#allocation2 + $0x50] sm:$0xff]
        %v4832 = vld [vmem:[#allocation2 + $0x58] sm:$0xff]
        %v4833 = vld [vmem:[#allocation2 + $0x60] sm:$0xff]
        %v4834 = vld [vmem:[#allocation2 + $0x68] sm:$0xff]
        %v4835 = vld [vmem:[#allocation2 + $0x70] sm:$0xff]
        %v4836 = vld [vmem:[#allocation2 + $0x78] sm:$0xff]
        %v4837 = vld [vmem:[#allocation2 + $0x80] sm:$0xff]
        %v4838 = vld [vmem:[#allocation2 + $0x88] sm:$0xff]
        %v4839 = vld [vmem:[#allocation2 + $0x90] sm:$0xff]
        %v4840 = vld [vmem:[#allocation2 + $0x98] sm:$0xff]
        %v4841 = vld [vmem:[#allocation2 + $0xa0] sm:$0xff]
        %v4842 = vld [vmem:[#allocation2 + $0xa8] sm:$0xff]
        %v4843 = vld [vmem:[#allocation2 + $0xb0] sm:$0xff]
        %v4844 = vld [vmem:[#allocation2 + $0xb8] sm:$0xff]
        %v4845 = vld [vmem:[#allocation2 + $0xc0] sm:$0xff]
        %v4846 = vld [vmem:[#allocation2 + $0xc8] sm:$0xff]
        %v4847 = vld [vmem:[#allocation2 + $0xd0] sm:$0xff]
        %v4848 = vld [vmem:[#allocation2 + $0xd8] sm:$0xff]
        %v4849 = vld [vmem:[#allocation2 + $0xe0] sm:$0xff]
        %v4850 = vld [vmem:[#allocation2 + $0xe8] sm:$0xff]
        %v4851 = vld [vmem:[#allocation2 + $0xf0] sm:$0xff]
        %v4852 = vld [vmem:[#allocation2 + $0xf8] sm:$0xff]
        %v4853 = vld [vmem:[#allocation2 + $0x100] sm:$0xff]
        %v4854 = vld [vmem:[#allocation2 + $0x108] sm:$0xff]
        %v4855 = vld [vmem:[#allocation2 + $0x110] sm:$0xff]
        %v4856 = vld [vmem:[#allocation2 + $0x118] sm:$0xff]
        %v4857 = vld [vmem:[#allocation2 + $0x120] sm:$0xff]
        %v4858 = vld [vmem:[#allocation2 + $0x128] sm:$0xff]
        %v4859 = vld [vmem:[#allocation2 + $0x130] sm:$0xff]
        %v4860 = vpack.c.bf16 %v4825, %v4824
        %v4861 = vpack.c.bf16 %v4827, %v4826
        %v4862 = vpack.c.bf16 %v4829, %v4828
        %v4863 = vpack.c.bf16 %v4831, %v4830
        %v4864 = vpack.c.bf16 %v4833, %v4832
        %v4865 = vpack.c.bf16 %v4835, %v4834
        %v4866 = vpack.c.bf16 %v4837, %v4836
        %v4867 = vpack.c.bf16 %v4839, %v4838
        %v4868 = vpack.c.bf16 %v4841, %v4840
        %v4869 = vpack.c.bf16 %v4843, %v4842
        %v4870 = vpack.c.bf16 %v4845, %v4844
        %v4871 = vpack.c.bf16 %v4847, %v4846
        %v4872 = vpack.c.bf16 %v4849, %v4848
        %v4873 = vpack.c.bf16 %v4851, %v4850
        %v4874 = vpack.c.bf16 %v4853, %v4852
        %v4875 = vpack.c.bf16 %v4855, %v4854
        %v4876 = vpack.c.bf16 %v4857, %v4856
        %v4877 = vpack.c.bf16 %v4859, %v4858
        %s4878 = scalar_lea.vmem %s3, 32
        %v4879 = vld [vmem:[%s4878] sm:$0xf]
        %v4880 = vld [vmem:[%s4878 + $0x4] sm:$0xf]
        %v4883 = vunpack.c.l.b16 %v4879
        %v4884 = vunpack.c.l.b16 %v4880
        %v4885 = vpack.c.b16 %v4884, %v4883
        %v4888 = vsel %vm3498, %v4860, 0
        %v4891 = vsel %vm3498, %v4861, 0
        %v4894 = vsel %vm3498, %v4862, 0
        %v4897 = vsel %vm3498, %v4863, 0
        %v4900 = vsel %vm3498, %v4864, 0
        %v4903 = vsel %vm3498, %v4865, 0
        %v4906 = vsel %vm3498, %v4866, 0
        %v4909 = vsel %vm3498, %v4867, 0
        %v4912 = vsel %vm3498, %v4868, 0
        %v4915 = vsel %vm3498, %v4869, 0
        %v4918 = vsel %vm3498, %v4870, 0
        %v4921 = vsel %vm3498, %v4871, 0
        %v4924 = vsel %vm3498, %v4872, 0
        %v4927 = vsel %vm3498, %v4873, 0
        %v4930 = vsel %vm3498, %v4874, 0
        %v4933 = vsel %vm3498, %v4875, 0
        %v4936 = vsel %vm3498, %v4876, 0
        %v4939 = vsel %vm3498, %v4877, 0
        %4941 = vmatprep.subr.bf16.mxu0 0
        %4942 = vmatpush1.bf16.msra.mxu0 0
        %4943 = vmatprep.subr.bf16.mxu0 0
        %4944 = vmatpush1.bf16.msra.mxu0 0
        %4945 = vmatprep.subr.bf16.mxu0 0
        %4946 = vmatpush1.bf16.msra.mxu0 0
        %4947 = vmatprep.subr.bf16.mxu0 0
        %4948 = vmatpush1.bf16.msra.mxu0 0
        %4949 = vmatprep.subr.bf16.mxu0 0
        %4950 = vmatpush1.bf16.msra.mxu0 0
        %4951 = vmatprep.subr.bf16.mxu0 0
        %4952 = vmatpush1.bf16.msra.mxu0 0
        %4953 = vmatprep.subr.bf16.mxu0 0
        %4954 = vmatpush1.bf16.msra.mxu0 0
        %4955 = vmatprep.subr.bf16.mxu0 0
        %4956 = vmatpush1.bf16.msra.mxu0 %v4885
        %4957 = vmatprep.subr.bf16.mxu0 0
        %4958 = vmatpush2.bf16.msra.mxu0 0
        %4959 = vmatprep.subr.bf16.mxu0 0
        %4960 = vmatpush2.bf16.msra.mxu0 0
        %4961 = vmatprep.subr.bf16.mxu0 0
        %4962 = vmatpush2.bf16.msra.mxu0 0
        %4963 = vmatprep.subr.bf16.mxu0 0
        %4964 = vmatpush2.bf16.msra.mxu0 0
        %4965 = vmatprep.subr.bf16.mxu0 0
        %4966 = vmatpush2.bf16.msra.mxu0 0
        %4967 = vmatprep.subr.bf16.mxu0 0
        %4968 = vmatpush2.bf16.msra.mxu0 0
        %4969 = vmatprep.subr.bf16.mxu0 0
        %4970 = vmatpush2.bf16.msra.mxu0 0
        %4971 = vmatprep.subr.bf16.mxu0 0
        %4972 = vmatpush2.bf16.msra.mxu0 0
        %4973 = vmatprep.mubr.bf16.mxu0 0
        %4974 = vmatmul.mubr.bf16.gmra.mxu0 %v4888
        %v4975 = vpop.f32.mrf.mxu0
        %v4976 = vadd.f32 0.0, %v4975
        %v4977 = vpop.f32.mrf.mxu0
        %v4978 = vpop.f32.mrf.mxu0
        %v4979 = vadd.f32 0.0, %v4978
        %v4980 = vpop.f32.mrf.mxu0
        %4981 = vmatprep.mubr.bf16.mxu0 0
        %4982 = vmatmul.mubr.bf16.gmra.mxu0 %v4891
        %v4983 = vpop.f32.mrf.mxu0
        %v4984 = vadd.f32 0.0, %v4983
        %v4985 = vpop.f32.mrf.mxu0
        %v4986 = vpop.f32.mrf.mxu0
        %v4987 = vadd.f32 0.0, %v4986
        %v4988 = vpop.f32.mrf.mxu0
        %4989 = vmatprep.mubr.bf16.mxu0 0
        %4990 = vmatmul.mubr.bf16.gmra.mxu0 %v4894
        %v4991 = vpop.f32.mrf.mxu0
        %v4992 = vadd.f32 0.0, %v4991
        %v4993 = vpop.f32.mrf.mxu0
        %v4994 = vpop.f32.mrf.mxu0
        %v4995 = vadd.f32 0.0, %v4994
        %v4996 = vpop.f32.mrf.mxu0
        %4997 = vmatprep.mubr.bf16.mxu0 0
        %4998 = vmatmul.mubr.bf16.gmra.mxu0 %v4897
        %v4999 = vpop.f32.mrf.mxu0
        %v5000 = vadd.f32 0.0, %v4999
        %v5001 = vpop.f32.mrf.mxu0
        %v5002 = vpop.f32.mrf.mxu0
        %v5003 = vadd.f32 0.0, %v5002
        %v5004 = vpop.f32.mrf.mxu0
        %5005 = vmatprep.mubr.bf16.mxu0 0
        %5006 = vmatmul.mubr.bf16.gmra.mxu0 %v4900
        %v5007 = vpop.f32.mrf.mxu0
        %v5008 = vadd.f32 0.0, %v5007
        %v5009 = vpop.f32.mrf.mxu0
        %v5010 = vpop.f32.mrf.mxu0
        %v5011 = vadd.f32 0.0, %v5010
        %v5012 = vpop.f32.mrf.mxu0
        %5013 = vmatprep.mubr.bf16.mxu0 0
        %5014 = vmatmul.mubr.bf16.gmra.mxu0 %v4903
        %v5015 = vpop.f32.mrf.mxu0
        %v5016 = vadd.f32 0.0, %v5015
        %v5017 = vpop.f32.mrf.mxu0
        %v5018 = vpop.f32.mrf.mxu0
        %v5019 = vadd.f32 0.0, %v5018
        %v5020 = vpop.f32.mrf.mxu0
        %5021 = vmatprep.mubr.bf16.mxu0 0
        %5022 = vmatmul.mubr.bf16.gmra.mxu0 %v4906
        %v5023 = vpop.f32.mrf.mxu0
        %v5024 = vadd.f32 0.0, %v5023
        %v5025 = vpop.f32.mrf.mxu0
        %v5026 = vpop.f32.mrf.mxu0
        %v5027 = vadd.f32 0.0, %v5026
        %v5028 = vpop.f32.mrf.mxu0
        %5029 = vmatprep.mubr.bf16.mxu0 0
        %5030 = vmatmul.mubr.bf16.gmra.mxu0 %v4909
        %v5031 = vpop.f32.mrf.mxu0
        %v5032 = vadd.f32 0.0, %v5031
        %v5033 = vpop.f32.mrf.mxu0
        %v5034 = vpop.f32.mrf.mxu0
        %v5035 = vadd.f32 0.0, %v5034
        %v5036 = vpop.f32.mrf.mxu0
        %5037 = vmatprep.mubr.bf16.mxu0 0
        %5038 = vmatmul.mubr.bf16.gmra.mxu0 %v4912
        %v5039 = vpop.f32.mrf.mxu0
        %v5040 = vadd.f32 0.0, %v5039
        %v5041 = vpop.f32.mrf.mxu0
        %v5042 = vpop.f32.mrf.mxu0
        %v5043 = vadd.f32 0.0, %v5042
        %v5044 = vpop.f32.mrf.mxu0
        %5045 = vmatprep.mubr.bf16.mxu0 0
        %5046 = vmatmul.mubr.bf16.gmra.mxu0 %v4915
        %v5047 = vpop.f32.mrf.mxu0
        %v5048 = vadd.f32 0.0, %v5047
        %v5049 = vpop.f32.mrf.mxu0
        %v5050 = vpop.f32.mrf.mxu0
        %v5051 = vadd.f32 0.0, %v5050
        %v5052 = vpop.f32.mrf.mxu0
        %5053 = vmatprep.mubr.bf16.mxu0 0
        %5054 = vmatmul.mubr.bf16.gmra.mxu0 %v4918
        %v5055 = vpop.f32.mrf.mxu0
        %v5056 = vadd.f32 0.0, %v5055
        %v5057 = vpop.f32.mrf.mxu0
        %v5058 = vpop.f32.mrf.mxu0
        %v5059 = vadd.f32 0.0, %v5058
        %v5060 = vpop.f32.mrf.mxu0
        %5061 = vmatprep.mubr.bf16.mxu0 0
        %5062 = vmatmul.mubr.bf16.gmra.mxu0 %v4921
        %v5063 = vpop.f32.mrf.mxu0
        %v5064 = vadd.f32 0.0, %v5063
        %v5065 = vpop.f32.mrf.mxu0
        %v5066 = vpop.f32.mrf.mxu0
        %v5067 = vadd.f32 0.0, %v5066
        %v5068 = vpop.f32.mrf.mxu0
        %5069 = vmatprep.mubr.bf16.mxu0 0
        %5070 = vmatmul.mubr.bf16.gmra.mxu0 %v4924
        %v5071 = vpop.f32.mrf.mxu0
        %v5072 = vadd.f32 0.0, %v5071
        %v5073 = vpop.f32.mrf.mxu0
        %v5074 = vpop.f32.mrf.mxu0
        %v5075 = vadd.f32 0.0, %v5074
        %v5076 = vpop.f32.mrf.mxu0
        %5077 = vmatprep.mubr.bf16.mxu0 0
        %5078 = vmatmul.mubr.bf16.gmra.mxu0 %v4927
        %v5079 = vpop.f32.mrf.mxu0
        %v5080 = vadd.f32 0.0, %v5079
        %v5081 = vpop.f32.mrf.mxu0
        %v5082 = vpop.f32.mrf.mxu0
        %v5083 = vadd.f32 0.0, %v5082
        %v5084 = vpop.f32.mrf.mxu0
        %5085 = vmatprep.mubr.bf16.mxu0 0
        %5086 = vmatmul.mubr.bf16.gmra.mxu0 %v4930
        %v5087 = vpop.f32.mrf.mxu0
        %v5088 = vadd.f32 0.0, %v5087
        %v5089 = vpop.f32.mrf.mxu0
        %v5090 = vpop.f32.mrf.mxu0
        %v5091 = vadd.f32 0.0, %v5090
        %v5092 = vpop.f32.mrf.mxu0
        %5093 = vmatprep.mubr.bf16.mxu0 0
        %5094 = vmatmul.mubr.bf16.gmra.mxu0 %v4933
        %v5095 = vpop.f32.mrf.mxu0
        %v5096 = vadd.f32 0.0, %v5095
        %v5097 = vpop.f32.mrf.mxu0
        %v5098 = vpop.f32.mrf.mxu0
        %v5099 = vadd.f32 0.0, %v5098
        %v5100 = vpop.f32.mrf.mxu0
        %5101 = vmatprep.mubr.bf16.mxu0 0
        %5102 = vmatmul.mubr.bf16.gmra.mxu0 %v4936
        %v5103 = vpop.f32.mrf.mxu0
        %v5104 = vadd.f32 0.0, %v5103
        %v5105 = vpop.f32.mrf.mxu0
        %v5106 = vpop.f32.mrf.mxu0
        %v5107 = vadd.f32 0.0, %v5106
        %v5108 = vpop.f32.mrf.mxu0
        %5109 = vmatprep.mubr.bf16.mxu0 0
        %5110 = vmatmul.mubr.bf16.gmra.mxu0 %v4939
        %v5111 = vpop.f32.mrf.mxu0
        %v5112 = vadd.f32 0.0, %v5111
        %v5113 = vpop.f32.mrf.mxu0
        %v5114 = vpop.f32.mrf.mxu0
        %v5115 = vadd.f32 0.0, %v5114
        %v5116 = vpop.f32.mrf.mxu0
        %5117 = vdwg.mxu0
        %v5118 = vadd.f32 %v4788, %v4976
        %v5119 = vadd.f32 %v4789, %v4979
        %v5120 = vadd.f32 %v4790, %v4984
        %v5121 = vadd.f32 %v4791, %v4987
        %v5122 = vadd.f32 %v4792, %v4992
        %v5123 = vadd.f32 %v4793, %v4995
        %v5124 = vadd.f32 %v4794, %v5000
        %v5125 = vadd.f32 %v4795, %v5003
        %v5126 = vadd.f32 %v4796, %v5008
        %v5127 = vadd.f32 %v4797, %v5011
        %v5128 = vadd.f32 %v4798, %v5016
        %v5129 = vadd.f32 %v4799, %v5019
        %v5130 = vadd.f32 %v4800, %v5024
        %v5131 = vadd.f32 %v4801, %v5027
        %v5132 = vadd.f32 %v4802, %v5032
        %v5133 = vadd.f32 %v4803, %v5035
        %v5134 = vadd.f32 %v4804, %v5040
        %v5135 = vadd.f32 %v4805, %v5043
        %v5136 = vadd.f32 %v4806, %v5048
        %v5137 = vadd.f32 %v4807, %v5051
        %v5138 = vadd.f32 %v4808, %v5056
        %v5139 = vadd.f32 %v4809, %v5059
        %v5140 = vadd.f32 %v4810, %v5064
        %v5141 = vadd.f32 %v4811, %v5067
        %v5142 = vadd.f32 %v4812, %v5072
        %v5143 = vadd.f32 %v4813, %v5075
        %v5144 = vadd.f32 %v4814, %v5080
        %v5145 = vadd.f32 %v4815, %v5083
        %v5146 = vadd.f32 %v4816, %v5088
        %v5147 = vadd.f32 %v4817, %v5091
        %v5148 = vadd.f32 %v4818, %v5096
        %v5149 = vadd.f32 %v4819, %v5099
        %v5150 = vadd.f32 %v4820, %v5104
        %v5151 = vadd.f32 %v4821, %v5107
        %v5152 = vadd.f32 %v4822, %v5112
        %v5153 = vadd.f32 %v4823, %v5115
        %v5154 = vld [vmem:[#allocation2 + $0x19] sm:$0xff]
        %v5155 = vld [vmem:[#allocation2 + $0x21] sm:$0xff]
        %v5156 = vld [vmem:[#allocation2 + $0x29] sm:$0xff]
        %v5157 = vld [vmem:[#allocation2 + $0x31] sm:$0xff]
        %v5158 = vld [vmem:[#allocation2 + $0x39] sm:$0xff]
        %v5159 = vld [vmem:[#allocation2 + $0x41] sm:$0xff]
        %v5160 = vld [vmem:[#allocation2 + $0x49] sm:$0xff]
        %v5161 = vld [vmem:[#allocation2 + $0x51] sm:$0xff]
        %v5162 = vld [vmem:[#allocation2 + $0x59] sm:$0xff]
        %v5163 = vld [vmem:[#allocation2 + $0x61] sm:$0xff]
        %v5164 = vld [vmem:[#allocation2 + $0x69] sm:$0xff]
        %v5165 = vld [vmem:[#allocation2 + $0x71] sm:$0xff]
        %v5166 = vld [vmem:[#allocation2 + $0x79] sm:$0xff]
        %v5167 = vld [vmem:[#allocation2 + $0x81] sm:$0xff]
        %v5168 = vld [vmem:[#allocation2 + $0x89] sm:$0xff]
        %v5169 = vld [vmem:[#allocation2 + $0x91] sm:$0xff]
        %v5170 = vld [vmem:[#allocation2 + $0x99] sm:$0xff]
        %v5171 = vld [vmem:[#allocation2 + $0xa1] sm:$0xff]
        %v5172 = vld [vmem:[#allocation2 + $0xa9] sm:$0xff]
        %v5173 = vld [vmem:[#allocation2 + $0xb1] sm:$0xff]
        %v5174 = vld [vmem:[#allocation2 + $0xb9] sm:$0xff]
        %v5175 = vld [vmem:[#allocation2 + $0xc1] sm:$0xff]
        %v5176 = vld [vmem:[#allocation2 + $0xc9] sm:$0xff]
        %v5177 = vld [vmem:[#allocation2 + $0xd1] sm:$0xff]
        %v5178 = vld [vmem:[#allocation2 + $0xd9] sm:$0xff]
        %v5179 = vld [vmem:[#allocation2 + $0xe1] sm:$0xff]
        %v5180 = vld [vmem:[#allocation2 + $0xe9] sm:$0xff]
        %v5181 = vld [vmem:[#allocation2 + $0xf1] sm:$0xff]
        %v5182 = vld [vmem:[#allocation2 + $0xf9] sm:$0xff]
        %v5183 = vld [vmem:[#allocation2 + $0x101] sm:$0xff]
        %v5184 = vld [vmem:[#allocation2 + $0x109] sm:$0xff]
        %v5185 = vld [vmem:[#allocation2 + $0x111] sm:$0xff]
        %v5186 = vld [vmem:[#allocation2 + $0x119] sm:$0xff]
        %v5187 = vld [vmem:[#allocation2 + $0x121] sm:$0xff]
        %v5188 = vld [vmem:[#allocation2 + $0x129] sm:$0xff]
        %v5189 = vld [vmem:[#allocation2 + $0x131] sm:$0xff]
        %v5190 = vpack.c.bf16 %v5155, %v5154
        %v5191 = vpack.c.bf16 %v5157, %v5156
        %v5192 = vpack.c.bf16 %v5159, %v5158
        %v5193 = vpack.c.bf16 %v5161, %v5160
        %v5194 = vpack.c.bf16 %v5163, %v5162
        %v5195 = vpack.c.bf16 %v5165, %v5164
        %v5196 = vpack.c.bf16 %v5167, %v5166
        %v5197 = vpack.c.bf16 %v5169, %v5168
        %v5198 = vpack.c.bf16 %v5171, %v5170
        %v5199 = vpack.c.bf16 %v5173, %v5172
        %v5200 = vpack.c.bf16 %v5175, %v5174
        %v5201 = vpack.c.bf16 %v5177, %v5176
        %v5202 = vpack.c.bf16 %v5179, %v5178
        %v5203 = vpack.c.bf16 %v5181, %v5180
        %v5204 = vpack.c.bf16 %v5183, %v5182
        %v5205 = vpack.c.bf16 %v5185, %v5184
        %v5206 = vpack.c.bf16 %v5187, %v5186
        %v5207 = vpack.c.bf16 %v5189, %v5188
        %s5208 = scalar_lea.vmem %s3, 40
        %v5209 = vld [vmem:[%s5208] sm:$0xf]
        %v5210 = vld [vmem:[%s5208 + $0x4] sm:$0xf]
        %v5213 = vunpack.c.l.b16 %v5209
        %v5214 = vunpack.c.l.b16 %v5210
        %v5215 = vpack.c.b16 %v5214, %v5213
        %v5218 = vsel %vm3498, %v5190, 0
        %v5221 = vsel %vm3498, %v5191, 0
        %v5224 = vsel %vm3498, %v5192, 0
        %v5227 = vsel %vm3498, %v5193, 0
        %v5230 = vsel %vm3498, %v5194, 0
        %v5233 = vsel %vm3498, %v5195, 0
        %v5236 = vsel %vm3498, %v5196, 0
        %v5239 = vsel %vm3498, %v5197, 0
        %v5242 = vsel %vm3498, %v5198, 0
        %v5245 = vsel %vm3498, %v5199, 0
        %v5248 = vsel %vm3498, %v5200, 0
        %v5251 = vsel %vm3498, %v5201, 0
        %v5254 = vsel %vm3498, %v5202, 0
        %v5257 = vsel %vm3498, %v5203, 0
        %v5260 = vsel %vm3498, %v5204, 0
        %v5263 = vsel %vm3498, %v5205, 0
        %v5266 = vsel %vm3498, %v5206, 0
        %v5269 = vsel %vm3498, %v5207, 0
        %5271 = vmatprep.subr.bf16.mxu0 0
        %5272 = vmatpush1.bf16.msra.mxu0 0
        %5273 = vmatprep.subr.bf16.mxu0 0
        %5274 = vmatpush1.bf16.msra.mxu0 0
        %5275 = vmatprep.subr.bf16.mxu0 0
        %5276 = vmatpush1.bf16.msra.mxu0 0
        %5277 = vmatprep.subr.bf16.mxu0 0
        %5278 = vmatpush1.bf16.msra.mxu0 0
        %5279 = vmatprep.subr.bf16.mxu0 0
        %5280 = vmatpush1.bf16.msra.mxu0 0
        %5281 = vmatprep.subr.bf16.mxu0 0
        %5282 = vmatpush1.bf16.msra.mxu0 0
        %5283 = vmatprep.subr.bf16.mxu0 0
        %5284 = vmatpush1.bf16.msra.mxu0 0
        %5285 = vmatprep.subr.bf16.mxu0 0
        %5286 = vmatpush1.bf16.msra.mxu0 %v5215
        %5287 = vmatprep.subr.bf16.mxu0 0
        %5288 = vmatpush2.bf16.msra.mxu0 0
        %5289 = vmatprep.subr.bf16.mxu0 0
        %5290 = vmatpush2.bf16.msra.mxu0 0
        %5291 = vmatprep.subr.bf16.mxu0 0
        %5292 = vmatpush2.bf16.msra.mxu0 0
        %5293 = vmatprep.subr.bf16.mxu0 0
        %5294 = vmatpush2.bf16.msra.mxu0 0
        %5295 = vmatprep.subr.bf16.mxu0 0
        %5296 = vmatpush2.bf16.msra.mxu0 0
        %5297 = vmatprep.subr.bf16.mxu0 0
        %5298 = vmatpush2.bf16.msra.mxu0 0
        %5299 = vmatprep.subr.bf16.mxu0 0
        %5300 = vmatpush2.bf16.msra.mxu0 0
        %5301 = vmatprep.subr.bf16.mxu0 0
        %5302 = vmatpush2.bf16.msra.mxu0 0
        %5303 = vmatprep.mubr.bf16.mxu0 0
        %5304 = vmatmul.mubr.bf16.gmra.mxu0 %v5218
        %v5305 = vpop.f32.mrf.mxu0
        %v5306 = vadd.f32 0.0, %v5305
        %v5307 = vpop.f32.mrf.mxu0
        %v5308 = vpop.f32.mrf.mxu0
        %v5309 = vadd.f32 0.0, %v5308
        %v5310 = vpop.f32.mrf.mxu0
        %5311 = vmatprep.mubr.bf16.mxu0 0
        %5312 = vmatmul.mubr.bf16.gmra.mxu0 %v5221
        %v5313 = vpop.f32.mrf.mxu0
        %v5314 = vadd.f32 0.0, %v5313
        %v5315 = vpop.f32.mrf.mxu0
        %v5316 = vpop.f32.mrf.mxu0
        %v5317 = vadd.f32 0.0, %v5316
        %v5318 = vpop.f32.mrf.mxu0
        %5319 = vmatprep.mubr.bf16.mxu0 0
        %5320 = vmatmul.mubr.bf16.gmra.mxu0 %v5224
        %v5321 = vpop.f32.mrf.mxu0
        %v5322 = vadd.f32 0.0, %v5321
        %v5323 = vpop.f32.mrf.mxu0
        %v5324 = vpop.f32.mrf.mxu0
        %v5325 = vadd.f32 0.0, %v5324
        %v5326 = vpop.f32.mrf.mxu0
        %5327 = vmatprep.mubr.bf16.mxu0 0
        %5328 = vmatmul.mubr.bf16.gmra.mxu0 %v5227
        %v5329 = vpop.f32.mrf.mxu0
        %v5330 = vadd.f32 0.0, %v5329
        %v5331 = vpop.f32.mrf.mxu0
        %v5332 = vpop.f32.mrf.mxu0
        %v5333 = vadd.f32 0.0, %v5332
        %v5334 = vpop.f32.mrf.mxu0
        %5335 = vmatprep.mubr.bf16.mxu0 0
        %5336 = vmatmul.mubr.bf16.gmra.mxu0 %v5230
        %v5337 = vpop.f32.mrf.mxu0
        %v5338 = vadd.f32 0.0, %v5337
        %v5339 = vpop.f32.mrf.mxu0
        %v5340 = vpop.f32.mrf.mxu0
        %v5341 = vadd.f32 0.0, %v5340
        %v5342 = vpop.f32.mrf.mxu0
        %5343 = vmatprep.mubr.bf16.mxu0 0
        %5344 = vmatmul.mubr.bf16.gmra.mxu0 %v5233
        %v5345 = vpop.f32.mrf.mxu0
        %v5346 = vadd.f32 0.0, %v5345
        %v5347 = vpop.f32.mrf.mxu0
        %v5348 = vpop.f32.mrf.mxu0
        %v5349 = vadd.f32 0.0, %v5348
        %v5350 = vpop.f32.mrf.mxu0
        %5351 = vmatprep.mubr.bf16.mxu0 0
        %5352 = vmatmul.mubr.bf16.gmra.mxu0 %v5236
        %v5353 = vpop.f32.mrf.mxu0
        %v5354 = vadd.f32 0.0, %v5353
        %v5355 = vpop.f32.mrf.mxu0
        %v5356 = vpop.f32.mrf.mxu0
        %v5357 = vadd.f32 0.0, %v5356
        %v5358 = vpop.f32.mrf.mxu0
        %5359 = vmatprep.mubr.bf16.mxu0 0
        %5360 = vmatmul.mubr.bf16.gmra.mxu0 %v5239
        %v5361 = vpop.f32.mrf.mxu0
        %v5362 = vadd.f32 0.0, %v5361
        %v5363 = vpop.f32.mrf.mxu0
        %v5364 = vpop.f32.mrf.mxu0
        %v5365 = vadd.f32 0.0, %v5364
        %v5366 = vpop.f32.mrf.mxu0
        %5367 = vmatprep.mubr.bf16.mxu0 0
        %5368 = vmatmul.mubr.bf16.gmra.mxu0 %v5242
        %v5369 = vpop.f32.mrf.mxu0
        %v5370 = vadd.f32 0.0, %v5369
        %v5371 = vpop.f32.mrf.mxu0
        %v5372 = vpop.f32.mrf.mxu0
        %v5373 = vadd.f32 0.0, %v5372
        %v5374 = vpop.f32.mrf.mxu0
        %5375 = vmatprep.mubr.bf16.mxu0 0
        %5376 = vmatmul.mubr.bf16.gmra.mxu0 %v5245
        %v5377 = vpop.f32.mrf.mxu0
        %v5378 = vadd.f32 0.0, %v5377
        %v5379 = vpop.f32.mrf.mxu0
        %v5380 = vpop.f32.mrf.mxu0
        %v5381 = vadd.f32 0.0, %v5380
        %v5382 = vpop.f32.mrf.mxu0
        %5383 = vmatprep.mubr.bf16.mxu0 0
        %5384 = vmatmul.mubr.bf16.gmra.mxu0 %v5248
        %v5385 = vpop.f32.mrf.mxu0
        %v5386 = vadd.f32 0.0, %v5385
        %v5387 = vpop.f32.mrf.mxu0
        %v5388 = vpop.f32.mrf.mxu0
        %v5389 = vadd.f32 0.0, %v5388
        %v5390 = vpop.f32.mrf.mxu0
        %5391 = vmatprep.mubr.bf16.mxu0 0
        %5392 = vmatmul.mubr.bf16.gmra.mxu0 %v5251
        %v5393 = vpop.f32.mrf.mxu0
        %v5394 = vadd.f32 0.0, %v5393
        %v5395 = vpop.f32.mrf.mxu0
        %v5396 = vpop.f32.mrf.mxu0
        %v5397 = vadd.f32 0.0, %v5396
        %v5398 = vpop.f32.mrf.mxu0
        %5399 = vmatprep.mubr.bf16.mxu0 0
        %5400 = vmatmul.mubr.bf16.gmra.mxu0 %v5254
        %v5401 = vpop.f32.mrf.mxu0
        %v5402 = vadd.f32 0.0, %v5401
        %v5403 = vpop.f32.mrf.mxu0
        %v5404 = vpop.f32.mrf.mxu0
        %v5405 = vadd.f32 0.0, %v5404
        %v5406 = vpop.f32.mrf.mxu0
        %5407 = vmatprep.mubr.bf16.mxu0 0
        %5408 = vmatmul.mubr.bf16.gmra.mxu0 %v5257
        %v5409 = vpop.f32.mrf.mxu0
        %v5410 = vadd.f32 0.0, %v5409
        %v5411 = vpop.f32.mrf.mxu0
        %v5412 = vpop.f32.mrf.mxu0
        %v5413 = vadd.f32 0.0, %v5412
        %v5414 = vpop.f32.mrf.mxu0
        %5415 = vmatprep.mubr.bf16.mxu0 0
        %5416 = vmatmul.mubr.bf16.gmra.mxu0 %v5260
        %v5417 = vpop.f32.mrf.mxu0
        %v5418 = vadd.f32 0.0, %v5417
        %v5419 = vpop.f32.mrf.mxu0
        %v5420 = vpop.f32.mrf.mxu0
        %v5421 = vadd.f32 0.0, %v5420
        %v5422 = vpop.f32.mrf.mxu0
        %5423 = vmatprep.mubr.bf16.mxu0 0
        %5424 = vmatmul.mubr.bf16.gmra.mxu0 %v5263
        %v5425 = vpop.f32.mrf.mxu0
        %v5426 = vadd.f32 0.0, %v5425
        %v5427 = vpop.f32.mrf.mxu0
        %v5428 = vpop.f32.mrf.mxu0
        %v5429 = vadd.f32 0.0, %v5428
        %v5430 = vpop.f32.mrf.mxu0
        %5431 = vmatprep.mubr.bf16.mxu0 0
        %5432 = vmatmul.mubr.bf16.gmra.mxu0 %v5266
        %v5433 = vpop.f32.mrf.mxu0
        %v5434 = vadd.f32 0.0, %v5433
        %v5435 = vpop.f32.mrf.mxu0
        %v5436 = vpop.f32.mrf.mxu0
        %v5437 = vadd.f32 0.0, %v5436
        %v5438 = vpop.f32.mrf.mxu0
        %5439 = vmatprep.mubr.bf16.mxu0 0
        %5440 = vmatmul.mubr.bf16.gmra.mxu0 %v5269
        %v5441 = vpop.f32.mrf.mxu0
        %v5442 = vadd.f32 0.0, %v5441
        %v5443 = vpop.f32.mrf.mxu0
        %v5444 = vpop.f32.mrf.mxu0
        %v5445 = vadd.f32 0.0, %v5444
        %v5446 = vpop.f32.mrf.mxu0
        %5447 = vdwg.mxu0
        %v5448 = vadd.f32 %v5118, %v5306
        %v5449 = vadd.f32 %v5119, %v5309
        %v5450 = vadd.f32 %v5120, %v5314
        %v5451 = vadd.f32 %v5121, %v5317
        %v5452 = vadd.f32 %v5122, %v5322
        %v5453 = vadd.f32 %v5123, %v5325
        %v5454 = vadd.f32 %v5124, %v5330
        %v5455 = vadd.f32 %v5125, %v5333
        %v5456 = vadd.f32 %v5126, %v5338
        %v5457 = vadd.f32 %v5127, %v5341
        %v5458 = vadd.f32 %v5128, %v5346
        %v5459 = vadd.f32 %v5129, %v5349
        %v5460 = vadd.f32 %v5130, %v5354
        %v5461 = vadd.f32 %v5131, %v5357
        %v5462 = vadd.f32 %v5132, %v5362
        %v5463 = vadd.f32 %v5133, %v5365
        %v5464 = vadd.f32 %v5134, %v5370
        %v5465 = vadd.f32 %v5135, %v5373
        %v5466 = vadd.f32 %v5136, %v5378
        %v5467 = vadd.f32 %v5137, %v5381
        %v5468 = vadd.f32 %v5138, %v5386
        %v5469 = vadd.f32 %v5139, %v5389
        %v5470 = vadd.f32 %v5140, %v5394
        %v5471 = vadd.f32 %v5141, %v5397
        %v5472 = vadd.f32 %v5142, %v5402
        %v5473 = vadd.f32 %v5143, %v5405
        %v5474 = vadd.f32 %v5144, %v5410
        %v5475 = vadd.f32 %v5145, %v5413
        %v5476 = vadd.f32 %v5146, %v5418
        %v5477 = vadd.f32 %v5147, %v5421
        %v5478 = vadd.f32 %v5148, %v5426
        %v5479 = vadd.f32 %v5149, %v5429
        %v5480 = vadd.f32 %v5150, %v5434
        %v5481 = vadd.f32 %v5151, %v5437
        %v5482 = vadd.f32 %v5152, %v5442
        %v5483 = vadd.f32 %v5153, %v5445
        %v5484 = vld [vmem:[#allocation2 + $0x29] sm:$0xff]
        %v5485 = vld [vmem:[#allocation2 + $0x31] sm:$0xff]
        %v5486 = vld [vmem:[#allocation2 + $0x39] sm:$0xff]
        %v5487 = vld [vmem:[#allocation2 + $0x41] sm:$0xff]
        %v5488 = vld [vmem:[#allocation2 + $0x49] sm:$0xff]
        %v5489 = vld [vmem:[#allocation2 + $0x51] sm:$0xff]
        %v5490 = vld [vmem:[#allocation2 + $0x59] sm:$0xff]
        %v5491 = vld [vmem:[#allocation2 + $0x61] sm:$0xff]
        %v5492 = vld [vmem:[#allocation2 + $0x69] sm:$0xff]
        %v5493 = vld [vmem:[#allocation2 + $0x71] sm:$0xff]
        %v5494 = vld [vmem:[#allocation2 + $0x79] sm:$0xff]
        %v5495 = vld [vmem:[#allocation2 + $0x81] sm:$0xff]
        %v5496 = vld [vmem:[#allocation2 + $0x89] sm:$0xff]
        %v5497 = vld [vmem:[#allocation2 + $0x91] sm:$0xff]
        %v5498 = vld [vmem:[#allocation2 + $0x99] sm:$0xff]
        %v5499 = vld [vmem:[#allocation2 + $0xa1] sm:$0xff]
        %v5500 = vld [vmem:[#allocation2 + $0xa9] sm:$0xff]
        %v5501 = vld [vmem:[#allocation2 + $0xb1] sm:$0xff]
        %v5502 = vld [vmem:[#allocation2 + $0xb9] sm:$0xff]
        %v5503 = vld [vmem:[#allocation2 + $0xc1] sm:$0xff]
        %v5504 = vld [vmem:[#allocation2 + $0xc9] sm:$0xff]
        %v5505 = vld [vmem:[#allocation2 + $0xd1] sm:$0xff]
        %v5506 = vld [vmem:[#allocation2 + $0xd9] sm:$0xff]
        %v5507 = vld [vmem:[#allocation2 + $0xe1] sm:$0xff]
        %v5508 = vld [vmem:[#allocation2 + $0xe9] sm:$0xff]
        %v5509 = vld [vmem:[#allocation2 + $0xf1] sm:$0xff]
        %v5510 = vld [vmem:[#allocation2 + $0xf9] sm:$0xff]
        %v5511 = vld [vmem:[#allocation2 + $0x101] sm:$0xff]
        %v5512 = vld [vmem:[#allocation2 + $0x109] sm:$0xff]
        %v5513 = vld [vmem:[#allocation2 + $0x111] sm:$0xff]
        %v5514 = vld [vmem:[#allocation2 + $0x119] sm:$0xff]
        %v5515 = vld [vmem:[#allocation2 + $0x121] sm:$0xff]
        %v5516 = vld [vmem:[#allocation2 + $0x129] sm:$0xff]
        %v5517 = vld [vmem:[#allocation2 + $0x131] sm:$0xff]
        %v5518 = vld [vmem:[#allocation2 + $0x139] sm:$0xff]
        %v5519 = vld [vmem:[#allocation2 + $0x141] sm:$0xff]
        %v5520 = vpack.c.bf16 %v5485, %v5484
        %v5521 = vpack.c.bf16 %v5487, %v5486
        %v5522 = vpack.c.bf16 %v5489, %v5488
        %v5523 = vpack.c.bf16 %v5491, %v5490
        %v5524 = vpack.c.bf16 %v5493, %v5492
        %v5525 = vpack.c.bf16 %v5495, %v5494
        %v5526 = vpack.c.bf16 %v5497, %v5496
        %v5527 = vpack.c.bf16 %v5499, %v5498
        %v5528 = vpack.c.bf16 %v5501, %v5500
        %v5529 = vpack.c.bf16 %v5503, %v5502
        %v5530 = vpack.c.bf16 %v5505, %v5504
        %v5531 = vpack.c.bf16 %v5507, %v5506
        %v5532 = vpack.c.bf16 %v5509, %v5508
        %v5533 = vpack.c.bf16 %v5511, %v5510
        %v5534 = vpack.c.bf16 %v5513, %v5512
        %v5535 = vpack.c.bf16 %v5515, %v5514
        %v5536 = vpack.c.bf16 %v5517, %v5516
        %v5537 = vpack.c.bf16 %v5519, %v5518
        %s5538 = scalar_lea.vmem %s3, 48
        %v5539 = vld [vmem:[%s5538] sm:$0xf]
        %v5540 = vld [vmem:[%s5538 + $0x4] sm:$0xf]
        %v5543 = vunpack.c.l.b16 %v5539
        %v5544 = vunpack.c.l.b16 %v5540
        %v5545 = vpack.c.b16 %v5544, %v5543
        %v5548 = vsel %vm3498, %v5520, 0
        %v5551 = vsel %vm3498, %v5521, 0
        %v5554 = vsel %vm3498, %v5522, 0
        %v5557 = vsel %vm3498, %v5523, 0
        %v5560 = vsel %vm3498, %v5524, 0
        %v5563 = vsel %vm3498, %v5525, 0
        %v5566 = vsel %vm3498, %v5526, 0
        %v5569 = vsel %vm3498, %v5527, 0
        %v5572 = vsel %vm3498, %v5528, 0
        %v5575 = vsel %vm3498, %v5529, 0
        %v5578 = vsel %vm3498, %v5530, 0
        %v5581 = vsel %vm3498, %v5531, 0
        %v5584 = vsel %vm3498, %v5532, 0
        %v5587 = vsel %vm3498, %v5533, 0
        %v5590 = vsel %vm3498, %v5534, 0
        %v5593 = vsel %vm3498, %v5535, 0
        %v5596 = vsel %vm3498, %v5536, 0
        %v5599 = vsel %vm3498, %v5537, 0
        %5601 = vmatprep.subr.bf16.mxu0 0
        %5602 = vmatpush1.bf16.msra.mxu0 0
        %5603 = vmatprep.subr.bf16.mxu0 0
        %5604 = vmatpush1.bf16.msra.mxu0 0
        %5605 = vmatprep.subr.bf16.mxu0 0
        %5606 = vmatpush1.bf16.msra.mxu0 0
        %5607 = vmatprep.subr.bf16.mxu0 0
        %5608 = vmatpush1.bf16.msra.mxu0 0
        %5609 = vmatprep.subr.bf16.mxu0 0
        %5610 = vmatpush1.bf16.msra.mxu0 0
        %5611 = vmatprep.subr.bf16.mxu0 0
        %5612 = vmatpush1.bf16.msra.mxu0 0
        %5613 = vmatprep.subr.bf16.mxu0 0
        %5614 = vmatpush1.bf16.msra.mxu0 0
        %5615 = vmatprep.subr.bf16.mxu0 0
        %5616 = vmatpush1.bf16.msra.mxu0 %v5545
        %5617 = vmatprep.subr.bf16.mxu0 0
        %5618 = vmatpush2.bf16.msra.mxu0 0
        %5619 = vmatprep.subr.bf16.mxu0 0
        %5620 = vmatpush2.bf16.msra.mxu0 0
        %5621 = vmatprep.subr.bf16.mxu0 0
        %5622 = vmatpush2.bf16.msra.mxu0 0
        %5623 = vmatprep.subr.bf16.mxu0 0
        %5624 = vmatpush2.bf16.msra.mxu0 0
        %5625 = vmatprep.subr.bf16.mxu0 0
        %5626 = vmatpush2.bf16.msra.mxu0 0
        %5627 = vmatprep.subr.bf16.mxu0 0
        %5628 = vmatpush2.bf16.msra.mxu0 0
        %5629 = vmatprep.subr.bf16.mxu0 0
        %5630 = vmatpush2.bf16.msra.mxu0 0
        %5631 = vmatprep.subr.bf16.mxu0 0
        %5632 = vmatpush2.bf16.msra.mxu0 0
        %5633 = vmatprep.mubr.bf16.mxu0 0
        %5634 = vmatmul.mubr.bf16.gmra.mxu0 %v5548
        %v5635 = vpop.f32.mrf.mxu0
        %v5636 = vadd.f32 0.0, %v5635
        %v5637 = vpop.f32.mrf.mxu0
        %v5638 = vpop.f32.mrf.mxu0
        %v5639 = vadd.f32 0.0, %v5638
        %v5640 = vpop.f32.mrf.mxu0
        %5641 = vmatprep.mubr.bf16.mxu0 0
        %5642 = vmatmul.mubr.bf16.gmra.mxu0 %v5551
        %v5643 = vpop.f32.mrf.mxu0
        %v5644 = vadd.f32 0.0, %v5643
        %v5645 = vpop.f32.mrf.mxu0
        %v5646 = vpop.f32.mrf.mxu0
        %v5647 = vadd.f32 0.0, %v5646
        %v5648 = vpop.f32.mrf.mxu0
        %5649 = vmatprep.mubr.bf16.mxu0 0
        %5650 = vmatmul.mubr.bf16.gmra.mxu0 %v5554
        %v5651 = vpop.f32.mrf.mxu0
        %v5652 = vadd.f32 0.0, %v5651
        %v5653 = vpop.f32.mrf.mxu0
        %v5654 = vpop.f32.mrf.mxu0
        %v5655 = vadd.f32 0.0, %v5654
        %v5656 = vpop.f32.mrf.mxu0
        %5657 = vmatprep.mubr.bf16.mxu0 0
        %5658 = vmatmul.mubr.bf16.gmra.mxu0 %v5557
        %v5659 = vpop.f32.mrf.mxu0
        %v5660 = vadd.f32 0.0, %v5659
        %v5661 = vpop.f32.mrf.mxu0
        %v5662 = vpop.f32.mrf.mxu0
        %v5663 = vadd.f32 0.0, %v5662
        %v5664 = vpop.f32.mrf.mxu0
        %5665 = vmatprep.mubr.bf16.mxu0 0
        %5666 = vmatmul.mubr.bf16.gmra.mxu0 %v5560
        %v5667 = vpop.f32.mrf.mxu0
        %v5668 = vadd.f32 0.0, %v5667
        %v5669 = vpop.f32.mrf.mxu0
        %v5670 = vpop.f32.mrf.mxu0
        %v5671 = vadd.f32 0.0, %v5670
        %v5672 = vpop.f32.mrf.mxu0
        %5673 = vmatprep.mubr.bf16.mxu0 0
        %5674 = vmatmul.mubr.bf16.gmra.mxu0 %v5563
        %v5675 = vpop.f32.mrf.mxu0
        %v5676 = vadd.f32 0.0, %v5675
        %v5677 = vpop.f32.mrf.mxu0
        %v5678 = vpop.f32.mrf.mxu0
        %v5679 = vadd.f32 0.0, %v5678
        %v5680 = vpop.f32.mrf.mxu0
        %5681 = vmatprep.mubr.bf16.mxu0 0
        %5682 = vmatmul.mubr.bf16.gmra.mxu0 %v5566
        %v5683 = vpop.f32.mrf.mxu0
        %v5684 = vadd.f32 0.0, %v5683
        %v5685 = vpop.f32.mrf.mxu0
        %v5686 = vpop.f32.mrf.mxu0
        %v5687 = vadd.f32 0.0, %v5686
        %v5688 = vpop.f32.mrf.mxu0
        %5689 = vmatprep.mubr.bf16.mxu0 0
        %5690 = vmatmul.mubr.bf16.gmra.mxu0 %v5569
        %v5691 = vpop.f32.mrf.mxu0
        %v5692 = vadd.f32 0.0, %v5691
        %v5693 = vpop.f32.mrf.mxu0
        %v5694 = vpop.f32.mrf.mxu0
        %v5695 = vadd.f32 0.0, %v5694
        %v5696 = vpop.f32.mrf.mxu0
        %5697 = vmatprep.mubr.bf16.mxu0 0
        %5698 = vmatmul.mubr.bf16.gmra.mxu0 %v5572
        %v5699 = vpop.f32.mrf.mxu0
        %v5700 = vadd.f32 0.0, %v5699
        %v5701 = vpop.f32.mrf.mxu0
        %v5702 = vpop.f32.mrf.mxu0
        %v5703 = vadd.f32 0.0, %v5702
        %v5704 = vpop.f32.mrf.mxu0
        %5705 = vmatprep.mubr.bf16.mxu0 0
        %5706 = vmatmul.mubr.bf16.gmra.mxu0 %v5575
        %v5707 = vpop.f32.mrf.mxu0
        %v5708 = vadd.f32 0.0, %v5707
        %v5709 = vpop.f32.mrf.mxu0
        %v5710 = vpop.f32.mrf.mxu0
        %v5711 = vadd.f32 0.0, %v5710
        %v5712 = vpop.f32.mrf.mxu0
        %5713 = vmatprep.mubr.bf16.mxu0 0
        %5714 = vmatmul.mubr.bf16.gmra.mxu0 %v5578
        %v5715 = vpop.f32.mrf.mxu0
        %v5716 = vadd.f32 0.0, %v5715
        %v5717 = vpop.f32.mrf.mxu0
        %v5718 = vpop.f32.mrf.mxu0
        %v5719 = vadd.f32 0.0, %v5718
        %v5720 = vpop.f32.mrf.mxu0
        %5721 = vmatprep.mubr.bf16.mxu0 0
        %5722 = vmatmul.mubr.bf16.gmra.mxu0 %v5581
        %v5723 = vpop.f32.mrf.mxu0
        %v5724 = vadd.f32 0.0, %v5723
        %v5725 = vpop.f32.mrf.mxu0
        %v5726 = vpop.f32.mrf.mxu0
        %v5727 = vadd.f32 0.0, %v5726
        %v5728 = vpop.f32.mrf.mxu0
        %5729 = vmatprep.mubr.bf16.mxu0 0
        %5730 = vmatmul.mubr.bf16.gmra.mxu0 %v5584
        %v5731 = vpop.f32.mrf.mxu0
        %v5732 = vadd.f32 0.0, %v5731
        %v5733 = vpop.f32.mrf.mxu0
        %v5734 = vpop.f32.mrf.mxu0
        %v5735 = vadd.f32 0.0, %v5734
        %v5736 = vpop.f32.mrf.mxu0
        %5737 = vmatprep.mubr.bf16.mxu0 0
        %5738 = vmatmul.mubr.bf16.gmra.mxu0 %v5587
        %v5739 = vpop.f32.mrf.mxu0
        %v5740 = vadd.f32 0.0, %v5739
        %v5741 = vpop.f32.mrf.mxu0
        %v5742 = vpop.f32.mrf.mxu0
        %v5743 = vadd.f32 0.0, %v5742
        %v5744 = vpop.f32.mrf.mxu0
        %5745 = vmatprep.mubr.bf16.mxu0 0
        %5746 = vmatmul.mubr.bf16.gmra.mxu0 %v5590
        %v5747 = vpop.f32.mrf.mxu0
        %v5748 = vadd.f32 0.0, %v5747
        %v5749 = vpop.f32.mrf.mxu0
        %v5750 = vpop.f32.mrf.mxu0
        %v5751 = vadd.f32 0.0, %v5750
        %v5752 = vpop.f32.mrf.mxu0
        %5753 = vmatprep.mubr.bf16.mxu0 0
        %5754 = vmatmul.mubr.bf16.gmra.mxu0 %v5593
        %v5755 = vpop.f32.mrf.mxu0
        %v5756 = vadd.f32 0.0, %v5755
        %v5757 = vpop.f32.mrf.mxu0
        %v5758 = vpop.f32.mrf.mxu0
        %v5759 = vadd.f32 0.0, %v5758
        %v5760 = vpop.f32.mrf.mxu0
        %5761 = vmatprep.mubr.bf16.mxu0 0
        %5762 = vmatmul.mubr.bf16.gmra.mxu0 %v5596
        %v5763 = vpop.f32.mrf.mxu0
        %v5764 = vadd.f32 0.0, %v5763
        %v5765 = vpop.f32.mrf.mxu0
        %v5766 = vpop.f32.mrf.mxu0
        %v5767 = vadd.f32 0.0, %v5766
        %v5768 = vpop.f32.mrf.mxu0
        %5769 = vmatprep.mubr.bf16.mxu0 0
        %5770 = vmatmul.mubr.bf16.gmra.mxu0 %v5599
        %v5771 = vpop.f32.mrf.mxu0
        %v5772 = vadd.f32 0.0, %v5771
        %v5773 = vpop.f32.mrf.mxu0
        %v5774 = vpop.f32.mrf.mxu0
        %v5775 = vadd.f32 0.0, %v5774
        %v5776 = vpop.f32.mrf.mxu0
        %5777 = vdwg.mxu0
        %v5778 = vadd.f32 %v5448, %v5636
        %v5779 = vadd.f32 %v5449, %v5639
        %v5780 = vadd.f32 %v5450, %v5644
        %v5781 = vadd.f32 %v5451, %v5647
        %v5782 = vadd.f32 %v5452, %v5652
        %v5783 = vadd.f32 %v5453, %v5655
        %v5784 = vadd.f32 %v5454, %v5660
        %v5785 = vadd.f32 %v5455, %v5663
        %v5786 = vadd.f32 %v5456, %v5668
        %v5787 = vadd.f32 %v5457, %v5671
        %v5788 = vadd.f32 %v5458, %v5676
        %v5789 = vadd.f32 %v5459, %v5679
        %v5790 = vadd.f32 %v5460, %v5684
        %v5791 = vadd.f32 %v5461, %v5687
        %v5792 = vadd.f32 %v5462, %v5692
        %v5793 = vadd.f32 %v5463, %v5695
        %v5794 = vadd.f32 %v5464, %v5700
        %v5795 = vadd.f32 %v5465, %v5703
        %v5796 = vadd.f32 %v5466, %v5708
        %v5797 = vadd.f32 %v5467, %v5711
        %v5798 = vadd.f32 %v5468, %v5716
        %v5799 = vadd.f32 %v5469, %v5719
        %v5800 = vadd.f32 %v5470, %v5724
        %v5801 = vadd.f32 %v5471, %v5727
        %v5802 = vadd.f32 %v5472, %v5732
        %v5803 = vadd.f32 %v5473, %v5735
        %v5804 = vadd.f32 %v5474, %v5740
        %v5805 = vadd.f32 %v5475, %v5743
        %v5806 = vadd.f32 %v5476, %v5748
        %v5807 = vadd.f32 %v5477, %v5751
        %v5808 = vadd.f32 %v5478, %v5756
        %v5809 = vadd.f32 %v5479, %v5759
        %v5810 = vadd.f32 %v5480, %v5764
        %v5811 = vadd.f32 %v5481, %v5767
        %v5812 = vadd.f32 %v5482, %v5772
        %v5813 = vadd.f32 %v5483, %v5775
        %v5814 = vld [vmem:[#allocation2 + $0x2a] sm:$0xff]
        %v5815 = vld [vmem:[#allocation2 + $0x32] sm:$0xff]
        %v5816 = vld [vmem:[#allocation2 + $0x3a] sm:$0xff]
        %v5817 = vld [vmem:[#allocation2 + $0x42] sm:$0xff]
        %v5818 = vld [vmem:[#allocation2 + $0x4a] sm:$0xff]
        %v5819 = vld [vmem:[#allocation2 + $0x52] sm:$0xff]
        %v5820 = vld [vmem:[#allocation2 + $0x5a] sm:$0xff]
        %v5821 = vld [vmem:[#allocation2 + $0x62] sm:$0xff]
        %v5822 = vld [vmem:[#allocation2 + $0x6a] sm:$0xff]
        %v5823 = vld [vmem:[#allocation2 + $0x72] sm:$0xff]
        %v5824 = vld [vmem:[#allocation2 + $0x7a] sm:$0xff]
        %v5825 = vld [vmem:[#allocation2 + $0x82] sm:$0xff]
        %v5826 = vld [vmem:[#allocation2 + $0x8a] sm:$0xff]
        %v5827 = vld [vmem:[#allocation2 + $0x92] sm:$0xff]
        %v5828 = vld [vmem:[#allocation2 + $0x9a] sm:$0xff]
        %v5829 = vld [vmem:[#allocation2 + $0xa2] sm:$0xff]
        %v5830 = vld [vmem:[#allocation2 + $0xaa] sm:$0xff]
        %v5831 = vld [vmem:[#allocation2 + $0xb2] sm:$0xff]
        %v5832 = vld [vmem:[#allocation2 + $0xba] sm:$0xff]
        %v5833 = vld [vmem:[#allocation2 + $0xc2] sm:$0xff]
        %v5834 = vld [vmem:[#allocation2 + $0xca] sm:$0xff]
        %v5835 = vld [vmem:[#allocation2 + $0xd2] sm:$0xff]
        %v5836 = vld [vmem:[#allocation2 + $0xda] sm:$0xff]
        %v5837 = vld [vmem:[#allocation2 + $0xe2] sm:$0xff]
        %v5838 = vld [vmem:[#allocation2 + $0xea] sm:$0xff]
        %v5839 = vld [vmem:[#allocation2 + $0xf2] sm:$0xff]
        %v5840 = vld [vmem:[#allocation2 + $0xfa] sm:$0xff]
        %v5841 = vld [vmem:[#allocation2 + $0x102] sm:$0xff]
        %v5842 = vld [vmem:[#allocation2 + $0x10a] sm:$0xff]
        %v5843 = vld [vmem:[#allocation2 + $0x112] sm:$0xff]
        %v5844 = vld [vmem:[#allocation2 + $0x11a] sm:$0xff]
        %v5845 = vld [vmem:[#allocation2 + $0x122] sm:$0xff]
        %v5846 = vld [vmem:[#allocation2 + $0x12a] sm:$0xff]
        %v5847 = vld [vmem:[#allocation2 + $0x132] sm:$0xff]
        %v5848 = vld [vmem:[#allocation2 + $0x13a] sm:$0xff]
        %v5849 = vld [vmem:[#allocation2 + $0x142] sm:$0xff]
        %v5850 = vpack.c.bf16 %v5815, %v5814
        %v5851 = vpack.c.bf16 %v5817, %v5816
        %v5852 = vpack.c.bf16 %v5819, %v5818
        %v5853 = vpack.c.bf16 %v5821, %v5820
        %v5854 = vpack.c.bf16 %v5823, %v5822
        %v5855 = vpack.c.bf16 %v5825, %v5824
        %v5856 = vpack.c.bf16 %v5827, %v5826
        %v5857 = vpack.c.bf16 %v5829, %v5828
        %v5858 = vpack.c.bf16 %v5831, %v5830
        %v5859 = vpack.c.bf16 %v5833, %v5832
        %v5860 = vpack.c.bf16 %v5835, %v5834
        %v5861 = vpack.c.bf16 %v5837, %v5836
        %v5862 = vpack.c.bf16 %v5839, %v5838
        %v5863 = vpack.c.bf16 %v5841, %v5840
        %v5864 = vpack.c.bf16 %v5843, %v5842
        %v5865 = vpack.c.bf16 %v5845, %v5844
        %v5866 = vpack.c.bf16 %v5847, %v5846
        %v5867 = vpack.c.bf16 %v5849, %v5848
        %s5868 = scalar_lea.vmem %s3, 56
        %v5869 = vld [vmem:[%s5868] sm:$0xf]
        %v5870 = vld [vmem:[%s5868 + $0x4] sm:$0xf]
        %v5873 = vunpack.c.l.b16 %v5869
        %v5874 = vunpack.c.l.b16 %v5870
        %v5875 = vpack.c.b16 %v5874, %v5873
        %v5878 = vsel %vm3498, %v5850, 0
        %v5881 = vsel %vm3498, %v5851, 0
        %v5884 = vsel %vm3498, %v5852, 0
        %v5887 = vsel %vm3498, %v5853, 0
        %v5890 = vsel %vm3498, %v5854, 0
        %v5893 = vsel %vm3498, %v5855, 0
        %v5896 = vsel %vm3498, %v5856, 0
        %v5899 = vsel %vm3498, %v5857, 0
        %v5902 = vsel %vm3498, %v5858, 0
        %v5905 = vsel %vm3498, %v5859, 0
        %v5908 = vsel %vm3498, %v5860, 0
        %v5911 = vsel %vm3498, %v5861, 0
        %v5914 = vsel %vm3498, %v5862, 0
        %v5917 = vsel %vm3498, %v5863, 0
        %v5920 = vsel %vm3498, %v5864, 0
        %v5923 = vsel %vm3498, %v5865, 0
        %v5926 = vsel %vm3498, %v5866, 0
        %v5929 = vsel %vm3498, %v5867, 0
        %5931 = vmatprep.subr.bf16.mxu0 0
        %5932 = vmatpush1.bf16.msra.mxu0 0
        %5933 = vmatprep.subr.bf16.mxu0 0
        %5934 = vmatpush1.bf16.msra.mxu0 0
        %5935 = vmatprep.subr.bf16.mxu0 0
        %5936 = vmatpush1.bf16.msra.mxu0 0
        %5937 = vmatprep.subr.bf16.mxu0 0
        %5938 = vmatpush1.bf16.msra.mxu0 0
        %5939 = vmatprep.subr.bf16.mxu0 0
        %5940 = vmatpush1.bf16.msra.mxu0 0
        %5941 = vmatprep.subr.bf16.mxu0 0
        %5942 = vmatpush1.bf16.msra.mxu0 0
        %5943 = vmatprep.subr.bf16.mxu0 0
        %5944 = vmatpush1.bf16.msra.mxu0 0
        %5945 = vmatprep.subr.bf16.mxu0 0
        %5946 = vmatpush1.bf16.msra.mxu0 %v5875
        %5947 = vmatprep.subr.bf16.mxu0 0
        %5948 = vmatpush2.bf16.msra.mxu0 0
        %5949 = vmatprep.subr.bf16.mxu0 0
        %5950 = vmatpush2.bf16.msra.mxu0 0
        %5951 = vmatprep.subr.bf16.mxu0 0
        %5952 = vmatpush2.bf16.msra.mxu0 0
        %5953 = vmatprep.subr.bf16.mxu0 0
        %5954 = vmatpush2.bf16.msra.mxu0 0
        %5955 = vmatprep.subr.bf16.mxu0 0
        %5956 = vmatpush2.bf16.msra.mxu0 0
        %5957 = vmatprep.subr.bf16.mxu0 0
        %5958 = vmatpush2.bf16.msra.mxu0 0
        %5959 = vmatprep.subr.bf16.mxu0 0
        %5960 = vmatpush2.bf16.msra.mxu0 0
        %5961 = vmatprep.subr.bf16.mxu0 0
        %5962 = vmatpush2.bf16.msra.mxu0 0
        %5963 = vmatprep.mubr.bf16.mxu0 0
        %5964 = vmatmul.mubr.bf16.gmra.mxu0 %v5878
        %v5965 = vpop.f32.mrf.mxu0
        %v5966 = vadd.f32 0.0, %v5965
        %v5967 = vpop.f32.mrf.mxu0
        %v5968 = vpop.f32.mrf.mxu0
        %v5969 = vadd.f32 0.0, %v5968
        %v5970 = vpop.f32.mrf.mxu0
        %5971 = vmatprep.mubr.bf16.mxu0 0
        %5972 = vmatmul.mubr.bf16.gmra.mxu0 %v5881
        %v5973 = vpop.f32.mrf.mxu0
        %v5974 = vadd.f32 0.0, %v5973
        %v5975 = vpop.f32.mrf.mxu0
        %v5976 = vpop.f32.mrf.mxu0
        %v5977 = vadd.f32 0.0, %v5976
        %v5978 = vpop.f32.mrf.mxu0
        %5979 = vmatprep.mubr.bf16.mxu0 0
        %5980 = vmatmul.mubr.bf16.gmra.mxu0 %v5884
        %v5981 = vpop.f32.mrf.mxu0
        %v5982 = vadd.f32 0.0, %v5981
        %v5983 = vpop.f32.mrf.mxu0
        %v5984 = vpop.f32.mrf.mxu0
        %v5985 = vadd.f32 0.0, %v5984
        %v5986 = vpop.f32.mrf.mxu0
        %5987 = vmatprep.mubr.bf16.mxu0 0
        %5988 = vmatmul.mubr.bf16.gmra.mxu0 %v5887
        %v5989 = vpop.f32.mrf.mxu0
        %v5990 = vadd.f32 0.0, %v5989
        %v5991 = vpop.f32.mrf.mxu0
        %v5992 = vpop.f32.mrf.mxu0
        %v5993 = vadd.f32 0.0, %v5992
        %v5994 = vpop.f32.mrf.mxu0
        %5995 = vmatprep.mubr.bf16.mxu0 0
        %5996 = vmatmul.mubr.bf16.gmra.mxu0 %v5890
        %v5997 = vpop.f32.mrf.mxu0
        %v5998 = vadd.f32 0.0, %v5997
        %v5999 = vpop.f32.mrf.mxu0
        %v6000 = vpop.f32.mrf.mxu0
        %v6001 = vadd.f32 0.0, %v6000
        %v6002 = vpop.f32.mrf.mxu0
        %6003 = vmatprep.mubr.bf16.mxu0 0
        %6004 = vmatmul.mubr.bf16.gmra.mxu0 %v5893
        %v6005 = vpop.f32.mrf.mxu0
        %v6006 = vadd.f32 0.0, %v6005
        %v6007 = vpop.f32.mrf.mxu0
        %v6008 = vpop.f32.mrf.mxu0
        %v6009 = vadd.f32 0.0, %v6008
        %v6010 = vpop.f32.mrf.mxu0
        %6011 = vmatprep.mubr.bf16.mxu0 0
        %6012 = vmatmul.mubr.bf16.gmra.mxu0 %v5896
        %v6013 = vpop.f32.mrf.mxu0
        %v6014 = vadd.f32 0.0, %v6013
        %v6015 = vpop.f32.mrf.mxu0
        %v6016 = vpop.f32.mrf.mxu0
        %v6017 = vadd.f32 0.0, %v6016
        %v6018 = vpop.f32.mrf.mxu0
        %6019 = vmatprep.mubr.bf16.mxu0 0
        %6020 = vmatmul.mubr.bf16.gmra.mxu0 %v5899
        %v6021 = vpop.f32.mrf.mxu0
        %v6022 = vadd.f32 0.0, %v6021
        %v6023 = vpop.f32.mrf.mxu0
        %v6024 = vpop.f32.mrf.mxu0
        %v6025 = vadd.f32 0.0, %v6024
        %v6026 = vpop.f32.mrf.mxu0
        %6027 = vmatprep.mubr.bf16.mxu0 0
        %6028 = vmatmul.mubr.bf16.gmra.mxu0 %v5902
        %v6029 = vpop.f32.mrf.mxu0
        %v6030 = vadd.f32 0.0, %v6029
        %v6031 = vpop.f32.mrf.mxu0
        %v6032 = vpop.f32.mrf.mxu0
        %v6033 = vadd.f32 0.0, %v6032
        %v6034 = vpop.f32.mrf.mxu0
        %6035 = vmatprep.mubr.bf16.mxu0 0
        %6036 = vmatmul.mubr.bf16.gmra.mxu0 %v5905
        %v6037 = vpop.f32.mrf.mxu0
        %v6038 = vadd.f32 0.0, %v6037
        %v6039 = vpop.f32.mrf.mxu0
        %v6040 = vpop.f32.mrf.mxu0
        %v6041 = vadd.f32 0.0, %v6040
        %v6042 = vpop.f32.mrf.mxu0
        %6043 = vmatprep.mubr.bf16.mxu0 0
        %6044 = vmatmul.mubr.bf16.gmra.mxu0 %v5908
        %v6045 = vpop.f32.mrf.mxu0
        %v6046 = vadd.f32 0.0, %v6045
        %v6047 = vpop.f32.mrf.mxu0
        %v6048 = vpop.f32.mrf.mxu0
        %v6049 = vadd.f32 0.0, %v6048
        %v6050 = vpop.f32.mrf.mxu0
        %6051 = vmatprep.mubr.bf16.mxu0 0
        %6052 = vmatmul.mubr.bf16.gmra.mxu0 %v5911
        %v6053 = vpop.f32.mrf.mxu0
        %v6054 = vadd.f32 0.0, %v6053
        %v6055 = vpop.f32.mrf.mxu0
        %v6056 = vpop.f32.mrf.mxu0
        %v6057 = vadd.f32 0.0, %v6056
        %v6058 = vpop.f32.mrf.mxu0
        %6059 = vmatprep.mubr.bf16.mxu0 0
        %6060 = vmatmul.mubr.bf16.gmra.mxu0 %v5914
        %v6061 = vpop.f32.mrf.mxu0
        %v6062 = vadd.f32 0.0, %v6061
        %v6063 = vpop.f32.mrf.mxu0
        %v6064 = vpop.f32.mrf.mxu0
        %v6065 = vadd.f32 0.0, %v6064
        %v6066 = vpop.f32.mrf.mxu0
        %6067 = vmatprep.mubr.bf16.mxu0 0
        %6068 = vmatmul.mubr.bf16.gmra.mxu0 %v5917
        %v6069 = vpop.f32.mrf.mxu0
        %v6070 = vadd.f32 0.0, %v6069
        %v6071 = vpop.f32.mrf.mxu0
        %v6072 = vpop.f32.mrf.mxu0
        %v6073 = vadd.f32 0.0, %v6072
        %v6074 = vpop.f32.mrf.mxu0
        %6075 = vmatprep.mubr.bf16.mxu0 0
        %6076 = vmatmul.mubr.bf16.gmra.mxu0 %v5920
        %v6077 = vpop.f32.mrf.mxu0
        %v6078 = vadd.f32 0.0, %v6077
        %v6079 = vpop.f32.mrf.mxu0
        %v6080 = vpop.f32.mrf.mxu0
        %v6081 = vadd.f32 0.0, %v6080
        %v6082 = vpop.f32.mrf.mxu0
        %6083 = vmatprep.mubr.bf16.mxu0 0
        %6084 = vmatmul.mubr.bf16.gmra.mxu0 %v5923
        %v6085 = vpop.f32.mrf.mxu0
        %v6086 = vadd.f32 0.0, %v6085
        %v6087 = vpop.f32.mrf.mxu0
        %v6088 = vpop.f32.mrf.mxu0
        %v6089 = vadd.f32 0.0, %v6088
        %v6090 = vpop.f32.mrf.mxu0
        %6091 = vmatprep.mubr.bf16.mxu0 0
        %6092 = vmatmul.mubr.bf16.gmra.mxu0 %v5926
        %v6093 = vpop.f32.mrf.mxu0
        %v6094 = vadd.f32 0.0, %v6093
        %v6095 = vpop.f32.mrf.mxu0
        %v6096 = vpop.f32.mrf.mxu0
        %v6097 = vadd.f32 0.0, %v6096
        %v6098 = vpop.f32.mrf.mxu0
        %6099 = vmatprep.mubr.bf16.mxu0 0
        %6100 = vmatmul.mubr.bf16.gmra.mxu0 %v5929
        %v6101 = vpop.f32.mrf.mxu0
        %v6102 = vadd.f32 0.0, %v6101
        %v6103 = vpop.f32.mrf.mxu0
        %v6104 = vpop.f32.mrf.mxu0
        %v6105 = vadd.f32 0.0, %v6104
        %v6106 = vpop.f32.mrf.mxu0
        %6107 = vdwg.mxu0
        %v6108 = vadd.f32 %v5778, %v5966
        %v6109 = vadd.f32 %v5779, %v5969
        %v6110 = vadd.f32 %v5780, %v5974
        %v6111 = vadd.f32 %v5781, %v5977
        %v6112 = vadd.f32 %v5782, %v5982
        %v6113 = vadd.f32 %v5783, %v5985
        %v6114 = vadd.f32 %v5784, %v5990
        %v6115 = vadd.f32 %v5785, %v5993
        %v6116 = vadd.f32 %v5786, %v5998
        %v6117 = vadd.f32 %v5787, %v6001
        %v6118 = vadd.f32 %v5788, %v6006
        %v6119 = vadd.f32 %v5789, %v6009
        %v6120 = vadd.f32 %v5790, %v6014
        %v6121 = vadd.f32 %v5791, %v6017
        %v6122 = vadd.f32 %v5792, %v6022
        %v6123 = vadd.f32 %v5793, %v6025
        %v6124 = vadd.f32 %v5794, %v6030
        %v6125 = vadd.f32 %v5795, %v6033
        %v6126 = vadd.f32 %v5796, %v6038
        %v6127 = vadd.f32 %v5797, %v6041
        %v6128 = vadd.f32 %v5798, %v6046
        %v6129 = vadd.f32 %v5799, %v6049
        %v6130 = vadd.f32 %v5800, %v6054
        %v6131 = vadd.f32 %v5801, %v6057
        %v6132 = vadd.f32 %v5802, %v6062
        %v6133 = vadd.f32 %v5803, %v6065
        %v6134 = vadd.f32 %v5804, %v6070
        %v6135 = vadd.f32 %v5805, %v6073
        %v6136 = vadd.f32 %v5806, %v6078
        %v6137 = vadd.f32 %v5807, %v6081
        %v6138 = vadd.f32 %v5808, %v6086
        %v6139 = vadd.f32 %v5809, %v6089
        %v6140 = vadd.f32 %v5810, %v6094
        %v6141 = vadd.f32 %v5811, %v6097
        %v6142 = vadd.f32 %v5812, %v6102
        %v6143 = vadd.f32 %v5813, %v6105
        %v6144 = vld [vmem:[#allocation2 + $0x2b] sm:$0xff]
        %v6145 = vld [vmem:[#allocation2 + $0x33] sm:$0xff]
        %v6146 = vld [vmem:[#allocation2 + $0x3b] sm:$0xff]
        %v6147 = vld [vmem:[#allocation2 + $0x43] sm:$0xff]
        %v6148 = vld [vmem:[#allocation2 + $0x4b] sm:$0xff]
        %v6149 = vld [vmem:[#allocation2 + $0x53] sm:$0xff]
        %v6150 = vld [vmem:[#allocation2 + $0x5b] sm:$0xff]
        %v6151 = vld [vmem:[#allocation2 + $0x63] sm:$0xff]
        %v6152 = vld [vmem:[#allocation2 + $0x6b] sm:$0xff]
        %v6153 = vld [vmem:[#allocation2 + $0x73] sm:$0xff]
        %v6154 = vld [vmem:[#allocation2 + $0x7b] sm:$0xff]
        %v6155 = vld [vmem:[#allocation2 + $0x83] sm:$0xff]
        %v6156 = vld [vmem:[#allocation2 + $0x8b] sm:$0xff]
        %v6157 = vld [vmem:[#allocation2 + $0x93] sm:$0xff]
        %v6158 = vld [vmem:[#allocation2 + $0x9b] sm:$0xff]
        %v6159 = vld [vmem:[#allocation2 + $0xa3] sm:$0xff]
        %v6160 = vld [vmem:[#allocation2 + $0xab] sm:$0xff]
        %v6161 = vld [vmem:[#allocation2 + $0xb3] sm:$0xff]
        %v6162 = vld [vmem:[#allocation2 + $0xbb] sm:$0xff]
        %v6163 = vld [vmem:[#allocation2 + $0xc3] sm:$0xff]
        %v6164 = vld [vmem:[#allocation2 + $0xcb] sm:$0xff]
        %v6165 = vld [vmem:[#allocation2 + $0xd3] sm:$0xff]
        %v6166 = vld [vmem:[#allocation2 + $0xdb] sm:$0xff]
        %v6167 = vld [vmem:[#allocation2 + $0xe3] sm:$0xff]
        %v6168 = vld [vmem:[#allocation2 + $0xeb] sm:$0xff]
        %v6169 = vld [vmem:[#allocation2 + $0xf3] sm:$0xff]
        %v6170 = vld [vmem:[#allocation2 + $0xfb] sm:$0xff]
        %v6171 = vld [vmem:[#allocation2 + $0x103] sm:$0xff]
        %v6172 = vld [vmem:[#allocation2 + $0x10b] sm:$0xff]
        %v6173 = vld [vmem:[#allocation2 + $0x113] sm:$0xff]
        %v6174 = vld [vmem:[#allocation2 + $0x11b] sm:$0xff]
        %v6175 = vld [vmem:[#allocation2 + $0x123] sm:$0xff]
        %v6176 = vld [vmem:[#allocation2 + $0x12b] sm:$0xff]
        %v6177 = vld [vmem:[#allocation2 + $0x133] sm:$0xff]
        %v6178 = vld [vmem:[#allocation2 + $0x13b] sm:$0xff]
        %v6179 = vld [vmem:[#allocation2 + $0x143] sm:$0xff]
        %v6180 = vpack.c.bf16 %v6145, %v6144
        %v6181 = vpack.c.bf16 %v6147, %v6146
        %v6182 = vpack.c.bf16 %v6149, %v6148
        %v6183 = vpack.c.bf16 %v6151, %v6150
        %v6184 = vpack.c.bf16 %v6153, %v6152
        %v6185 = vpack.c.bf16 %v6155, %v6154
        %v6186 = vpack.c.bf16 %v6157, %v6156
        %v6187 = vpack.c.bf16 %v6159, %v6158
        %v6188 = vpack.c.bf16 %v6161, %v6160
        %v6189 = vpack.c.bf16 %v6163, %v6162
        %v6190 = vpack.c.bf16 %v6165, %v6164
        %v6191 = vpack.c.bf16 %v6167, %v6166
        %v6192 = vpack.c.bf16 %v6169, %v6168
        %v6193 = vpack.c.bf16 %v6171, %v6170
        %v6194 = vpack.c.bf16 %v6173, %v6172
        %v6195 = vpack.c.bf16 %v6175, %v6174
        %v6196 = vpack.c.bf16 %v6177, %v6176
        %v6197 = vpack.c.bf16 %v6179, %v6178
        %s6198 = scalar_lea.vmem %s3, 64
        %v6199 = vld [vmem:[%s6198] sm:$0xf]
        %v6200 = vld [vmem:[%s6198 + $0x4] sm:$0xf]
        %v6203 = vunpack.c.l.b16 %v6199
        %v6204 = vunpack.c.l.b16 %v6200
        %v6205 = vpack.c.b16 %v6204, %v6203
        %v6208 = vsel %vm3498, %v6180, 0
        %v6211 = vsel %vm3498, %v6181, 0
        %v6214 = vsel %vm3498, %v6182, 0
        %v6217 = vsel %vm3498, %v6183, 0
        %v6220 = vsel %vm3498, %v6184, 0
        %v6223 = vsel %vm3498, %v6185, 0
        %v6226 = vsel %vm3498, %v6186, 0
        %v6229 = vsel %vm3498, %v6187, 0
        %v6232 = vsel %vm3498, %v6188, 0
        %v6235 = vsel %vm3498, %v6189, 0
        %v6238 = vsel %vm3498, %v6190, 0
        %v6241 = vsel %vm3498, %v6191, 0
        %v6244 = vsel %vm3498, %v6192, 0
        %v6247 = vsel %vm3498, %v6193, 0
        %v6250 = vsel %vm3498, %v6194, 0
        %v6253 = vsel %vm3498, %v6195, 0
        %v6256 = vsel %vm3498, %v6196, 0
        %v6259 = vsel %vm3498, %v6197, 0
        %6261 = vmatprep.subr.bf16.mxu0 0
        %6262 = vmatpush1.bf16.msra.mxu0 0
        %6263 = vmatprep.subr.bf16.mxu0 0
        %6264 = vmatpush1.bf16.msra.mxu0 0
        %6265 = vmatprep.subr.bf16.mxu0 0
        %6266 = vmatpush1.bf16.msra.mxu0 0
        %6267 = vmatprep.subr.bf16.mxu0 0
        %6268 = vmatpush1.bf16.msra.mxu0 0
        %6269 = vmatprep.subr.bf16.mxu0 0
        %6270 = vmatpush1.bf16.msra.mxu0 0
        %6271 = vmatprep.subr.bf16.mxu0 0
        %6272 = vmatpush1.bf16.msra.mxu0 0
        %6273 = vmatprep.subr.bf16.mxu0 0
        %6274 = vmatpush1.bf16.msra.mxu0 0
        %6275 = vmatprep.subr.bf16.mxu0 0
        %6276 = vmatpush1.bf16.msra.mxu0 %v6205
        %6277 = vmatprep.subr.bf16.mxu0 0
        %6278 = vmatpush2.bf16.msra.mxu0 0
        %6279 = vmatprep.subr.bf16.mxu0 0
        %6280 = vmatpush2.bf16.msra.mxu0 0
        %6281 = vmatprep.subr.bf16.mxu0 0
        %6282 = vmatpush2.bf16.msra.mxu0 0
        %6283 = vmatprep.subr.bf16.mxu0 0
        %6284 = vmatpush2.bf16.msra.mxu0 0
        %6285 = vmatprep.subr.bf16.mxu0 0
        %6286 = vmatpush2.bf16.msra.mxu0 0
        %6287 = vmatprep.subr.bf16.mxu0 0
        %6288 = vmatpush2.bf16.msra.mxu0 0
        %6289 = vmatprep.subr.bf16.mxu0 0
        %6290 = vmatpush2.bf16.msra.mxu0 0
        %6291 = vmatprep.subr.bf16.mxu0 0
        %6292 = vmatpush2.bf16.msra.mxu0 0
        %6293 = vmatprep.mubr.bf16.mxu0 0
        %6294 = vmatmul.mubr.bf16.gmra.mxu0 %v6208
        %v6295 = vpop.f32.mrf.mxu0
        %v6296 = vadd.f32 0.0, %v6295
        %v6297 = vpop.f32.mrf.mxu0
        %v6298 = vpop.f32.mrf.mxu0
        %v6299 = vadd.f32 0.0, %v6298
        %v6300 = vpop.f32.mrf.mxu0
        %6301 = vmatprep.mubr.bf16.mxu0 0
        %6302 = vmatmul.mubr.bf16.gmra.mxu0 %v6211
        %v6303 = vpop.f32.mrf.mxu0
        %v6304 = vadd.f32 0.0, %v6303
        %v6305 = vpop.f32.mrf.mxu0
        %v6306 = vpop.f32.mrf.mxu0
        %v6307 = vadd.f32 0.0, %v6306
        %v6308 = vpop.f32.mrf.mxu0
        %6309 = vmatprep.mubr.bf16.mxu0 0
        %6310 = vmatmul.mubr.bf16.gmra.mxu0 %v6214
        %v6311 = vpop.f32.mrf.mxu0
        %v6312 = vadd.f32 0.0, %v6311
        %v6313 = vpop.f32.mrf.mxu0
        %v6314 = vpop.f32.mrf.mxu0
        %v6315 = vadd.f32 0.0, %v6314
        %v6316 = vpop.f32.mrf.mxu0
        %6317 = vmatprep.mubr.bf16.mxu0 0
        %6318 = vmatmul.mubr.bf16.gmra.mxu0 %v6217
        %v6319 = vpop.f32.mrf.mxu0
        %v6320 = vadd.f32 0.0, %v6319
        %v6321 = vpop.f32.mrf.mxu0
        %v6322 = vpop.f32.mrf.mxu0
        %v6323 = vadd.f32 0.0, %v6322
        %v6324 = vpop.f32.mrf.mxu0
        %6325 = vmatprep.mubr.bf16.mxu0 0
        %6326 = vmatmul.mubr.bf16.gmra.mxu0 %v6220
        %v6327 = vpop.f32.mrf.mxu0
        %v6328 = vadd.f32 0.0, %v6327
        %v6329 = vpop.f32.mrf.mxu0
        %v6330 = vpop.f32.mrf.mxu0
        %v6331 = vadd.f32 0.0, %v6330
        %v6332 = vpop.f32.mrf.mxu0
        %6333 = vmatprep.mubr.bf16.mxu0 0
        %6334 = vmatmul.mubr.bf16.gmra.mxu0 %v6223
        %v6335 = vpop.f32.mrf.mxu0
        %v6336 = vadd.f32 0.0, %v6335
        %v6337 = vpop.f32.mrf.mxu0
        %v6338 = vpop.f32.mrf.mxu0
        %v6339 = vadd.f32 0.0, %v6338
        %v6340 = vpop.f32.mrf.mxu0
        %6341 = vmatprep.mubr.bf16.mxu0 0
        %6342 = vmatmul.mubr.bf16.gmra.mxu0 %v6226
        %v6343 = vpop.f32.mrf.mxu0
        %v6344 = vadd.f32 0.0, %v6343
        %v6345 = vpop.f32.mrf.mxu0
        %v6346 = vpop.f32.mrf.mxu0
        %v6347 = vadd.f32 0.0, %v6346
        %v6348 = vpop.f32.mrf.mxu0
        %6349 = vmatprep.mubr.bf16.mxu0 0
        %6350 = vmatmul.mubr.bf16.gmra.mxu0 %v6229
        %v6351 = vpop.f32.mrf.mxu0
        %v6352 = vadd.f32 0.0, %v6351
        %v6353 = vpop.f32.mrf.mxu0
        %v6354 = vpop.f32.mrf.mxu0
        %v6355 = vadd.f32 0.0, %v6354
        %v6356 = vpop.f32.mrf.mxu0
        %6357 = vmatprep.mubr.bf16.mxu0 0
        %6358 = vmatmul.mubr.bf16.gmra.mxu0 %v6232
        %v6359 = vpop.f32.mrf.mxu0
        %v6360 = vadd.f32 0.0, %v6359
        %v6361 = vpop.f32.mrf.mxu0
        %v6362 = vpop.f32.mrf.mxu0
        %v6363 = vadd.f32 0.0, %v6362
        %v6364 = vpop.f32.mrf.mxu0
        %6365 = vmatprep.mubr.bf16.mxu0 0
        %6366 = vmatmul.mubr.bf16.gmra.mxu0 %v6235
        %v6367 = vpop.f32.mrf.mxu0
        %v6368 = vadd.f32 0.0, %v6367
        %v6369 = vpop.f32.mrf.mxu0
        %v6370 = vpop.f32.mrf.mxu0
        %v6371 = vadd.f32 0.0, %v6370
        %v6372 = vpop.f32.mrf.mxu0
        %6373 = vmatprep.mubr.bf16.mxu0 0
        %6374 = vmatmul.mubr.bf16.gmra.mxu0 %v6238
        %v6375 = vpop.f32.mrf.mxu0
        %v6376 = vadd.f32 0.0, %v6375
        %v6377 = vpop.f32.mrf.mxu0
        %v6378 = vpop.f32.mrf.mxu0
        %v6379 = vadd.f32 0.0, %v6378
        %v6380 = vpop.f32.mrf.mxu0
        %6381 = vmatprep.mubr.bf16.mxu0 0
        %6382 = vmatmul.mubr.bf16.gmra.mxu0 %v6241
        %v6383 = vpop.f32.mrf.mxu0
        %v6384 = vadd.f32 0.0, %v6383
        %v6385 = vpop.f32.mrf.mxu0
        %v6386 = vpop.f32.mrf.mxu0
        %v6387 = vadd.f32 0.0, %v6386
        %v6388 = vpop.f32.mrf.mxu0
        %6389 = vmatprep.mubr.bf16.mxu0 0
        %6390 = vmatmul.mubr.bf16.gmra.mxu0 %v6244
        %v6391 = vpop.f32.mrf.mxu0
        %v6392 = vadd.f32 0.0, %v6391
        %v6393 = vpop.f32.mrf.mxu0
        %v6394 = vpop.f32.mrf.mxu0
        %v6395 = vadd.f32 0.0, %v6394
        %v6396 = vpop.f32.mrf.mxu0
        %6397 = vmatprep.mubr.bf16.mxu0 0
        %6398 = vmatmul.mubr.bf16.gmra.mxu0 %v6247
        %v6399 = vpop.f32.mrf.mxu0
        %v6400 = vadd.f32 0.0, %v6399
        %v6401 = vpop.f32.mrf.mxu0
        %v6402 = vpop.f32.mrf.mxu0
        %v6403 = vadd.f32 0.0, %v6402
        %v6404 = vpop.f32.mrf.mxu0
        %6405 = vmatprep.mubr.bf16.mxu0 0
        %6406 = vmatmul.mubr.bf16.gmra.mxu0 %v6250
        %v6407 = vpop.f32.mrf.mxu0
        %v6408 = vadd.f32 0.0, %v6407
        %v6409 = vpop.f32.mrf.mxu0
        %v6410 = vpop.f32.mrf.mxu0
        %v6411 = vadd.f32 0.0, %v6410
        %v6412 = vpop.f32.mrf.mxu0
        %6413 = vmatprep.mubr.bf16.mxu0 0
        %6414 = vmatmul.mubr.bf16.gmra.mxu0 %v6253
        %v6415 = vpop.f32.mrf.mxu0
        %v6416 = vadd.f32 0.0, %v6415
        %v6417 = vpop.f32.mrf.mxu0
        %v6418 = vpop.f32.mrf.mxu0
        %v6419 = vadd.f32 0.0, %v6418
        %v6420 = vpop.f32.mrf.mxu0
        %6421 = vmatprep.mubr.bf16.mxu0 0
        %6422 = vmatmul.mubr.bf16.gmra.mxu0 %v6256
        %v6423 = vpop.f32.mrf.mxu0
        %v6424 = vadd.f32 0.0, %v6423
        %v6425 = vpop.f32.mrf.mxu0
        %v6426 = vpop.f32.mrf.mxu0
        %v6427 = vadd.f32 0.0, %v6426
        %v6428 = vpop.f32.mrf.mxu0
        %6429 = vmatprep.mubr.bf16.mxu0 0
        %6430 = vmatmul.mubr.bf16.gmra.mxu0 %v6259
        %v6431 = vpop.f32.mrf.mxu0
        %v6432 = vadd.f32 0.0, %v6431
        %v6433 = vpop.f32.mrf.mxu0
        %v6434 = vpop.f32.mrf.mxu0
        %v6435 = vadd.f32 0.0, %v6434
        %v6436 = vpop.f32.mrf.mxu0
        %6437 = vdwg.mxu0
        %v6438 = vadd.f32 %v6108, %v6296
        %v6439 = vadd.f32 %v6109, %v6299
        %v6440 = vadd.f32 %v6110, %v6304
        %v6441 = vadd.f32 %v6111, %v6307
        %v6442 = vadd.f32 %v6112, %v6312
        %v6443 = vadd.f32 %v6113, %v6315
        %v6444 = vadd.f32 %v6114, %v6320
        %v6445 = vadd.f32 %v6115, %v6323
        %v6446 = vadd.f32 %v6116, %v6328
        %v6447 = vadd.f32 %v6117, %v6331
        %v6448 = vadd.f32 %v6118, %v6336
        %v6449 = vadd.f32 %v6119, %v6339
        %v6450 = vadd.f32 %v6120, %v6344
        %v6451 = vadd.f32 %v6121, %v6347
        %v6452 = vadd.f32 %v6122, %v6352
        %v6453 = vadd.f32 %v6123, %v6355
        %v6454 = vadd.f32 %v6124, %v6360
        %v6455 = vadd.f32 %v6125, %v6363
        %v6456 = vadd.f32 %v6126, %v6368
        %v6457 = vadd.f32 %v6127, %v6371
        %v6458 = vadd.f32 %v6128, %v6376
        %v6459 = vadd.f32 %v6129, %v6379
        %v6460 = vadd.f32 %v6130, %v6384
        %v6461 = vadd.f32 %v6131, %v6387
        %v6462 = vadd.f32 %v6132, %v6392
        %v6463 = vadd.f32 %v6133, %v6395
        %v6464 = vadd.f32 %v6134, %v6400
        %v6465 = vadd.f32 %v6135, %v6403
        %v6466 = vadd.f32 %v6136, %v6408
        %v6467 = vadd.f32 %v6137, %v6411
        %v6468 = vadd.f32 %v6138, %v6416
        %v6469 = vadd.f32 %v6139, %v6419
        %v6470 = vadd.f32 %v6140, %v6424
        %v6471 = vadd.f32 %v6141, %v6427
        %v6472 = vadd.f32 %v6142, %v6432
        %v6473 = vadd.f32 %v6143, %v6435
        %v6474 = vld [vmem:[%s4] sm:$0x1]
        %v6476 = vlaneseq
        %v6477 = vshrl.u32 %v6476, 7
        %v6478 = vsub.s32 0, %v6477
        %v6479 = vrot.slane %v6474, %v6478
        %v6481 = vadd.f32 %v6438, %v6479
        %v6482 = vadd.f32 %v6439, %v6479
        %v6483 = vadd.f32 %v6440, %v6479
        %v6484 = vadd.f32 %v6441, %v6479
        %v6485 = vadd.f32 %v6442, %v6479
        %v6486 = vadd.f32 %v6443, %v6479
        %v6487 = vadd.f32 %v6444, %v6479
        %v6488 = vadd.f32 %v6445, %v6479
        %v6489 = vadd.f32 %v6446, %v6479
        %v6490 = vadd.f32 %v6447, %v6479
        %v6491 = vadd.f32 %v6448, %v6479
        %v6492 = vadd.f32 %v6449, %v6479
        %v6493 = vadd.f32 %v6450, %v6479
        %v6494 = vadd.f32 %v6451, %v6479
        %v6495 = vadd.f32 %v6452, %v6479
        %v6496 = vadd.f32 %v6453, %v6479
        %v6497 = vadd.f32 %v6454, %v6479
        %v6498 = vadd.f32 %v6455, %v6479
        %v6499 = vadd.f32 %v6456, %v6479
        %v6500 = vadd.f32 %v6457, %v6479
        %v6501 = vadd.f32 %v6458, %v6479
        %v6502 = vadd.f32 %v6459, %v6479
        %v6503 = vadd.f32 %v6460, %v6479
        %v6504 = vadd.f32 %v6461, %v6479
        %v6505 = vadd.f32 %v6462, %v6479
        %v6506 = vadd.f32 %v6463, %v6479
        %v6507 = vadd.f32 %v6464, %v6479
        %v6508 = vadd.f32 %v6465, %v6479
        %v6509 = vadd.f32 %v6466, %v6479
        %v6510 = vadd.f32 %v6467, %v6479
        %v6511 = vadd.f32 %v6468, %v6479
        %v6512 = vadd.f32 %v6469, %v6479
        %v6513 = vadd.f32 %v6470, %v6479
        %v6514 = vadd.f32 %v6471, %v6479
        %v6515 = vadd.f32 %v6472, %v6479
        %v6516 = vadd.f32 %v6473, %v6479
        %v6517 = vmax.f32 %v6481, 0.0
        %v6518 = vmax.f32 %v6482, 0.0
        %v6519 = vmax.f32 %v6483, 0.0
        %v6520 = vmax.f32 %v6484, 0.0
        %v6521 = vmax.f32 %v6485, 0.0
        %v6522 = vmax.f32 %v6486, 0.0
        %v6523 = vmax.f32 %v6487, 0.0
        %v6524 = vmax.f32 %v6488, 0.0
        %v6525 = vmax.f32 %v6489, 0.0
        %v6526 = vmax.f32 %v6490, 0.0
        %v6527 = vmax.f32 %v6491, 0.0
        %v6528 = vmax.f32 %v6492, 0.0
        %v6529 = vmax.f32 %v6493, 0.0
        %v6530 = vmax.f32 %v6494, 0.0
        %v6531 = vmax.f32 %v6495, 0.0
        %v6532 = vmax.f32 %v6496, 0.0
        %v6533 = vmax.f32 %v6497, 0.0
        %v6534 = vmax.f32 %v6498, 0.0
        %v6535 = vmax.f32 %v6499, 0.0
        %v6536 = vmax.f32 %v6500, 0.0
        %v6537 = vmax.f32 %v6501, 0.0
        %v6538 = vmax.f32 %v6502, 0.0
        %v6539 = vmax.f32 %v6503, 0.0
        %v6540 = vmax.f32 %v6504, 0.0
        %v6541 = vmax.f32 %v6505, 0.0
        %v6542 = vmax.f32 %v6506, 0.0
        %v6543 = vmax.f32 %v6507, 0.0
        %v6544 = vmax.f32 %v6508, 0.0
        %v6545 = vmax.f32 %v6509, 0.0
        %v6546 = vmax.f32 %v6510, 0.0
        %v6547 = vmax.f32 %v6511, 0.0
        %v6548 = vmax.f32 %v6512, 0.0
        %v6549 = vmax.f32 %v6513, 0.0
        %v6550 = vmax.f32 %v6514, 0.0
        %v6551 = vmax.f32 %v6515, 0.0
        %v6552 = vmax.f32 %v6516, 0.0
        %v6553 = vmul.f32 %v6517, %v3285
        %v6554 = vmul.f32 %v6518, %v3290
        %v6555 = vmul.f32 %v6519, %v3295
        %v6556 = vmul.f32 %v6520, %v3300
        %v6557 = vmul.f32 %v6521, %v3305
        %v6558 = vmul.f32 %v6522, %v3310
        %v6559 = vmul.f32 %v6523, %v3315
        %v6560 = vmul.f32 %v6524, %v3320
        %v6561 = vmul.f32 %v6525, %v3325
        %v6562 = vmul.f32 %v6526, %v3330
        %v6563 = vmul.f32 %v6527, %v3335
        %v6564 = vmul.f32 %v6528, %v3340
        %v6565 = vmul.f32 %v6529, %v3345
        %v6566 = vmul.f32 %v6530, %v3350
        %v6567 = vmul.f32 %v6531, %v3355
        %v6568 = vmul.f32 %v6532, %v3360
        %v6569 = vmul.f32 %v6533, %v3365
        %v6570 = vmul.f32 %v6534, %v3370
        %v6571 = vmul.f32 %v6535, %v3375
        %v6572 = vmul.f32 %v6536, %v3380
        %v6573 = vmul.f32 %v6537, %v3385
        %v6574 = vmul.f32 %v6538, %v3390
        %v6575 = vmul.f32 %v6539, %v3395
        %v6576 = vmul.f32 %v6540, %v3400
        %v6577 = vmul.f32 %v6541, %v3405
        %v6578 = vmul.f32 %v6542, %v3410
        %v6579 = vmul.f32 %v6543, %v3415
        %v6580 = vmul.f32 %v6544, %v3420
        %v6581 = vmul.f32 %v6545, %v3425
        %v6582 = vmul.f32 %v6546, %v3430
        %v6583 = vmul.f32 %v6547, %v3435
        %v6584 = vmul.f32 %v6548, %v3440
        %v6585 = vmul.f32 %v6549, %v3445
        %v6586 = vmul.f32 %v6550, %v3450
        %v6587 = vmul.f32 %v6551, %v3455
        %v6588 = vmul.f32 %v6552, %v3460
        %vm6589 = vcmask 261120
        %v6591 = vsel %vm6589, 1.0, 0
        %6593 = vmatprep.subr.mxu0 0.0
        %6594 = vmatpush1.msra.mxu0 %v6568
        %6595 = vmatprep.subr.mxu0 0.0
        %6596 = vmatpush1.msra.mxu0 %v6567
        %6597 = vmatprep.subr.mxu0 0.0
        %6598 = vmatpush1.msra.mxu0 %v6566
        %6599 = vmatprep.subr.mxu0 0.0
        %6600 = vmatpush1.msra.mxu0 %v6565
        %6601 = vmatprep.subr.mxu0 0.0
        %6602 = vmatpush1.msra.mxu0 %v6564
        %6603 = vmatprep.subr.mxu0 0.0
        %6604 = vmatpush1.msra.mxu0 %v6563
        %6605 = vmatprep.subr.mxu0 0.0
        %6606 = vmatpush1.msra.mxu0 %v6562
        %6607 = vmatprep.subr.mxu0 0.0
        %6608 = vmatpush1.msra.mxu0 %v6561
        %6609 = vmatprep.subr.mxu0 0.0
        %6610 = vmatpush1.msra.mxu0 %v6560
        %6611 = vmatprep.subr.mxu0 0.0
        %6612 = vmatpush1.msra.mxu0 %v6559
        %6613 = vmatprep.subr.mxu0 0.0
        %6614 = vmatpush1.msra.mxu0 %v6558
        %6615 = vmatprep.subr.mxu0 0.0
        %6616 = vmatpush1.msra.mxu0 %v6557
        %6617 = vmatprep.subr.mxu0 0.0
        %6618 = vmatpush1.msra.mxu0 %v6556
        %6619 = vmatprep.subr.mxu0 0.0
        %6620 = vmatpush1.msra.mxu0 %v6555
        %6621 = vmatprep.subr.mxu0 0.0
        %6622 = vmatpush1.msra.mxu0 %v6554
        %6623 = vmatprep.subr.mxu0 0.0
        %6624 = vmatpush1.msra.mxu0 %v6553
        %6625 = vmatprep.subr.mxu0 0.0
        %6626 = vmatpush2.msra.mxu0 %v6584
        %6627 = vmatprep.subr.mxu0 0.0
        %6628 = vmatpush2.msra.mxu0 %v6583
        %6629 = vmatprep.subr.mxu0 0.0
        %6630 = vmatpush2.msra.mxu0 %v6582
        %6631 = vmatprep.subr.mxu0 0.0
        %6632 = vmatpush2.msra.mxu0 %v6581
        %6633 = vmatprep.subr.mxu0 0.0
        %6634 = vmatpush2.msra.mxu0 %v6580
        %6635 = vmatprep.subr.mxu0 0.0
        %6636 = vmatpush2.msra.mxu0 %v6579
        %6637 = vmatprep.subr.mxu0 0.0
        %6638 = vmatpush2.msra.mxu0 %v6578
        %6639 = vmatprep.subr.mxu0 0.0
        %6640 = vmatpush2.msra.mxu0 %v6577
        %6641 = vmatprep.subr.mxu0 0.0
        %6642 = vmatpush2.msra.mxu0 %v6576
        %6643 = vmatprep.subr.mxu0 0.0
        %6644 = vmatpush2.msra.mxu0 %v6575
        %6645 = vmatprep.subr.mxu0 0.0
        %6646 = vmatpush2.msra.mxu0 %v6574
        %6647 = vmatprep.subr.mxu0 0.0
        %6648 = vmatpush2.msra.mxu0 %v6573
        %6649 = vmatprep.subr.mxu0 0.0
        %6650 = vmatpush2.msra.mxu0 %v6572
        %6651 = vmatprep.subr.mxu0 0.0
        %6652 = vmatpush2.msra.mxu0 %v6571
        %6653 = vmatprep.subr.mxu0 0.0
        %6654 = vmatpush2.msra.mxu0 %v6570
        %6655 = vmatprep.subr.mxu0 0.0
        %6656 = vmatpush2.msra.mxu0 %v6569
        %6657 = vmatprep.mubr.f32.mxu0 1.0
        %6658 = vmatmul.mubr.f32.gmra.mxu0 1.0
        %v6659 = vpop.f32.mrf.mxu0
        %v6660 = vadd.f32 0.0, %v6659
        %v6661 = vpop.f32.mrf.mxu0
        %6662 = vdwg.mxu0
        %6663 = vmatprep.subr.mxu0 0.0
        %6664 = vmatpush1.msra.mxu0 0.0
        %6665 = vmatprep.subr.mxu0 0.0
        %6666 = vmatpush1.msra.mxu0 0.0
        %6667 = vmatprep.subr.mxu0 0.0
        %6668 = vmatpush1.msra.mxu0 0.0
        %6669 = vmatprep.subr.mxu0 0.0
        %6670 = vmatpush1.msra.mxu0 0.0
        %6671 = vmatprep.subr.mxu0 0.0
        %6672 = vmatpush1.msra.mxu0 0.0
        %6673 = vmatprep.subr.mxu0 0.0
        %6674 = vmatpush1.msra.mxu0 0.0
        %6675 = vmatprep.subr.mxu0 0.0
        %6676 = vmatpush1.msra.mxu0 0.0
        %6677 = vmatprep.subr.mxu0 0.0
        %6678 = vmatpush1.msra.mxu0 0.0
        %6679 = vmatprep.subr.mxu0 0.0
        %6680 = vmatpush1.msra.mxu0 0.0
        %6681 = vmatprep.subr.mxu0 0.0
        %6682 = vmatpush1.msra.mxu0 0.0
        %6683 = vmatprep.subr.mxu0 0.0
        %6684 = vmatpush1.msra.mxu0 0.0
        %6685 = vmatprep.subr.mxu0 0.0
        %6686 = vmatpush1.msra.mxu0 0.0
        %6687 = vmatprep.subr.mxu0 0.0
        %6688 = vmatpush1.msra.mxu0 %v6588
        %6689 = vmatprep.subr.mxu0 0.0
        %6690 = vmatpush1.msra.mxu0 %v6587
        %6691 = vmatprep.subr.mxu0 0.0
        %6692 = vmatpush1.msra.mxu0 %v6586
        %6693 = vmatprep.subr.mxu0 0.0
        %6694 = vmatpush1.msra.mxu0 %v6585
        %6695 = vmatprep.subr.mxu0 0.0
        %6696 = vmatpush2.msra.mxu0 0.0
        %6697 = vmatprep.subr.mxu0 0.0
        %6698 = vmatpush2.msra.mxu0 0.0
        %6699 = vmatprep.subr.mxu0 0.0
        %6700 = vmatpush2.msra.mxu0 0.0
        %6701 = vmatprep.subr.mxu0 0.0
        %6702 = vmatpush2.msra.mxu0 0.0
        %6703 = vmatprep.subr.mxu0 0.0
        %6704 = vmatpush2.msra.mxu0 0.0
        %6705 = vmatprep.subr.mxu0 0.0
        %6706 = vmatpush2.msra.mxu0 0.0
        %6707 = vmatprep.subr.mxu0 0.0
        %6708 = vmatpush2.msra.mxu0 0.0
        %6709 = vmatprep.subr.mxu0 0.0
        %6710 = vmatpush2.msra.mxu0 0.0
        %6711 = vmatprep.subr.mxu0 0.0
        %6712 = vmatpush2.msra.mxu0 0.0
        %6713 = vmatprep.subr.mxu0 0.0
        %6714 = vmatpush2.msra.mxu0 0.0
        %6715 = vmatprep.subr.mxu0 0.0
        %6716 = vmatpush2.msra.mxu0 0.0
        %6717 = vmatprep.subr.mxu0 0.0
        %6718 = vmatpush2.msra.mxu0 0.0
        %6719 = vmatprep.subr.mxu0 0.0
        %6720 = vmatpush2.msra.mxu0 0.0
        %6721 = vmatprep.subr.mxu0 0.0
        %6722 = vmatpush2.msra.mxu0 0.0
        %6723 = vmatprep.subr.mxu0 0.0
        %6724 = vmatpush2.msra.mxu0 0.0
        %6725 = vmatprep.subr.mxu0 0.0
        %6726 = vmatpush2.msra.mxu0 0.0
        %6727 = vmatprep.mubr.f32.mxu0 0.0
        %6728 = vmatmul.mubr.f32.gmra.mxu0 %v6591
        %v6729 = vpop.f32.mrf.mxu0
        %v6730 = vadd.f32 %v6660, %v6729
        %v6731 = vpop.f32.mrf.mxu0
        %6732 = vdwg.mxu0
        %v6733 = vmul.f32 %v6730, 0.00390625
        %v6734 = vld [vmem:[%s5] sm:$0xff]
        %v6735 = vld [vmem:[%s5 + $0x8] sm:$0xff]
        %v6736 = vld [vmem:[%s5 + $0x10] sm:$0xff]
        %v6737 = vld [vmem:[%s5 + $0x18] sm:$0xff]
        %v6738 = vld [vmem:[%s6] sm:$0x1]
        %v6740 = vsel %vm6589, %v6733, 0
        %6742 = vmatprep.subr.mxu0 0.0
        %6743 = vmatpush1.msra.mxu0 0.0
        %6744 = vmatprep.subr.mxu0 0.0
        %6745 = vmatpush1.msra.mxu0 0.0
        %6746 = vmatprep.subr.mxu0 0.0
        %6747 = vmatpush1.msra.mxu0 0.0
        %6748 = vmatprep.subr.mxu0 0.0
        %6749 = vmatpush1.msra.mxu0 0.0
        %6750 = vmatprep.subr.mxu0 0.0
        %6751 = vmatpush1.msra.mxu0 0.0
        %6752 = vmatprep.subr.mxu0 0.0
        %6753 = vmatpush1.msra.mxu0 0.0
        %6754 = vmatprep.subr.mxu0 0.0
        %6755 = vmatpush1.msra.mxu0 0.0
        %6756 = vmatprep.subr.mxu0 0.0
        %6757 = vmatpush1.msra.mxu0 0.0
        %6758 = vmatprep.subr.mxu0 0.0
        %6759 = vmatpush1.msra.mxu0 0.0
        %6760 = vmatprep.subr.mxu0 0.0
        %6761 = vmatpush1.msra.mxu0 0.0
        %6762 = vmatprep.subr.mxu0 0.0
        %6763 = vmatpush1.msra.mxu0 0.0
        %6764 = vmatprep.subr.mxu0 0.0
        %6765 = vmatpush1.msra.mxu0 0.0
        %6766 = vmatprep.subr.mxu0 0.0
        %6767 = vmatpush1.msra.mxu0 %v6737
        %6768 = vmatprep.subr.mxu0 0.0
        %6769 = vmatpush1.msra.mxu0 %v6736
        %6770 = vmatprep.subr.mxu0 0.0
        %6771 = vmatpush1.msra.mxu0 %v6735
        %6772 = vmatprep.subr.mxu0 0.0
        %6773 = vmatpush1.msra.mxu0 %v6734
        %6774 = vmatprep.subr.mxu0 0.0
        %6775 = vmatpush2.msra.mxu0 0.0
        %6776 = vmatprep.subr.mxu0 0.0
        %6777 = vmatpush2.msra.mxu0 0.0
        %6778 = vmatprep.subr.mxu0 0.0
        %6779 = vmatpush2.msra.mxu0 0.0
        %6780 = vmatprep.subr.mxu0 0.0
        %6781 = vmatpush2.msra.mxu0 0.0
        %6782 = vmatprep.subr.mxu0 0.0
        %6783 = vmatpush2.msra.mxu0 0.0
        %6784 = vmatprep.subr.mxu0 0.0
        %6785 = vmatpush2.msra.mxu0 0.0
        %6786 = vmatprep.subr.mxu0 0.0
        %6787 = vmatpush2.msra.mxu0 0.0
        %6788 = vmatprep.subr.mxu0 0.0
        %6789 = vmatpush2.msra.mxu0 0.0
        %6790 = vmatprep.subr.mxu0 0.0
        %6791 = vmatpush2.msra.mxu0 0.0
        %6792 = vmatprep.subr.mxu0 0.0
        %6793 = vmatpush2.msra.mxu0 0.0
        %6794 = vmatprep.subr.mxu0 0.0
        %6795 = vmatpush2.msra.mxu0 0.0
        %6796 = vmatprep.subr.mxu0 0.0
        %6797 = vmatpush2.msra.mxu0 0.0
        %6798 = vmatprep.subr.mxu0 0.0
        %6799 = vmatpush2.msra.mxu0 0.0
        %6800 = vmatprep.subr.mxu0 0.0
        %6801 = vmatpush2.msra.mxu0 0.0
        %6802 = vmatprep.subr.mxu0 0.0
        %6803 = vmatpush2.msra.mxu0 0.0
        %6804 = vmatprep.subr.mxu0 0.0
        %6805 = vmatpush2.msra.mxu0 0.0
        %6806 = vmatprep.mubr.f32.mxu0 0.0
        %6807 = vmatmul.mubr.f32.gmra.mxu0 %v6740
        %v6808 = vpop.f32.mrf.mxu0
        %v6809 = vadd.f32 %v6738, %v6808
        %v6810 = vpop.f32.mrf.mxu0
        %6811 = vdwg.mxu0
        %6812 = vst [vmem:[%s297] sm:$0x1] %v6809
        %s6813 = sand.u32 %s203, 1
        %s6814 = scalar_lea.sflag [#allocation4], %s6813
        %s6815 = sand.u32 %s203, 1
        %s6816 = scalar_lea.vmem [#allocation3], %s6815
        // Predicated region
        $region53: #{basemodel_forward.1} parent=51 // pred_check
          %p6817 = pneg %p213
        $region54: #{basemodel_forward.1} parent=51 // pred_check_branch
          %6819 = sbr.rel (%p6817) target = $region56
        $region55: #{basemodel_forward.1} parent=51 // pred_region
          %s6821 = ssub.s32 16, 16
          %6822 = vsyncadd %s6814, %s6821
          %s6823 = smul.addr %s22, 16
          %s6824 = scalar_lea.hbm %s8, %s6823
          %s6826 = sshll.u32 %s6816, 4
          %s6827 = int_to_ptr.vmem [resolvable:$true] %s6826
          %6829 = dma.vmem_to_hbm [thread:$0]  %s6827, 16, %s6824, %s6814
        $region56: #{basemodel_forward.1} parent=51 // pred_fallthru
          _
      $region52: #{basemodel_forward.1} parent=5 // pred_fallthru
        _
      %p6830 = scmp.le.s32.totalorder 2, %s17
      // Predicated region
      $region57: #{basemodel_forward.1} parent=5 // pred_check
        %p6831 = pneg %p6830
      $region58: #{basemodel_forward.1} parent=5 // pred_check_branch
        %6833 = sbr.rel (%p6831) target = $region60
      $region59: #{basemodel_forward.1} parent=5 // pred_region
        %s6834 = ssub.s32 %s17, 2
        // Predicated region
        $region61: #{basemodel_forward.1} parent=59 // pred_check
          %p6835 = pneg %p219
        $region62: #{basemodel_forward.1} parent=59 // pred_check_branch
          %6837 = sbr.rel (%p6835) target = $region64
        $region63: #{basemodel_forward.1} parent=59 // pred_region
          %s6838 = sand.u32 %s204, 1
          %s6839 = scalar_lea.sflag [#allocation4], %s6838
          %s6840 = sand.u32 %s204, 1
          %s6841 = scalar_lea.vmem [#allocation3], %s6840
          %6842 = dma.done %s6839, 16
        $region64: #{basemodel_forward.1} parent=59 // pred_fallthru
          _
      $region60: #{basemodel_forward.1} parent=5 // pred_fallthru
        _
    $region6: #{basemodel_forward.1} parent=1 // loop_footer
      %s21 = sadd.s32 1, %s17
    $region7: #{basemodel_forward.1} parent=1 // loop_footer_branch
      %16 = sbr.rel target = $region3
    $region8: #{basemodel_forward.1} parent=1 // loop_exit
      _
    %6843 = vsyncpa [#allocation4], 1
    %s6844 = scalar_lea.sflag [#allocation4], 1
    %6845 = vsyncpa %s6844, 1

</llo_original>
